<compile_context>
chip_gen: v5e
topology: v5e:2x2
jax: 0.10.0
libtpu: 0.0.40
codegen_flags: <defaults>
</compile_context>

<pallas_src>
import jax
import jax.numpy as jnp
from jax.experimental import pallas as pl
from jax.experimental.pallas import tpu as pltpu

EPS = 1e-5
LANES = 128
POOL = 4


def _round_up(x, m):
    return ((x + m - 1) // m) * m


def _vmem_specs(n):
    return [pl.BlockSpec(memory_space=pltpu.MemorySpace.VMEM) for _ in range(n)]


def _pad2d(a, rows, cols):
    return jnp.zeros((rows, cols), jnp.float32).at[: a.shape[0], : a.shape[1]].set(a)


def _pad_vec(v, cols):
    return jnp.zeros((1, cols), jnp.float32).at[0, : v.shape[0]].set(v)


# ------------------------------ fused kernel --------------------------------

def make_m5_kernel(N, Lout1, Cp, chunk):
    """conv1..4 + BN(batch stats) + ReLU + MaxPool(4), avg-pool, fc1 — fused."""

    def bn_affine(bn_ref, stage, s, ss, count):
        gamma = bn_ref[pl.ds(2 * stage, 1), :]
        beta = bn_ref[pl.ds(2 * stage + 1, 1), :]
        inv = 1.0 / float(count)
        mean = s * inv
        var = jnp.maximum(ss * inv - mean * mean, 0.0)   # biased var (training BN)
        scale = gamma * jax.lax.rsqrt(var + EPS)
        shift = beta - mean * scale
        return scale, shift

    def pool_pass(src_ref, dst_ref, base_stride, Lp, scale, shift):
        # Fused BN-affine + ReLU + MaxPool1d(4).  The four phase-strided views
        # are disjoint: every pre-pool row is read & normalized exactly once.
        for n in range(N):
            base = n * base_stride
            m = None
            for p in range(POOL):
                v = src_ref[pl.ds(base + p, Lp, stride=POOL), :]
                v = jnp.maximum(v * scale + shift, 0.0)
                m = v if m is None else jnp.maximum(m, v)
            dst_ref[pl.ds(n * Lp, Lp), :] = m

    def kernel(p_ref, w1_ref, bn_ref, taps_ref, wf_ref, bf_ref, o_ref, ys, xs):
        # ---- stage 1: conv1 as chunked (rows, Kp) x (Kp, Cp) matmuls --------
        rows1 = N * Lout1
        s = jnp.zeros((1, Cp), jnp.float32)
        ss = jnp.zeros((1, Cp), jnp.float32)
        for c in range(rows1 // chunk):
            y = jnp.dot(p_ref[pl.ds(c * chunk, chunk), :], w1_ref[...],
                        preferred_element_type=jnp.float32)
            s = s + jnp.sum(y, axis=0, keepdims=True)
            ss = ss + jnp.sum(y * y, axis=0, keepdims=True)
            ys[pl.ds(c * chunk, chunk), :] = y
        scale, shift = bn_affine(bn_ref, 0, s, ss, rows1)
        Lp = Lout1 // POOL
        pool_pass(ys, xs, Lout1, Lp, scale, shift)

        # ---- stages 2..4: batch-flattened 3-tap conv + BN + ReLU + pool -----
        Lin = Lp
        for st in range(3):
            Lout = Lin - 2
            Lp = Lout // POOL
            nrows = N * Lin - 2
            acc = jnp.dot(xs[pl.ds(0, nrows), :], taps_ref[3 * st + 0],
                          preferred_element_type=jnp.float32)
            acc = acc + jnp.dot(xs[pl.ds(1, nrows), :], taps_ref[3 * st + 1],
                                preferred_element_type=jnp.float32)
            acc = acc + jnp.dot(xs[pl.ds(2, nrows), :], taps_ref[3 * st + 2],
                                preferred_element_type=jnp.float32)
            # BN batch stats from the still-in-vreg accumulator; subtract the
            # (N-1)*2 rows that straddle sample boundaries in the flat view.
            s = jnp.sum(acc, axis=0, keepdims=True)
            ss = jnp.sum(acc * acc, axis=0, keepdims=True)
            for n in range(N - 1):
                bad = acc[n * Lin + Lout: n * Lin + Lin, :]
                s = s - jnp.sum(bad, axis=0, keepdims=True)
                ss = ss - jnp.sum(bad * bad, axis=0, keepdims=True)
            ys[pl.ds(0, nrows), :] = acc
            scale, shift = bn_affine(bn_ref, st + 1, s, ss, N * Lout)
            pool_pass(ys, xs, Lin, Lp, scale, shift)
            Lin = Lp

        # ---- global average pool + fc1 (single batched matmul) -------------
        inv = 1.0 / float(Lin)
        feats = [jnp.sum(xs[pl.ds(n * Lin, Lin), :], axis=0, keepdims=True) * inv
                 for n in range(N)]
        f = jnp.concatenate(feats, axis=0)                            # (N, Cp)
        o_ref[...] = (jnp.dot(f, wf_ref[...],
                              preferred_element_type=jnp.float32) + bf_ref[...])

    return kernel


# ------------------------------ JAX glue -------------------------------------

def build_patches(x_nl, K, stride, Kp):
    """Gather-free im2col for single-channel input: (N, L) -> (N*Lout, Kp)."""
    N, L = x_nl.shape
    assert L % stride == 0 and K % stride == 0
    xb = x_nl.reshape(N, L // stride, stride)          # stride-sized blocks
    Lout = (L - K) // stride + 1
    parts = [xb[:, s:s + Lout, :] for s in range(K // stride)]
    p = jnp.concatenate(parts, axis=-1).reshape(N * Lout, K)
    return jnp.pad(p, ((0, 0), (0, Kp - K))), Lout


def _conv3_taps(w, Cp):
    # w: (Cout, Cin, 3) -> (3, Cp, Cp), tap[k][ci, co] = w[co, ci, k].
    return jnp.stack(
        [_pad2d(jnp.transpose(w[:, :, k]), Cp, Cp) for k in range(3)], axis=0)


# --------------------------- parameter setup ---------------------------------

def init_params(key, n_input=1, n_output=35, n_channel=32):
    def conv_init(k, cout, cin, ksz):
        fan_in = cin * ksz
        bound = 1.0 / (fan_in ** 0.5)
        kw, kb = jax.random.split(k)
        w = jax.random.uniform(kw, (cout, cin, ksz), jnp.float32, -bound, bound)
        b = jax.random.uniform(kb, (cout,), jnp.float32, -bound, bound)
        return w, b

    keys = jax.random.split(key, 5)
    p = {
        "conv1": conv_init(keys[0], n_channel, n_input, 80),
        "conv2": conv_init(keys[1], n_channel, n_channel, 3),
        "conv3": conv_init(keys[2], 2 * n_channel, n_channel, 3),
        "conv4": conv_init(keys[3], 2 * n_channel, 2 * n_channel, 3),
        "bn1": (jnp.ones((n_channel,), jnp.float32), jnp.zeros((n_channel,), jnp.float32)),
        "bn2": (jnp.ones((n_channel,), jnp.float32), jnp.zeros((n_channel,), jnp.float32)),
        "bn3": (jnp.ones((2 * n_channel,), jnp.float32), jnp.zeros((2 * n_channel,), jnp.float32)),
        "bn4": (jnp.ones((2 * n_channel,), jnp.float32), jnp.zeros((2 * n_channel,), jnp.float32)),
    }
    fan_in = 2 * n_channel
    bound = 1.0 / (fan_in ** 0.5)
    kw, kb = jax.random.split(keys[4])
    p["fc1"] = (
        jax.random.uniform(kw, (n_output, fan_in), jnp.float32, -bound, bound),
        jax.random.uniform(kb, (n_output,), jnp.float32, -bound, bound),
    )
    return p


# ------------------------------- forward -------------------------------------

@jax.jit
def m5_forward(params, x_ncl):
    stride = 16
    N, Cin, L = x_ncl.shape
    assert Cin == 1   # M5 consumes mono audio (n_input=1)

    # Conv biases are intentionally unused: they cancel exactly under
    # training-mode BatchNorm (the bias shifts y and mean(y) identically).
    w1, _b1 = params["conv1"]
    w2, _b2 = params["conv2"]
    w3, _b3 = params["conv3"]
    w4, _b4 = params["conv4"]
    g1, be1 = params["bn1"]; g2, be2 = params["bn2"]
    g3, be3 = params["bn3"]; g4, be4 = params["bn4"]
    wf, bf = params["fc1"]

    Cout1, _, K1 = w1.shape
    n_out = wf.shape[0]
    Cp = _round_up(max(Cout1, w3.shape[0], w4.shape[0]), LANES)   # lane-dense C
    Kp = _round_up(Cin * K1, LANES)                               # lane-dense K

    patches, Lout1 = build_patches(x_ncl[:, 0, :], K1, stride, Kp)
    w1p = _pad2d(jnp.transpose(w1.reshape(Cout1, Cin * K1)), Kp, Cp)
    bn_pack = jnp.concatenate(
        [_pad_vec(g1, Cp), _pad_vec(be1, Cp),
         _pad_vec(g2, Cp), _pad_vec(be2, Cp),
         _pad_vec(g3, Cp), _pad_vec(be3, Cp),
         _pad_vec(g4, Cp), _pad_vec(be4, Cp)], axis=0)            # (8, Cp)
    taps = jnp.concatenate(
        [_conv3_taps(w2, Cp), _conv3_taps(w3, Cp), _conv3_taps(w4, Cp)],
        axis=0)                                                   # (9, Cp, Cp)
    wfp = _pad2d(jnp.transpose(wf), Cp, n_out)                    # (Cp, n_out)
    bfp = bf.reshape(1, n_out)

    rows1 = N * Lout1
    chunk = rows1
    for c in range(256, 7, -8):        # largest 8-aligned divisor <= 256
        if rows1 % c == 0:
            chunk = c
            break

    out = pl.pallas_call(
        make_m5_kernel(N, Lout1, Cp, chunk),
        out_shape=jax.ShapeDtypeStruct((N, n_out), jnp.float32),
        in_specs=_vmem_specs(6),
        out_specs=pl.BlockSpec(memory_space=pltpu.MemorySpace.VMEM),
        scratch_shapes=[pltpu.VMEM((rows1, Cp), jnp.float32),             # pre-pool
                        pltpu.VMEM((N * (Lout1 // POOL), Cp), jnp.float32)],  # pooled
    )(patches, w1p, bn_pack, taps, wfp, bfp)
    return out                                                    # (N, n_output)


if __name__ == "__main__":
    key = jax.random.PRNGKey(0)
    k_param, k_x = jax.random.split(key)
    params = init_params(k_param)

    # 8000-sample waveform: the smallest "nice" length where the final
    # feature length is exactly 1 (496 -> 124 -> 30 -> 7 -> 1).
    x = jax.random.normal(k_x, (2, 1, 8000), dtype=jnp.float32)

    out = m5_forward(params, x)
    out = jax.block_until_ready(out)

    assert out.shape == (2, 35), out.shape
    assert bool(jnp.all(jnp.isfinite(out)))
    print("KERNEL_OK")
</pallas_src>

<mosaic_0001>
module attributes {stable_mosaic.version = 11 : i64} {
  func.func @kernel(%arg0: memref<992x128xf32, #tpu.memory_space<vmem>>, %arg1: memref<128x128xf32, #tpu.memory_space<vmem>>, %arg2: memref<8x128xf32, #tpu.memory_space<vmem>>, %arg3: memref<9x128x128xf32, #tpu.memory_space<vmem>>, %arg4: memref<128x35xf32, #tpu.memory_space<vmem>>, %arg5: memref<1x35xf32, #tpu.memory_space<vmem>>, %arg6: memref<2x35xf32, #tpu.memory_space<vmem>>, %arg7: memref<992x128xf32, #tpu.memory_space<vmem>>, %arg8: memref<248x128xf32, #tpu.memory_space<vmem>>) attributes {dimension_semantics = [], scalar_prefetch = 0 : i64, scratch_operands = 2 : i64, tpu.core_type = #tpu.core_type<tc>} {
    %cst = arith.constant 0.000000e+00 : f32
    %0 = vector.broadcast %cst : f32 to vector<1x128xf32>
    %cst_0 = arith.constant 0.000000e+00 : f32
    %1 = vector.broadcast %cst_0 : f32 to vector<1x128xf32>
    %c0 = arith.constant 0 : index
    %c0_1 = arith.constant 0 : index
    %2 = vector.load %arg0[%c0, %c0_1] : memref<992x128xf32, #tpu.memory_space<vmem>>, vector<248x128xf32>
    %c0_2 = arith.constant 0 : index
    %c0_3 = arith.constant 0 : index
    %3 = vector.load %arg1[%c0_2, %c0_3] : memref<128x128xf32, #tpu.memory_space<vmem>>, vector<128x128xf32>
    %cst_4 = arith.constant dense<0.000000e+00> : vector<248x128xf32>
    %4 = tpu.matmul %2, %3, %cst_4 {dimension_numbers = #tpu.dot_dimension_numbers<[1], [0], [0], [1], [0, 0, 1, 1], [], []>} : vector<248x128xf32>, vector<128x128xf32>, vector<248x128xf32> -> vector<248x128xf32>
    %cst_5 = arith.constant dense<0.000000e+00> : vector<128xf32>
    %5 = vector.multi_reduction <add>, %4, %cst_5 [0] : vector<248x128xf32> to vector<128xf32>
    %6 = vector.shape_cast %5 : vector<128xf32> to vector<1x128xf32>
    %7 = arith.addf %0, %6 : vector<1x128xf32>
    %8 = arith.mulf %4, %4 : vector<248x128xf32>
    %cst_6 = arith.constant dense<0.000000e+00> : vector<128xf32>
    %9 = vector.multi_reduction <add>, %8, %cst_6 [0] : vector<248x128xf32> to vector<128xf32>
    %10 = vector.shape_cast %9 : vector<128xf32> to vector<1x128xf32>
    %11 = arith.addf %1, %10 : vector<1x128xf32>
    %c0_7 = arith.constant 0 : index
    %c0_8 = arith.constant 0 : index
    %12 = vector.load %arg7[%c0_7, %c0_8] : memref<992x128xf32, #tpu.memory_space<vmem>>, vector<248x128xf32>
    tpu.vector_store %arg7[%c0_7, %c0_8], %4 {strides = array<i32>} : memref<992x128xf32, #tpu.memory_space<vmem>>, vector<248x128xf32>,
    %c248 = arith.constant 248 : index
    %c0_9 = arith.constant 0 : index
    %13 = vector.load %arg0[%c248, %c0_9] : memref<992x128xf32, #tpu.memory_space<vmem>>, vector<248x128xf32>
    %c0_10 = arith.constant 0 : index
    %c0_11 = arith.constant 0 : index
    %14 = vector.load %arg1[%c0_10, %c0_11] : memref<128x128xf32, #tpu.memory_space<vmem>>, vector<128x128xf32>
    %cst_12 = arith.constant dense<0.000000e+00> : vector<248x128xf32>
    %15 = tpu.matmul %13, %14, %cst_12 {dimension_numbers = #tpu.dot_dimension_numbers<[1], [0], [0], [1], [0, 0, 1, 1], [], []>} : vector<248x128xf32>, vector<128x128xf32>, vector<248x128xf32> -> vector<248x128xf32>
    %cst_13 = arith.constant dense<0.000000e+00> : vector<128xf32>
    %16 = vector.multi_reduction <add>, %15, %cst_13 [0] : vector<248x128xf32> to vector<128xf32>
    %17 = vector.shape_cast %16 : vector<128xf32> to vector<1x128xf32>
    %18 = arith.addf %7, %17 : vector<1x128xf32>
    %19 = arith.mulf %15, %15 : vector<248x128xf32>
    %cst_14 = arith.constant dense<0.000000e+00> : vector<128xf32>
    %20 = vector.multi_reduction <add>, %19, %cst_14 [0] : vector<248x128xf32> to vector<128xf32>
    %21 = vector.shape_cast %20 : vector<128xf32> to vector<1x128xf32>
    %22 = arith.addf %11, %21 : vector<1x128xf32>
    %c248_15 = arith.constant 248 : index
    %c0_16 = arith.constant 0 : index
    %23 = vector.load %arg7[%c248_15, %c0_16] : memref<992x128xf32, #tpu.memory_space<vmem>>, vector<248x128xf32>
    tpu.vector_store %arg7[%c248_15, %c0_16], %15 {strides = array<i32>} : memref<992x128xf32, #tpu.memory_space<vmem>>, vector<248x128xf32>,
    %c496 = arith.constant 496 : index
    %c0_17 = arith.constant 0 : index
    %24 = vector.load %arg0[%c496, %c0_17] : memref<992x128xf32, #tpu.memory_space<vmem>>, vector<248x128xf32>
    %c0_18 = arith.constant 0 : index
    %c0_19 = arith.constant 0 : index
    %25 = vector.load %arg1[%c0_18, %c0_19] : memref<128x128xf32, #tpu.memory_space<vmem>>, vector<128x128xf32>
    %cst_20 = arith.constant dense<0.000000e+00> : vector<248x128xf32>
    %26 = tpu.matmul %24, %25, %cst_20 {dimension_numbers = #tpu.dot_dimension_numbers<[1], [0], [0], [1], [0, 0, 1, 1], [], []>} : vector<248x128xf32>, vector<128x128xf32>, vector<248x128xf32> -> vector<248x128xf32>
    %cst_21 = arith.constant dense<0.000000e+00> : vector<128xf32>
    %27 = vector.multi_reduction <add>, %26, %cst_21 [0] : vector<248x128xf32> to vector<128xf32>
    %28 = vector.shape_cast %27 : vector<128xf32> to vector<1x128xf32>
    %29 = arith.addf %18, %28 : vector<1x128xf32>
    %30 = arith.mulf %26, %26 : vector<248x128xf32>
    %cst_22 = arith.constant dense<0.000000e+00> : vector<128xf32>
    %31 = vector.multi_reduction <add>, %30, %cst_22 [0] : vector<248x128xf32> to vector<128xf32>
    %32 = vector.shape_cast %31 : vector<128xf32> to vector<1x128xf32>
    %33 = arith.addf %22, %32 : vector<1x128xf32>
    %c496_23 = arith.constant 496 : index
    %c0_24 = arith.constant 0 : index
    %34 = vector.load %arg7[%c496_23, %c0_24] : memref<992x128xf32, #tpu.memory_space<vmem>>, vector<248x128xf32>
    tpu.vector_store %arg7[%c496_23, %c0_24], %26 {strides = array<i32>} : memref<992x128xf32, #tpu.memory_space<vmem>>, vector<248x128xf32>,
    %c744 = arith.constant 744 : index
    %c0_25 = arith.constant 0 : index
    %35 = vector.load %arg0[%c744, %c0_25] : memref<992x128xf32, #tpu.memory_space<vmem>>, vector<248x128xf32>
    %c0_26 = arith.constant 0 : index
    %c0_27 = arith.constant 0 : index
    %36 = vector.load %arg1[%c0_26, %c0_27] : memref<128x128xf32, #tpu.memory_space<vmem>>, vector<128x128xf32>
    %cst_28 = arith.constant dense<0.000000e+00> : vector<248x128xf32>
    %37 = tpu.matmul %35, %36, %cst_28 {dimension_numbers = #tpu.dot_dimension_numbers<[1], [0], [0], [1], [0, 0, 1, 1], [], []>} : vector<248x128xf32>, vector<128x128xf32>, vector<248x128xf32> -> vector<248x128xf32>
    %cst_29 = arith.constant dense<0.000000e+00> : vector<128xf32>
    %38 = vector.multi_reduction <add>, %37, %cst_29 [0] : vector<248x128xf32> to vector<128xf32>
    %39 = vector.shape_cast %38 : vector<128xf32> to vector<1x128xf32>
    %40 = arith.addf %29, %39 : vector<1x128xf32>
    %41 = arith.mulf %37, %37 : vector<248x128xf32>
    %cst_30 = arith.constant dense<0.000000e+00> : vector<128xf32>
    %42 = vector.multi_reduction <add>, %41, %cst_30 [0] : vector<248x128xf32> to vector<128xf32>
    %43 = vector.shape_cast %42 : vector<128xf32> to vector<1x128xf32>
    %44 = arith.addf %33, %43 : vector<1x128xf32>
    %c744_31 = arith.constant 744 : index
    %c0_32 = arith.constant 0 : index
    %45 = vector.load %arg7[%c744_31, %c0_32] : memref<992x128xf32, #tpu.memory_space<vmem>>, vector<248x128xf32>
    tpu.vector_store %arg7[%c744_31, %c0_32], %37 {strides = array<i32>} : memref<992x128xf32, #tpu.memory_space<vmem>>, vector<248x128xf32>,
    %c0_33 = arith.constant 0 : index
    %c0_34 = arith.constant 0 : index
    %46 = vector.load %arg2[%c0_33, %c0_34] : memref<8x128xf32, #tpu.memory_space<vmem>>, vector<1x128xf32>
    %c1 = arith.constant 1 : index
    %c0_35 = arith.constant 0 : index
    %47 = vector.load %arg2[%c1, %c0_35] : memref<8x128xf32, #tpu.memory_space<vmem>>, vector<1x128xf32>
    %cst_36 = arith.constant 0.00100806449 : f32
    %48 = vector.broadcast %cst_36 : f32 to vector<1x128xf32>
    %49 = arith.mulf %40, %48 : vector<1x128xf32>
    %cst_37 = arith.constant 0.00100806449 : f32
    %50 = vector.broadcast %cst_37 : f32 to vector<1x128xf32>
    %51 = arith.mulf %44, %50 : vector<1x128xf32>
    %52 = arith.mulf %49, %49 : vector<1x128xf32>
    %53 = arith.subf %51, %52 : vector<1x128xf32>
    %cst_38 = arith.constant 0.000000e+00 : f32
    %54 = vector.broadcast %cst_38 : f32 to vector<1x128xf32>
    %55 = arith.maximumf %53, %54 : vector<1x128xf32>
    %cst_39 = arith.constant 9.99999974E-6 : f32
    %56 = vector.broadcast %cst_39 : f32 to vector<1x128xf32>
    %57 = arith.addf %55, %56 : vector<1x128xf32>
    %58 = math.rsqrt %57 : vector<1x128xf32>
    %59 = arith.mulf %46, %58 : vector<1x128xf32>
    %60 = arith.mulf %49, %59 : vector<1x128xf32>
    %61 = arith.subf %47, %60 : vector<1x128xf32>
    %c0_40 = arith.constant 0 : index
    %c0_41 = arith.constant 0 : index
    %62 = tpu.strided_load %arg7[%c0_40, %c0_41] {strides = array<i32: 4, 1>} : memref<992x128xf32, #tpu.memory_space<vmem>>, vector<124x128xf32>
    %63 = vector.broadcast %59 : vector<1x128xf32> to vector<124x128xf32>
    %64 = arith.mulf %62, %63 : vector<124x128xf32>
    %65 = vector.broadcast %61 : vector<1x128xf32> to vector<124x128xf32>
    %66 = arith.addf %64, %65 : vector<124x128xf32>
    %cst_42 = arith.constant 0.000000e+00 : f32
    %67 = vector.broadcast %cst_42 : f32 to vector<124x128xf32>
    %68 = arith.maximumf %66, %67 : vector<124x128xf32>
    %c1_43 = arith.constant 1 : index
    %c0_44 = arith.constant 0 : index
    %69 = tpu.strided_load %arg7[%c1_43, %c0_44] {strides = array<i32: 4, 1>} : memref<992x128xf32, #tpu.memory_space<vmem>>, vector<124x128xf32>
    %70 = vector.broadcast %59 : vector<1x128xf32> to vector<124x128xf32>
    %71 = arith.mulf %69, %70 : vector<124x128xf32>
    %72 = vector.broadcast %61 : vector<1x128xf32> to vector<124x128xf32>
    %73 = arith.addf %71, %72 : vector<124x128xf32>
    %cst_45 = arith.constant 0.000000e+00 : f32
    %74 = vector.broadcast %cst_45 : f32 to vector<124x128xf32>
    %75 = arith.maximumf %73, %74 : vector<124x128xf32>
    %76 = arith.maximumf %68, %75 : vector<124x128xf32>
    %c2 = arith.constant 2 : index
    %c0_46 = arith.constant 0 : index
    %77 = tpu.strided_load %arg7[%c2, %c0_46] {strides = array<i32: 4, 1>} : memref<992x128xf32, #tpu.memory_space<vmem>>, vector<124x128xf32>
    %78 = vector.broadcast %59 : vector<1x128xf32> to vector<124x128xf32>
    %79 = arith.mulf %77, %78 : vector<124x128xf32>
    %80 = vector.broadcast %61 : vector<1x128xf32> to vector<124x128xf32>
    %81 = arith.addf %79, %80 : vector<124x128xf32>
    %cst_47 = arith.constant 0.000000e+00 : f32
    %82 = vector.broadcast %cst_47 : f32 to vector<124x128xf32>
    %83 = arith.maximumf %81, %82 : vector<124x128xf32>
    %84 = arith.maximumf %76, %83 : vector<124x128xf32>
    %c3 = arith.constant 3 : index
    %c0_48 = arith.constant 0 : index
    %85 = tpu.strided_load %arg7[%c3, %c0_48] {strides = array<i32: 4, 1>} : memref<992x128xf32, #tpu.memory_space<vmem>>, vector<124x128xf32>
    %86 = vector.broadcast %59 : vector<1x128xf32> to vector<124x128xf32>
    %87 = arith.mulf %85, %86 : vector<124x128xf32>
    %88 = vector.broadcast %61 : vector<1x128xf32> to vector<124x128xf32>
    %89 = arith.addf %87, %88 : vector<124x128xf32>
    %cst_49 = arith.constant 0.000000e+00 : f32
    %90 = vector.broadcast %cst_49 : f32 to vector<124x128xf32>
    %91 = arith.maximumf %89, %90 : vector<124x128xf32>
    %92 = arith.maximumf %84, %91 : vector<124x128xf32>
    %c0_50 = arith.constant 0 : index
    %c0_51 = arith.constant 0 : index
    %93 = vector.load %arg8[%c0_50, %c0_51] : memref<248x128xf32, #tpu.memory_space<vmem>>, vector<124x128xf32>
    tpu.vector_store %arg8[%c0_50, %c0_51], %92 {strides = array<i32>} : memref<248x128xf32, #tpu.memory_space<vmem>>, vector<124x128xf32>,
    %c496_52 = arith.constant 496 : index
    %c0_53 = arith.constant 0 : index
    %94 = tpu.strided_load %arg7[%c496_52, %c0_53] {strides = array<i32: 4, 1>} : memref<992x128xf32, #tpu.memory_space<vmem>>, vector<124x128xf32>
    %95 = vector.broadcast %59 : vector<1x128xf32> to vector<124x128xf32>
    %96 = arith.mulf %94, %95 : vector<124x128xf32>
    %97 = vector.broadcast %61 : vector<1x128xf32> to vector<124x128xf32>
    %98 = arith.addf %96, %97 : vector<124x128xf32>
    %cst_54 = arith.constant 0.000000e+00 : f32
    %99 = vector.broadcast %cst_54 : f32 to vector<124x128xf32>
    %100 = arith.maximumf %98, %99 : vector<124x128xf32>
    %c497 = arith.constant 497 : index
    %c0_55 = arith.constant 0 : index
    %101 = tpu.strided_load %arg7[%c497, %c0_55] {strides = array<i32: 4, 1>} : memref<992x128xf32, #tpu.memory_space<vmem>>, vector<124x128xf32>
    %102 = vector.broadcast %59 : vector<1x128xf32> to vector<124x128xf32>
    %103 = arith.mulf %101, %102 : vector<124x128xf32>
    %104 = vector.broadcast %61 : vector<1x128xf32> to vector<124x128xf32>
    %105 = arith.addf %103, %104 : vector<124x128xf32>
    %cst_56 = arith.constant 0.000000e+00 : f32
    %106 = vector.broadcast %cst_56 : f32 to vector<124x128xf32>
    %107 = arith.maximumf %105, %106 : vector<124x128xf32>
    %108 = arith.maximumf %100, %107 : vector<124x128xf32>
    %c498 = arith.constant 498 : index
    %c0_57 = arith.constant 0 : index
    %109 = tpu.strided_load %arg7[%c498, %c0_57] {strides = array<i32: 4, 1>} : memref<992x128xf32, #tpu.memory_space<vmem>>, vector<124x128xf32>
    %110 = vector.broadcast %59 : vector<1x128xf32> to vector<124x128xf32>
    %111 = arith.mulf %109, %110 : vector<124x128xf32>
    %112 = vector.broadcast %61 : vector<1x128xf32> to vector<124x128xf32>
    %113 = arith.addf %111, %112 : vector<124x128xf32>
    %cst_58 = arith.constant 0.000000e+00 : f32
    %114 = vector.broadcast %cst_58 : f32 to vector<124x128xf32>
    %115 = arith.maximumf %113, %114 : vector<124x128xf32>
    %116 = arith.maximumf %108, %115 : vector<124x128xf32>
    %c499 = arith.constant 499 : index
    %c0_59 = arith.constant 0 : index
    %117 = tpu.strided_load %arg7[%c499, %c0_59] {strides = array<i32: 4, 1>} : memref<992x128xf32, #tpu.memory_space<vmem>>, vector<124x128xf32>
    %118 = vector.broadcast %59 : vector<1x128xf32> to vector<124x128xf32>
    %119 = arith.mulf %117, %118 : vector<124x128xf32>
    %120 = vector.broadcast %61 : vector<1x128xf32> to vector<124x128xf32>
    %121 = arith.addf %119, %120 : vector<124x128xf32>
    %cst_60 = arith.constant 0.000000e+00 : f32
    %122 = vector.broadcast %cst_60 : f32 to vector<124x128xf32>
    %123 = arith.maximumf %121, %122 : vector<124x128xf32>
    %124 = arith.maximumf %116, %123 : vector<124x128xf32>
    %c124 = arith.constant 124 : index
    %c0_61 = arith.constant 0 : index
    %125 = vector.load %arg8[%c124, %c0_61] : memref<248x128xf32, #tpu.memory_space<vmem>>, vector<124x128xf32>
    tpu.vector_store %arg8[%c124, %c0_61], %124 {strides = array<i32>} : memref<248x128xf32, #tpu.memory_space<vmem>>, vector<124x128xf32>,
    %c0_62 = arith.constant 0 : index
    %c0_63 = arith.constant 0 : index
    %126 = vector.load %arg8[%c0_62, %c0_63] : memref<248x128xf32, #tpu.memory_space<vmem>>, vector<246x128xf32>
    %c0_64 = arith.constant 0 : index
    %c0_65 = arith.constant 0 : index
    %c0_66 = arith.constant 0 : index
    %127 = vector.load %arg3[%c0_64, %c0_65, %c0_66] : memref<9x128x128xf32, #tpu.memory_space<vmem>>, vector<1x128x128xf32>
    %128 = vector.shape_cast %127 : vector<1x128x128xf32> to vector<128x128xf32>
    %cst_67 = arith.constant dense<0.000000e+00> : vector<246x128xf32>
    %129 = tpu.matmul %126, %128, %cst_67 {dimension_numbers = #tpu.dot_dimension_numbers<[1], [0], [0], [1], [0, 0, 1, 1], [], []>} : vector<246x128xf32>, vector<128x128xf32>, vector<246x128xf32> -> vector<246x128xf32>
    %c1_68 = arith.constant 1 : index
    %c0_69 = arith.constant 0 : index
    %130 = vector.load %arg8[%c1_68, %c0_69] : memref<248x128xf32, #tpu.memory_space<vmem>>, vector<246x128xf32>
    %c1_70 = arith.constant 1 : index
    %c0_71 = arith.constant 0 : index
    %c0_72 = arith.constant 0 : index
    %131 = vector.load %arg3[%c1_70, %c0_71, %c0_72] : memref<9x128x128xf32, #tpu.memory_space<vmem>>, vector<1x128x128xf32>
    %132 = vector.shape_cast %131 : vector<1x128x128xf32> to vector<128x128xf32>
    %cst_73 = arith.constant dense<0.000000e+00> : vector<246x128xf32>
    %133 = tpu.matmul %130, %132, %cst_73 {dimension_numbers = #tpu.dot_dimension_numbers<[1], [0], [0], [1], [0, 0, 1, 1], [], []>} : vector<246x128xf32>, vector<128x128xf32>, vector<246x128xf32> -> vector<246x128xf32>
    %134 = arith.addf %129, %133 : vector<246x128xf32>
    %c2_74 = arith.constant 2 : index
    %c0_75 = arith.constant 0 : index
    %135 = vector.load %arg8[%c2_74, %c0_75] : memref<248x128xf32, #tpu.memory_space<vmem>>, vector<246x128xf32>
    %c2_76 = arith.constant 2 : index
    %c0_77 = arith.constant 0 : index
    %c0_78 = arith.constant 0 : index
    %136 = vector.load %arg3[%c2_76, %c0_77, %c0_78] : memref<9x128x128xf32, #tpu.memory_space<vmem>>, vector<1x128x128xf32>
    %137 = vector.shape_cast %136 : vector<1x128x128xf32> to vector<128x128xf32>
    %cst_79 = arith.constant dense<0.000000e+00> : vector<246x128xf32>
    %138 = tpu.matmul %135, %137, %cst_79 {dimension_numbers = #tpu.dot_dimension_numbers<[1], [0], [0], [1], [0, 0, 1, 1], [], []>} : vector<246x128xf32>, vector<128x128xf32>, vector<246x128xf32> -> vector<246x128xf32>
    %139 = arith.addf %134, %138 : vector<246x128xf32>
    %cst_80 = arith.constant dense<0.000000e+00> : vector<128xf32>
    %140 = vector.multi_reduction <add>, %139, %cst_80 [0] : vector<246x128xf32> to vector<128xf32>
    %141 = vector.shape_cast %140 : vector<128xf32> to vector<1x128xf32>
    %142 = arith.mulf %139, %139 : vector<246x128xf32>
    %cst_81 = arith.constant dense<0.000000e+00> : vector<128xf32>
    %143 = vector.multi_reduction <add>, %142, %cst_81 [0] : vector<246x128xf32> to vector<128xf32>
    %144 = vector.shape_cast %143 : vector<128xf32> to vector<1x128xf32>
    %145 = vector.extract_strided_slice %139 {offsets = [122, 0], sizes = [2, 128], strides = [1, 1]} : vector<246x128xf32> to vector<2x128xf32>
    %cst_82 = arith.constant dense<0.000000e+00> : vector<128xf32>
    %146 = vector.multi_reduction <add>, %145, %cst_82 [0] : vector<2x128xf32> to vector<128xf32>
    %147 = vector.shape_cast %146 : vector<128xf32> to vector<1x128xf32>
    %148 = arith.subf %141, %147 : vector<1x128xf32>
    %149 = arith.mulf %145, %145 : vector<2x128xf32>
    %cst_83 = arith.constant dense<0.000000e+00> : vector<128xf32>
    %150 = vector.multi_reduction <add>, %149, %cst_83 [0] : vector<2x128xf32> to vector<128xf32>
    %151 = vector.shape_cast %150 : vector<128xf32> to vector<1x128xf32>
    %152 = arith.subf %144, %151 : vector<1x128xf32>
    %c0_84 = arith.constant 0 : index
    %c0_85 = arith.constant 0 : index
    %153 = vector.load %arg7[%c0_84, %c0_85] : memref<992x128xf32, #tpu.memory_space<vmem>>, vector<246x128xf32>
    tpu.vector_store %arg7[%c0_84, %c0_85], %139 {strides = array<i32>} : memref<992x128xf32, #tpu.memory_space<vmem>>, vector<246x128xf32>,
    %c2_86 = arith.constant 2 : index
    %c0_87 = arith.constant 0 : index
    %154 = vector.load %arg2[%c2_86, %c0_87] : memref<8x128xf32, #tpu.memory_space<vmem>>, vector<1x128xf32>
    %c3_88 = arith.constant 3 : index
    %c0_89 = arith.constant 0 : index
    %155 = vector.load %arg2[%c3_88, %c0_89] : memref<8x128xf32, #tpu.memory_space<vmem>>, vector<1x128xf32>
    %cst_90 = arith.constant 0.00409836043 : f32
    %156 = vector.broadcast %cst_90 : f32 to vector<1x128xf32>
    %157 = arith.mulf %148, %156 : vector<1x128xf32>
    %cst_91 = arith.constant 0.00409836043 : f32
    %158 = vector.broadcast %cst_91 : f32 to vector<1x128xf32>
    %159 = arith.mulf %152, %158 : vector<1x128xf32>
    %160 = arith.mulf %157, %157 : vector<1x128xf32>
    %161 = arith.subf %159, %160 : vector<1x128xf32>
    %cst_92 = arith.constant 0.000000e+00 : f32
    %162 = vector.broadcast %cst_92 : f32 to vector<1x128xf32>
    %163 = arith.maximumf %161, %162 : vector<1x128xf32>
    %cst_93 = arith.constant 9.99999974E-6 : f32
    %164 = vector.broadcast %cst_93 : f32 to vector<1x128xf32>
    %165 = arith.addf %163, %164 : vector<1x128xf32>
    %166 = math.rsqrt %165 : vector<1x128xf32>
    %167 = arith.mulf %154, %166 : vector<1x128xf32>
    %168 = arith.mulf %157, %167 : vector<1x128xf32>
    %169 = arith.subf %155, %168 : vector<1x128xf32>
    %c0_94 = arith.constant 0 : index
    %c0_95 = arith.constant 0 : index
    %170 = tpu.strided_load %arg7[%c0_94, %c0_95] {strides = array<i32: 4, 1>} : memref<992x128xf32, #tpu.memory_space<vmem>>, vector<30x128xf32>
    %171 = vector.broadcast %167 : vector<1x128xf32> to vector<30x128xf32>
    %172 = arith.mulf %170, %171 : vector<30x128xf32>
    %173 = vector.broadcast %169 : vector<1x128xf32> to vector<30x128xf32>
    %174 = arith.addf %172, %173 : vector<30x128xf32>
    %cst_96 = arith.constant 0.000000e+00 : f32
    %175 = vector.broadcast %cst_96 : f32 to vector<30x128xf32>
    %176 = arith.maximumf %174, %175 : vector<30x128xf32>
    %c1_97 = arith.constant 1 : index
    %c0_98 = arith.constant 0 : index
    %177 = tpu.strided_load %arg7[%c1_97, %c0_98] {strides = array<i32: 4, 1>} : memref<992x128xf32, #tpu.memory_space<vmem>>, vector<30x128xf32>
    %178 = vector.broadcast %167 : vector<1x128xf32> to vector<30x128xf32>
    %179 = arith.mulf %177, %178 : vector<30x128xf32>
    %180 = vector.broadcast %169 : vector<1x128xf32> to vector<30x128xf32>
    %181 = arith.addf %179, %180 : vector<30x128xf32>
    %cst_99 = arith.constant 0.000000e+00 : f32
    %182 = vector.broadcast %cst_99 : f32 to vector<30x128xf32>
    %183 = arith.maximumf %181, %182 : vector<30x128xf32>
    %184 = arith.maximumf %176, %183 : vector<30x128xf32>
    %c2_100 = arith.constant 2 : index
    %c0_101 = arith.constant 0 : index
    %185 = tpu.strided_load %arg7[%c2_100, %c0_101] {strides = array<i32: 4, 1>} : memref<992x128xf32, #tpu.memory_space<vmem>>, vector<30x128xf32>
    %186 = vector.broadcast %167 : vector<1x128xf32> to vector<30x128xf32>
    %187 = arith.mulf %185, %186 : vector<30x128xf32>
    %188 = vector.broadcast %169 : vector<1x128xf32> to vector<30x128xf32>
    %189 = arith.addf %187, %188 : vector<30x128xf32>
    %cst_102 = arith.constant 0.000000e+00 : f32
    %190 = vector.broadcast %cst_102 : f32 to vector<30x128xf32>
    %191 = arith.maximumf %189, %190 : vector<30x128xf32>
    %192 = arith.maximumf %184, %191 : vector<30x128xf32>
    %c3_103 = arith.constant 3 : index
    %c0_104 = arith.constant 0 : index
    %193 = tpu.strided_load %arg7[%c3_103, %c0_104] {strides = array<i32: 4, 1>} : memref<992x128xf32, #tpu.memory_space<vmem>>, vector<30x128xf32>
    %194 = vector.broadcast %167 : vector<1x128xf32> to vector<30x128xf32>
    %195 = arith.mulf %193, %194 : vector<30x128xf32>
    %196 = vector.broadcast %169 : vector<1x128xf32> to vector<30x128xf32>
    %197 = arith.addf %195, %196 : vector<30x128xf32>
    %cst_105 = arith.constant 0.000000e+00 : f32
    %198 = vector.broadcast %cst_105 : f32 to vector<30x128xf32>
    %199 = arith.maximumf %197, %198 : vector<30x128xf32>
    %200 = arith.maximumf %192, %199 : vector<30x128xf32>
    %c0_106 = arith.constant 0 : index
    %c0_107 = arith.constant 0 : index
    %201 = vector.load %arg8[%c0_106, %c0_107] : memref<248x128xf32, #tpu.memory_space<vmem>>, vector<30x128xf32>
    tpu.vector_store %arg8[%c0_106, %c0_107], %200 {strides = array<i32>} : memref<248x128xf32, #tpu.memory_space<vmem>>, vector<30x128xf32>,
    %c124_108 = arith.constant 124 : index
    %c0_109 = arith.constant 0 : index
    %202 = tpu.strided_load %arg7[%c124_108, %c0_109] {strides = array<i32: 4, 1>} : memref<992x128xf32, #tpu.memory_space<vmem>>, vector<30x128xf32>
    %203 = vector.broadcast %167 : vector<1x128xf32> to vector<30x128xf32>
    %204 = arith.mulf %202, %203 : vector<30x128xf32>
    %205 = vector.broadcast %169 : vector<1x128xf32> to vector<30x128xf32>
    %206 = arith.addf %204, %205 : vector<30x128xf32>
    %cst_110 = arith.constant 0.000000e+00 : f32
    %207 = vector.broadcast %cst_110 : f32 to vector<30x128xf32>
    %208 = arith.maximumf %206, %207 : vector<30x128xf32>
    %c125 = arith.constant 125 : index
    %c0_111 = arith.constant 0 : index
    %209 = tpu.strided_load %arg7[%c125, %c0_111] {strides = array<i32: 4, 1>} : memref<992x128xf32, #tpu.memory_space<vmem>>, vector<30x128xf32>
    %210 = vector.broadcast %167 : vector<1x128xf32> to vector<30x128xf32>
    %211 = arith.mulf %209, %210 : vector<30x128xf32>
    %212 = vector.broadcast %169 : vector<1x128xf32> to vector<30x128xf32>
    %213 = arith.addf %211, %212 : vector<30x128xf32>
    %cst_112 = arith.constant 0.000000e+00 : f32
    %214 = vector.broadcast %cst_112 : f32 to vector<30x128xf32>
    %215 = arith.maximumf %213, %214 : vector<30x128xf32>
    %216 = arith.maximumf %208, %215 : vector<30x128xf32>
    %c126 = arith.constant 126 : index
    %c0_113 = arith.constant 0 : index
    %217 = tpu.strided_load %arg7[%c126, %c0_113] {strides = array<i32: 4, 1>} : memref<992x128xf32, #tpu.memory_space<vmem>>, vector<30x128xf32>
    %218 = vector.broadcast %167 : vector<1x128xf32> to vector<30x128xf32>
    %219 = arith.mulf %217, %218 : vector<30x128xf32>
    %220 = vector.broadcast %169 : vector<1x128xf32> to vector<30x128xf32>
    %221 = arith.addf %219, %220 : vector<30x128xf32>
    %cst_114 = arith.constant 0.000000e+00 : f32
    %222 = vector.broadcast %cst_114 : f32 to vector<30x128xf32>
    %223 = arith.maximumf %221, %222 : vector<30x128xf32>
    %224 = arith.maximumf %216, %223 : vector<30x128xf32>
    %c127 = arith.constant 127 : index
    %c0_115 = arith.constant 0 : index
    %225 = tpu.strided_load %arg7[%c127, %c0_115] {strides = array<i32: 4, 1>} : memref<992x128xf32, #tpu.memory_space<vmem>>, vector<30x128xf32>
    %226 = vector.broadcast %167 : vector<1x128xf32> to vector<30x128xf32>
    %227 = arith.mulf %225, %226 : vector<30x128xf32>
    %228 = vector.broadcast %169 : vector<1x128xf32> to vector<30x128xf32>
    %229 = arith.addf %227, %228 : vector<30x128xf32>
    %cst_116 = arith.constant 0.000000e+00 : f32
    %230 = vector.broadcast %cst_116 : f32 to vector<30x128xf32>
    %231 = arith.maximumf %229, %230 : vector<30x128xf32>
    %232 = arith.maximumf %224, %231 : vector<30x128xf32>
    %c30 = arith.constant 30 : index
    %c0_117 = arith.constant 0 : index
    %233 = vector.load %arg8[%c30, %c0_117] : memref<248x128xf32, #tpu.memory_space<vmem>>, vector<30x128xf32>
    tpu.vector_store %arg8[%c30, %c0_117], %232 {strides = array<i32>} : memref<248x128xf32, #tpu.memory_space<vmem>>, vector<30x128xf32>,
    %c0_118 = arith.constant 0 : index
    %c0_119 = arith.constant 0 : index
    %234 = vector.load %arg8[%c0_118, %c0_119] : memref<248x128xf32, #tpu.memory_space<vmem>>, vector<58x128xf32>
    %c3_120 = arith.constant 3 : index
    %c0_121 = arith.constant 0 : index
    %c0_122 = arith.constant 0 : index
    %235 = vector.load %arg3[%c3_120, %c0_121, %c0_122] : memref<9x128x128xf32, #tpu.memory_space<vmem>>, vector<1x128x128xf32>
    %236 = vector.shape_cast %235 : vector<1x128x128xf32> to vector<128x128xf32>
    %cst_123 = arith.constant dense<0.000000e+00> : vector<58x128xf32>
    %237 = tpu.matmul %234, %236, %cst_123 {dimension_numbers = #tpu.dot_dimension_numbers<[1], [0], [0], [1], [0, 0, 1, 1], [], []>} : vector<58x128xf32>, vector<128x128xf32>, vector<58x128xf32> -> vector<58x128xf32>
    %c1_124 = arith.constant 1 : index
    %c0_125 = arith.constant 0 : index
    %238 = vector.load %arg8[%c1_124, %c0_125] : memref<248x128xf32, #tpu.memory_space<vmem>>, vector<58x128xf32>
    %c4 = arith.constant 4 : index
    %c0_126 = arith.constant 0 : index
    %c0_127 = arith.constant 0 : index
    %239 = vector.load %arg3[%c4, %c0_126, %c0_127] : memref<9x128x128xf32, #tpu.memory_space<vmem>>, vector<1x128x128xf32>
    %240 = vector.shape_cast %239 : vector<1x128x128xf32> to vector<128x128xf32>
    %cst_128 = arith.constant dense<0.000000e+00> : vector<58x128xf32>
    %241 = tpu.matmul %238, %240, %cst_128 {dimension_numbers = #tpu.dot_dimension_numbers<[1], [0], [0], [1], [0, 0, 1, 1], [], []>} : vector<58x128xf32>, vector<128x128xf32>, vector<58x128xf32> -> vector<58x128xf32>
    %242 = arith.addf %237, %241 : vector<58x128xf32>
    %c2_129 = arith.constant 2 : index
    %c0_130 = arith.constant 0 : index
    %243 = vector.load %arg8[%c2_129, %c0_130] : memref<248x128xf32, #tpu.memory_space<vmem>>, vector<58x128xf32>
    %c5 = arith.constant 5 : index
    %c0_131 = arith.constant 0 : index
    %c0_132 = arith.constant 0 : index
    %244 = vector.load %arg3[%c5, %c0_131, %c0_132] : memref<9x128x128xf32, #tpu.memory_space<vmem>>, vector<1x128x128xf32>
    %245 = vector.shape_cast %244 : vector<1x128x128xf32> to vector<128x128xf32>
    %cst_133 = arith.constant dense<0.000000e+00> : vector<58x128xf32>
    %246 = tpu.matmul %243, %245, %cst_133 {dimension_numbers = #tpu.dot_dimension_numbers<[1], [0], [0], [1], [0, 0, 1, 1], [], []>} : vector<58x128xf32>, vector<128x128xf32>, vector<58x128xf32> -> vector<58x128xf32>
    %247 = arith.addf %242, %246 : vector<58x128xf32>
    %cst_134 = arith.constant dense<0.000000e+00> : vector<128xf32>
    %248 = vector.multi_reduction <add>, %247, %cst_134 [0] : vector<58x128xf32> to vector<128xf32>
    %249 = vector.shape_cast %248 : vector<128xf32> to vector<1x128xf32>
    %250 = arith.mulf %247, %247 : vector<58x128xf32>
    %cst_135 = arith.constant dense<0.000000e+00> : vector<128xf32>
    %251 = vector.multi_reduction <add>, %250, %cst_135 [0] : vector<58x128xf32> to vector<128xf32>
    %252 = vector.shape_cast %251 : vector<128xf32> to vector<1x128xf32>
    %253 = vector.extract_strided_slice %247 {offsets = [28, 0], sizes = [2, 128], strides = [1, 1]} : vector<58x128xf32> to vector<2x128xf32>
    %cst_136 = arith.constant dense<0.000000e+00> : vector<128xf32>
    %254 = vector.multi_reduction <add>, %253, %cst_136 [0] : vector<2x128xf32> to vector<128xf32>
    %255 = vector.shape_cast %254 : vector<128xf32> to vector<1x128xf32>
    %256 = arith.subf %249, %255 : vector<1x128xf32>
    %257 = arith.mulf %253, %253 : vector<2x128xf32>
    %cst_137 = arith.constant dense<0.000000e+00> : vector<128xf32>
    %258 = vector.multi_reduction <add>, %257, %cst_137 [0] : vector<2x128xf32> to vector<128xf32>
    %259 = vector.shape_cast %258 : vector<128xf32> to vector<1x128xf32>
    %260 = arith.subf %252, %259 : vector<1x128xf32>
    %c0_138 = arith.constant 0 : index
    %c0_139 = arith.constant 0 : index
    %261 = vector.load %arg7[%c0_138, %c0_139] : memref<992x128xf32, #tpu.memory_space<vmem>>, vector<58x128xf32>
    tpu.vector_store %arg7[%c0_138, %c0_139], %247 {strides = array<i32>} : memref<992x128xf32, #tpu.memory_space<vmem>>, vector<58x128xf32>,
    %c4_140 = arith.constant 4 : index
    %c0_141 = arith.constant 0 : index
    %262 = vector.load %arg2[%c4_140, %c0_141] : memref<8x128xf32, #tpu.memory_space<vmem>>, vector<1x128xf32>
    %c5_142 = arith.constant 5 : index
    %c0_143 = arith.constant 0 : index
    %263 = vector.load %arg2[%c5_142, %c0_143] : memref<8x128xf32, #tpu.memory_space<vmem>>, vector<1x128xf32>
    %cst_144 = arith.constant 0.0178571437 : f32
    %264 = vector.broadcast %cst_144 : f32 to vector<1x128xf32>
    %265 = arith.mulf %256, %264 : vector<1x128xf32>
    %cst_145 = arith.constant 0.0178571437 : f32
    %266 = vector.broadcast %cst_145 : f32 to vector<1x128xf32>
    %267 = arith.mulf %260, %266 : vector<1x128xf32>
    %268 = arith.mulf %265, %265 : vector<1x128xf32>
    %269 = arith.subf %267, %268 : vector<1x128xf32>
    %cst_146 = arith.constant 0.000000e+00 : f32
    %270 = vector.broadcast %cst_146 : f32 to vector<1x128xf32>
    %271 = arith.maximumf %269, %270 : vector<1x128xf32>
    %cst_147 = arith.constant 9.99999974E-6 : f32
    %272 = vector.broadcast %cst_147 : f32 to vector<1x128xf32>
    %273 = arith.addf %271, %272 : vector<1x128xf32>
    %274 = math.rsqrt %273 : vector<1x128xf32>
    %275 = arith.mulf %262, %274 : vector<1x128xf32>
    %276 = arith.mulf %265, %275 : vector<1x128xf32>
    %277 = arith.subf %263, %276 : vector<1x128xf32>
    %c0_148 = arith.constant 0 : index
    %c0_149 = arith.constant 0 : index
    %278 = tpu.strided_load %arg7[%c0_148, %c0_149] {strides = array<i32: 4, 1>} : memref<992x128xf32, #tpu.memory_space<vmem>>, vector<7x128xf32>
    %279 = vector.broadcast %275 : vector<1x128xf32> to vector<7x128xf32>
    %280 = arith.mulf %278, %279 : vector<7x128xf32>
    %281 = vector.broadcast %277 : vector<1x128xf32> to vector<7x128xf32>
    %282 = arith.addf %280, %281 : vector<7x128xf32>
    %cst_150 = arith.constant 0.000000e+00 : f32
    %283 = vector.broadcast %cst_150 : f32 to vector<7x128xf32>
    %284 = arith.maximumf %282, %283 : vector<7x128xf32>
    %c1_151 = arith.constant 1 : index
    %c0_152 = arith.constant 0 : index
    %285 = tpu.strided_load %arg7[%c1_151, %c0_152] {strides = array<i32: 4, 1>} : memref<992x128xf32, #tpu.memory_space<vmem>>, vector<7x128xf32>
    %286 = vector.broadcast %275 : vector<1x128xf32> to vector<7x128xf32>
    %287 = arith.mulf %285, %286 : vector<7x128xf32>
    %288 = vector.broadcast %277 : vector<1x128xf32> to vector<7x128xf32>
    %289 = arith.addf %287, %288 : vector<7x128xf32>
    %cst_153 = arith.constant 0.000000e+00 : f32
    %290 = vector.broadcast %cst_153 : f32 to vector<7x128xf32>
    %291 = arith.maximumf %289, %290 : vector<7x128xf32>
    %292 = arith.maximumf %284, %291 : vector<7x128xf32>
    %c2_154 = arith.constant 2 : index
    %c0_155 = arith.constant 0 : index
    %293 = tpu.strided_load %arg7[%c2_154, %c0_155] {strides = array<i32: 4, 1>} : memref<992x128xf32, #tpu.memory_space<vmem>>, vector<7x128xf32>
    %294 = vector.broadcast %275 : vector<1x128xf32> to vector<7x128xf32>
    %295 = arith.mulf %293, %294 : vector<7x128xf32>
    %296 = vector.broadcast %277 : vector<1x128xf32> to vector<7x128xf32>
    %297 = arith.addf %295, %296 : vector<7x128xf32>
    %cst_156 = arith.constant 0.000000e+00 : f32
    %298 = vector.broadcast %cst_156 : f32 to vector<7x128xf32>
    %299 = arith.maximumf %297, %298 : vector<7x128xf32>
    %300 = arith.maximumf %292, %299 : vector<7x128xf32>
    %c3_157 = arith.constant 3 : index
    %c0_158 = arith.constant 0 : index
    %301 = tpu.strided_load %arg7[%c3_157, %c0_158] {strides = array<i32: 4, 1>} : memref<992x128xf32, #tpu.memory_space<vmem>>, vector<7x128xf32>
    %302 = vector.broadcast %275 : vector<1x128xf32> to vector<7x128xf32>
    %303 = arith.mulf %301, %302 : vector<7x128xf32>
    %304 = vector.broadcast %277 : vector<1x128xf32> to vector<7x128xf32>
    %305 = arith.addf %303, %304 : vector<7x128xf32>
    %cst_159 = arith.constant 0.000000e+00 : f32
    %306 = vector.broadcast %cst_159 : f32 to vector<7x128xf32>
    %307 = arith.maximumf %305, %306 : vector<7x128xf32>
    %308 = arith.maximumf %300, %307 : vector<7x128xf32>
    %c0_160 = arith.constant 0 : index
    %c0_161 = arith.constant 0 : index
    %309 = vector.load %arg8[%c0_160, %c0_161] : memref<248x128xf32, #tpu.memory_space<vmem>>, vector<7x128xf32>
    tpu.vector_store %arg8[%c0_160, %c0_161], %308 {strides = array<i32>} : memref<248x128xf32, #tpu.memory_space<vmem>>, vector<7x128xf32>,
    %c30_162 = arith.constant 30 : index
    %c0_163 = arith.constant 0 : index
    %310 = tpu.strided_load %arg7[%c30_162, %c0_163] {strides = array<i32: 4, 1>} : memref<992x128xf32, #tpu.memory_space<vmem>>, vector<7x128xf32>
    %311 = vector.broadcast %275 : vector<1x128xf32> to vector<7x128xf32>
    %312 = arith.mulf %310, %311 : vector<7x128xf32>
    %313 = vector.broadcast %277 : vector<1x128xf32> to vector<7x128xf32>
    %314 = arith.addf %312, %313 : vector<7x128xf32>
    %cst_164 = arith.constant 0.000000e+00 : f32
    %315 = vector.broadcast %cst_164 : f32 to vector<7x128xf32>
    %316 = arith.maximumf %314, %315 : vector<7x128xf32>
    %c31 = arith.constant 31 : index
    %c0_165 = arith.constant 0 : index
    %317 = tpu.strided_load %arg7[%c31, %c0_165] {strides = array<i32: 4, 1>} : memref<992x128xf32, #tpu.memory_space<vmem>>, vector<7x128xf32>
    %318 = vector.broadcast %275 : vector<1x128xf32> to vector<7x128xf32>
    %319 = arith.mulf %317, %318 : vector<7x128xf32>
    %320 = vector.broadcast %277 : vector<1x128xf32> to vector<7x128xf32>
    %321 = arith.addf %319, %320 : vector<7x128xf32>
    %cst_166 = arith.constant 0.000000e+00 : f32
    %322 = vector.broadcast %cst_166 : f32 to vector<7x128xf32>
    %323 = arith.maximumf %321, %322 : vector<7x128xf32>
    %324 = arith.maximumf %316, %323 : vector<7x128xf32>
    %c32 = arith.constant 32 : index
    %c0_167 = arith.constant 0 : index
    %325 = tpu.strided_load %arg7[%c32, %c0_167] {strides = array<i32: 4, 1>} : memref<992x128xf32, #tpu.memory_space<vmem>>, vector<7x128xf32>
    %326 = vector.broadcast %275 : vector<1x128xf32> to vector<7x128xf32>
    %327 = arith.mulf %325, %326 : vector<7x128xf32>
    %328 = vector.broadcast %277 : vector<1x128xf32> to vector<7x128xf32>
    %329 = arith.addf %327, %328 : vector<7x128xf32>
    %cst_168 = arith.constant 0.000000e+00 : f32
    %330 = vector.broadcast %cst_168 : f32 to vector<7x128xf32>
    %331 = arith.maximumf %329, %330 : vector<7x128xf32>
    %332 = arith.maximumf %324, %331 : vector<7x128xf32>
    %c33 = arith.constant 33 : index
    %c0_169 = arith.constant 0 : index
    %333 = tpu.strided_load %arg7[%c33, %c0_169] {strides = array<i32: 4, 1>} : memref<992x128xf32, #tpu.memory_space<vmem>>, vector<7x128xf32>
    %334 = vector.broadcast %275 : vector<1x128xf32> to vector<7x128xf32>
    %335 = arith.mulf %333, %334 : vector<7x128xf32>
    %336 = vector.broadcast %277 : vector<1x128xf32> to vector<7x128xf32>
    %337 = arith.addf %335, %336 : vector<7x128xf32>
    %cst_170 = arith.constant 0.000000e+00 : f32
    %338 = vector.broadcast %cst_170 : f32 to vector<7x128xf32>
    %339 = arith.maximumf %337, %338 : vector<7x128xf32>
    %340 = arith.maximumf %332, %339 : vector<7x128xf32>
    %c7 = arith.constant 7 : index
    %c0_171 = arith.constant 0 : index
    %341 = vector.load %arg8[%c7, %c0_171] : memref<248x128xf32, #tpu.memory_space<vmem>>, vector<7x128xf32>
    tpu.vector_store %arg8[%c7, %c0_171], %340 {strides = array<i32>} : memref<248x128xf32, #tpu.memory_space<vmem>>, vector<7x128xf32>,
    %c0_172 = arith.constant 0 : index
    %c0_173 = arith.constant 0 : index
    %342 = vector.load %arg8[%c0_172, %c0_173] : memref<248x128xf32, #tpu.memory_space<vmem>>, vector<12x128xf32>
    %c6 = arith.constant 6 : index
    %c0_174 = arith.constant 0 : index
    %c0_175 = arith.constant 0 : index
    %343 = vector.load %arg3[%c6, %c0_174, %c0_175] : memref<9x128x128xf32, #tpu.memory_space<vmem>>, vector<1x128x128xf32>
    %344 = vector.shape_cast %343 : vector<1x128x128xf32> to vector<128x128xf32>
    %cst_176 = arith.constant dense<0.000000e+00> : vector<12x128xf32>
    %345 = tpu.matmul %342, %344, %cst_176 {dimension_numbers = #tpu.dot_dimension_numbers<[1], [0], [0], [1], [0, 0, 1, 1], [], []>} : vector<12x128xf32>, vector<128x128xf32>, vector<12x128xf32> -> vector<12x128xf32>
    %c1_177 = arith.constant 1 : index
    %c0_178 = arith.constant 0 : index
    %346 = vector.load %arg8[%c1_177, %c0_178] : memref<248x128xf32, #tpu.memory_space<vmem>>, vector<12x128xf32>
    %c7_179 = arith.constant 7 : index
    %c0_180 = arith.constant 0 : index
    %c0_181 = arith.constant 0 : index
    %347 = vector.load %arg3[%c7_179, %c0_180, %c0_181] : memref<9x128x128xf32, #tpu.memory_space<vmem>>, vector<1x128x128xf32>
    %348 = vector.shape_cast %347 : vector<1x128x128xf32> to vector<128x128xf32>
    %cst_182 = arith.constant dense<0.000000e+00> : vector<12x128xf32>
    %349 = tpu.matmul %346, %348, %cst_182 {dimension_numbers = #tpu.dot_dimension_numbers<[1], [0], [0], [1], [0, 0, 1, 1], [], []>} : vector<12x128xf32>, vector<128x128xf32>, vector<12x128xf32> -> vector<12x128xf32>
    %350 = arith.addf %345, %349 : vector<12x128xf32>
    %c2_183 = arith.constant 2 : index
    %c0_184 = arith.constant 0 : index
    %351 = vector.load %arg8[%c2_183, %c0_184] : memref<248x128xf32, #tpu.memory_space<vmem>>, vector<12x128xf32>
    %c8 = arith.constant 8 : index
    %c0_185 = arith.constant 0 : index
    %c0_186 = arith.constant 0 : index
    %352 = vector.load %arg3[%c8, %c0_185, %c0_186] : memref<9x128x128xf32, #tpu.memory_space<vmem>>, vector<1x128x128xf32>
    %353 = vector.shape_cast %352 : vector<1x128x128xf32> to vector<128x128xf32>
    %cst_187 = arith.constant dense<0.000000e+00> : vector<12x128xf32>
    %354 = tpu.matmul %351, %353, %cst_187 {dimension_numbers = #tpu.dot_dimension_numbers<[1], [0], [0], [1], [0, 0, 1, 1], [], []>} : vector<12x128xf32>, vector<128x128xf32>, vector<12x128xf32> -> vector<12x128xf32>
    %355 = arith.addf %350, %354 : vector<12x128xf32>
    %cst_188 = arith.constant dense<0.000000e+00> : vector<128xf32>
    %356 = vector.multi_reduction <add>, %355, %cst_188 [0] : vector<12x128xf32> to vector<128xf32>
    %357 = vector.shape_cast %356 : vector<128xf32> to vector<1x128xf32>
    %358 = arith.mulf %355, %355 : vector<12x128xf32>
    %cst_189 = arith.constant dense<0.000000e+00> : vector<128xf32>
    %359 = vector.multi_reduction <add>, %358, %cst_189 [0] : vector<12x128xf32> to vector<128xf32>
    %360 = vector.shape_cast %359 : vector<128xf32> to vector<1x128xf32>
    %361 = vector.extract_strided_slice %355 {offsets = [5, 0], sizes = [2, 128], strides = [1, 1]} : vector<12x128xf32> to vector<2x128xf32>
    %cst_190 = arith.constant dense<0.000000e+00> : vector<128xf32>
    %362 = vector.multi_reduction <add>, %361, %cst_190 [0] : vector<2x128xf32> to vector<128xf32>
    %363 = vector.shape_cast %362 : vector<128xf32> to vector<1x128xf32>
    %364 = arith.subf %357, %363 : vector<1x128xf32>
    %365 = arith.mulf %361, %361 : vector<2x128xf32>
    %cst_191 = arith.constant dense<0.000000e+00> : vector<128xf32>
    %366 = vector.multi_reduction <add>, %365, %cst_191 [0] : vector<2x128xf32> to vector<128xf32>
    %367 = vector.shape_cast %366 : vector<128xf32> to vector<1x128xf32>
    %368 = arith.subf %360, %367 : vector<1x128xf32>
    %c0_192 = arith.constant 0 : index
    %c0_193 = arith.constant 0 : index
    %369 = vector.load %arg7[%c0_192, %c0_193] : memref<992x128xf32, #tpu.memory_space<vmem>>, vector<12x128xf32>
    tpu.vector_store %arg7[%c0_192, %c0_193], %355 {strides = array<i32>} : memref<992x128xf32, #tpu.memory_space<vmem>>, vector<12x128xf32>,
    %c6_194 = arith.constant 6 : index
    %c0_195 = arith.constant 0 : index
    %370 = vector.load %arg2[%c6_194, %c0_195] : memref<8x128xf32, #tpu.memory_space<vmem>>, vector<1x128xf32>
    %c7_196 = arith.constant 7 : index
    %c0_197 = arith.constant 0 : index
    %371 = vector.load %arg2[%c7_196, %c0_197] : memref<8x128xf32, #tpu.memory_space<vmem>>, vector<1x128xf32>
    %cst_198 = arith.constant 1.000000e-01 : f32
    %372 = vector.broadcast %cst_198 : f32 to vector<1x128xf32>
    %373 = arith.mulf %364, %372 : vector<1x128xf32>
    %cst_199 = arith.constant 1.000000e-01 : f32
    %374 = vector.broadcast %cst_199 : f32 to vector<1x128xf32>
    %375 = arith.mulf %368, %374 : vector<1x128xf32>
    %376 = arith.mulf %373, %373 : vector<1x128xf32>
    %377 = arith.subf %375, %376 : vector<1x128xf32>
    %cst_200 = arith.constant 0.000000e+00 : f32
    %378 = vector.broadcast %cst_200 : f32 to vector<1x128xf32>
    %379 = arith.maximumf %377, %378 : vector<1x128xf32>
    %cst_201 = arith.constant 9.99999974E-6 : f32
    %380 = vector.broadcast %cst_201 : f32 to vector<1x128xf32>
    %381 = arith.addf %379, %380 : vector<1x128xf32>
    %382 = math.rsqrt %381 : vector<1x128xf32>
    %383 = arith.mulf %370, %382 : vector<1x128xf32>
    %384 = arith.mulf %373, %383 : vector<1x128xf32>
    %385 = arith.subf %371, %384 : vector<1x128xf32>
    %c0_202 = arith.constant 0 : index
    %c0_203 = arith.constant 0 : index
    %386 = tpu.strided_load %arg7[%c0_202, %c0_203] {strides = array<i32: 4, 1>} : memref<992x128xf32, #tpu.memory_space<vmem>>, vector<1x128xf32>
    %387 = arith.mulf %386, %383 : vector<1x128xf32>
    %388 = arith.addf %387, %385 : vector<1x128xf32>
    %cst_204 = arith.constant 0.000000e+00 : f32
    %389 = vector.broadcast %cst_204 : f32 to vector<1x128xf32>
    %390 = arith.maximumf %388, %389 : vector<1x128xf32>
    %c1_205 = arith.constant 1 : index
    %c0_206 = arith.constant 0 : index
    %391 = tpu.strided_load %arg7[%c1_205, %c0_206] {strides = array<i32: 4, 1>} : memref<992x128xf32, #tpu.memory_space<vmem>>, vector<1x128xf32>
    %392 = arith.mulf %391, %383 : vector<1x128xf32>
    %393 = arith.addf %392, %385 : vector<1x128xf32>
    %cst_207 = arith.constant 0.000000e+00 : f32
    %394 = vector.broadcast %cst_207 : f32 to vector<1x128xf32>
    %395 = arith.maximumf %393, %394 : vector<1x128xf32>
    %396 = arith.maximumf %390, %395 : vector<1x128xf32>
    %c2_208 = arith.constant 2 : index
    %c0_209 = arith.constant 0 : index
    %397 = tpu.strided_load %arg7[%c2_208, %c0_209] {strides = array<i32: 4, 1>} : memref<992x128xf32, #tpu.memory_space<vmem>>, vector<1x128xf32>
    %398 = arith.mulf %397, %383 : vector<1x128xf32>
    %399 = arith.addf %398, %385 : vector<1x128xf32>
    %cst_210 = arith.constant 0.000000e+00 : f32
    %400 = vector.broadcast %cst_210 : f32 to vector<1x128xf32>
    %401 = arith.maximumf %399, %400 : vector<1x128xf32>
    %402 = arith.maximumf %396, %401 : vector<1x128xf32>
    %c3_211 = arith.constant 3 : index
    %c0_212 = arith.constant 0 : index
    %403 = tpu.strided_load %arg7[%c3_211, %c0_212] {strides = array<i32: 4, 1>} : memref<992x128xf32, #tpu.memory_space<vmem>>, vector<1x128xf32>
    %404 = arith.mulf %403, %383 : vector<1x128xf32>
    %405 = arith.addf %404, %385 : vector<1x128xf32>
    %cst_213 = arith.constant 0.000000e+00 : f32
    %406 = vector.broadcast %cst_213 : f32 to vector<1x128xf32>
    %407 = arith.maximumf %405, %406 : vector<1x128xf32>
    %408 = arith.maximumf %402, %407 : vector<1x128xf32>
    %c0_214 = arith.constant 0 : index
    %c0_215 = arith.constant 0 : index
    %409 = vector.load %arg8[%c0_214, %c0_215] : memref<248x128xf32, #tpu.memory_space<vmem>>, vector<1x128xf32>
    tpu.vector_store %arg8[%c0_214, %c0_215], %408 {strides = array<i32>} : memref<248x128xf32, #tpu.memory_space<vmem>>, vector<1x128xf32>,
    %c7_216 = arith.constant 7 : index
    %c0_217 = arith.constant 0 : index
    %410 = tpu.strided_load %arg7[%c7_216, %c0_217] {strides = array<i32: 4, 1>} : memref<992x128xf32, #tpu.memory_space<vmem>>, vector<1x128xf32>
    %411 = arith.mulf %410, %383 : vector<1x128xf32>
    %412 = arith.addf %411, %385 : vector<1x128xf32>
    %cst_218 = arith.constant 0.000000e+00 : f32
    %413 = vector.broadcast %cst_218 : f32 to vector<1x128xf32>
    %414 = arith.maximumf %412, %413 : vector<1x128xf32>
    %c8_219 = arith.constant 8 : index
    %c0_220 = arith.constant 0 : index
    %415 = tpu.strided_load %arg7[%c8_219, %c0_220] {strides = array<i32: 4, 1>} : memref<992x128xf32, #tpu.memory_space<vmem>>, vector<1x128xf32>
    %416 = arith.mulf %415, %383 : vector<1x128xf32>
    %417 = arith.addf %416, %385 : vector<1x128xf32>
    %cst_221 = arith.constant 0.000000e+00 : f32
    %418 = vector.broadcast %cst_221 : f32 to vector<1x128xf32>
    %419 = arith.maximumf %417, %418 : vector<1x128xf32>
    %420 = arith.maximumf %414, %419 : vector<1x128xf32>
    %c9 = arith.constant 9 : index
    %c0_222 = arith.constant 0 : index
    %421 = tpu.strided_load %arg7[%c9, %c0_222] {strides = array<i32: 4, 1>} : memref<992x128xf32, #tpu.memory_space<vmem>>, vector<1x128xf32>
    %422 = arith.mulf %421, %383 : vector<1x128xf32>
    %423 = arith.addf %422, %385 : vector<1x128xf32>
    %cst_223 = arith.constant 0.000000e+00 : f32
    %424 = vector.broadcast %cst_223 : f32 to vector<1x128xf32>
    %425 = arith.maximumf %423, %424 : vector<1x128xf32>
    %426 = arith.maximumf %420, %425 : vector<1x128xf32>
    %c10 = arith.constant 10 : index
    %c0_224 = arith.constant 0 : index
    %427 = tpu.strided_load %arg7[%c10, %c0_224] {strides = array<i32: 4, 1>} : memref<992x128xf32, #tpu.memory_space<vmem>>, vector<1x128xf32>
    %428 = arith.mulf %427, %383 : vector<1x128xf32>
    %429 = arith.addf %428, %385 : vector<1x128xf32>
    %cst_225 = arith.constant 0.000000e+00 : f32
    %430 = vector.broadcast %cst_225 : f32 to vector<1x128xf32>
    %431 = arith.maximumf %429, %430 : vector<1x128xf32>
    %432 = arith.maximumf %426, %431 : vector<1x128xf32>
    %c1_226 = arith.constant 1 : index
    %c0_227 = arith.constant 0 : index
    %433 = vector.load %arg8[%c1_226, %c0_227] : memref<248x128xf32, #tpu.memory_space<vmem>>, vector<1x128xf32>
    tpu.vector_store %arg8[%c1_226, %c0_227], %432 {strides = array<i32>} : memref<248x128xf32, #tpu.memory_space<vmem>>, vector<1x128xf32>,
    %c0_228 = arith.constant 0 : index
    %c0_229 = arith.constant 0 : index
    %434 = vector.load %arg8[%c0_228, %c0_229] : memref<248x128xf32, #tpu.memory_space<vmem>>, vector<1x128xf32>
    %cst_230 = arith.constant dense<0.000000e+00> : vector<128xf32>
    %435 = vector.multi_reduction <add>, %434, %cst_230 [0] : vector<1x128xf32> to vector<128xf32>
    %436 = vector.shape_cast %435 : vector<128xf32> to vector<1x128xf32>
    %cst_231 = arith.constant 1.000000e+00 : f32
    %437 = vector.broadcast %cst_231 : f32 to vector<1x128xf32>
    %438 = arith.mulf %436, %437 : vector<1x128xf32>
    %c1_232 = arith.constant 1 : index
    %c0_233 = arith.constant 0 : index
    %439 = vector.load %arg8[%c1_232, %c0_233] : memref<248x128xf32, #tpu.memory_space<vmem>>, vector<1x128xf32>
    %cst_234 = arith.constant dense<0.000000e+00> : vector<128xf32>
    %440 = vector.multi_reduction <add>, %439, %cst_234 [0] : vector<1x128xf32> to vector<128xf32>
    %441 = vector.shape_cast %440 : vector<128xf32> to vector<1x128xf32>
    %cst_235 = arith.constant 1.000000e+00 : f32
    %442 = vector.broadcast %cst_235 : f32 to vector<1x128xf32>
    %443 = arith.mulf %441, %442 : vector<1x128xf32>
    %444 = tpu.concatenate %438, %443 in 0 : vector<1x128xf32>, vector<1x128xf32> -> vector<2x128xf32>
    %c0_236 = arith.constant 0 : index
    %c0_237 = arith.constant 0 : index
    %445 = vector.load %arg4[%c0_236, %c0_237] : memref<128x35xf32, #tpu.memory_space<vmem>>, vector<128x35xf32>
    %cst_238 = arith.constant dense<0.000000e+00> : vector<2x35xf32>
    %446 = tpu.matmul %444, %445, %cst_238 {dimension_numbers = #tpu.dot_dimension_numbers<[1], [0], [0], [1], [0, 0, 1, 1], [], []>} : vector<2x128xf32>, vector<128x35xf32>, vector<2x35xf32> -> vector<2x35xf32>
    %c0_239 = arith.constant 0 : index
    %c0_240 = arith.constant 0 : index
    %447 = vector.load %arg5[%c0_239, %c0_240] : memref<1x35xf32, #tpu.memory_space<vmem>>, vector<1x35xf32>
    %448 = vector.broadcast %447 : vector<1x35xf32> to vector<2x35xf32>
    %449 = arith.addf %446, %448 : vector<2x35xf32>
    %c0_241 = arith.constant 0 : index
    %c0_242 = arith.constant 0 : index
    %450 = vector.load %arg6[%c0_241, %c0_242] : memref<2x35xf32, #tpu.memory_space<vmem>>, vector<2x35xf32>
    tpu.vector_store %arg6[%c0_241, %c0_242], %449 {strides = array<i32>} : memref<2x35xf32, #tpu.memory_space<vmem>>, vector<2x35xf32>,
    return
  }
}

</mosaic_0001>

<llo_original>
// kernel: squeeze.10
$region0: #{squeeze.10}
  %s0 = inlined_call_operand.vmem [shape: f32[2,8000], index: 0, kind: input, shape index: {}]
  %s1 = inlined_call_operand.vmem [shape: f32[2,500,16], index: 1, kind: output, shape index: {}]
  $region1: #{squeeze.10} parent=0
    #allocation0 [shape = 'u8[258048]{0}', space=vmem, size = 0x3f000, scoped, tag = 'scoped mem for input reshape']
    %s3 = ssub.s32 4, 1
    %s4 = scalar_lea.vmem %s0, 124
    %v5 = vld [vmem:[%s4] sm:%s3]
    %s6 = scalar_lea.vmem [#allocation0], 496
    %7 = vst [vmem:[%s6] sm:%s3] %v5
    %s8 = scalar_lea.vmem %s0, 122
    %v9 = vld [vmem:[%s8] sm:%s3]
    %s10 = scalar_lea.vmem [#allocation0], 488
    %11 = vst [vmem:[%s10] sm:%s3] %v9
    %s12 = scalar_lea.vmem %s0, 120
    %v13 = vld [vmem:[%s12] sm:%s3]
    %s14 = scalar_lea.vmem [#allocation0], 480
    %15 = vst [vmem:[%s14] sm:%s3] %v13
    %s16 = scalar_lea.vmem %s0, 118
    %v17 = vld [vmem:[%s16] sm:%s3]
    %s18 = scalar_lea.vmem [#allocation0], 472
    %19 = vst [vmem:[%s18] sm:%s3] %v17
    %s20 = scalar_lea.vmem %s0, 116
    %v21 = vld [vmem:[%s20] sm:%s3]
    %s22 = scalar_lea.vmem [#allocation0], 464
    %23 = vst [vmem:[%s22] sm:%s3] %v21
    %s24 = scalar_lea.vmem %s0, 114
    %v25 = vld [vmem:[%s24] sm:%s3]
    %s26 = scalar_lea.vmem [#allocation0], 456
    %27 = vst [vmem:[%s26] sm:%s3] %v25
    %s28 = scalar_lea.vmem %s0, 112
    %v29 = vld [vmem:[%s28] sm:%s3]
    %s30 = scalar_lea.vmem [#allocation0], 448
    %31 = vst [vmem:[%s30] sm:%s3] %v29
    %s32 = scalar_lea.vmem %s0, 110
    %v33 = vld [vmem:[%s32] sm:%s3]
    %s34 = scalar_lea.vmem [#allocation0], 440
    %35 = vst [vmem:[%s34] sm:%s3] %v33
    %s36 = scalar_lea.vmem %s0, 108
    %v37 = vld [vmem:[%s36] sm:%s3]
    %s38 = scalar_lea.vmem [#allocation0], 432
    %39 = vst [vmem:[%s38] sm:%s3] %v37
    %s40 = scalar_lea.vmem %s0, 106
    %v41 = vld [vmem:[%s40] sm:%s3]
    %s42 = scalar_lea.vmem [#allocation0], 424
    %43 = vst [vmem:[%s42] sm:%s3] %v41
    %s44 = scalar_lea.vmem %s0, 104
    %v45 = vld [vmem:[%s44] sm:%s3]
    %s46 = scalar_lea.vmem [#allocation0], 416
    %47 = vst [vmem:[%s46] sm:%s3] %v45
    %s48 = scalar_lea.vmem %s0, 102
    %v49 = vld [vmem:[%s48] sm:%s3]
    %s50 = scalar_lea.vmem [#allocation0], 408
    %51 = vst [vmem:[%s50] sm:%s3] %v49
    %s52 = scalar_lea.vmem %s0, 100
    %v53 = vld [vmem:[%s52] sm:%s3]
    %s54 = scalar_lea.vmem [#allocation0], 400
    %55 = vst [vmem:[%s54] sm:%s3] %v53
    %s56 = scalar_lea.vmem %s0, 98
    %v57 = vld [vmem:[%s56] sm:%s3]
    %s58 = scalar_lea.vmem [#allocation0], 392
    %59 = vst [vmem:[%s58] sm:%s3] %v57
    %s60 = scalar_lea.vmem %s0, 96
    %v61 = vld [vmem:[%s60] sm:%s3]
    %s62 = scalar_lea.vmem [#allocation0], 384
    %63 = vst [vmem:[%s62] sm:%s3] %v61
    %s64 = scalar_lea.vmem %s0, 94
    %v65 = vld [vmem:[%s64] sm:%s3]
    %s66 = scalar_lea.vmem [#allocation0], 376
    %67 = vst [vmem:[%s66] sm:%s3] %v65
    %s68 = scalar_lea.vmem %s0, 92
    %v69 = vld [vmem:[%s68] sm:%s3]
    %s70 = scalar_lea.vmem [#allocation0], 368
    %71 = vst [vmem:[%s70] sm:%s3] %v69
    %s72 = scalar_lea.vmem %s0, 90
    %v73 = vld [vmem:[%s72] sm:%s3]
    %s74 = scalar_lea.vmem [#allocation0], 360
    %75 = vst [vmem:[%s74] sm:%s3] %v73
    %s76 = scalar_lea.vmem %s0, 88
    %v77 = vld [vmem:[%s76] sm:%s3]
    %s78 = scalar_lea.vmem [#allocation0], 352
    %79 = vst [vmem:[%s78] sm:%s3] %v77
    %s80 = scalar_lea.vmem %s0, 86
    %v81 = vld [vmem:[%s80] sm:%s3]
    %s82 = scalar_lea.vmem [#allocation0], 344
    %83 = vst [vmem:[%s82] sm:%s3] %v81
    %s84 = scalar_lea.vmem %s0, 84
    %v85 = vld [vmem:[%s84] sm:%s3]
    %s86 = scalar_lea.vmem [#allocation0], 336
    %87 = vst [vmem:[%s86] sm:%s3] %v85
    %s88 = scalar_lea.vmem %s0, 82
    %v89 = vld [vmem:[%s88] sm:%s3]
    %s90 = scalar_lea.vmem [#allocation0], 328
    %91 = vst [vmem:[%s90] sm:%s3] %v89
    %s92 = scalar_lea.vmem %s0, 80
    %v93 = vld [vmem:[%s92] sm:%s3]
    %s94 = scalar_lea.vmem [#allocation0], 320
    %95 = vst [vmem:[%s94] sm:%s3] %v93
    %s96 = scalar_lea.vmem %s0, 78
    %v97 = vld [vmem:[%s96] sm:%s3]
    %s98 = scalar_lea.vmem [#allocation0], 312
    %99 = vst [vmem:[%s98] sm:%s3] %v97
    %s100 = scalar_lea.vmem %s0, 76
    %v101 = vld [vmem:[%s100] sm:%s3]
    %s102 = scalar_lea.vmem [#allocation0], 304
    %103 = vst [vmem:[%s102] sm:%s3] %v101
    %s104 = scalar_lea.vmem %s0, 74
    %v105 = vld [vmem:[%s104] sm:%s3]
    %s106 = scalar_lea.vmem [#allocation0], 296
    %107 = vst [vmem:[%s106] sm:%s3] %v105
    %s108 = scalar_lea.vmem %s0, 72
    %v109 = vld [vmem:[%s108] sm:%s3]
    %s110 = scalar_lea.vmem [#allocation0], 288
    %111 = vst [vmem:[%s110] sm:%s3] %v109
    %s112 = scalar_lea.vmem %s0, 70
    %v113 = vld [vmem:[%s112] sm:%s3]
    %s114 = scalar_lea.vmem [#allocation0], 280
    %115 = vst [vmem:[%s114] sm:%s3] %v113
    %s116 = scalar_lea.vmem %s0, 68
    %v117 = vld [vmem:[%s116] sm:%s3]
    %s118 = scalar_lea.vmem [#allocation0], 272
    %119 = vst [vmem:[%s118] sm:%s3] %v117
    %s120 = scalar_lea.vmem %s0, 66
    %v121 = vld [vmem:[%s120] sm:%s3]
    %s122 = scalar_lea.vmem [#allocation0], 264
    %123 = vst [vmem:[%s122] sm:%s3] %v121
    %s124 = scalar_lea.vmem %s0, 64
    %v125 = vld [vmem:[%s124] sm:%s3]
    %s126 = scalar_lea.vmem [#allocation0], 256
    %127 = vst [vmem:[%s126] sm:%s3] %v125
    %s128 = scalar_lea.vmem %s0, 62
    %v129 = vld [vmem:[%s128] sm:%s3]
    %s130 = scalar_lea.vmem [#allocation0], 248
    %131 = vst [vmem:[%s130] sm:%s3] %v129
    %s132 = scalar_lea.vmem %s0, 60
    %v133 = vld [vmem:[%s132] sm:%s3]
    %s134 = scalar_lea.vmem [#allocation0], 240
    %135 = vst [vmem:[%s134] sm:%s3] %v133
    %s136 = scalar_lea.vmem %s0, 58
    %v137 = vld [vmem:[%s136] sm:%s3]
    %s138 = scalar_lea.vmem [#allocation0], 232
    %139 = vst [vmem:[%s138] sm:%s3] %v137
    %s140 = scalar_lea.vmem %s0, 56
    %v141 = vld [vmem:[%s140] sm:%s3]
    %s142 = scalar_lea.vmem [#allocation0], 224
    %143 = vst [vmem:[%s142] sm:%s3] %v141
    %s144 = scalar_lea.vmem %s0, 54
    %v145 = vld [vmem:[%s144] sm:%s3]
    %s146 = scalar_lea.vmem [#allocation0], 216
    %147 = vst [vmem:[%s146] sm:%s3] %v145
    %s148 = scalar_lea.vmem %s0, 52
    %v149 = vld [vmem:[%s148] sm:%s3]
    %s150 = scalar_lea.vmem [#allocation0], 208
    %151 = vst [vmem:[%s150] sm:%s3] %v149
    %s152 = scalar_lea.vmem %s0, 50
    %v153 = vld [vmem:[%s152] sm:%s3]
    %s154 = scalar_lea.vmem [#allocation0], 200
    %155 = vst [vmem:[%s154] sm:%s3] %v153
    %s156 = scalar_lea.vmem %s0, 48
    %v157 = vld [vmem:[%s156] sm:%s3]
    %s158 = scalar_lea.vmem [#allocation0], 192
    %159 = vst [vmem:[%s158] sm:%s3] %v157
    %s160 = scalar_lea.vmem %s0, 46
    %v161 = vld [vmem:[%s160] sm:%s3]
    %s162 = scalar_lea.vmem [#allocation0], 184
    %163 = vst [vmem:[%s162] sm:%s3] %v161
    %s164 = scalar_lea.vmem %s0, 44
    %v165 = vld [vmem:[%s164] sm:%s3]
    %s166 = scalar_lea.vmem [#allocation0], 176
    %167 = vst [vmem:[%s166] sm:%s3] %v165
    %s168 = scalar_lea.vmem %s0, 42
    %v169 = vld [vmem:[%s168] sm:%s3]
    %s170 = scalar_lea.vmem [#allocation0], 168
    %171 = vst [vmem:[%s170] sm:%s3] %v169
    %s172 = scalar_lea.vmem %s0, 40
    %v173 = vld [vmem:[%s172] sm:%s3]
    %s174 = scalar_lea.vmem [#allocation0], 160
    %175 = vst [vmem:[%s174] sm:%s3] %v173
    %s176 = scalar_lea.vmem %s0, 38
    %v177 = vld [vmem:[%s176] sm:%s3]
    %s178 = scalar_lea.vmem [#allocation0], 152
    %179 = vst [vmem:[%s178] sm:%s3] %v177
    %s180 = scalar_lea.vmem %s0, 36
    %v181 = vld [vmem:[%s180] sm:%s3]
    %s182 = scalar_lea.vmem [#allocation0], 144
    %183 = vst [vmem:[%s182] sm:%s3] %v181
    %s184 = scalar_lea.vmem %s0, 34
    %v185 = vld [vmem:[%s184] sm:%s3]
    %s186 = scalar_lea.vmem [#allocation0], 136
    %187 = vst [vmem:[%s186] sm:%s3] %v185
    %s188 = scalar_lea.vmem %s0, 32
    %v189 = vld [vmem:[%s188] sm:%s3]
    %s190 = scalar_lea.vmem [#allocation0], 128
    %191 = vst [vmem:[%s190] sm:%s3] %v189
    %s192 = scalar_lea.vmem %s0, 30
    %v193 = vld [vmem:[%s192] sm:%s3]
    %s194 = scalar_lea.vmem [#allocation0], 120
    %195 = vst [vmem:[%s194] sm:%s3] %v193
    %s196 = scalar_lea.vmem %s0, 28
    %v197 = vld [vmem:[%s196] sm:%s3]
    %s198 = scalar_lea.vmem [#allocation0], 112
    %199 = vst [vmem:[%s198] sm:%s3] %v197
    %s200 = scalar_lea.vmem %s0, 26
    %v201 = vld [vmem:[%s200] sm:%s3]
    %s202 = scalar_lea.vmem [#allocation0], 104
    %203 = vst [vmem:[%s202] sm:%s3] %v201
    %s204 = scalar_lea.vmem %s0, 24
    %v205 = vld [vmem:[%s204] sm:%s3]
    %s206 = scalar_lea.vmem [#allocation0], 96
    %207 = vst [vmem:[%s206] sm:%s3] %v205
    %s208 = scalar_lea.vmem %s0, 22
    %v209 = vld [vmem:[%s208] sm:%s3]
    %s210 = scalar_lea.vmem [#allocation0], 88
    %211 = vst [vmem:[%s210] sm:%s3] %v209
    %s212 = scalar_lea.vmem %s0, 20
    %v213 = vld [vmem:[%s212] sm:%s3]
    %s214 = scalar_lea.vmem [#allocation0], 80
    %215 = vst [vmem:[%s214] sm:%s3] %v213
    %s216 = scalar_lea.vmem %s0, 18
    %v217 = vld [vmem:[%s216] sm:%s3]
    %s218 = scalar_lea.vmem [#allocation0], 72
    %219 = vst [vmem:[%s218] sm:%s3] %v217
    %s220 = scalar_lea.vmem %s0, 16
    %v221 = vld [vmem:[%s220] sm:%s3]
    %s222 = scalar_lea.vmem [#allocation0], 64
    %223 = vst [vmem:[%s222] sm:%s3] %v221
    %s224 = scalar_lea.vmem %s0, 14
    %v225 = vld [vmem:[%s224] sm:%s3]
    %s226 = scalar_lea.vmem [#allocation0], 56
    %227 = vst [vmem:[%s226] sm:%s3] %v225
    %s228 = scalar_lea.vmem %s0, 12
    %v229 = vld [vmem:[%s228] sm:%s3]
    %s230 = scalar_lea.vmem [#allocation0], 48
    %231 = vst [vmem:[%s230] sm:%s3] %v229
    %s232 = scalar_lea.vmem %s0, 10
    %v233 = vld [vmem:[%s232] sm:%s3]
    %s234 = scalar_lea.vmem [#allocation0], 40
    %235 = vst [vmem:[%s234] sm:%s3] %v233
    %s236 = scalar_lea.vmem %s0, 8
    %v237 = vld [vmem:[%s236] sm:%s3]
    %s238 = scalar_lea.vmem [#allocation0], 32
    %239 = vst [vmem:[%s238] sm:%s3] %v237
    %s240 = scalar_lea.vmem %s0, 6
    %v241 = vld [vmem:[%s240] sm:%s3]
    %s242 = scalar_lea.vmem [#allocation0], 24
    %243 = vst [vmem:[%s242] sm:%s3] %v241
    %s244 = scalar_lea.vmem %s0, 4
    %v245 = vld [vmem:[%s244] sm:%s3]
    %s246 = scalar_lea.vmem [#allocation0], 16
    %247 = vst [vmem:[%s246] sm:%s3] %v245
    %s248 = scalar_lea.vmem %s0, 2
    %v249 = vld [vmem:[%s248] sm:%s3]
    %s250 = scalar_lea.vmem [#allocation0], 8
    %251 = vst [vmem:[%s250] sm:%s3] %v249
    %v252 = vld [vmem:[%s0] sm:%s3]
    %253 = vst [vmem:[#allocation0] sm:%s3] %v252
    %v254 = vld [vmem:[#allocation0] sm:$0x3]
    %vm255 = vcmask 130048
    %256 = vst.msk [vmem:[%s1] ss:$504 sm:$0x3] %vm255, %v254
    %s257 = scalar_lea.vmem [#allocation0], 8
    %v258 = vld [vmem:[%s257] sm:$0x3]
    %vm259 = vcmask 130048
    %s260 = scalar_lea.vmem %s1, 8
    %261 = vst.msk [vmem:[%s260] ss:$504 sm:$0x3] %vm259, %v258
    %s262 = scalar_lea.vmem [#allocation0], 16
    %v263 = vld [vmem:[%s262] sm:$0x3]
    %vm264 = vcmask 130048
    %s265 = scalar_lea.vmem %s1, 16
    %266 = vst.msk [vmem:[%s265] ss:$504 sm:$0x3] %vm264, %v263
    %s267 = scalar_lea.vmem [#allocation0], 24
    %v268 = vld [vmem:[%s267] sm:$0x3]
    %vm269 = vcmask 130048
    %s270 = scalar_lea.vmem %s1, 24
    %271 = vst.msk [vmem:[%s270] ss:$504 sm:$0x3] %vm269, %v268
    %s272 = scalar_lea.vmem [#allocation0], 32
    %v273 = vld [vmem:[%s272] sm:$0x3]
    %vm274 = vcmask 130048
    %s275 = scalar_lea.vmem %s1, 32
    %276 = vst.msk [vmem:[%s275] ss:$504 sm:$0x3] %vm274, %v273
    %s277 = scalar_lea.vmem [#allocation0], 40
    %v278 = vld [vmem:[%s277] sm:$0x3]
    %vm279 = vcmask 130048
    %s280 = scalar_lea.vmem %s1, 40
    %281 = vst.msk [vmem:[%s280] ss:$504 sm:$0x3] %vm279, %v278
    %s282 = scalar_lea.vmem [#allocation0], 48
    %v283 = vld [vmem:[%s282] sm:$0x3]
    %vm284 = vcmask 130048
    %s285 = scalar_lea.vmem %s1, 48
    %286 = vst.msk [vmem:[%s285] ss:$504 sm:$0x3] %vm284, %v283
    %s287 = scalar_lea.vmem [#allocation0], 56
    %v288 = vld [vmem:[%s287] sm:$0x3]
    %vm289 = vcmask 130048
    %s290 = scalar_lea.vmem %s1, 56
    %291 = vst.msk [vmem:[%s290] ss:$504 sm:$0x3] %vm289, %v288
    %s292 = scalar_lea.vmem [#allocation0], 64
    %v293 = vld [vmem:[%s292] sm:$0x3]
    %vm294 = vcmask 130048
    %s295 = scalar_lea.vmem %s1, 64
    %296 = vst.msk [vmem:[%s295] ss:$504 sm:$0x3] %vm294, %v293
    %s297 = scalar_lea.vmem [#allocation0], 72
    %v298 = vld [vmem:[%s297] sm:$0x3]
    %vm299 = vcmask 130048
    %s300 = scalar_lea.vmem %s1, 72
    %301 = vst.msk [vmem:[%s300] ss:$504 sm:$0x3] %vm299, %v298
    %s302 = scalar_lea.vmem [#allocation0], 80
    %v303 = vld [vmem:[%s302] sm:$0x3]
    %vm304 = vcmask 130048
    %s305 = scalar_lea.vmem %s1, 80
    %306 = vst.msk [vmem:[%s305] ss:$504 sm:$0x3] %vm304, %v303
    %s307 = scalar_lea.vmem [#allocation0], 88
    %v308 = vld [vmem:[%s307] sm:$0x3]
    %vm309 = vcmask 130048
    %s310 = scalar_lea.vmem %s1, 88
    %311 = vst.msk [vmem:[%s310] ss:$504 sm:$0x3] %vm309, %v308
    %s312 = scalar_lea.vmem [#allocation0], 96
    %v313 = vld [vmem:[%s312] sm:$0x3]
    %vm314 = vcmask 130048
    %s315 = scalar_lea.vmem %s1, 96
    %316 = vst.msk [vmem:[%s315] ss:$504 sm:$0x3] %vm314, %v313
    %s317 = scalar_lea.vmem [#allocation0], 104
    %v318 = vld [vmem:[%s317] sm:$0x3]
    %vm319 = vcmask 130048
    %s320 = scalar_lea.vmem %s1, 104
    %321 = vst.msk [vmem:[%s320] ss:$504 sm:$0x3] %vm319, %v318
    %s322 = scalar_lea.vmem [#allocation0], 112
    %v323 = vld [vmem:[%s322] sm:$0x3]
    %vm324 = vcmask 130048
    %s325 = scalar_lea.vmem %s1, 112
    %326 = vst.msk [vmem:[%s325] ss:$504 sm:$0x3] %vm324, %v323
    %s327 = scalar_lea.vmem [#allocation0], 120
    %v328 = vld [vmem:[%s327] sm:$0x3]
    %vm329 = vcmask 130048
    %s330 = scalar_lea.vmem %s1, 120
    %331 = vst.msk [vmem:[%s330] ss:$504 sm:$0x3] %vm329, %v328
    %s332 = scalar_lea.vmem [#allocation0], 128
    %v333 = vld [vmem:[%s332] sm:$0x3]
    %vm334 = vcmask 130048
    %s335 = scalar_lea.vmem %s1, 128
    %336 = vst.msk [vmem:[%s335] ss:$504 sm:$0x3] %vm334, %v333
    %s337 = scalar_lea.vmem [#allocation0], 136
    %v338 = vld [vmem:[%s337] sm:$0x3]
    %vm339 = vcmask 130048
    %s340 = scalar_lea.vmem %s1, 136
    %341 = vst.msk [vmem:[%s340] ss:$504 sm:$0x3] %vm339, %v338
    %s342 = scalar_lea.vmem [#allocation0], 144
    %v343 = vld [vmem:[%s342] sm:$0x3]
    %vm344 = vcmask 130048
    %s345 = scalar_lea.vmem %s1, 144
    %346 = vst.msk [vmem:[%s345] ss:$504 sm:$0x3] %vm344, %v343
    %s347 = scalar_lea.vmem [#allocation0], 152
    %v348 = vld [vmem:[%s347] sm:$0x3]
    %vm349 = vcmask 130048
    %s350 = scalar_lea.vmem %s1, 152
    %351 = vst.msk [vmem:[%s350] ss:$504 sm:$0x3] %vm349, %v348
    %s352 = scalar_lea.vmem [#allocation0], 160
    %v353 = vld [vmem:[%s352] sm:$0x3]
    %vm354 = vcmask 130048
    %s355 = scalar_lea.vmem %s1, 160
    %356 = vst.msk [vmem:[%s355] ss:$504 sm:$0x3] %vm354, %v353
    %s357 = scalar_lea.vmem [#allocation0], 168
    %v358 = vld [vmem:[%s357] sm:$0x3]
    %vm359 = vcmask 130048
    %s360 = scalar_lea.vmem %s1, 168
    %361 = vst.msk [vmem:[%s360] ss:$504 sm:$0x3] %vm359, %v358
    %s362 = scalar_lea.vmem [#allocation0], 176
    %v363 = vld [vmem:[%s362] sm:$0x3]
    %vm364 = vcmask 130048
    %s365 = scalar_lea.vmem %s1, 176
    %366 = vst.msk [vmem:[%s365] ss:$504 sm:$0x3] %vm364, %v363
    %s367 = scalar_lea.vmem [#allocation0], 184
    %v368 = vld [vmem:[%s367] sm:$0x3]
    %vm369 = vcmask 130048
    %s370 = scalar_lea.vmem %s1, 184
    %371 = vst.msk [vmem:[%s370] ss:$504 sm:$0x3] %vm369, %v368
    %s372 = scalar_lea.vmem [#allocation0], 192
    %v373 = vld [vmem:[%s372] sm:$0x3]
    %vm374 = vcmask 130048
    %s375 = scalar_lea.vmem %s1, 192
    %376 = vst.msk [vmem:[%s375] ss:$504 sm:$0x3] %vm374, %v373
    %s377 = scalar_lea.vmem [#allocation0], 200
    %v378 = vld [vmem:[%s377] sm:$0x3]
    %vm379 = vcmask 130048
    %s380 = scalar_lea.vmem %s1, 200
    %381 = vst.msk [vmem:[%s380] ss:$504 sm:$0x3] %vm379, %v378
    %s382 = scalar_lea.vmem [#allocation0], 208
    %v383 = vld [vmem:[%s382] sm:$0x3]
    %vm384 = vcmask 130048
    %s385 = scalar_lea.vmem %s1, 208
    %386 = vst.msk [vmem:[%s385] ss:$504 sm:$0x3] %vm384, %v383
    %s387 = scalar_lea.vmem [#allocation0], 216
    %v388 = vld [vmem:[%s387] sm:$0x3]
    %vm389 = vcmask 130048
    %s390 = scalar_lea.vmem %s1, 216
    %391 = vst.msk [vmem:[%s390] ss:$504 sm:$0x3] %vm389, %v388
    %s392 = scalar_lea.vmem [#allocation0], 224
    %v393 = vld [vmem:[%s392] sm:$0x3]
    %vm394 = vcmask 130048
    %s395 = scalar_lea.vmem %s1, 224
    %396 = vst.msk [vmem:[%s395] ss:$504 sm:$0x3] %vm394, %v393
    %s397 = scalar_lea.vmem [#allocation0], 232
    %v398 = vld [vmem:[%s397] sm:$0x3]
    %vm399 = vcmask 130048
    %s400 = scalar_lea.vmem %s1, 232
    %401 = vst.msk [vmem:[%s400] ss:$504 sm:$0x3] %vm399, %v398
    %s402 = scalar_lea.vmem [#allocation0], 240
    %v403 = vld [vmem:[%s402] sm:$0x3]
    %vm404 = vcmask 130048
    %s405 = scalar_lea.vmem %s1, 240
    %406 = vst.msk [vmem:[%s405] ss:$504 sm:$0x3] %vm404, %v403
    %s407 = scalar_lea.vmem [#allocation0], 248
    %v408 = vld [vmem:[%s407] sm:$0x3]
    %vm409 = vcmask 130048
    %s410 = scalar_lea.vmem %s1, 248
    %411 = vst.msk [vmem:[%s410] ss:$504 sm:$0x3] %vm409, %v408
    %s412 = scalar_lea.vmem [#allocation0], 256
    %v413 = vld [vmem:[%s412] sm:$0x3]
    %vm414 = vcmask 130048
    %s415 = scalar_lea.vmem %s1, 256
    %416 = vst.msk [vmem:[%s415] ss:$504 sm:$0x3] %vm414, %v413
    %s417 = scalar_lea.vmem [#allocation0], 264
    %v418 = vld [vmem:[%s417] sm:$0x3]
    %vm419 = vcmask 130048
    %s420 = scalar_lea.vmem %s1, 264
    %421 = vst.msk [vmem:[%s420] ss:$504 sm:$0x3] %vm419, %v418
    %s422 = scalar_lea.vmem [#allocation0], 272
    %v423 = vld [vmem:[%s422] sm:$0x3]
    %vm424 = vcmask 130048
    %s425 = scalar_lea.vmem %s1, 272
    %426 = vst.msk [vmem:[%s425] ss:$504 sm:$0x3] %vm424, %v423
    %s427 = scalar_lea.vmem [#allocation0], 280
    %v428 = vld [vmem:[%s427] sm:$0x3]
    %vm429 = vcmask 130048
    %s430 = scalar_lea.vmem %s1, 280
    %431 = vst.msk [vmem:[%s430] ss:$504 sm:$0x3] %vm429, %v428
    %s432 = scalar_lea.vmem [#allocation0], 288
    %v433 = vld [vmem:[%s432] sm:$0x3]
    %vm434 = vcmask 130048
    %s435 = scalar_lea.vmem %s1, 288
    %436 = vst.msk [vmem:[%s435] ss:$504 sm:$0x3] %vm434, %v433
    %s437 = scalar_lea.vmem [#allocation0], 296
    %v438 = vld [vmem:[%s437] sm:$0x3]
    %vm439 = vcmask 130048
    %s440 = scalar_lea.vmem %s1, 296
    %441 = vst.msk [vmem:[%s440] ss:$504 sm:$0x3] %vm439, %v438
    %s442 = scalar_lea.vmem [#allocation0], 304
    %v443 = vld [vmem:[%s442] sm:$0x3]
    %vm444 = vcmask 130048
    %s445 = scalar_lea.vmem %s1, 304
    %446 = vst.msk [vmem:[%s445] ss:$504 sm:$0x3] %vm444, %v443
    %s447 = scalar_lea.vmem [#allocation0], 312
    %v448 = vld [vmem:[%s447] sm:$0x3]
    %vm449 = vcmask 130048
    %s450 = scalar_lea.vmem %s1, 312
    %451 = vst.msk [vmem:[%s450] ss:$504 sm:$0x3] %vm449, %v448
    %s452 = scalar_lea.vmem [#allocation0], 320
    %v453 = vld [vmem:[%s452] sm:$0x3]
    %vm454 = vcmask 130048
    %s455 = scalar_lea.vmem %s1, 320
    %456 = vst.msk [vmem:[%s455] ss:$504 sm:$0x3] %vm454, %v453
    %s457 = scalar_lea.vmem [#allocation0], 328
    %v458 = vld [vmem:[%s457] sm:$0x3]
    %vm459 = vcmask 130048
    %s460 = scalar_lea.vmem %s1, 328
    %461 = vst.msk [vmem:[%s460] ss:$504 sm:$0x3] %vm459, %v458
    %s462 = scalar_lea.vmem [#allocation0], 336
    %v463 = vld [vmem:[%s462] sm:$0x3]
    %vm464 = vcmask 130048
    %s465 = scalar_lea.vmem %s1, 336
    %466 = vst.msk [vmem:[%s465] ss:$504 sm:$0x3] %vm464, %v463
    %s467 = scalar_lea.vmem [#allocation0], 344
    %v468 = vld [vmem:[%s467] sm:$0x3]
    %vm469 = vcmask 130048
    %s470 = scalar_lea.vmem %s1, 344
    %471 = vst.msk [vmem:[%s470] ss:$504 sm:$0x3] %vm469, %v468
    %s472 = scalar_lea.vmem [#allocation0], 352
    %v473 = vld [vmem:[%s472] sm:$0x3]
    %vm474 = vcmask 130048
    %s475 = scalar_lea.vmem %s1, 352
    %476 = vst.msk [vmem:[%s475] ss:$504 sm:$0x3] %vm474, %v473
    %s477 = scalar_lea.vmem [#allocation0], 360
    %v478 = vld [vmem:[%s477] sm:$0x3]
    %vm479 = vcmask 130048
    %s480 = scalar_lea.vmem %s1, 360
    %481 = vst.msk [vmem:[%s480] ss:$504 sm:$0x3] %vm479, %v478
    %s482 = scalar_lea.vmem [#allocation0], 368
    %v483 = vld [vmem:[%s482] sm:$0x3]
    %vm484 = vcmask 130048
    %s485 = scalar_lea.vmem %s1, 368
    %486 = vst.msk [vmem:[%s485] ss:$504 sm:$0x3] %vm484, %v483
    %s487 = scalar_lea.vmem [#allocation0], 376
    %v488 = vld [vmem:[%s487] sm:$0x3]
    %vm489 = vcmask 130048
    %s490 = scalar_lea.vmem %s1, 376
    %491 = vst.msk [vmem:[%s490] ss:$504 sm:$0x3] %vm489, %v488
    %s492 = scalar_lea.vmem [#allocation0], 384
    %v493 = vld [vmem:[%s492] sm:$0x3]
    %vm494 = vcmask 130048
    %s495 = scalar_lea.vmem %s1, 384
    %496 = vst.msk [vmem:[%s495] ss:$504 sm:$0x3] %vm494, %v493
    %s497 = scalar_lea.vmem [#allocation0], 392
    %v498 = vld [vmem:[%s497] sm:$0x3]
    %vm499 = vcmask 130048
    %s500 = scalar_lea.vmem %s1, 392
    %501 = vst.msk [vmem:[%s500] ss:$504 sm:$0x3] %vm499, %v498
    %s502 = scalar_lea.vmem [#allocation0], 400
    %v503 = vld [vmem:[%s502] sm:$0x3]
    %vm504 = vcmask 130048
    %s505 = scalar_lea.vmem %s1, 400
    %506 = vst.msk [vmem:[%s505] ss:$504 sm:$0x3] %vm504, %v503
    %s507 = scalar_lea.vmem [#allocation0], 408
    %v508 = vld [vmem:[%s507] sm:$0x3]
    %vm509 = vcmask 130048
    %s510 = scalar_lea.vmem %s1, 408
    %511 = vst.msk [vmem:[%s510] ss:$504 sm:$0x3] %vm509, %v508
    %s512 = scalar_lea.vmem [#allocation0], 416
    %v513 = vld [vmem:[%s512] sm:$0x3]
    %vm514 = vcmask 130048
    %s515 = scalar_lea.vmem %s1, 416
    %516 = vst.msk [vmem:[%s515] ss:$504 sm:$0x3] %vm514, %v513
    %s517 = scalar_lea.vmem [#allocation0], 424
    %v518 = vld [vmem:[%s517] sm:$0x3]
    %vm519 = vcmask 130048
    %s520 = scalar_lea.vmem %s1, 424
    %521 = vst.msk [vmem:[%s520] ss:$504 sm:$0x3] %vm519, %v518
    %s522 = scalar_lea.vmem [#allocation0], 432
    %v523 = vld [vmem:[%s522] sm:$0x3]
    %vm524 = vcmask 130048
    %s525 = scalar_lea.vmem %s1, 432
    %526 = vst.msk [vmem:[%s525] ss:$504 sm:$0x3] %vm524, %v523
    %s527 = scalar_lea.vmem [#allocation0], 440
    %v528 = vld [vmem:[%s527] sm:$0x3]
    %vm529 = vcmask 130048
    %s530 = scalar_lea.vmem %s1, 440
    %531 = vst.msk [vmem:[%s530] ss:$504 sm:$0x3] %vm529, %v528
    %s532 = scalar_lea.vmem [#allocation0], 448
    %v533 = vld [vmem:[%s532] sm:$0x3]
    %vm534 = vcmask 130048
    %s535 = scalar_lea.vmem %s1, 448
    %536 = vst.msk [vmem:[%s535] ss:$504 sm:$0x3] %vm534, %v533
    %s537 = scalar_lea.vmem [#allocation0], 456
    %v538 = vld [vmem:[%s537] sm:$0x3]
    %vm539 = vcmask 130048
    %s540 = scalar_lea.vmem %s1, 456
    %541 = vst.msk [vmem:[%s540] ss:$504 sm:$0x3] %vm539, %v538
    %s542 = scalar_lea.vmem [#allocation0], 464
    %v543 = vld [vmem:[%s542] sm:$0x3]
    %vm544 = vcmask 130048
    %s545 = scalar_lea.vmem %s1, 464
    %546 = vst.msk [vmem:[%s545] ss:$504 sm:$0x3] %vm544, %v543
    %s547 = scalar_lea.vmem [#allocation0], 472
    %v548 = vld [vmem:[%s547] sm:$0x3]
    %vm549 = vcmask 130048
    %s550 = scalar_lea.vmem %s1, 472
    %551 = vst.msk [vmem:[%s550] ss:$504 sm:$0x3] %vm549, %v548
    %s552 = scalar_lea.vmem [#allocation0], 480
    %v553 = vld [vmem:[%s552] sm:$0x3]
    %vm554 = vcmask 130048
    %s555 = scalar_lea.vmem %s1, 480
    %556 = vst.msk [vmem:[%s555] ss:$504 sm:$0x3] %vm554, %v553
    %s557 = scalar_lea.vmem [#allocation0], 488
    %v558 = vld [vmem:[%s557] sm:$0x3]
    %vm559 = vcmask 130048
    %s560 = scalar_lea.vmem %s1, 488
    %561 = vst.msk [vmem:[%s560] ss:$504 sm:$0x3] %vm559, %v558
    %s562 = scalar_lea.vmem [#allocation0], 496
    %v563 = vld [vmem:[%s562] sm:$0x3]
    %vm564 = vcmask 130048
    %s565 = scalar_lea.vmem %s1, 496
    %566 = vst.msk [vmem:[%s565] ss:$504 sm:$0x3] %vm564, %v563
    %v567 = vld [vmem:[#allocation0] ss:$8 sm:$0x7]
    %s568 = scalar_lea.vmem [#allocation0], 4294967273
    %v569 = vld [vmem:[%s568] ss:$8 sm:$0x78]
    %vm570 = vcmask 1046531
    %v571 = vsel %vm570, %v569, %v567
    %s572 = scalar_lea.vmem [#allocation0], 17
    %v573 = vld [vmem:[%s572] sm:$0x80]
    %vm574 = vcmask 1047559
    %v575 = vsel %vm574, %v573, %v571
    %576 = vrot.lane.b32.xlu0 %v575, 112
    %v577 = vpop.permute.xlu0 %576
    %vm578 = vcmask 130048
    %s579 = scalar_lea.vmem %s1, 1
    %580 = vst.msk [vmem:[%s579] ss:$8 sm:$0x7] %vm578, %v577
    %s581 = scalar_lea.vmem %s1, 481
    %582 = vst.msk [vmem:[%s581] ss:$8 sm:$0x78] %vm578, %v577
    %s583 = scalar_lea.vmem %s1, 18
    %584 = vst.msk [vmem:[%s583] sm:$0x80] %vm578, %v577
    %s585 = scalar_lea.vmem [#allocation0], 32
    %v586 = vld [vmem:[%s585] ss:$8 sm:$0x7]
    %s587 = scalar_lea.vmem [#allocation0], 9
    %v588 = vld [vmem:[%s587] ss:$8 sm:$0x78]
    %vm589 = vcmask 1046531
    %v590 = vsel %vm589, %v588, %v586
    %s591 = scalar_lea.vmem [#allocation0], 49
    %v592 = vld [vmem:[%s591] sm:$0x80]
    %vm593 = vcmask 1047559
    %v594 = vsel %vm593, %v592, %v590
    %595 = vrot.lane.b32.xlu0 %v594, 112
    %v596 = vpop.permute.xlu0 %595
    %vm597 = vcmask 130048
    %s598 = scalar_lea.vmem %s1, 33
    %599 = vst.msk [vmem:[%s598] ss:$8 sm:$0x7] %vm597, %v596
    %s600 = scalar_lea.vmem %s1, 513
    %601 = vst.msk [vmem:[%s600] ss:$8 sm:$0x78] %vm597, %v596
    %s602 = scalar_lea.vmem %s1, 50
    %603 = vst.msk [vmem:[%s602] sm:$0x80] %vm597, %v596
    %s604 = scalar_lea.vmem [#allocation0], 64
    %v605 = vld [vmem:[%s604] ss:$8 sm:$0x7]
    %s606 = scalar_lea.vmem [#allocation0], 41
    %v607 = vld [vmem:[%s606] ss:$8 sm:$0x78]
    %vm608 = vcmask 1046531
    %v609 = vsel %vm608, %v607, %v605
    %s610 = scalar_lea.vmem [#allocation0], 81
    %v611 = vld [vmem:[%s610] sm:$0x80]
    %vm612 = vcmask 1047559
    %v613 = vsel %vm612, %v611, %v609
    %614 = vrot.lane.b32.xlu0 %v613, 112
    %v615 = vpop.permute.xlu0 %614
    %vm616 = vcmask 130048
    %s617 = scalar_lea.vmem %s1, 65
    %618 = vst.msk [vmem:[%s617] ss:$8 sm:$0x7] %vm616, %v615
    %s619 = scalar_lea.vmem %s1, 545
    %620 = vst.msk [vmem:[%s619] ss:$8 sm:$0x78] %vm616, %v615
    %s621 = scalar_lea.vmem %s1, 82
    %622 = vst.msk [vmem:[%s621] sm:$0x80] %vm616, %v615
    %s623 = scalar_lea.vmem [#allocation0], 96
    %v624 = vld [vmem:[%s623] ss:$8 sm:$0x7]
    %s625 = scalar_lea.vmem [#allocation0], 73
    %v626 = vld [vmem:[%s625] ss:$8 sm:$0x78]
    %vm627 = vcmask 1046531
    %v628 = vsel %vm627, %v626, %v624
    %s629 = scalar_lea.vmem [#allocation0], 113
    %v630 = vld [vmem:[%s629] sm:$0x80]
    %vm631 = vcmask 1047559
    %v632 = vsel %vm631, %v630, %v628
    %633 = vrot.lane.b32.xlu0 %v632, 112
    %v634 = vpop.permute.xlu0 %633
    %vm635 = vcmask 130048
    %s636 = scalar_lea.vmem %s1, 97
    %637 = vst.msk [vmem:[%s636] ss:$8 sm:$0x7] %vm635, %v634
    %s638 = scalar_lea.vmem %s1, 577
    %639 = vst.msk [vmem:[%s638] ss:$8 sm:$0x78] %vm635, %v634
    %s640 = scalar_lea.vmem %s1, 114
    %641 = vst.msk [vmem:[%s640] sm:$0x80] %vm635, %v634
    %s642 = scalar_lea.vmem [#allocation0], 128
    %v643 = vld [vmem:[%s642] ss:$8 sm:$0x7]
    %s644 = scalar_lea.vmem [#allocation0], 105
    %v645 = vld [vmem:[%s644] ss:$8 sm:$0x78]
    %vm646 = vcmask 1046531
    %v647 = vsel %vm646, %v645, %v643
    %s648 = scalar_lea.vmem [#allocation0], 145
    %v649 = vld [vmem:[%s648] sm:$0x80]
    %vm650 = vcmask 1047559
    %v651 = vsel %vm650, %v649, %v647
    %652 = vrot.lane.b32.xlu0 %v651, 112
    %v653 = vpop.permute.xlu0 %652
    %vm654 = vcmask 130048
    %s655 = scalar_lea.vmem %s1, 129
    %656 = vst.msk [vmem:[%s655] ss:$8 sm:$0x7] %vm654, %v653
    %s657 = scalar_lea.vmem %s1, 609
    %658 = vst.msk [vmem:[%s657] ss:$8 sm:$0x78] %vm654, %v653
    %s659 = scalar_lea.vmem %s1, 146
    %660 = vst.msk [vmem:[%s659] sm:$0x80] %vm654, %v653
    %s661 = scalar_lea.vmem [#allocation0], 160
    %v662 = vld [vmem:[%s661] ss:$8 sm:$0x7]
    %s663 = scalar_lea.vmem [#allocation0], 137
    %v664 = vld [vmem:[%s663] ss:$8 sm:$0x78]
    %vm665 = vcmask 1046531
    %v666 = vsel %vm665, %v664, %v662
    %s667 = scalar_lea.vmem [#allocation0], 177
    %v668 = vld [vmem:[%s667] sm:$0x80]
    %vm669 = vcmask 1047559
    %v670 = vsel %vm669, %v668, %v666
    %671 = vrot.lane.b32.xlu0 %v670, 112
    %v672 = vpop.permute.xlu0 %671
    %vm673 = vcmask 130048
    %s674 = scalar_lea.vmem %s1, 161
    %675 = vst.msk [vmem:[%s674] ss:$8 sm:$0x7] %vm673, %v672
    %s676 = scalar_lea.vmem %s1, 641
    %677 = vst.msk [vmem:[%s676] ss:$8 sm:$0x78] %vm673, %v672
    %s678 = scalar_lea.vmem %s1, 178
    %679 = vst.msk [vmem:[%s678] sm:$0x80] %vm673, %v672
    %s680 = scalar_lea.vmem [#allocation0], 192
    %v681 = vld [vmem:[%s680] ss:$8 sm:$0x7]
    %s682 = scalar_lea.vmem [#allocation0], 169
    %v683 = vld [vmem:[%s682] ss:$8 sm:$0x78]
    %vm684 = vcmask 1046531
    %v685 = vsel %vm684, %v683, %v681
    %s686 = scalar_lea.vmem [#allocation0], 209
    %v687 = vld [vmem:[%s686] sm:$0x80]
    %vm688 = vcmask 1047559
    %v689 = vsel %vm688, %v687, %v685
    %690 = vrot.lane.b32.xlu0 %v689, 112
    %v691 = vpop.permute.xlu0 %690
    %vm692 = vcmask 130048
    %s693 = scalar_lea.vmem %s1, 193
    %694 = vst.msk [vmem:[%s693] ss:$8 sm:$0x7] %vm692, %v691
    %s695 = scalar_lea.vmem %s1, 673
    %696 = vst.msk [vmem:[%s695] ss:$8 sm:$0x78] %vm692, %v691
    %s697 = scalar_lea.vmem %s1, 210
    %698 = vst.msk [vmem:[%s697] sm:$0x80] %vm692, %v691
    %s699 = scalar_lea.vmem [#allocation0], 224
    %v700 = vld [vmem:[%s699] ss:$8 sm:$0x7]
    %s701 = scalar_lea.vmem [#allocation0], 201
    %v702 = vld [vmem:[%s701] ss:$8 sm:$0x78]
    %vm703 = vcmask 1046531
    %v704 = vsel %vm703, %v702, %v700
    %s705 = scalar_lea.vmem [#allocation0], 241
    %v706 = vld [vmem:[%s705] sm:$0x80]
    %vm707 = vcmask 1047559
    %v708 = vsel %vm707, %v706, %v704
    %709 = vrot.lane.b32.xlu0 %v708, 112
    %v710 = vpop.permute.xlu0 %709
    %vm711 = vcmask 130048
    %s712 = scalar_lea.vmem %s1, 225
    %713 = vst.msk [vmem:[%s712] ss:$8 sm:$0x7] %vm711, %v710
    %s714 = scalar_lea.vmem %s1, 705
    %715 = vst.msk [vmem:[%s714] ss:$8 sm:$0x78] %vm711, %v710
    %s716 = scalar_lea.vmem %s1, 242
    %717 = vst.msk [vmem:[%s716] sm:$0x80] %vm711, %v710
    %s718 = scalar_lea.vmem [#allocation0], 256
    %v719 = vld [vmem:[%s718] ss:$8 sm:$0x7]
    %s720 = scalar_lea.vmem [#allocation0], 233
    %v721 = vld [vmem:[%s720] ss:$8 sm:$0x78]
    %vm722 = vcmask 1046531
    %v723 = vsel %vm722, %v721, %v719
    %s724 = scalar_lea.vmem [#allocation0], 273
    %v725 = vld [vmem:[%s724] sm:$0x80]
    %vm726 = vcmask 1047559
    %v727 = vsel %vm726, %v725, %v723
    %728 = vrot.lane.b32.xlu0 %v727, 112
    %v729 = vpop.permute.xlu0 %728
    %vm730 = vcmask 130048
    %s731 = scalar_lea.vmem %s1, 257
    %732 = vst.msk [vmem:[%s731] ss:$8 sm:$0x7] %vm730, %v729
    %s733 = scalar_lea.vmem %s1, 737
    %734 = vst.msk [vmem:[%s733] ss:$8 sm:$0x78] %vm730, %v729
    %s735 = scalar_lea.vmem %s1, 274
    %736 = vst.msk [vmem:[%s735] sm:$0x80] %vm730, %v729
    %s737 = scalar_lea.vmem [#allocation0], 288
    %v738 = vld [vmem:[%s737] ss:$8 sm:$0x7]
    %s739 = scalar_lea.vmem [#allocation0], 265
    %v740 = vld [vmem:[%s739] ss:$8 sm:$0x78]
    %vm741 = vcmask 1046531
    %v742 = vsel %vm741, %v740, %v738
    %s743 = scalar_lea.vmem [#allocation0], 305
    %v744 = vld [vmem:[%s743] sm:$0x80]
    %vm745 = vcmask 1047559
    %v746 = vsel %vm745, %v744, %v742
    %747 = vrot.lane.b32.xlu0 %v746, 112
    %v748 = vpop.permute.xlu0 %747
    %vm749 = vcmask 130048
    %s750 = scalar_lea.vmem %s1, 289
    %751 = vst.msk [vmem:[%s750] ss:$8 sm:$0x7] %vm749, %v748
    %s752 = scalar_lea.vmem %s1, 769
    %753 = vst.msk [vmem:[%s752] ss:$8 sm:$0x78] %vm749, %v748
    %s754 = scalar_lea.vmem %s1, 306
    %755 = vst.msk [vmem:[%s754] sm:$0x80] %vm749, %v748
    %s756 = scalar_lea.vmem [#allocation0], 320
    %v757 = vld [vmem:[%s756] ss:$8 sm:$0x7]
    %s758 = scalar_lea.vmem [#allocation0], 297
    %v759 = vld [vmem:[%s758] ss:$8 sm:$0x78]
    %vm760 = vcmask 1046531
    %v761 = vsel %vm760, %v759, %v757
    %s762 = scalar_lea.vmem [#allocation0], 337
    %v763 = vld [vmem:[%s762] sm:$0x80]
    %vm764 = vcmask 1047559
    %v765 = vsel %vm764, %v763, %v761
    %766 = vrot.lane.b32.xlu0 %v765, 112
    %v767 = vpop.permute.xlu0 %766
    %vm768 = vcmask 130048
    %s769 = scalar_lea.vmem %s1, 321
    %770 = vst.msk [vmem:[%s769] ss:$8 sm:$0x7] %vm768, %v767
    %s771 = scalar_lea.vmem %s1, 801
    %772 = vst.msk [vmem:[%s771] ss:$8 sm:$0x78] %vm768, %v767
    %s773 = scalar_lea.vmem %s1, 338
    %774 = vst.msk [vmem:[%s773] sm:$0x80] %vm768, %v767
    %s775 = scalar_lea.vmem [#allocation0], 352
    %v776 = vld [vmem:[%s775] ss:$8 sm:$0x7]
    %s777 = scalar_lea.vmem [#allocation0], 329
    %v778 = vld [vmem:[%s777] ss:$8 sm:$0x78]
    %vm779 = vcmask 1046531
    %v780 = vsel %vm779, %v778, %v776
    %s781 = scalar_lea.vmem [#allocation0], 369
    %v782 = vld [vmem:[%s781] sm:$0x80]
    %vm783 = vcmask 1047559
    %v784 = vsel %vm783, %v782, %v780
    %785 = vrot.lane.b32.xlu0 %v784, 112
    %v786 = vpop.permute.xlu0 %785
    %vm787 = vcmask 130048
    %s788 = scalar_lea.vmem %s1, 353
    %789 = vst.msk [vmem:[%s788] ss:$8 sm:$0x7] %vm787, %v786
    %s790 = scalar_lea.vmem %s1, 833
    %791 = vst.msk [vmem:[%s790] ss:$8 sm:$0x78] %vm787, %v786
    %s792 = scalar_lea.vmem %s1, 370
    %793 = vst.msk [vmem:[%s792] sm:$0x80] %vm787, %v786
    %s794 = scalar_lea.vmem [#allocation0], 384
    %v795 = vld [vmem:[%s794] ss:$8 sm:$0x7]
    %s796 = scalar_lea.vmem [#allocation0], 361
    %v797 = vld [vmem:[%s796] ss:$8 sm:$0x78]
    %vm798 = vcmask 1046531
    %v799 = vsel %vm798, %v797, %v795
    %s800 = scalar_lea.vmem [#allocation0], 401
    %v801 = vld [vmem:[%s800] sm:$0x80]
    %vm802 = vcmask 1047559
    %v803 = vsel %vm802, %v801, %v799
    %804 = vrot.lane.b32.xlu0 %v803, 112
    %v805 = vpop.permute.xlu0 %804
    %vm806 = vcmask 130048
    %s807 = scalar_lea.vmem %s1, 385
    %808 = vst.msk [vmem:[%s807] ss:$8 sm:$0x7] %vm806, %v805
    %s809 = scalar_lea.vmem %s1, 865
    %810 = vst.msk [vmem:[%s809] ss:$8 sm:$0x78] %vm806, %v805
    %s811 = scalar_lea.vmem %s1, 402
    %812 = vst.msk [vmem:[%s811] sm:$0x80] %vm806, %v805
    %s813 = scalar_lea.vmem [#allocation0], 416
    %v814 = vld [vmem:[%s813] ss:$8 sm:$0x7]
    %s815 = scalar_lea.vmem [#allocation0], 393
    %v816 = vld [vmem:[%s815] ss:$8 sm:$0x78]
    %vm817 = vcmask 1046531
    %v818 = vsel %vm817, %v816, %v814
    %s819 = scalar_lea.vmem [#allocation0], 433
    %v820 = vld [vmem:[%s819] sm:$0x80]
    %vm821 = vcmask 1047559
    %v822 = vsel %vm821, %v820, %v818
    %823 = vrot.lane.b32.xlu0 %v822, 112
    %v824 = vpop.permute.xlu0 %823
    %vm825 = vcmask 130048
    %s826 = scalar_lea.vmem %s1, 417
    %827 = vst.msk [vmem:[%s826] ss:$8 sm:$0x7] %vm825, %v824
    %s828 = scalar_lea.vmem %s1, 897
    %829 = vst.msk [vmem:[%s828] ss:$8 sm:$0x78] %vm825, %v824
    %s830 = scalar_lea.vmem %s1, 434
    %831 = vst.msk [vmem:[%s830] sm:$0x80] %vm825, %v824
    %s832 = scalar_lea.vmem [#allocation0], 448
    %v833 = vld [vmem:[%s832] ss:$8 sm:$0x7]
    %s834 = scalar_lea.vmem [#allocation0], 425
    %v835 = vld [vmem:[%s834] ss:$8 sm:$0x78]
    %vm836 = vcmask 1046531
    %v837 = vsel %vm836, %v835, %v833
    %s838 = scalar_lea.vmem [#allocation0], 465
    %v839 = vld [vmem:[%s838] sm:$0x80]
    %vm840 = vcmask 1047559
    %v841 = vsel %vm840, %v839, %v837
    %842 = vrot.lane.b32.xlu0 %v841, 112
    %v843 = vpop.permute.xlu0 %842
    %vm844 = vcmask 130048
    %s845 = scalar_lea.vmem %s1, 449
    %846 = vst.msk [vmem:[%s845] ss:$8 sm:$0x7] %vm844, %v843
    %s847 = scalar_lea.vmem %s1, 929
    %848 = vst.msk [vmem:[%s847] ss:$8 sm:$0x78] %vm844, %v843
    %s849 = scalar_lea.vmem %s1, 466
    %850 = vst.msk [vmem:[%s849] sm:$0x80] %vm844, %v843
    %s851 = scalar_lea.vmem [#allocation0], 480
    %v852 = vld [vmem:[%s851] ss:$8 sm:$0x7]
    %s853 = scalar_lea.vmem [#allocation0], 457
    %v854 = vld [vmem:[%s853] ss:$8 sm:$0x38]
    %vm855 = vcmask 1045507
    %v856 = vsel %vm855, %v854, %v852
    %857 = vrot.lane.b32.xlu0 %v856, 112
    %v858 = vpop.permute.xlu0 %857
    %vm859 = vcmask 130048
    %s860 = scalar_lea.vmem %s1, 481
    %861 = vst.msk [vmem:[%s860] ss:$8 sm:$0x7] %vm859, %v858
    %s862 = scalar_lea.vmem %s1, 961
    %863 = vst.msk [vmem:[%s862] ss:$8 sm:$0x38] %vm859, %v858
    %v864 = vld [vmem:[#allocation0] ss:$8 sm:$0x7]
    %s865 = scalar_lea.vmem [#allocation0], 4294967273
    %v866 = vld [vmem:[%s865] ss:$8 sm:$0x78]
    %vm867 = vcmask 1046531
    %v868 = vsel %vm867, %v866, %v864
    %s869 = scalar_lea.vmem [#allocation0], 17
    %v870 = vld [vmem:[%s869] sm:$0x80]
    %vm871 = vcmask 1047559
    %v872 = vsel %vm871, %v870, %v868
    %873 = vrot.lane.b32.xlu0 %v872, 96
    %v874 = vpop.permute.xlu0 %873
    %vm875 = vcmask 130048
    %s876 = scalar_lea.vmem %s1, 2
    %877 = vst.msk [vmem:[%s876] ss:$8 sm:$0x7] %vm875, %v874
    %s878 = scalar_lea.vmem %s1, 482
    %879 = vst.msk [vmem:[%s878] ss:$8 sm:$0x78] %vm875, %v874
    %s880 = scalar_lea.vmem %s1, 19
    %881 = vst.msk [vmem:[%s880] sm:$0x80] %vm875, %v874
    %s882 = scalar_lea.vmem [#allocation0], 32
    %v883 = vld [vmem:[%s882] ss:$8 sm:$0x7]
    %s884 = scalar_lea.vmem [#allocation0], 9
    %v885 = vld [vmem:[%s884] ss:$8 sm:$0x78]
    %vm886 = vcmask 1046531
    %v887 = vsel %vm886, %v885, %v883
    %s888 = scalar_lea.vmem [#allocation0], 49
    %v889 = vld [vmem:[%s888] sm:$0x80]
    %vm890 = vcmask 1047559
    %v891 = vsel %vm890, %v889, %v887
    %892 = vrot.lane.b32.xlu0 %v891, 96
    %v893 = vpop.permute.xlu0 %892
    %vm894 = vcmask 130048
    %s895 = scalar_lea.vmem %s1, 34
    %896 = vst.msk [vmem:[%s895] ss:$8 sm:$0x7] %vm894, %v893
    %s897 = scalar_lea.vmem %s1, 514
    %898 = vst.msk [vmem:[%s897] ss:$8 sm:$0x78] %vm894, %v893
    %s899 = scalar_lea.vmem %s1, 51
    %900 = vst.msk [vmem:[%s899] sm:$0x80] %vm894, %v893
    %s901 = scalar_lea.vmem [#allocation0], 64
    %v902 = vld [vmem:[%s901] ss:$8 sm:$0x7]
    %s903 = scalar_lea.vmem [#allocation0], 41
    %v904 = vld [vmem:[%s903] ss:$8 sm:$0x78]
    %vm905 = vcmask 1046531
    %v906 = vsel %vm905, %v904, %v902
    %s907 = scalar_lea.vmem [#allocation0], 81
    %v908 = vld [vmem:[%s907] sm:$0x80]
    %vm909 = vcmask 1047559
    %v910 = vsel %vm909, %v908, %v906
    %911 = vrot.lane.b32.xlu0 %v910, 96
    %v912 = vpop.permute.xlu0 %911
    %vm913 = vcmask 130048
    %s914 = scalar_lea.vmem %s1, 66
    %915 = vst.msk [vmem:[%s914] ss:$8 sm:$0x7] %vm913, %v912
    %s916 = scalar_lea.vmem %s1, 546
    %917 = vst.msk [vmem:[%s916] ss:$8 sm:$0x78] %vm913, %v912
    %s918 = scalar_lea.vmem %s1, 83
    %919 = vst.msk [vmem:[%s918] sm:$0x80] %vm913, %v912
    %s920 = scalar_lea.vmem [#allocation0], 96
    %v921 = vld [vmem:[%s920] ss:$8 sm:$0x7]
    %s922 = scalar_lea.vmem [#allocation0], 73
    %v923 = vld [vmem:[%s922] ss:$8 sm:$0x78]
    %vm924 = vcmask 1046531
    %v925 = vsel %vm924, %v923, %v921
    %s926 = scalar_lea.vmem [#allocation0], 113
    %v927 = vld [vmem:[%s926] sm:$0x80]
    %vm928 = vcmask 1047559
    %v929 = vsel %vm928, %v927, %v925
    %930 = vrot.lane.b32.xlu0 %v929, 96
    %v931 = vpop.permute.xlu0 %930
    %vm932 = vcmask 130048
    %s933 = scalar_lea.vmem %s1, 98
    %934 = vst.msk [vmem:[%s933] ss:$8 sm:$0x7] %vm932, %v931
    %s935 = scalar_lea.vmem %s1, 578
    %936 = vst.msk [vmem:[%s935] ss:$8 sm:$0x78] %vm932, %v931
    %s937 = scalar_lea.vmem %s1, 115
    %938 = vst.msk [vmem:[%s937] sm:$0x80] %vm932, %v931
    %s939 = scalar_lea.vmem [#allocation0], 128
    %v940 = vld [vmem:[%s939] ss:$8 sm:$0x7]
    %s941 = scalar_lea.vmem [#allocation0], 105
    %v942 = vld [vmem:[%s941] ss:$8 sm:$0x78]
    %vm943 = vcmask 1046531
    %v944 = vsel %vm943, %v942, %v940
    %s945 = scalar_lea.vmem [#allocation0], 145
    %v946 = vld [vmem:[%s945] sm:$0x80]
    %vm947 = vcmask 1047559
    %v948 = vsel %vm947, %v946, %v944
    %949 = vrot.lane.b32.xlu0 %v948, 96
    %v950 = vpop.permute.xlu0 %949
    %vm951 = vcmask 130048
    %s952 = scalar_lea.vmem %s1, 130
    %953 = vst.msk [vmem:[%s952] ss:$8 sm:$0x7] %vm951, %v950
    %s954 = scalar_lea.vmem %s1, 610
    %955 = vst.msk [vmem:[%s954] ss:$8 sm:$0x78] %vm951, %v950
    %s956 = scalar_lea.vmem %s1, 147
    %957 = vst.msk [vmem:[%s956] sm:$0x80] %vm951, %v950
    %s958 = scalar_lea.vmem [#allocation0], 160
    %v959 = vld [vmem:[%s958] ss:$8 sm:$0x7]
    %s960 = scalar_lea.vmem [#allocation0], 137
    %v961 = vld [vmem:[%s960] ss:$8 sm:$0x78]
    %vm962 = vcmask 1046531
    %v963 = vsel %vm962, %v961, %v959
    %s964 = scalar_lea.vmem [#allocation0], 177
    %v965 = vld [vmem:[%s964] sm:$0x80]
    %vm966 = vcmask 1047559
    %v967 = vsel %vm966, %v965, %v963
    %968 = vrot.lane.b32.xlu0 %v967, 96
    %v969 = vpop.permute.xlu0 %968
    %vm970 = vcmask 130048
    %s971 = scalar_lea.vmem %s1, 162
    %972 = vst.msk [vmem:[%s971] ss:$8 sm:$0x7] %vm970, %v969
    %s973 = scalar_lea.vmem %s1, 642
    %974 = vst.msk [vmem:[%s973] ss:$8 sm:$0x78] %vm970, %v969
    %s975 = scalar_lea.vmem %s1, 179
    %976 = vst.msk [vmem:[%s975] sm:$0x80] %vm970, %v969
    %s977 = scalar_lea.vmem [#allocation0], 192
    %v978 = vld [vmem:[%s977] ss:$8 sm:$0x7]
    %s979 = scalar_lea.vmem [#allocation0], 169
    %v980 = vld [vmem:[%s979] ss:$8 sm:$0x78]
    %vm981 = vcmask 1046531
    %v982 = vsel %vm981, %v980, %v978
    %s983 = scalar_lea.vmem [#allocation0], 209
    %v984 = vld [vmem:[%s983] sm:$0x80]
    %vm985 = vcmask 1047559
    %v986 = vsel %vm985, %v984, %v982
    %987 = vrot.lane.b32.xlu0 %v986, 96
    %v988 = vpop.permute.xlu0 %987
    %vm989 = vcmask 130048
    %s990 = scalar_lea.vmem %s1, 194
    %991 = vst.msk [vmem:[%s990] ss:$8 sm:$0x7] %vm989, %v988
    %s992 = scalar_lea.vmem %s1, 674
    %993 = vst.msk [vmem:[%s992] ss:$8 sm:$0x78] %vm989, %v988
    %s994 = scalar_lea.vmem %s1, 211
    %995 = vst.msk [vmem:[%s994] sm:$0x80] %vm989, %v988
    %s996 = scalar_lea.vmem [#allocation0], 224
    %v997 = vld [vmem:[%s996] ss:$8 sm:$0x7]
    %s998 = scalar_lea.vmem [#allocation0], 201
    %v999 = vld [vmem:[%s998] ss:$8 sm:$0x78]
    %vm1000 = vcmask 1046531
    %v1001 = vsel %vm1000, %v999, %v997
    %s1002 = scalar_lea.vmem [#allocation0], 241
    %v1003 = vld [vmem:[%s1002] sm:$0x80]
    %vm1004 = vcmask 1047559
    %v1005 = vsel %vm1004, %v1003, %v1001
    %1006 = vrot.lane.b32.xlu0 %v1005, 96
    %v1007 = vpop.permute.xlu0 %1006
    %vm1008 = vcmask 130048
    %s1009 = scalar_lea.vmem %s1, 226
    %1010 = vst.msk [vmem:[%s1009] ss:$8 sm:$0x7] %vm1008, %v1007
    %s1011 = scalar_lea.vmem %s1, 706
    %1012 = vst.msk [vmem:[%s1011] ss:$8 sm:$0x78] %vm1008, %v1007
    %s1013 = scalar_lea.vmem %s1, 243
    %1014 = vst.msk [vmem:[%s1013] sm:$0x80] %vm1008, %v1007
    %s1015 = scalar_lea.vmem [#allocation0], 256
    %v1016 = vld [vmem:[%s1015] ss:$8 sm:$0x7]
    %s1017 = scalar_lea.vmem [#allocation0], 233
    %v1018 = vld [vmem:[%s1017] ss:$8 sm:$0x78]
    %vm1019 = vcmask 1046531
    %v1020 = vsel %vm1019, %v1018, %v1016
    %s1021 = scalar_lea.vmem [#allocation0], 273
    %v1022 = vld [vmem:[%s1021] sm:$0x80]
    %vm1023 = vcmask 1047559
    %v1024 = vsel %vm1023, %v1022, %v1020
    %1025 = vrot.lane.b32.xlu0 %v1024, 96
    %v1026 = vpop.permute.xlu0 %1025
    %vm1027 = vcmask 130048
    %s1028 = scalar_lea.vmem %s1, 258
    %1029 = vst.msk [vmem:[%s1028] ss:$8 sm:$0x7] %vm1027, %v1026
    %s1030 = scalar_lea.vmem %s1, 738
    %1031 = vst.msk [vmem:[%s1030] ss:$8 sm:$0x78] %vm1027, %v1026
    %s1032 = scalar_lea.vmem %s1, 275
    %1033 = vst.msk [vmem:[%s1032] sm:$0x80] %vm1027, %v1026
    %s1034 = scalar_lea.vmem [#allocation0], 288
    %v1035 = vld [vmem:[%s1034] ss:$8 sm:$0x7]
    %s1036 = scalar_lea.vmem [#allocation0], 265
    %v1037 = vld [vmem:[%s1036] ss:$8 sm:$0x78]
    %vm1038 = vcmask 1046531
    %v1039 = vsel %vm1038, %v1037, %v1035
    %s1040 = scalar_lea.vmem [#allocation0], 305
    %v1041 = vld [vmem:[%s1040] sm:$0x80]
    %vm1042 = vcmask 1047559
    %v1043 = vsel %vm1042, %v1041, %v1039
    %1044 = vrot.lane.b32.xlu0 %v1043, 96
    %v1045 = vpop.permute.xlu0 %1044
    %vm1046 = vcmask 130048
    %s1047 = scalar_lea.vmem %s1, 290
    %1048 = vst.msk [vmem:[%s1047] ss:$8 sm:$0x7] %vm1046, %v1045
    %s1049 = scalar_lea.vmem %s1, 770
    %1050 = vst.msk [vmem:[%s1049] ss:$8 sm:$0x78] %vm1046, %v1045
    %s1051 = scalar_lea.vmem %s1, 307
    %1052 = vst.msk [vmem:[%s1051] sm:$0x80] %vm1046, %v1045
    %s1053 = scalar_lea.vmem [#allocation0], 320
    %v1054 = vld [vmem:[%s1053] ss:$8 sm:$0x7]
    %s1055 = scalar_lea.vmem [#allocation0], 297
    %v1056 = vld [vmem:[%s1055] ss:$8 sm:$0x78]
    %vm1057 = vcmask 1046531
    %v1058 = vsel %vm1057, %v1056, %v1054
    %s1059 = scalar_lea.vmem [#allocation0], 337
    %v1060 = vld [vmem:[%s1059] sm:$0x80]
    %vm1061 = vcmask 1047559
    %v1062 = vsel %vm1061, %v1060, %v1058
    %1063 = vrot.lane.b32.xlu0 %v1062, 96
    %v1064 = vpop.permute.xlu0 %1063
    %vm1065 = vcmask 130048
    %s1066 = scalar_lea.vmem %s1, 322
    %1067 = vst.msk [vmem:[%s1066] ss:$8 sm:$0x7] %vm1065, %v1064
    %s1068 = scalar_lea.vmem %s1, 802
    %1069 = vst.msk [vmem:[%s1068] ss:$8 sm:$0x78] %vm1065, %v1064
    %s1070 = scalar_lea.vmem %s1, 339
    %1071 = vst.msk [vmem:[%s1070] sm:$0x80] %vm1065, %v1064
    %s1072 = scalar_lea.vmem [#allocation0], 352
    %v1073 = vld [vmem:[%s1072] ss:$8 sm:$0x7]
    %s1074 = scalar_lea.vmem [#allocation0], 329
    %v1075 = vld [vmem:[%s1074] ss:$8 sm:$0x78]
    %vm1076 = vcmask 1046531
    %v1077 = vsel %vm1076, %v1075, %v1073
    %s1078 = scalar_lea.vmem [#allocation0], 369
    %v1079 = vld [vmem:[%s1078] sm:$0x80]
    %vm1080 = vcmask 1047559
    %v1081 = vsel %vm1080, %v1079, %v1077
    %1082 = vrot.lane.b32.xlu0 %v1081, 96
    %v1083 = vpop.permute.xlu0 %1082
    %vm1084 = vcmask 130048
    %s1085 = scalar_lea.vmem %s1, 354
    %1086 = vst.msk [vmem:[%s1085] ss:$8 sm:$0x7] %vm1084, %v1083
    %s1087 = scalar_lea.vmem %s1, 834
    %1088 = vst.msk [vmem:[%s1087] ss:$8 sm:$0x78] %vm1084, %v1083
    %s1089 = scalar_lea.vmem %s1, 371
    %1090 = vst.msk [vmem:[%s1089] sm:$0x80] %vm1084, %v1083
    %s1091 = scalar_lea.vmem [#allocation0], 384
    %v1092 = vld [vmem:[%s1091] ss:$8 sm:$0x7]
    %s1093 = scalar_lea.vmem [#allocation0], 361
    %v1094 = vld [vmem:[%s1093] ss:$8 sm:$0x78]
    %vm1095 = vcmask 1046531
    %v1096 = vsel %vm1095, %v1094, %v1092
    %s1097 = scalar_lea.vmem [#allocation0], 401
    %v1098 = vld [vmem:[%s1097] sm:$0x80]
    %vm1099 = vcmask 1047559
    %v1100 = vsel %vm1099, %v1098, %v1096
    %1101 = vrot.lane.b32.xlu0 %v1100, 96
    %v1102 = vpop.permute.xlu0 %1101
    %vm1103 = vcmask 130048
    %s1104 = scalar_lea.vmem %s1, 386
    %1105 = vst.msk [vmem:[%s1104] ss:$8 sm:$0x7] %vm1103, %v1102
    %s1106 = scalar_lea.vmem %s1, 866
    %1107 = vst.msk [vmem:[%s1106] ss:$8 sm:$0x78] %vm1103, %v1102
    %s1108 = scalar_lea.vmem %s1, 403
    %1109 = vst.msk [vmem:[%s1108] sm:$0x80] %vm1103, %v1102
    %s1110 = scalar_lea.vmem [#allocation0], 416
    %v1111 = vld [vmem:[%s1110] ss:$8 sm:$0x7]
    %s1112 = scalar_lea.vmem [#allocation0], 393
    %v1113 = vld [vmem:[%s1112] ss:$8 sm:$0x78]
    %vm1114 = vcmask 1046531
    %v1115 = vsel %vm1114, %v1113, %v1111
    %s1116 = scalar_lea.vmem [#allocation0], 433
    %v1117 = vld [vmem:[%s1116] sm:$0x80]
    %vm1118 = vcmask 1047559
    %v1119 = vsel %vm1118, %v1117, %v1115
    %1120 = vrot.lane.b32.xlu0 %v1119, 96
    %v1121 = vpop.permute.xlu0 %1120
    %vm1122 = vcmask 130048
    %s1123 = scalar_lea.vmem %s1, 418
    %1124 = vst.msk [vmem:[%s1123] ss:$8 sm:$0x7] %vm1122, %v1121
    %s1125 = scalar_lea.vmem %s1, 898
    %1126 = vst.msk [vmem:[%s1125] ss:$8 sm:$0x78] %vm1122, %v1121
    %s1127 = scalar_lea.vmem %s1, 435
    %1128 = vst.msk [vmem:[%s1127] sm:$0x80] %vm1122, %v1121
    %s1129 = scalar_lea.vmem [#allocation0], 448
    %v1130 = vld [vmem:[%s1129] ss:$8 sm:$0x7]
    %s1131 = scalar_lea.vmem [#allocation0], 425
    %v1132 = vld [vmem:[%s1131] ss:$8 sm:$0x78]
    %vm1133 = vcmask 1046531
    %v1134 = vsel %vm1133, %v1132, %v1130
    %s1135 = scalar_lea.vmem [#allocation0], 465
    %v1136 = vld [vmem:[%s1135] sm:$0x80]
    %vm1137 = vcmask 1047559
    %v1138 = vsel %vm1137, %v1136, %v1134
    %1139 = vrot.lane.b32.xlu0 %v1138, 96
    %v1140 = vpop.permute.xlu0 %1139
    %vm1141 = vcmask 130048
    %s1142 = scalar_lea.vmem %s1, 450
    %1143 = vst.msk [vmem:[%s1142] ss:$8 sm:$0x7] %vm1141, %v1140
    %s1144 = scalar_lea.vmem %s1, 930
    %1145 = vst.msk [vmem:[%s1144] ss:$8 sm:$0x78] %vm1141, %v1140
    %s1146 = scalar_lea.vmem %s1, 467
    %1147 = vst.msk [vmem:[%s1146] sm:$0x80] %vm1141, %v1140
    %s1148 = scalar_lea.vmem [#allocation0], 480
    %v1149 = vld [vmem:[%s1148] ss:$8 sm:$0x7]
    %s1150 = scalar_lea.vmem [#allocation0], 457
    %v1151 = vld [vmem:[%s1150] ss:$8 sm:$0x38]
    %vm1152 = vcmask 1045507
    %v1153 = vsel %vm1152, %v1151, %v1149
    %1154 = vrot.lane.b32.xlu0 %v1153, 96
    %v1155 = vpop.permute.xlu0 %1154
    %vm1156 = vcmask 130048
    %s1157 = scalar_lea.vmem %s1, 482
    %1158 = vst.msk [vmem:[%s1157] ss:$8 sm:$0x7] %vm1156, %v1155
    %s1159 = scalar_lea.vmem %s1, 962
    %1160 = vst.msk [vmem:[%s1159] ss:$8 sm:$0x38] %vm1156, %v1155
    %v1161 = vld [vmem:[#allocation0] ss:$8 sm:$0x7]
    %s1162 = scalar_lea.vmem [#allocation0], 4294967273
    %v1163 = vld [vmem:[%s1162] ss:$8 sm:$0x78]
    %vm1164 = vcmask 1046531
    %v1165 = vsel %vm1164, %v1163, %v1161
    %s1166 = scalar_lea.vmem [#allocation0], 17
    %v1167 = vld [vmem:[%s1166] sm:$0x80]
    %vm1168 = vcmask 1047559
    %v1169 = vsel %vm1168, %v1167, %v1165
    %1170 = vrot.lane.b32.xlu0 %v1169, 80
    %v1171 = vpop.permute.xlu0 %1170
    %vm1172 = vcmask 130048
    %s1173 = scalar_lea.vmem %s1, 3
    %1174 = vst.msk [vmem:[%s1173] ss:$8 sm:$0x7] %vm1172, %v1171
    %s1175 = scalar_lea.vmem %s1, 483
    %1176 = vst.msk [vmem:[%s1175] ss:$8 sm:$0x78] %vm1172, %v1171
    %s1177 = scalar_lea.vmem %s1, 20
    %1178 = vst.msk [vmem:[%s1177] sm:$0x80] %vm1172, %v1171
    %s1179 = scalar_lea.vmem [#allocation0], 32
    %v1180 = vld [vmem:[%s1179] ss:$8 sm:$0x7]
    %s1181 = scalar_lea.vmem [#allocation0], 9
    %v1182 = vld [vmem:[%s1181] ss:$8 sm:$0x78]
    %vm1183 = vcmask 1046531
    %v1184 = vsel %vm1183, %v1182, %v1180
    %s1185 = scalar_lea.vmem [#allocation0], 49
    %v1186 = vld [vmem:[%s1185] sm:$0x80]
    %vm1187 = vcmask 1047559
    %v1188 = vsel %vm1187, %v1186, %v1184
    %1189 = vrot.lane.b32.xlu0 %v1188, 80
    %v1190 = vpop.permute.xlu0 %1189
    %vm1191 = vcmask 130048
    %s1192 = scalar_lea.vmem %s1, 35
    %1193 = vst.msk [vmem:[%s1192] ss:$8 sm:$0x7] %vm1191, %v1190
    %s1194 = scalar_lea.vmem %s1, 515
    %1195 = vst.msk [vmem:[%s1194] ss:$8 sm:$0x78] %vm1191, %v1190
    %s1196 = scalar_lea.vmem %s1, 52
    %1197 = vst.msk [vmem:[%s1196] sm:$0x80] %vm1191, %v1190
    %s1198 = scalar_lea.vmem [#allocation0], 64
    %v1199 = vld [vmem:[%s1198] ss:$8 sm:$0x7]
    %s1200 = scalar_lea.vmem [#allocation0], 41
    %v1201 = vld [vmem:[%s1200] ss:$8 sm:$0x78]
    %vm1202 = vcmask 1046531
    %v1203 = vsel %vm1202, %v1201, %v1199
    %s1204 = scalar_lea.vmem [#allocation0], 81
    %v1205 = vld [vmem:[%s1204] sm:$0x80]
    %vm1206 = vcmask 1047559
    %v1207 = vsel %vm1206, %v1205, %v1203
    %1208 = vrot.lane.b32.xlu0 %v1207, 80
    %v1209 = vpop.permute.xlu0 %1208
    %vm1210 = vcmask 130048
    %s1211 = scalar_lea.vmem %s1, 67
    %1212 = vst.msk [vmem:[%s1211] ss:$8 sm:$0x7] %vm1210, %v1209
    %s1213 = scalar_lea.vmem %s1, 547
    %1214 = vst.msk [vmem:[%s1213] ss:$8 sm:$0x78] %vm1210, %v1209
    %s1215 = scalar_lea.vmem %s1, 84
    %1216 = vst.msk [vmem:[%s1215] sm:$0x80] %vm1210, %v1209
    %s1217 = scalar_lea.vmem [#allocation0], 96
    %v1218 = vld [vmem:[%s1217] ss:$8 sm:$0x7]
    %s1219 = scalar_lea.vmem [#allocation0], 73
    %v1220 = vld [vmem:[%s1219] ss:$8 sm:$0x78]
    %vm1221 = vcmask 1046531
    %v1222 = vsel %vm1221, %v1220, %v1218
    %s1223 = scalar_lea.vmem [#allocation0], 113
    %v1224 = vld [vmem:[%s1223] sm:$0x80]
    %vm1225 = vcmask 1047559
    %v1226 = vsel %vm1225, %v1224, %v1222
    %1227 = vrot.lane.b32.xlu0 %v1226, 80
    %v1228 = vpop.permute.xlu0 %1227
    %vm1229 = vcmask 130048
    %s1230 = scalar_lea.vmem %s1, 99
    %1231 = vst.msk [vmem:[%s1230] ss:$8 sm:$0x7] %vm1229, %v1228
    %s1232 = scalar_lea.vmem %s1, 579
    %1233 = vst.msk [vmem:[%s1232] ss:$8 sm:$0x78] %vm1229, %v1228
    %s1234 = scalar_lea.vmem %s1, 116
    %1235 = vst.msk [vmem:[%s1234] sm:$0x80] %vm1229, %v1228
    %s1236 = scalar_lea.vmem [#allocation0], 128
    %v1237 = vld [vmem:[%s1236] ss:$8 sm:$0x7]
    %s1238 = scalar_lea.vmem [#allocation0], 105
    %v1239 = vld [vmem:[%s1238] ss:$8 sm:$0x78]
    %vm1240 = vcmask 1046531
    %v1241 = vsel %vm1240, %v1239, %v1237
    %s1242 = scalar_lea.vmem [#allocation0], 145
    %v1243 = vld [vmem:[%s1242] sm:$0x80]
    %vm1244 = vcmask 1047559
    %v1245 = vsel %vm1244, %v1243, %v1241
    %1246 = vrot.lane.b32.xlu0 %v1245, 80
    %v1247 = vpop.permute.xlu0 %1246
    %vm1248 = vcmask 130048
    %s1249 = scalar_lea.vmem %s1, 131
    %1250 = vst.msk [vmem:[%s1249] ss:$8 sm:$0x7] %vm1248, %v1247
    %s1251 = scalar_lea.vmem %s1, 611
    %1252 = vst.msk [vmem:[%s1251] ss:$8 sm:$0x78] %vm1248, %v1247
    %s1253 = scalar_lea.vmem %s1, 148
    %1254 = vst.msk [vmem:[%s1253] sm:$0x80] %vm1248, %v1247
    %s1255 = scalar_lea.vmem [#allocation0], 160
    %v1256 = vld [vmem:[%s1255] ss:$8 sm:$0x7]
    %s1257 = scalar_lea.vmem [#allocation0], 137
    %v1258 = vld [vmem:[%s1257] ss:$8 sm:$0x78]
    %vm1259 = vcmask 1046531
    %v1260 = vsel %vm1259, %v1258, %v1256
    %s1261 = scalar_lea.vmem [#allocation0], 177
    %v1262 = vld [vmem:[%s1261] sm:$0x80]
    %vm1263 = vcmask 1047559
    %v1264 = vsel %vm1263, %v1262, %v1260
    %1265 = vrot.lane.b32.xlu0 %v1264, 80
    %v1266 = vpop.permute.xlu0 %1265
    %vm1267 = vcmask 130048
    %s1268 = scalar_lea.vmem %s1, 163
    %1269 = vst.msk [vmem:[%s1268] ss:$8 sm:$0x7] %vm1267, %v1266
    %s1270 = scalar_lea.vmem %s1, 643
    %1271 = vst.msk [vmem:[%s1270] ss:$8 sm:$0x78] %vm1267, %v1266
    %s1272 = scalar_lea.vmem %s1, 180
    %1273 = vst.msk [vmem:[%s1272] sm:$0x80] %vm1267, %v1266
    %s1274 = scalar_lea.vmem [#allocation0], 192
    %v1275 = vld [vmem:[%s1274] ss:$8 sm:$0x7]
    %s1276 = scalar_lea.vmem [#allocation0], 169
    %v1277 = vld [vmem:[%s1276] ss:$8 sm:$0x78]
    %vm1278 = vcmask 1046531
    %v1279 = vsel %vm1278, %v1277, %v1275
    %s1280 = scalar_lea.vmem [#allocation0], 209
    %v1281 = vld [vmem:[%s1280] sm:$0x80]
    %vm1282 = vcmask 1047559
    %v1283 = vsel %vm1282, %v1281, %v1279
    %1284 = vrot.lane.b32.xlu0 %v1283, 80
    %v1285 = vpop.permute.xlu0 %1284
    %vm1286 = vcmask 130048
    %s1287 = scalar_lea.vmem %s1, 195
    %1288 = vst.msk [vmem:[%s1287] ss:$8 sm:$0x7] %vm1286, %v1285
    %s1289 = scalar_lea.vmem %s1, 675
    %1290 = vst.msk [vmem:[%s1289] ss:$8 sm:$0x78] %vm1286, %v1285
    %s1291 = scalar_lea.vmem %s1, 212
    %1292 = vst.msk [vmem:[%s1291] sm:$0x80] %vm1286, %v1285
    %s1293 = scalar_lea.vmem [#allocation0], 224
    %v1294 = vld [vmem:[%s1293] ss:$8 sm:$0x7]
    %s1295 = scalar_lea.vmem [#allocation0], 201
    %v1296 = vld [vmem:[%s1295] ss:$8 sm:$0x78]
    %vm1297 = vcmask 1046531
    %v1298 = vsel %vm1297, %v1296, %v1294
    %s1299 = scalar_lea.vmem [#allocation0], 241
    %v1300 = vld [vmem:[%s1299] sm:$0x80]
    %vm1301 = vcmask 1047559
    %v1302 = vsel %vm1301, %v1300, %v1298
    %1303 = vrot.lane.b32.xlu0 %v1302, 80
    %v1304 = vpop.permute.xlu0 %1303
    %vm1305 = vcmask 130048
    %s1306 = scalar_lea.vmem %s1, 227
    %1307 = vst.msk [vmem:[%s1306] ss:$8 sm:$0x7] %vm1305, %v1304
    %s1308 = scalar_lea.vmem %s1, 707
    %1309 = vst.msk [vmem:[%s1308] ss:$8 sm:$0x78] %vm1305, %v1304
    %s1310 = scalar_lea.vmem %s1, 244
    %1311 = vst.msk [vmem:[%s1310] sm:$0x80] %vm1305, %v1304
    %s1312 = scalar_lea.vmem [#allocation0], 256
    %v1313 = vld [vmem:[%s1312] ss:$8 sm:$0x7]
    %s1314 = scalar_lea.vmem [#allocation0], 233
    %v1315 = vld [vmem:[%s1314] ss:$8 sm:$0x78]
    %vm1316 = vcmask 1046531
    %v1317 = vsel %vm1316, %v1315, %v1313
    %s1318 = scalar_lea.vmem [#allocation0], 273
    %v1319 = vld [vmem:[%s1318] sm:$0x80]
    %vm1320 = vcmask 1047559
    %v1321 = vsel %vm1320, %v1319, %v1317
    %1322 = vrot.lane.b32.xlu0 %v1321, 80
    %v1323 = vpop.permute.xlu0 %1322
    %vm1324 = vcmask 130048
    %s1325 = scalar_lea.vmem %s1, 259
    %1326 = vst.msk [vmem:[%s1325] ss:$8 sm:$0x7] %vm1324, %v1323
    %s1327 = scalar_lea.vmem %s1, 739
    %1328 = vst.msk [vmem:[%s1327] ss:$8 sm:$0x78] %vm1324, %v1323
    %s1329 = scalar_lea.vmem %s1, 276
    %1330 = vst.msk [vmem:[%s1329] sm:$0x80] %vm1324, %v1323
    %s1331 = scalar_lea.vmem [#allocation0], 288
    %v1332 = vld [vmem:[%s1331] ss:$8 sm:$0x7]
    %s1333 = scalar_lea.vmem [#allocation0], 265
    %v1334 = vld [vmem:[%s1333] ss:$8 sm:$0x78]
    %vm1335 = vcmask 1046531
    %v1336 = vsel %vm1335, %v1334, %v1332
    %s1337 = scalar_lea.vmem [#allocation0], 305
    %v1338 = vld [vmem:[%s1337] sm:$0x80]
    %vm1339 = vcmask 1047559
    %v1340 = vsel %vm1339, %v1338, %v1336
    %1341 = vrot.lane.b32.xlu0 %v1340, 80
    %v1342 = vpop.permute.xlu0 %1341
    %vm1343 = vcmask 130048
    %s1344 = scalar_lea.vmem %s1, 291
    %1345 = vst.msk [vmem:[%s1344] ss:$8 sm:$0x7] %vm1343, %v1342
    %s1346 = scalar_lea.vmem %s1, 771
    %1347 = vst.msk [vmem:[%s1346] ss:$8 sm:$0x78] %vm1343, %v1342
    %s1348 = scalar_lea.vmem %s1, 308
    %1349 = vst.msk [vmem:[%s1348] sm:$0x80] %vm1343, %v1342
    %s1350 = scalar_lea.vmem [#allocation0], 320
    %v1351 = vld [vmem:[%s1350] ss:$8 sm:$0x7]
    %s1352 = scalar_lea.vmem [#allocation0], 297
    %v1353 = vld [vmem:[%s1352] ss:$8 sm:$0x78]
    %vm1354 = vcmask 1046531
    %v1355 = vsel %vm1354, %v1353, %v1351
    %s1356 = scalar_lea.vmem [#allocation0], 337
    %v1357 = vld [vmem:[%s1356] sm:$0x80]
    %vm1358 = vcmask 1047559
    %v1359 = vsel %vm1358, %v1357, %v1355
    %1360 = vrot.lane.b32.xlu0 %v1359, 80
    %v1361 = vpop.permute.xlu0 %1360
    %vm1362 = vcmask 130048
    %s1363 = scalar_lea.vmem %s1, 323
    %1364 = vst.msk [vmem:[%s1363] ss:$8 sm:$0x7] %vm1362, %v1361
    %s1365 = scalar_lea.vmem %s1, 803
    %1366 = vst.msk [vmem:[%s1365] ss:$8 sm:$0x78] %vm1362, %v1361
    %s1367 = scalar_lea.vmem %s1, 340
    %1368 = vst.msk [vmem:[%s1367] sm:$0x80] %vm1362, %v1361
    %s1369 = scalar_lea.vmem [#allocation0], 352
    %v1370 = vld [vmem:[%s1369] ss:$8 sm:$0x7]
    %s1371 = scalar_lea.vmem [#allocation0], 329
    %v1372 = vld [vmem:[%s1371] ss:$8 sm:$0x78]
    %vm1373 = vcmask 1046531
    %v1374 = vsel %vm1373, %v1372, %v1370
    %s1375 = scalar_lea.vmem [#allocation0], 369
    %v1376 = vld [vmem:[%s1375] sm:$0x80]
    %vm1377 = vcmask 1047559
    %v1378 = vsel %vm1377, %v1376, %v1374
    %1379 = vrot.lane.b32.xlu0 %v1378, 80
    %v1380 = vpop.permute.xlu0 %1379
    %vm1381 = vcmask 130048
    %s1382 = scalar_lea.vmem %s1, 355
    %1383 = vst.msk [vmem:[%s1382] ss:$8 sm:$0x7] %vm1381, %v1380
    %s1384 = scalar_lea.vmem %s1, 835
    %1385 = vst.msk [vmem:[%s1384] ss:$8 sm:$0x78] %vm1381, %v1380
    %s1386 = scalar_lea.vmem %s1, 372
    %1387 = vst.msk [vmem:[%s1386] sm:$0x80] %vm1381, %v1380
    %s1388 = scalar_lea.vmem [#allocation0], 384
    %v1389 = vld [vmem:[%s1388] ss:$8 sm:$0x7]
    %s1390 = scalar_lea.vmem [#allocation0], 361
    %v1391 = vld [vmem:[%s1390] ss:$8 sm:$0x78]
    %vm1392 = vcmask 1046531
    %v1393 = vsel %vm1392, %v1391, %v1389
    %s1394 = scalar_lea.vmem [#allocation0], 401
    %v1395 = vld [vmem:[%s1394] sm:$0x80]
    %vm1396 = vcmask 1047559
    %v1397 = vsel %vm1396, %v1395, %v1393
    %1398 = vrot.lane.b32.xlu0 %v1397, 80
    %v1399 = vpop.permute.xlu0 %1398
    %vm1400 = vcmask 130048
    %s1401 = scalar_lea.vmem %s1, 387
    %1402 = vst.msk [vmem:[%s1401] ss:$8 sm:$0x7] %vm1400, %v1399
    %s1403 = scalar_lea.vmem %s1, 867
    %1404 = vst.msk [vmem:[%s1403] ss:$8 sm:$0x78] %vm1400, %v1399
    %s1405 = scalar_lea.vmem %s1, 404
    %1406 = vst.msk [vmem:[%s1405] sm:$0x80] %vm1400, %v1399
    %s1407 = scalar_lea.vmem [#allocation0], 416
    %v1408 = vld [vmem:[%s1407] ss:$8 sm:$0x7]
    %s1409 = scalar_lea.vmem [#allocation0], 393
    %v1410 = vld [vmem:[%s1409] ss:$8 sm:$0x78]
    %vm1411 = vcmask 1046531
    %v1412 = vsel %vm1411, %v1410, %v1408
    %s1413 = scalar_lea.vmem [#allocation0], 433
    %v1414 = vld [vmem:[%s1413] sm:$0x80]
    %vm1415 = vcmask 1047559
    %v1416 = vsel %vm1415, %v1414, %v1412
    %1417 = vrot.lane.b32.xlu0 %v1416, 80
    %v1418 = vpop.permute.xlu0 %1417
    %vm1419 = vcmask 130048
    %s1420 = scalar_lea.vmem %s1, 419
    %1421 = vst.msk [vmem:[%s1420] ss:$8 sm:$0x7] %vm1419, %v1418
    %s1422 = scalar_lea.vmem %s1, 899
    %1423 = vst.msk [vmem:[%s1422] ss:$8 sm:$0x78] %vm1419, %v1418
    %s1424 = scalar_lea.vmem %s1, 436
    %1425 = vst.msk [vmem:[%s1424] sm:$0x80] %vm1419, %v1418
    %s1426 = scalar_lea.vmem [#allocation0], 448
    %v1427 = vld [vmem:[%s1426] ss:$8 sm:$0x7]
    %s1428 = scalar_lea.vmem [#allocation0], 425
    %v1429 = vld [vmem:[%s1428] ss:$8 sm:$0x78]
    %vm1430 = vcmask 1046531
    %v1431 = vsel %vm1430, %v1429, %v1427
    %s1432 = scalar_lea.vmem [#allocation0], 465
    %v1433 = vld [vmem:[%s1432] sm:$0x80]
    %vm1434 = vcmask 1047559
    %v1435 = vsel %vm1434, %v1433, %v1431
    %1436 = vrot.lane.b32.xlu0 %v1435, 80
    %v1437 = vpop.permute.xlu0 %1436
    %vm1438 = vcmask 130048
    %s1439 = scalar_lea.vmem %s1, 451
    %1440 = vst.msk [vmem:[%s1439] ss:$8 sm:$0x7] %vm1438, %v1437
    %s1441 = scalar_lea.vmem %s1, 931
    %1442 = vst.msk [vmem:[%s1441] ss:$8 sm:$0x78] %vm1438, %v1437
    %s1443 = scalar_lea.vmem %s1, 468
    %1444 = vst.msk [vmem:[%s1443] sm:$0x80] %vm1438, %v1437
    %s1445 = scalar_lea.vmem [#allocation0], 480
    %v1446 = vld [vmem:[%s1445] ss:$8 sm:$0x7]
    %s1447 = scalar_lea.vmem [#allocation0], 457
    %v1448 = vld [vmem:[%s1447] ss:$8 sm:$0x38]
    %vm1449 = vcmask 1045507
    %v1450 = vsel %vm1449, %v1448, %v1446
    %1451 = vrot.lane.b32.xlu0 %v1450, 80
    %v1452 = vpop.permute.xlu0 %1451
    %vm1453 = vcmask 130048
    %s1454 = scalar_lea.vmem %s1, 483
    %1455 = vst.msk [vmem:[%s1454] ss:$8 sm:$0x7] %vm1453, %v1452
    %s1456 = scalar_lea.vmem %s1, 963
    %1457 = vst.msk [vmem:[%s1456] ss:$8 sm:$0x38] %vm1453, %v1452
    %v1458 = vld [vmem:[#allocation0] ss:$8 sm:$0x7]
    %s1459 = scalar_lea.vmem [#allocation0], 4294967273
    %v1460 = vld [vmem:[%s1459] ss:$8 sm:$0x78]
    %vm1461 = vcmask 1046531
    %v1462 = vsel %vm1461, %v1460, %v1458
    %s1463 = scalar_lea.vmem [#allocation0], 17
    %v1464 = vld [vmem:[%s1463] sm:$0x80]
    %vm1465 = vcmask 1047559
    %v1466 = vsel %vm1465, %v1464, %v1462
    %1467 = vrot.lane.b32.xlu0 %v1466, 64
    %v1468 = vpop.permute.xlu0 %1467
    %vm1469 = vcmask 130048
    %s1470 = scalar_lea.vmem %s1, 4
    %1471 = vst.msk [vmem:[%s1470] ss:$8 sm:$0x7] %vm1469, %v1468
    %s1472 = scalar_lea.vmem %s1, 484
    %1473 = vst.msk [vmem:[%s1472] ss:$8 sm:$0x78] %vm1469, %v1468
    %s1474 = scalar_lea.vmem %s1, 21
    %1475 = vst.msk [vmem:[%s1474] sm:$0x80] %vm1469, %v1468
    %s1476 = scalar_lea.vmem [#allocation0], 32
    %v1477 = vld [vmem:[%s1476] ss:$8 sm:$0x7]
    %s1478 = scalar_lea.vmem [#allocation0], 9
    %v1479 = vld [vmem:[%s1478] ss:$8 sm:$0x78]
    %vm1480 = vcmask 1046531
    %v1481 = vsel %vm1480, %v1479, %v1477
    %s1482 = scalar_lea.vmem [#allocation0], 49
    %v1483 = vld [vmem:[%s1482] sm:$0x80]
    %vm1484 = vcmask 1047559
    %v1485 = vsel %vm1484, %v1483, %v1481
    %1486 = vrot.lane.b32.xlu0 %v1485, 64
    %v1487 = vpop.permute.xlu0 %1486
    %vm1488 = vcmask 130048
    %s1489 = scalar_lea.vmem %s1, 36
    %1490 = vst.msk [vmem:[%s1489] ss:$8 sm:$0x7] %vm1488, %v1487
    %s1491 = scalar_lea.vmem %s1, 516
    %1492 = vst.msk [vmem:[%s1491] ss:$8 sm:$0x78] %vm1488, %v1487
    %s1493 = scalar_lea.vmem %s1, 53
    %1494 = vst.msk [vmem:[%s1493] sm:$0x80] %vm1488, %v1487
    %s1495 = scalar_lea.vmem [#allocation0], 64
    %v1496 = vld [vmem:[%s1495] ss:$8 sm:$0x7]
    %s1497 = scalar_lea.vmem [#allocation0], 41
    %v1498 = vld [vmem:[%s1497] ss:$8 sm:$0x78]
    %vm1499 = vcmask 1046531
    %v1500 = vsel %vm1499, %v1498, %v1496
    %s1501 = scalar_lea.vmem [#allocation0], 81
    %v1502 = vld [vmem:[%s1501] sm:$0x80]
    %vm1503 = vcmask 1047559
    %v1504 = vsel %vm1503, %v1502, %v1500
    %1505 = vrot.lane.b32.xlu0 %v1504, 64
    %v1506 = vpop.permute.xlu0 %1505
    %vm1507 = vcmask 130048
    %s1508 = scalar_lea.vmem %s1, 68
    %1509 = vst.msk [vmem:[%s1508] ss:$8 sm:$0x7] %vm1507, %v1506
    %s1510 = scalar_lea.vmem %s1, 548
    %1511 = vst.msk [vmem:[%s1510] ss:$8 sm:$0x78] %vm1507, %v1506
    %s1512 = scalar_lea.vmem %s1, 85
    %1513 = vst.msk [vmem:[%s1512] sm:$0x80] %vm1507, %v1506
    %s1514 = scalar_lea.vmem [#allocation0], 96
    %v1515 = vld [vmem:[%s1514] ss:$8 sm:$0x7]
    %s1516 = scalar_lea.vmem [#allocation0], 73
    %v1517 = vld [vmem:[%s1516] ss:$8 sm:$0x78]
    %vm1518 = vcmask 1046531
    %v1519 = vsel %vm1518, %v1517, %v1515
    %s1520 = scalar_lea.vmem [#allocation0], 113
    %v1521 = vld [vmem:[%s1520] sm:$0x80]
    %vm1522 = vcmask 1047559
    %v1523 = vsel %vm1522, %v1521, %v1519
    %1524 = vrot.lane.b32.xlu0 %v1523, 64
    %v1525 = vpop.permute.xlu0 %1524
    %vm1526 = vcmask 130048
    %s1527 = scalar_lea.vmem %s1, 100
    %1528 = vst.msk [vmem:[%s1527] ss:$8 sm:$0x7] %vm1526, %v1525
    %s1529 = scalar_lea.vmem %s1, 580
    %1530 = vst.msk [vmem:[%s1529] ss:$8 sm:$0x78] %vm1526, %v1525
    %s1531 = scalar_lea.vmem %s1, 117
    %1532 = vst.msk [vmem:[%s1531] sm:$0x80] %vm1526, %v1525
    %s1533 = scalar_lea.vmem [#allocation0], 128
    %v1534 = vld [vmem:[%s1533] ss:$8 sm:$0x7]
    %s1535 = scalar_lea.vmem [#allocation0], 105
    %v1536 = vld [vmem:[%s1535] ss:$8 sm:$0x78]
    %vm1537 = vcmask 1046531
    %v1538 = vsel %vm1537, %v1536, %v1534
    %s1539 = scalar_lea.vmem [#allocation0], 145
    %v1540 = vld [vmem:[%s1539] sm:$0x80]
    %vm1541 = vcmask 1047559
    %v1542 = vsel %vm1541, %v1540, %v1538
    %1543 = vrot.lane.b32.xlu0 %v1542, 64
    %v1544 = vpop.permute.xlu0 %1543
    %vm1545 = vcmask 130048
    %s1546 = scalar_lea.vmem %s1, 132
    %1547 = vst.msk [vmem:[%s1546] ss:$8 sm:$0x7] %vm1545, %v1544
    %s1548 = scalar_lea.vmem %s1, 612
    %1549 = vst.msk [vmem:[%s1548] ss:$8 sm:$0x78] %vm1545, %v1544
    %s1550 = scalar_lea.vmem %s1, 149
    %1551 = vst.msk [vmem:[%s1550] sm:$0x80] %vm1545, %v1544
    %s1552 = scalar_lea.vmem [#allocation0], 160
    %v1553 = vld [vmem:[%s1552] ss:$8 sm:$0x7]
    %s1554 = scalar_lea.vmem [#allocation0], 137
    %v1555 = vld [vmem:[%s1554] ss:$8 sm:$0x78]
    %vm1556 = vcmask 1046531
    %v1557 = vsel %vm1556, %v1555, %v1553
    %s1558 = scalar_lea.vmem [#allocation0], 177
    %v1559 = vld [vmem:[%s1558] sm:$0x80]
    %vm1560 = vcmask 1047559
    %v1561 = vsel %vm1560, %v1559, %v1557
    %1562 = vrot.lane.b32.xlu0 %v1561, 64
    %v1563 = vpop.permute.xlu0 %1562
    %vm1564 = vcmask 130048
    %s1565 = scalar_lea.vmem %s1, 164
    %1566 = vst.msk [vmem:[%s1565] ss:$8 sm:$0x7] %vm1564, %v1563
    %s1567 = scalar_lea.vmem %s1, 644
    %1568 = vst.msk [vmem:[%s1567] ss:$8 sm:$0x78] %vm1564, %v1563
    %s1569 = scalar_lea.vmem %s1, 181
    %1570 = vst.msk [vmem:[%s1569] sm:$0x80] %vm1564, %v1563
    %s1571 = scalar_lea.vmem [#allocation0], 192
    %v1572 = vld [vmem:[%s1571] ss:$8 sm:$0x7]
    %s1573 = scalar_lea.vmem [#allocation0], 169
    %v1574 = vld [vmem:[%s1573] ss:$8 sm:$0x78]
    %vm1575 = vcmask 1046531
    %v1576 = vsel %vm1575, %v1574, %v1572
    %s1577 = scalar_lea.vmem [#allocation0], 209
    %v1578 = vld [vmem:[%s1577] sm:$0x80]
    %vm1579 = vcmask 1047559
    %v1580 = vsel %vm1579, %v1578, %v1576
    %1581 = vrot.lane.b32.xlu0 %v1580, 64
    %v1582 = vpop.permute.xlu0 %1581
    %vm1583 = vcmask 130048
    %s1584 = scalar_lea.vmem %s1, 196
    %1585 = vst.msk [vmem:[%s1584] ss:$8 sm:$0x7] %vm1583, %v1582
    %s1586 = scalar_lea.vmem %s1, 676
    %1587 = vst.msk [vmem:[%s1586] ss:$8 sm:$0x78] %vm1583, %v1582
    %s1588 = scalar_lea.vmem %s1, 213
    %1589 = vst.msk [vmem:[%s1588] sm:$0x80] %vm1583, %v1582
    %s1590 = scalar_lea.vmem [#allocation0], 224
    %v1591 = vld [vmem:[%s1590] ss:$8 sm:$0x7]
    %s1592 = scalar_lea.vmem [#allocation0], 201
    %v1593 = vld [vmem:[%s1592] ss:$8 sm:$0x78]
    %vm1594 = vcmask 1046531
    %v1595 = vsel %vm1594, %v1593, %v1591
    %s1596 = scalar_lea.vmem [#allocation0], 241
    %v1597 = vld [vmem:[%s1596] sm:$0x80]
    %vm1598 = vcmask 1047559
    %v1599 = vsel %vm1598, %v1597, %v1595
    %1600 = vrot.lane.b32.xlu0 %v1599, 64
    %v1601 = vpop.permute.xlu0 %1600
    %vm1602 = vcmask 130048
    %s1603 = scalar_lea.vmem %s1, 228
    %1604 = vst.msk [vmem:[%s1603] ss:$8 sm:$0x7] %vm1602, %v1601
    %s1605 = scalar_lea.vmem %s1, 708
    %1606 = vst.msk [vmem:[%s1605] ss:$8 sm:$0x78] %vm1602, %v1601
    %s1607 = scalar_lea.vmem %s1, 245
    %1608 = vst.msk [vmem:[%s1607] sm:$0x80] %vm1602, %v1601
    %s1609 = scalar_lea.vmem [#allocation0], 256
    %v1610 = vld [vmem:[%s1609] ss:$8 sm:$0x7]
    %s1611 = scalar_lea.vmem [#allocation0], 233
    %v1612 = vld [vmem:[%s1611] ss:$8 sm:$0x78]
    %vm1613 = vcmask 1046531
    %v1614 = vsel %vm1613, %v1612, %v1610
    %s1615 = scalar_lea.vmem [#allocation0], 273
    %v1616 = vld [vmem:[%s1615] sm:$0x80]
    %vm1617 = vcmask 1047559
    %v1618 = vsel %vm1617, %v1616, %v1614
    %1619 = vrot.lane.b32.xlu0 %v1618, 64
    %v1620 = vpop.permute.xlu0 %1619
    %vm1621 = vcmask 130048
    %s1622 = scalar_lea.vmem %s1, 260
    %1623 = vst.msk [vmem:[%s1622] ss:$8 sm:$0x7] %vm1621, %v1620
    %s1624 = scalar_lea.vmem %s1, 740
    %1625 = vst.msk [vmem:[%s1624] ss:$8 sm:$0x78] %vm1621, %v1620
    %s1626 = scalar_lea.vmem %s1, 277
    %1627 = vst.msk [vmem:[%s1626] sm:$0x80] %vm1621, %v1620
    %s1628 = scalar_lea.vmem [#allocation0], 288
    %v1629 = vld [vmem:[%s1628] ss:$8 sm:$0x7]
    %s1630 = scalar_lea.vmem [#allocation0], 265
    %v1631 = vld [vmem:[%s1630] ss:$8 sm:$0x78]
    %vm1632 = vcmask 1046531
    %v1633 = vsel %vm1632, %v1631, %v1629
    %s1634 = scalar_lea.vmem [#allocation0], 305
    %v1635 = vld [vmem:[%s1634] sm:$0x80]
    %vm1636 = vcmask 1047559
    %v1637 = vsel %vm1636, %v1635, %v1633
    %1638 = vrot.lane.b32.xlu0 %v1637, 64
    %v1639 = vpop.permute.xlu0 %1638
    %vm1640 = vcmask 130048
    %s1641 = scalar_lea.vmem %s1, 292
    %1642 = vst.msk [vmem:[%s1641] ss:$8 sm:$0x7] %vm1640, %v1639
    %s1643 = scalar_lea.vmem %s1, 772
    %1644 = vst.msk [vmem:[%s1643] ss:$8 sm:$0x78] %vm1640, %v1639
    %s1645 = scalar_lea.vmem %s1, 309
    %1646 = vst.msk [vmem:[%s1645] sm:$0x80] %vm1640, %v1639
    %s1647 = scalar_lea.vmem [#allocation0], 320
    %v1648 = vld [vmem:[%s1647] ss:$8 sm:$0x7]
    %s1649 = scalar_lea.vmem [#allocation0], 297
    %v1650 = vld [vmem:[%s1649] ss:$8 sm:$0x78]
    %vm1651 = vcmask 1046531
    %v1652 = vsel %vm1651, %v1650, %v1648
    %s1653 = scalar_lea.vmem [#allocation0], 337
    %v1654 = vld [vmem:[%s1653] sm:$0x80]
    %vm1655 = vcmask 1047559
    %v1656 = vsel %vm1655, %v1654, %v1652
    %1657 = vrot.lane.b32.xlu0 %v1656, 64
    %v1658 = vpop.permute.xlu0 %1657
    %vm1659 = vcmask 130048
    %s1660 = scalar_lea.vmem %s1, 324
    %1661 = vst.msk [vmem:[%s1660] ss:$8 sm:$0x7] %vm1659, %v1658
    %s1662 = scalar_lea.vmem %s1, 804
    %1663 = vst.msk [vmem:[%s1662] ss:$8 sm:$0x78] %vm1659, %v1658
    %s1664 = scalar_lea.vmem %s1, 341
    %1665 = vst.msk [vmem:[%s1664] sm:$0x80] %vm1659, %v1658
    %s1666 = scalar_lea.vmem [#allocation0], 352
    %v1667 = vld [vmem:[%s1666] ss:$8 sm:$0x7]
    %s1668 = scalar_lea.vmem [#allocation0], 329
    %v1669 = vld [vmem:[%s1668] ss:$8 sm:$0x78]
    %vm1670 = vcmask 1046531
    %v1671 = vsel %vm1670, %v1669, %v1667
    %s1672 = scalar_lea.vmem [#allocation0], 369
    %v1673 = vld [vmem:[%s1672] sm:$0x80]
    %vm1674 = vcmask 1047559
    %v1675 = vsel %vm1674, %v1673, %v1671
    %1676 = vrot.lane.b32.xlu0 %v1675, 64
    %v1677 = vpop.permute.xlu0 %1676
    %vm1678 = vcmask 130048
    %s1679 = scalar_lea.vmem %s1, 356
    %1680 = vst.msk [vmem:[%s1679] ss:$8 sm:$0x7] %vm1678, %v1677
    %s1681 = scalar_lea.vmem %s1, 836
    %1682 = vst.msk [vmem:[%s1681] ss:$8 sm:$0x78] %vm1678, %v1677
    %s1683 = scalar_lea.vmem %s1, 373
    %1684 = vst.msk [vmem:[%s1683] sm:$0x80] %vm1678, %v1677
    %s1685 = scalar_lea.vmem [#allocation0], 384
    %v1686 = vld [vmem:[%s1685] ss:$8 sm:$0x7]
    %s1687 = scalar_lea.vmem [#allocation0], 361
    %v1688 = vld [vmem:[%s1687] ss:$8 sm:$0x78]
    %vm1689 = vcmask 1046531
    %v1690 = vsel %vm1689, %v1688, %v1686
    %s1691 = scalar_lea.vmem [#allocation0], 401
    %v1692 = vld [vmem:[%s1691] sm:$0x80]
    %vm1693 = vcmask 1047559
    %v1694 = vsel %vm1693, %v1692, %v1690
    %1695 = vrot.lane.b32.xlu0 %v1694, 64
    %v1696 = vpop.permute.xlu0 %1695
    %vm1697 = vcmask 130048
    %s1698 = scalar_lea.vmem %s1, 388
    %1699 = vst.msk [vmem:[%s1698] ss:$8 sm:$0x7] %vm1697, %v1696
    %s1700 = scalar_lea.vmem %s1, 868
    %1701 = vst.msk [vmem:[%s1700] ss:$8 sm:$0x78] %vm1697, %v1696
    %s1702 = scalar_lea.vmem %s1, 405
    %1703 = vst.msk [vmem:[%s1702] sm:$0x80] %vm1697, %v1696
    %s1704 = scalar_lea.vmem [#allocation0], 416
    %v1705 = vld [vmem:[%s1704] ss:$8 sm:$0x7]
    %s1706 = scalar_lea.vmem [#allocation0], 393
    %v1707 = vld [vmem:[%s1706] ss:$8 sm:$0x78]
    %vm1708 = vcmask 1046531
    %v1709 = vsel %vm1708, %v1707, %v1705
    %s1710 = scalar_lea.vmem [#allocation0], 433
    %v1711 = vld [vmem:[%s1710] sm:$0x80]
    %vm1712 = vcmask 1047559
    %v1713 = vsel %vm1712, %v1711, %v1709
    %1714 = vrot.lane.b32.xlu0 %v1713, 64
    %v1715 = vpop.permute.xlu0 %1714
    %vm1716 = vcmask 130048
    %s1717 = scalar_lea.vmem %s1, 420
    %1718 = vst.msk [vmem:[%s1717] ss:$8 sm:$0x7] %vm1716, %v1715
    %s1719 = scalar_lea.vmem %s1, 900
    %1720 = vst.msk [vmem:[%s1719] ss:$8 sm:$0x78] %vm1716, %v1715
    %s1721 = scalar_lea.vmem %s1, 437
    %1722 = vst.msk [vmem:[%s1721] sm:$0x80] %vm1716, %v1715
    %s1723 = scalar_lea.vmem [#allocation0], 448
    %v1724 = vld [vmem:[%s1723] ss:$8 sm:$0x7]
    %s1725 = scalar_lea.vmem [#allocation0], 425
    %v1726 = vld [vmem:[%s1725] ss:$8 sm:$0x78]
    %vm1727 = vcmask 1046531
    %v1728 = vsel %vm1727, %v1726, %v1724
    %s1729 = scalar_lea.vmem [#allocation0], 465
    %v1730 = vld [vmem:[%s1729] sm:$0x80]
    %vm1731 = vcmask 1047559
    %v1732 = vsel %vm1731, %v1730, %v1728
    %1733 = vrot.lane.b32.xlu0 %v1732, 64
    %v1734 = vpop.permute.xlu0 %1733
    %vm1735 = vcmask 130048
    %s1736 = scalar_lea.vmem %s1, 452
    %1737 = vst.msk [vmem:[%s1736] ss:$8 sm:$0x7] %vm1735, %v1734
    %s1738 = scalar_lea.vmem %s1, 932
    %1739 = vst.msk [vmem:[%s1738] ss:$8 sm:$0x78] %vm1735, %v1734
    %s1740 = scalar_lea.vmem %s1, 469
    %1741 = vst.msk [vmem:[%s1740] sm:$0x80] %vm1735, %v1734
    %s1742 = scalar_lea.vmem [#allocation0], 480
    %v1743 = vld.sshfl [vmem:[%s1742] sm:$0xff pattern:$0x99999180]
    %1744 = vrot.lane.b32.xlu0 %v1743, 64
    %v1745 = vpop.permute.xlu0 %1744
    %vm1746 = vcmask 130048
    %s1747 = scalar_lea.vmem %s1, 484
    %1748 = vst.msk [vmem:[%s1747] ss:$8 sm:$0x3] %vm1746, %v1745
    %s1749 = scalar_lea.vmem %s1, 972
    %1750 = vst.msk [vmem:[%s1749] ss:$8 sm:$0xc] %vm1746, %v1745
    %v1751 = vld [vmem:[#allocation0] ss:$8 sm:$0x7]
    %s1752 = scalar_lea.vmem [#allocation0], 4294967273
    %v1753 = vld [vmem:[%s1752] ss:$8 sm:$0x78]
    %vm1754 = vcmask 1046531
    %v1755 = vsel %vm1754, %v1753, %v1751
    %s1756 = scalar_lea.vmem [#allocation0], 17
    %v1757 = vld [vmem:[%s1756] sm:$0x80]
    %vm1758 = vcmask 1047559
    %v1759 = vsel %vm1758, %v1757, %v1755
    %1760 = vrot.lane.b32.xlu0 %v1759, 48
    %v1761 = vpop.permute.xlu0 %1760
    %vm1762 = vcmask 130048
    %s1763 = scalar_lea.vmem %s1, 5
    %1764 = vst.msk [vmem:[%s1763] ss:$8 sm:$0x7] %vm1762, %v1761
    %s1765 = scalar_lea.vmem %s1, 485
    %1766 = vst.msk [vmem:[%s1765] ss:$8 sm:$0x78] %vm1762, %v1761
    %s1767 = scalar_lea.vmem %s1, 22
    %1768 = vst.msk [vmem:[%s1767] sm:$0x80] %vm1762, %v1761
    %s1769 = scalar_lea.vmem [#allocation0], 32
    %v1770 = vld [vmem:[%s1769] ss:$8 sm:$0x7]
    %s1771 = scalar_lea.vmem [#allocation0], 9
    %v1772 = vld [vmem:[%s1771] ss:$8 sm:$0x78]
    %vm1773 = vcmask 1046531
    %v1774 = vsel %vm1773, %v1772, %v1770
    %s1775 = scalar_lea.vmem [#allocation0], 49
    %v1776 = vld [vmem:[%s1775] sm:$0x80]
    %vm1777 = vcmask 1047559
    %v1778 = vsel %vm1777, %v1776, %v1774
    %1779 = vrot.lane.b32.xlu0 %v1778, 48
    %v1780 = vpop.permute.xlu0 %1779
    %vm1781 = vcmask 130048
    %s1782 = scalar_lea.vmem %s1, 37
    %1783 = vst.msk [vmem:[%s1782] ss:$8 sm:$0x7] %vm1781, %v1780
    %s1784 = scalar_lea.vmem %s1, 517
    %1785 = vst.msk [vmem:[%s1784] ss:$8 sm:$0x78] %vm1781, %v1780
    %s1786 = scalar_lea.vmem %s1, 54
    %1787 = vst.msk [vmem:[%s1786] sm:$0x80] %vm1781, %v1780
    %s1788 = scalar_lea.vmem [#allocation0], 64
    %v1789 = vld [vmem:[%s1788] ss:$8 sm:$0x7]
    %s1790 = scalar_lea.vmem [#allocation0], 41
    %v1791 = vld [vmem:[%s1790] ss:$8 sm:$0x78]
    %vm1792 = vcmask 1046531
    %v1793 = vsel %vm1792, %v1791, %v1789
    %s1794 = scalar_lea.vmem [#allocation0], 81
    %v1795 = vld [vmem:[%s1794] sm:$0x80]
    %vm1796 = vcmask 1047559
    %v1797 = vsel %vm1796, %v1795, %v1793
    %1798 = vrot.lane.b32.xlu0 %v1797, 48
    %v1799 = vpop.permute.xlu0 %1798
    %vm1800 = vcmask 130048
    %s1801 = scalar_lea.vmem %s1, 69
    %1802 = vst.msk [vmem:[%s1801] ss:$8 sm:$0x7] %vm1800, %v1799
    %s1803 = scalar_lea.vmem %s1, 549
    %1804 = vst.msk [vmem:[%s1803] ss:$8 sm:$0x78] %vm1800, %v1799
    %s1805 = scalar_lea.vmem %s1, 86
    %1806 = vst.msk [vmem:[%s1805] sm:$0x80] %vm1800, %v1799
    %s1807 = scalar_lea.vmem [#allocation0], 96
    %v1808 = vld [vmem:[%s1807] ss:$8 sm:$0x7]
    %s1809 = scalar_lea.vmem [#allocation0], 73
    %v1810 = vld [vmem:[%s1809] ss:$8 sm:$0x78]
    %vm1811 = vcmask 1046531
    %v1812 = vsel %vm1811, %v1810, %v1808
    %s1813 = scalar_lea.vmem [#allocation0], 113
    %v1814 = vld [vmem:[%s1813] sm:$0x80]
    %vm1815 = vcmask 1047559
    %v1816 = vsel %vm1815, %v1814, %v1812
    %1817 = vrot.lane.b32.xlu0 %v1816, 48
    %v1818 = vpop.permute.xlu0 %1817
    %vm1819 = vcmask 130048
    %s1820 = scalar_lea.vmem %s1, 101
    %1821 = vst.msk [vmem:[%s1820] ss:$8 sm:$0x7] %vm1819, %v1818
    %s1822 = scalar_lea.vmem %s1, 581
    %1823 = vst.msk [vmem:[%s1822] ss:$8 sm:$0x78] %vm1819, %v1818
    %s1824 = scalar_lea.vmem %s1, 118
    %1825 = vst.msk [vmem:[%s1824] sm:$0x80] %vm1819, %v1818
    %s1826 = scalar_lea.vmem [#allocation0], 128
    %v1827 = vld [vmem:[%s1826] ss:$8 sm:$0x7]
    %s1828 = scalar_lea.vmem [#allocation0], 105
    %v1829 = vld [vmem:[%s1828] ss:$8 sm:$0x78]
    %vm1830 = vcmask 1046531
    %v1831 = vsel %vm1830, %v1829, %v1827
    %s1832 = scalar_lea.vmem [#allocation0], 145
    %v1833 = vld [vmem:[%s1832] sm:$0x80]
    %vm1834 = vcmask 1047559
    %v1835 = vsel %vm1834, %v1833, %v1831
    %1836 = vrot.lane.b32.xlu0 %v1835, 48
    %v1837 = vpop.permute.xlu0 %1836
    %vm1838 = vcmask 130048
    %s1839 = scalar_lea.vmem %s1, 133
    %1840 = vst.msk [vmem:[%s1839] ss:$8 sm:$0x7] %vm1838, %v1837
    %s1841 = scalar_lea.vmem %s1, 613
    %1842 = vst.msk [vmem:[%s1841] ss:$8 sm:$0x78] %vm1838, %v1837
    %s1843 = scalar_lea.vmem %s1, 150
    %1844 = vst.msk [vmem:[%s1843] sm:$0x80] %vm1838, %v1837
    %s1845 = scalar_lea.vmem [#allocation0], 160
    %v1846 = vld [vmem:[%s1845] ss:$8 sm:$0x7]
    %s1847 = scalar_lea.vmem [#allocation0], 137
    %v1848 = vld [vmem:[%s1847] ss:$8 sm:$0x78]
    %vm1849 = vcmask 1046531
    %v1850 = vsel %vm1849, %v1848, %v1846
    %s1851 = scalar_lea.vmem [#allocation0], 177
    %v1852 = vld [vmem:[%s1851] sm:$0x80]
    %vm1853 = vcmask 1047559
    %v1854 = vsel %vm1853, %v1852, %v1850
    %1855 = vrot.lane.b32.xlu0 %v1854, 48
    %v1856 = vpop.permute.xlu0 %1855
    %vm1857 = vcmask 130048
    %s1858 = scalar_lea.vmem %s1, 165
    %1859 = vst.msk [vmem:[%s1858] ss:$8 sm:$0x7] %vm1857, %v1856
    %s1860 = scalar_lea.vmem %s1, 645
    %1861 = vst.msk [vmem:[%s1860] ss:$8 sm:$0x78] %vm1857, %v1856
    %s1862 = scalar_lea.vmem %s1, 182
    %1863 = vst.msk [vmem:[%s1862] sm:$0x80] %vm1857, %v1856
    %s1864 = scalar_lea.vmem [#allocation0], 192
    %v1865 = vld [vmem:[%s1864] ss:$8 sm:$0x7]
    %s1866 = scalar_lea.vmem [#allocation0], 169
    %v1867 = vld [vmem:[%s1866] ss:$8 sm:$0x78]
    %vm1868 = vcmask 1046531
    %v1869 = vsel %vm1868, %v1867, %v1865
    %s1870 = scalar_lea.vmem [#allocation0], 209
    %v1871 = vld [vmem:[%s1870] sm:$0x80]
    %vm1872 = vcmask 1047559
    %v1873 = vsel %vm1872, %v1871, %v1869
    %1874 = vrot.lane.b32.xlu0 %v1873, 48
    %v1875 = vpop.permute.xlu0 %1874
    %vm1876 = vcmask 130048
    %s1877 = scalar_lea.vmem %s1, 197
    %1878 = vst.msk [vmem:[%s1877] ss:$8 sm:$0x7] %vm1876, %v1875
    %s1879 = scalar_lea.vmem %s1, 677
    %1880 = vst.msk [vmem:[%s1879] ss:$8 sm:$0x78] %vm1876, %v1875
    %s1881 = scalar_lea.vmem %s1, 214
    %1882 = vst.msk [vmem:[%s1881] sm:$0x80] %vm1876, %v1875
    %s1883 = scalar_lea.vmem [#allocation0], 224
    %v1884 = vld [vmem:[%s1883] ss:$8 sm:$0x7]
    %s1885 = scalar_lea.vmem [#allocation0], 201
    %v1886 = vld [vmem:[%s1885] ss:$8 sm:$0x78]
    %vm1887 = vcmask 1046531
    %v1888 = vsel %vm1887, %v1886, %v1884
    %s1889 = scalar_lea.vmem [#allocation0], 241
    %v1890 = vld [vmem:[%s1889] sm:$0x80]
    %vm1891 = vcmask 1047559
    %v1892 = vsel %vm1891, %v1890, %v1888
    %1893 = vrot.lane.b32.xlu0 %v1892, 48
    %v1894 = vpop.permute.xlu0 %1893
    %vm1895 = vcmask 130048
    %s1896 = scalar_lea.vmem %s1, 229
    %1897 = vst.msk [vmem:[%s1896] ss:$8 sm:$0x7] %vm1895, %v1894
    %s1898 = scalar_lea.vmem %s1, 709
    %1899 = vst.msk [vmem:[%s1898] ss:$8 sm:$0x78] %vm1895, %v1894
    %s1900 = scalar_lea.vmem %s1, 246
    %1901 = vst.msk [vmem:[%s1900] sm:$0x80] %vm1895, %v1894
    %s1902 = scalar_lea.vmem [#allocation0], 256
    %v1903 = vld [vmem:[%s1902] ss:$8 sm:$0x7]
    %s1904 = scalar_lea.vmem [#allocation0], 233
    %v1905 = vld [vmem:[%s1904] ss:$8 sm:$0x78]
    %vm1906 = vcmask 1046531
    %v1907 = vsel %vm1906, %v1905, %v1903
    %s1908 = scalar_lea.vmem [#allocation0], 273
    %v1909 = vld [vmem:[%s1908] sm:$0x80]
    %vm1910 = vcmask 1047559
    %v1911 = vsel %vm1910, %v1909, %v1907
    %1912 = vrot.lane.b32.xlu0 %v1911, 48
    %v1913 = vpop.permute.xlu0 %1912
    %vm1914 = vcmask 130048
    %s1915 = scalar_lea.vmem %s1, 261
    %1916 = vst.msk [vmem:[%s1915] ss:$8 sm:$0x7] %vm1914, %v1913
    %s1917 = scalar_lea.vmem %s1, 741
    %1918 = vst.msk [vmem:[%s1917] ss:$8 sm:$0x78] %vm1914, %v1913
    %s1919 = scalar_lea.vmem %s1, 278
    %1920 = vst.msk [vmem:[%s1919] sm:$0x80] %vm1914, %v1913
    %s1921 = scalar_lea.vmem [#allocation0], 288
    %v1922 = vld [vmem:[%s1921] ss:$8 sm:$0x7]
    %s1923 = scalar_lea.vmem [#allocation0], 265
    %v1924 = vld [vmem:[%s1923] ss:$8 sm:$0x78]
    %vm1925 = vcmask 1046531
    %v1926 = vsel %vm1925, %v1924, %v1922
    %s1927 = scalar_lea.vmem [#allocation0], 305
    %v1928 = vld [vmem:[%s1927] sm:$0x80]
    %vm1929 = vcmask 1047559
    %v1930 = vsel %vm1929, %v1928, %v1926
    %1931 = vrot.lane.b32.xlu0 %v1930, 48
    %v1932 = vpop.permute.xlu0 %1931
    %vm1933 = vcmask 130048
    %s1934 = scalar_lea.vmem %s1, 293
    %1935 = vst.msk [vmem:[%s1934] ss:$8 sm:$0x7] %vm1933, %v1932
    %s1936 = scalar_lea.vmem %s1, 773
    %1937 = vst.msk [vmem:[%s1936] ss:$8 sm:$0x78] %vm1933, %v1932
    %s1938 = scalar_lea.vmem %s1, 310
    %1939 = vst.msk [vmem:[%s1938] sm:$0x80] %vm1933, %v1932
    %s1940 = scalar_lea.vmem [#allocation0], 320
    %v1941 = vld [vmem:[%s1940] ss:$8 sm:$0x7]
    %s1942 = scalar_lea.vmem [#allocation0], 297
    %v1943 = vld [vmem:[%s1942] ss:$8 sm:$0x78]
    %vm1944 = vcmask 1046531
    %v1945 = vsel %vm1944, %v1943, %v1941
    %s1946 = scalar_lea.vmem [#allocation0], 337
    %v1947 = vld [vmem:[%s1946] sm:$0x80]
    %vm1948 = vcmask 1047559
    %v1949 = vsel %vm1948, %v1947, %v1945
    %1950 = vrot.lane.b32.xlu0 %v1949, 48
    %v1951 = vpop.permute.xlu0 %1950
    %vm1952 = vcmask 130048
    %s1953 = scalar_lea.vmem %s1, 325
    %1954 = vst.msk [vmem:[%s1953] ss:$8 sm:$0x7] %vm1952, %v1951
    %s1955 = scalar_lea.vmem %s1, 805
    %1956 = vst.msk [vmem:[%s1955] ss:$8 sm:$0x78] %vm1952, %v1951
    %s1957 = scalar_lea.vmem %s1, 342
    %1958 = vst.msk [vmem:[%s1957] sm:$0x80] %vm1952, %v1951
    %s1959 = scalar_lea.vmem [#allocation0], 352
    %v1960 = vld [vmem:[%s1959] ss:$8 sm:$0x7]
    %s1961 = scalar_lea.vmem [#allocation0], 329
    %v1962 = vld [vmem:[%s1961] ss:$8 sm:$0x78]
    %vm1963 = vcmask 1046531
    %v1964 = vsel %vm1963, %v1962, %v1960
    %s1965 = scalar_lea.vmem [#allocation0], 369
    %v1966 = vld [vmem:[%s1965] sm:$0x80]
    %vm1967 = vcmask 1047559
    %v1968 = vsel %vm1967, %v1966, %v1964
    %1969 = vrot.lane.b32.xlu0 %v1968, 48
    %v1970 = vpop.permute.xlu0 %1969
    %vm1971 = vcmask 130048
    %s1972 = scalar_lea.vmem %s1, 357
    %1973 = vst.msk [vmem:[%s1972] ss:$8 sm:$0x7] %vm1971, %v1970
    %s1974 = scalar_lea.vmem %s1, 837
    %1975 = vst.msk [vmem:[%s1974] ss:$8 sm:$0x78] %vm1971, %v1970
    %s1976 = scalar_lea.vmem %s1, 374
    %1977 = vst.msk [vmem:[%s1976] sm:$0x80] %vm1971, %v1970
    %s1978 = scalar_lea.vmem [#allocation0], 384
    %v1979 = vld [vmem:[%s1978] ss:$8 sm:$0x7]
    %s1980 = scalar_lea.vmem [#allocation0], 361
    %v1981 = vld [vmem:[%s1980] ss:$8 sm:$0x78]
    %vm1982 = vcmask 1046531
    %v1983 = vsel %vm1982, %v1981, %v1979
    %s1984 = scalar_lea.vmem [#allocation0], 401
    %v1985 = vld [vmem:[%s1984] sm:$0x80]
    %vm1986 = vcmask 1047559
    %v1987 = vsel %vm1986, %v1985, %v1983
    %1988 = vrot.lane.b32.xlu0 %v1987, 48
    %v1989 = vpop.permute.xlu0 %1988
    %vm1990 = vcmask 130048
    %s1991 = scalar_lea.vmem %s1, 389
    %1992 = vst.msk [vmem:[%s1991] ss:$8 sm:$0x7] %vm1990, %v1989
    %s1993 = scalar_lea.vmem %s1, 869
    %1994 = vst.msk [vmem:[%s1993] ss:$8 sm:$0x78] %vm1990, %v1989
    %s1995 = scalar_lea.vmem %s1, 406
    %1996 = vst.msk [vmem:[%s1995] sm:$0x80] %vm1990, %v1989
    %s1997 = scalar_lea.vmem [#allocation0], 416
    %v1998 = vld [vmem:[%s1997] ss:$8 sm:$0x7]
    %s1999 = scalar_lea.vmem [#allocation0], 393
    %v2000 = vld [vmem:[%s1999] ss:$8 sm:$0x78]
    %vm2001 = vcmask 1046531
    %v2002 = vsel %vm2001, %v2000, %v1998
    %s2003 = scalar_lea.vmem [#allocation0], 433
    %v2004 = vld [vmem:[%s2003] sm:$0x80]
    %vm2005 = vcmask 1047559
    %v2006 = vsel %vm2005, %v2004, %v2002
    %2007 = vrot.lane.b32.xlu0 %v2006, 48
    %v2008 = vpop.permute.xlu0 %2007
    %vm2009 = vcmask 130048
    %s2010 = scalar_lea.vmem %s1, 421
    %2011 = vst.msk [vmem:[%s2010] ss:$8 sm:$0x7] %vm2009, %v2008
    %s2012 = scalar_lea.vmem %s1, 901
    %2013 = vst.msk [vmem:[%s2012] ss:$8 sm:$0x78] %vm2009, %v2008
    %s2014 = scalar_lea.vmem %s1, 438
    %2015 = vst.msk [vmem:[%s2014] sm:$0x80] %vm2009, %v2008
    %s2016 = scalar_lea.vmem [#allocation0], 448
    %v2017 = vld [vmem:[%s2016] ss:$8 sm:$0x7]
    %s2018 = scalar_lea.vmem [#allocation0], 425
    %v2019 = vld [vmem:[%s2018] ss:$8 sm:$0x78]
    %vm2020 = vcmask 1046531
    %v2021 = vsel %vm2020, %v2019, %v2017
    %s2022 = scalar_lea.vmem [#allocation0], 465
    %v2023 = vld [vmem:[%s2022] sm:$0x80]
    %vm2024 = vcmask 1047559
    %v2025 = vsel %vm2024, %v2023, %v2021
    %2026 = vrot.lane.b32.xlu0 %v2025, 48
    %v2027 = vpop.permute.xlu0 %2026
    %vm2028 = vcmask 130048
    %s2029 = scalar_lea.vmem %s1, 453
    %2030 = vst.msk [vmem:[%s2029] ss:$8 sm:$0x7] %vm2028, %v2027
    %s2031 = scalar_lea.vmem %s1, 933
    %2032 = vst.msk [vmem:[%s2031] ss:$8 sm:$0x78] %vm2028, %v2027
    %s2033 = scalar_lea.vmem %s1, 470
    %2034 = vst.msk [vmem:[%s2033] sm:$0x80] %vm2028, %v2027
    %s2035 = scalar_lea.vmem [#allocation0], 480
    %v2036 = vld.sshfl [vmem:[%s2035] sm:$0xff pattern:$0x99999180]
    %2037 = vrot.lane.b32.xlu0 %v2036, 48
    %v2038 = vpop.permute.xlu0 %2037
    %vm2039 = vcmask 130048
    %s2040 = scalar_lea.vmem %s1, 485
    %2041 = vst.msk [vmem:[%s2040] ss:$8 sm:$0x3] %vm2039, %v2038
    %s2042 = scalar_lea.vmem %s1, 973
    %2043 = vst.msk [vmem:[%s2042] ss:$8 sm:$0xc] %vm2039, %v2038
    %v2044 = vld [vmem:[#allocation0] ss:$8 sm:$0x7]
    %s2045 = scalar_lea.vmem [#allocation0], 4294967273
    %v2046 = vld [vmem:[%s2045] ss:$8 sm:$0x78]
    %vm2047 = vcmask 1046531
    %v2048 = vsel %vm2047, %v2046, %v2044
    %s2049 = scalar_lea.vmem [#allocation0], 17
    %v2050 = vld [vmem:[%s2049] sm:$0x80]
    %vm2051 = vcmask 1047559
    %v2052 = vsel %vm2051, %v2050, %v2048
    %2053 = vrot.lane.b32.xlu0 %v2052, 32
    %v2054 = vpop.permute.xlu0 %2053
    %vm2055 = vcmask 130048
    %s2056 = scalar_lea.vmem %s1, 6
    %2057 = vst.msk [vmem:[%s2056] ss:$8 sm:$0x7] %vm2055, %v2054
    %s2058 = scalar_lea.vmem %s1, 486
    %2059 = vst.msk [vmem:[%s2058] ss:$8 sm:$0x78] %vm2055, %v2054
    %s2060 = scalar_lea.vmem %s1, 23
    %2061 = vst.msk [vmem:[%s2060] sm:$0x80] %vm2055, %v2054
    %s2062 = scalar_lea.vmem [#allocation0], 32
    %v2063 = vld [vmem:[%s2062] ss:$8 sm:$0x7]
    %s2064 = scalar_lea.vmem [#allocation0], 9
    %v2065 = vld [vmem:[%s2064] ss:$8 sm:$0x78]
    %vm2066 = vcmask 1046531
    %v2067 = vsel %vm2066, %v2065, %v2063
    %s2068 = scalar_lea.vmem [#allocation0], 49
    %v2069 = vld [vmem:[%s2068] sm:$0x80]
    %vm2070 = vcmask 1047559
    %v2071 = vsel %vm2070, %v2069, %v2067
    %2072 = vrot.lane.b32.xlu0 %v2071, 32
    %v2073 = vpop.permute.xlu0 %2072
    %vm2074 = vcmask 130048
    %s2075 = scalar_lea.vmem %s1, 38
    %2076 = vst.msk [vmem:[%s2075] ss:$8 sm:$0x7] %vm2074, %v2073
    %s2077 = scalar_lea.vmem %s1, 518
    %2078 = vst.msk [vmem:[%s2077] ss:$8 sm:$0x78] %vm2074, %v2073
    %s2079 = scalar_lea.vmem %s1, 55
    %2080 = vst.msk [vmem:[%s2079] sm:$0x80] %vm2074, %v2073
    %s2081 = scalar_lea.vmem [#allocation0], 64
    %v2082 = vld [vmem:[%s2081] ss:$8 sm:$0x7]
    %s2083 = scalar_lea.vmem [#allocation0], 41
    %v2084 = vld [vmem:[%s2083] ss:$8 sm:$0x78]
    %vm2085 = vcmask 1046531
    %v2086 = vsel %vm2085, %v2084, %v2082
    %s2087 = scalar_lea.vmem [#allocation0], 81
    %v2088 = vld [vmem:[%s2087] sm:$0x80]
    %vm2089 = vcmask 1047559
    %v2090 = vsel %vm2089, %v2088, %v2086
    %2091 = vrot.lane.b32.xlu0 %v2090, 32
    %v2092 = vpop.permute.xlu0 %2091
    %vm2093 = vcmask 130048
    %s2094 = scalar_lea.vmem %s1, 70
    %2095 = vst.msk [vmem:[%s2094] ss:$8 sm:$0x7] %vm2093, %v2092
    %s2096 = scalar_lea.vmem %s1, 550
    %2097 = vst.msk [vmem:[%s2096] ss:$8 sm:$0x78] %vm2093, %v2092
    %s2098 = scalar_lea.vmem %s1, 87
    %2099 = vst.msk [vmem:[%s2098] sm:$0x80] %vm2093, %v2092
    %s2100 = scalar_lea.vmem [#allocation0], 96
    %v2101 = vld [vmem:[%s2100] ss:$8 sm:$0x7]
    %s2102 = scalar_lea.vmem [#allocation0], 73
    %v2103 = vld [vmem:[%s2102] ss:$8 sm:$0x78]
    %vm2104 = vcmask 1046531
    %v2105 = vsel %vm2104, %v2103, %v2101
    %s2106 = scalar_lea.vmem [#allocation0], 113
    %v2107 = vld [vmem:[%s2106] sm:$0x80]
    %vm2108 = vcmask 1047559
    %v2109 = vsel %vm2108, %v2107, %v2105
    %2110 = vrot.lane.b32.xlu0 %v2109, 32
    %v2111 = vpop.permute.xlu0 %2110
    %vm2112 = vcmask 130048
    %s2113 = scalar_lea.vmem %s1, 102
    %2114 = vst.msk [vmem:[%s2113] ss:$8 sm:$0x7] %vm2112, %v2111
    %s2115 = scalar_lea.vmem %s1, 582
    %2116 = vst.msk [vmem:[%s2115] ss:$8 sm:$0x78] %vm2112, %v2111
    %s2117 = scalar_lea.vmem %s1, 119
    %2118 = vst.msk [vmem:[%s2117] sm:$0x80] %vm2112, %v2111
    %s2119 = scalar_lea.vmem [#allocation0], 128
    %v2120 = vld [vmem:[%s2119] ss:$8 sm:$0x7]
    %s2121 = scalar_lea.vmem [#allocation0], 105
    %v2122 = vld [vmem:[%s2121] ss:$8 sm:$0x78]
    %vm2123 = vcmask 1046531
    %v2124 = vsel %vm2123, %v2122, %v2120
    %s2125 = scalar_lea.vmem [#allocation0], 145
    %v2126 = vld [vmem:[%s2125] sm:$0x80]
    %vm2127 = vcmask 1047559
    %v2128 = vsel %vm2127, %v2126, %v2124
    %2129 = vrot.lane.b32.xlu0 %v2128, 32
    %v2130 = vpop.permute.xlu0 %2129
    %vm2131 = vcmask 130048
    %s2132 = scalar_lea.vmem %s1, 134
    %2133 = vst.msk [vmem:[%s2132] ss:$8 sm:$0x7] %vm2131, %v2130
    %s2134 = scalar_lea.vmem %s1, 614
    %2135 = vst.msk [vmem:[%s2134] ss:$8 sm:$0x78] %vm2131, %v2130
    %s2136 = scalar_lea.vmem %s1, 151
    %2137 = vst.msk [vmem:[%s2136] sm:$0x80] %vm2131, %v2130
    %s2138 = scalar_lea.vmem [#allocation0], 160
    %v2139 = vld [vmem:[%s2138] ss:$8 sm:$0x7]
    %s2140 = scalar_lea.vmem [#allocation0], 137
    %v2141 = vld [vmem:[%s2140] ss:$8 sm:$0x78]
    %vm2142 = vcmask 1046531
    %v2143 = vsel %vm2142, %v2141, %v2139
    %s2144 = scalar_lea.vmem [#allocation0], 177
    %v2145 = vld [vmem:[%s2144] sm:$0x80]
    %vm2146 = vcmask 1047559
    %v2147 = vsel %vm2146, %v2145, %v2143
    %2148 = vrot.lane.b32.xlu0 %v2147, 32
    %v2149 = vpop.permute.xlu0 %2148
    %vm2150 = vcmask 130048
    %s2151 = scalar_lea.vmem %s1, 166
    %2152 = vst.msk [vmem:[%s2151] ss:$8 sm:$0x7] %vm2150, %v2149
    %s2153 = scalar_lea.vmem %s1, 646
    %2154 = vst.msk [vmem:[%s2153] ss:$8 sm:$0x78] %vm2150, %v2149
    %s2155 = scalar_lea.vmem %s1, 183
    %2156 = vst.msk [vmem:[%s2155] sm:$0x80] %vm2150, %v2149
    %s2157 = scalar_lea.vmem [#allocation0], 192
    %v2158 = vld [vmem:[%s2157] ss:$8 sm:$0x7]
    %s2159 = scalar_lea.vmem [#allocation0], 169
    %v2160 = vld [vmem:[%s2159] ss:$8 sm:$0x78]
    %vm2161 = vcmask 1046531
    %v2162 = vsel %vm2161, %v2160, %v2158
    %s2163 = scalar_lea.vmem [#allocation0], 209
    %v2164 = vld [vmem:[%s2163] sm:$0x80]
    %vm2165 = vcmask 1047559
    %v2166 = vsel %vm2165, %v2164, %v2162
    %2167 = vrot.lane.b32.xlu0 %v2166, 32
    %v2168 = vpop.permute.xlu0 %2167
    %vm2169 = vcmask 130048
    %s2170 = scalar_lea.vmem %s1, 198
    %2171 = vst.msk [vmem:[%s2170] ss:$8 sm:$0x7] %vm2169, %v2168
    %s2172 = scalar_lea.vmem %s1, 678
    %2173 = vst.msk [vmem:[%s2172] ss:$8 sm:$0x78] %vm2169, %v2168
    %s2174 = scalar_lea.vmem %s1, 215
    %2175 = vst.msk [vmem:[%s2174] sm:$0x80] %vm2169, %v2168
    %s2176 = scalar_lea.vmem [#allocation0], 224
    %v2177 = vld [vmem:[%s2176] ss:$8 sm:$0x7]
    %s2178 = scalar_lea.vmem [#allocation0], 201
    %v2179 = vld [vmem:[%s2178] ss:$8 sm:$0x78]
    %vm2180 = vcmask 1046531
    %v2181 = vsel %vm2180, %v2179, %v2177
    %s2182 = scalar_lea.vmem [#allocation0], 241
    %v2183 = vld [vmem:[%s2182] sm:$0x80]
    %vm2184 = vcmask 1047559
    %v2185 = vsel %vm2184, %v2183, %v2181
    %2186 = vrot.lane.b32.xlu0 %v2185, 32
    %v2187 = vpop.permute.xlu0 %2186
    %vm2188 = vcmask 130048
    %s2189 = scalar_lea.vmem %s1, 230
    %2190 = vst.msk [vmem:[%s2189] ss:$8 sm:$0x7] %vm2188, %v2187
    %s2191 = scalar_lea.vmem %s1, 710
    %2192 = vst.msk [vmem:[%s2191] ss:$8 sm:$0x78] %vm2188, %v2187
    %s2193 = scalar_lea.vmem %s1, 247
    %2194 = vst.msk [vmem:[%s2193] sm:$0x80] %vm2188, %v2187
    %s2195 = scalar_lea.vmem [#allocation0], 256
    %v2196 = vld [vmem:[%s2195] ss:$8 sm:$0x7]
    %s2197 = scalar_lea.vmem [#allocation0], 233
    %v2198 = vld [vmem:[%s2197] ss:$8 sm:$0x78]
    %vm2199 = vcmask 1046531
    %v2200 = vsel %vm2199, %v2198, %v2196
    %s2201 = scalar_lea.vmem [#allocation0], 273
    %v2202 = vld [vmem:[%s2201] sm:$0x80]
    %vm2203 = vcmask 1047559
    %v2204 = vsel %vm2203, %v2202, %v2200
    %2205 = vrot.lane.b32.xlu0 %v2204, 32
    %v2206 = vpop.permute.xlu0 %2205
    %vm2207 = vcmask 130048
    %s2208 = scalar_lea.vmem %s1, 262
    %2209 = vst.msk [vmem:[%s2208] ss:$8 sm:$0x7] %vm2207, %v2206
    %s2210 = scalar_lea.vmem %s1, 742
    %2211 = vst.msk [vmem:[%s2210] ss:$8 sm:$0x78] %vm2207, %v2206
    %s2212 = scalar_lea.vmem %s1, 279
    %2213 = vst.msk [vmem:[%s2212] sm:$0x80] %vm2207, %v2206
    %s2214 = scalar_lea.vmem [#allocation0], 288
    %v2215 = vld [vmem:[%s2214] ss:$8 sm:$0x7]
    %s2216 = scalar_lea.vmem [#allocation0], 265
    %v2217 = vld [vmem:[%s2216] ss:$8 sm:$0x78]
    %vm2218 = vcmask 1046531
    %v2219 = vsel %vm2218, %v2217, %v2215
    %s2220 = scalar_lea.vmem [#allocation0], 305
    %v2221 = vld [vmem:[%s2220] sm:$0x80]
    %vm2222 = vcmask 1047559
    %v2223 = vsel %vm2222, %v2221, %v2219
    %2224 = vrot.lane.b32.xlu0 %v2223, 32
    %v2225 = vpop.permute.xlu0 %2224
    %vm2226 = vcmask 130048
    %s2227 = scalar_lea.vmem %s1, 294
    %2228 = vst.msk [vmem:[%s2227] ss:$8 sm:$0x7] %vm2226, %v2225
    %s2229 = scalar_lea.vmem %s1, 774
    %2230 = vst.msk [vmem:[%s2229] ss:$8 sm:$0x78] %vm2226, %v2225
    %s2231 = scalar_lea.vmem %s1, 311
    %2232 = vst.msk [vmem:[%s2231] sm:$0x80] %vm2226, %v2225
    %s2233 = scalar_lea.vmem [#allocation0], 320
    %v2234 = vld [vmem:[%s2233] ss:$8 sm:$0x7]
    %s2235 = scalar_lea.vmem [#allocation0], 297
    %v2236 = vld [vmem:[%s2235] ss:$8 sm:$0x78]
    %vm2237 = vcmask 1046531
    %v2238 = vsel %vm2237, %v2236, %v2234
    %s2239 = scalar_lea.vmem [#allocation0], 337
    %v2240 = vld [vmem:[%s2239] sm:$0x80]
    %vm2241 = vcmask 1047559
    %v2242 = vsel %vm2241, %v2240, %v2238
    %2243 = vrot.lane.b32.xlu0 %v2242, 32
    %v2244 = vpop.permute.xlu0 %2243
    %vm2245 = vcmask 130048
    %s2246 = scalar_lea.vmem %s1, 326
    %2247 = vst.msk [vmem:[%s2246] ss:$8 sm:$0x7] %vm2245, %v2244
    %s2248 = scalar_lea.vmem %s1, 806
    %2249 = vst.msk [vmem:[%s2248] ss:$8 sm:$0x78] %vm2245, %v2244
    %s2250 = scalar_lea.vmem %s1, 343
    %2251 = vst.msk [vmem:[%s2250] sm:$0x80] %vm2245, %v2244
    %s2252 = scalar_lea.vmem [#allocation0], 352
    %v2253 = vld [vmem:[%s2252] ss:$8 sm:$0x7]
    %s2254 = scalar_lea.vmem [#allocation0], 329
    %v2255 = vld [vmem:[%s2254] ss:$8 sm:$0x78]
    %vm2256 = vcmask 1046531
    %v2257 = vsel %vm2256, %v2255, %v2253
    %s2258 = scalar_lea.vmem [#allocation0], 369
    %v2259 = vld [vmem:[%s2258] sm:$0x80]
    %vm2260 = vcmask 1047559
    %v2261 = vsel %vm2260, %v2259, %v2257
    %2262 = vrot.lane.b32.xlu0 %v2261, 32
    %v2263 = vpop.permute.xlu0 %2262
    %vm2264 = vcmask 130048
    %s2265 = scalar_lea.vmem %s1, 358
    %2266 = vst.msk [vmem:[%s2265] ss:$8 sm:$0x7] %vm2264, %v2263
    %s2267 = scalar_lea.vmem %s1, 838
    %2268 = vst.msk [vmem:[%s2267] ss:$8 sm:$0x78] %vm2264, %v2263
    %s2269 = scalar_lea.vmem %s1, 375
    %2270 = vst.msk [vmem:[%s2269] sm:$0x80] %vm2264, %v2263
    %s2271 = scalar_lea.vmem [#allocation0], 384
    %v2272 = vld [vmem:[%s2271] ss:$8 sm:$0x7]
    %s2273 = scalar_lea.vmem [#allocation0], 361
    %v2274 = vld [vmem:[%s2273] ss:$8 sm:$0x78]
    %vm2275 = vcmask 1046531
    %v2276 = vsel %vm2275, %v2274, %v2272
    %s2277 = scalar_lea.vmem [#allocation0], 401
    %v2278 = vld [vmem:[%s2277] sm:$0x80]
    %vm2279 = vcmask 1047559
    %v2280 = vsel %vm2279, %v2278, %v2276
    %2281 = vrot.lane.b32.xlu0 %v2280, 32
    %v2282 = vpop.permute.xlu0 %2281
    %vm2283 = vcmask 130048
    %s2284 = scalar_lea.vmem %s1, 390
    %2285 = vst.msk [vmem:[%s2284] ss:$8 sm:$0x7] %vm2283, %v2282
    %s2286 = scalar_lea.vmem %s1, 870
    %2287 = vst.msk [vmem:[%s2286] ss:$8 sm:$0x78] %vm2283, %v2282
    %s2288 = scalar_lea.vmem %s1, 407
    %2289 = vst.msk [vmem:[%s2288] sm:$0x80] %vm2283, %v2282
    %s2290 = scalar_lea.vmem [#allocation0], 416
    %v2291 = vld [vmem:[%s2290] ss:$8 sm:$0x7]
    %s2292 = scalar_lea.vmem [#allocation0], 393
    %v2293 = vld [vmem:[%s2292] ss:$8 sm:$0x78]
    %vm2294 = vcmask 1046531
    %v2295 = vsel %vm2294, %v2293, %v2291
    %s2296 = scalar_lea.vmem [#allocation0], 433
    %v2297 = vld [vmem:[%s2296] sm:$0x80]
    %vm2298 = vcmask 1047559
    %v2299 = vsel %vm2298, %v2297, %v2295
    %2300 = vrot.lane.b32.xlu0 %v2299, 32
    %v2301 = vpop.permute.xlu0 %2300
    %vm2302 = vcmask 130048
    %s2303 = scalar_lea.vmem %s1, 422
    %2304 = vst.msk [vmem:[%s2303] ss:$8 sm:$0x7] %vm2302, %v2301
    %s2305 = scalar_lea.vmem %s1, 902
    %2306 = vst.msk [vmem:[%s2305] ss:$8 sm:$0x78] %vm2302, %v2301
    %s2307 = scalar_lea.vmem %s1, 439
    %2308 = vst.msk [vmem:[%s2307] sm:$0x80] %vm2302, %v2301
    %s2309 = scalar_lea.vmem [#allocation0], 448
    %v2310 = vld [vmem:[%s2309] ss:$8 sm:$0x7]
    %s2311 = scalar_lea.vmem [#allocation0], 425
    %v2312 = vld [vmem:[%s2311] ss:$8 sm:$0x78]
    %vm2313 = vcmask 1046531
    %v2314 = vsel %vm2313, %v2312, %v2310
    %s2315 = scalar_lea.vmem [#allocation0], 465
    %v2316 = vld [vmem:[%s2315] sm:$0x80]
    %vm2317 = vcmask 1047559
    %v2318 = vsel %vm2317, %v2316, %v2314
    %2319 = vrot.lane.b32.xlu0 %v2318, 32
    %v2320 = vpop.permute.xlu0 %2319
    %vm2321 = vcmask 130048
    %s2322 = scalar_lea.vmem %s1, 454
    %2323 = vst.msk [vmem:[%s2322] ss:$8 sm:$0x7] %vm2321, %v2320
    %s2324 = scalar_lea.vmem %s1, 934
    %2325 = vst.msk [vmem:[%s2324] ss:$8 sm:$0x78] %vm2321, %v2320
    %s2326 = scalar_lea.vmem %s1, 471
    %2327 = vst.msk [vmem:[%s2326] sm:$0x80] %vm2321, %v2320
    %s2328 = scalar_lea.vmem [#allocation0], 480
    %v2329 = vld.sshfl [vmem:[%s2328] sm:$0xff pattern:$0x99999180]
    %2330 = vrot.lane.b32.xlu0 %v2329, 32
    %v2331 = vpop.permute.xlu0 %2330
    %vm2332 = vcmask 130048
    %s2333 = scalar_lea.vmem %s1, 486
    %2334 = vst.msk [vmem:[%s2333] ss:$8 sm:$0x3] %vm2332, %v2331
    %s2335 = scalar_lea.vmem %s1, 974
    %2336 = vst.msk [vmem:[%s2335] ss:$8 sm:$0xc] %vm2332, %v2331
    %v2337 = vld [vmem:[#allocation0] ss:$8 sm:$0x7]
    %s2338 = scalar_lea.vmem [#allocation0], 4294967273
    %v2339 = vld [vmem:[%s2338] ss:$8 sm:$0x78]
    %vm2340 = vcmask 1046531
    %v2341 = vsel %vm2340, %v2339, %v2337
    %s2342 = scalar_lea.vmem [#allocation0], 17
    %v2343 = vld [vmem:[%s2342] sm:$0x80]
    %vm2344 = vcmask 1047559
    %v2345 = vsel %vm2344, %v2343, %v2341
    %2346 = vrot.lane.b32.xlu0 %v2345, 16
    %v2347 = vpop.permute.xlu0 %2346
    %vm2348 = vcmask 130048
    %s2349 = scalar_lea.vmem %s1, 7
    %2350 = vst.msk [vmem:[%s2349] ss:$8 sm:$0x7] %vm2348, %v2347
    %s2351 = scalar_lea.vmem %s1, 487
    %2352 = vst.msk [vmem:[%s2351] ss:$8 sm:$0x78] %vm2348, %v2347
    %s2353 = scalar_lea.vmem %s1, 24
    %2354 = vst.msk [vmem:[%s2353] sm:$0x80] %vm2348, %v2347
    %s2355 = scalar_lea.vmem [#allocation0], 32
    %v2356 = vld [vmem:[%s2355] ss:$8 sm:$0x7]
    %s2357 = scalar_lea.vmem [#allocation0], 9
    %v2358 = vld [vmem:[%s2357] ss:$8 sm:$0x78]
    %vm2359 = vcmask 1046531
    %v2360 = vsel %vm2359, %v2358, %v2356
    %s2361 = scalar_lea.vmem [#allocation0], 49
    %v2362 = vld [vmem:[%s2361] sm:$0x80]
    %vm2363 = vcmask 1047559
    %v2364 = vsel %vm2363, %v2362, %v2360
    %2365 = vrot.lane.b32.xlu0 %v2364, 16
    %v2366 = vpop.permute.xlu0 %2365
    %vm2367 = vcmask 130048
    %s2368 = scalar_lea.vmem %s1, 39
    %2369 = vst.msk [vmem:[%s2368] ss:$8 sm:$0x7] %vm2367, %v2366
    %s2370 = scalar_lea.vmem %s1, 519
    %2371 = vst.msk [vmem:[%s2370] ss:$8 sm:$0x78] %vm2367, %v2366
    %s2372 = scalar_lea.vmem %s1, 56
    %2373 = vst.msk [vmem:[%s2372] sm:$0x80] %vm2367, %v2366
    %s2374 = scalar_lea.vmem [#allocation0], 64
    %v2375 = vld [vmem:[%s2374] ss:$8 sm:$0x7]
    %s2376 = scalar_lea.vmem [#allocation0], 41
    %v2377 = vld [vmem:[%s2376] ss:$8 sm:$0x78]
    %vm2378 = vcmask 1046531
    %v2379 = vsel %vm2378, %v2377, %v2375
    %s2380 = scalar_lea.vmem [#allocation0], 81
    %v2381 = vld [vmem:[%s2380] sm:$0x80]
    %vm2382 = vcmask 1047559
    %v2383 = vsel %vm2382, %v2381, %v2379
    %2384 = vrot.lane.b32.xlu0 %v2383, 16
    %v2385 = vpop.permute.xlu0 %2384
    %vm2386 = vcmask 130048
    %s2387 = scalar_lea.vmem %s1, 71
    %2388 = vst.msk [vmem:[%s2387] ss:$8 sm:$0x7] %vm2386, %v2385
    %s2389 = scalar_lea.vmem %s1, 551
    %2390 = vst.msk [vmem:[%s2389] ss:$8 sm:$0x78] %vm2386, %v2385
    %s2391 = scalar_lea.vmem %s1, 88
    %2392 = vst.msk [vmem:[%s2391] sm:$0x80] %vm2386, %v2385
    %s2393 = scalar_lea.vmem [#allocation0], 96
    %v2394 = vld [vmem:[%s2393] ss:$8 sm:$0x7]
    %s2395 = scalar_lea.vmem [#allocation0], 73
    %v2396 = vld [vmem:[%s2395] ss:$8 sm:$0x78]
    %vm2397 = vcmask 1046531
    %v2398 = vsel %vm2397, %v2396, %v2394
    %s2399 = scalar_lea.vmem [#allocation0], 113
    %v2400 = vld [vmem:[%s2399] sm:$0x80]
    %vm2401 = vcmask 1047559
    %v2402 = vsel %vm2401, %v2400, %v2398
    %2403 = vrot.lane.b32.xlu0 %v2402, 16
    %v2404 = vpop.permute.xlu0 %2403
    %vm2405 = vcmask 130048
    %s2406 = scalar_lea.vmem %s1, 103
    %2407 = vst.msk [vmem:[%s2406] ss:$8 sm:$0x7] %vm2405, %v2404
    %s2408 = scalar_lea.vmem %s1, 583
    %2409 = vst.msk [vmem:[%s2408] ss:$8 sm:$0x78] %vm2405, %v2404
    %s2410 = scalar_lea.vmem %s1, 120
    %2411 = vst.msk [vmem:[%s2410] sm:$0x80] %vm2405, %v2404
    %s2412 = scalar_lea.vmem [#allocation0], 128
    %v2413 = vld [vmem:[%s2412] ss:$8 sm:$0x7]
    %s2414 = scalar_lea.vmem [#allocation0], 105
    %v2415 = vld [vmem:[%s2414] ss:$8 sm:$0x78]
    %vm2416 = vcmask 1046531
    %v2417 = vsel %vm2416, %v2415, %v2413
    %s2418 = scalar_lea.vmem [#allocation0], 145
    %v2419 = vld [vmem:[%s2418] sm:$0x80]
    %vm2420 = vcmask 1047559
    %v2421 = vsel %vm2420, %v2419, %v2417
    %2422 = vrot.lane.b32.xlu0 %v2421, 16
    %v2423 = vpop.permute.xlu0 %2422
    %vm2424 = vcmask 130048
    %s2425 = scalar_lea.vmem %s1, 135
    %2426 = vst.msk [vmem:[%s2425] ss:$8 sm:$0x7] %vm2424, %v2423
    %s2427 = scalar_lea.vmem %s1, 615
    %2428 = vst.msk [vmem:[%s2427] ss:$8 sm:$0x78] %vm2424, %v2423
    %s2429 = scalar_lea.vmem %s1, 152
    %2430 = vst.msk [vmem:[%s2429] sm:$0x80] %vm2424, %v2423
    %s2431 = scalar_lea.vmem [#allocation0], 160
    %v2432 = vld [vmem:[%s2431] ss:$8 sm:$0x7]
    %s2433 = scalar_lea.vmem [#allocation0], 137
    %v2434 = vld [vmem:[%s2433] ss:$8 sm:$0x78]
    %vm2435 = vcmask 1046531
    %v2436 = vsel %vm2435, %v2434, %v2432
    %s2437 = scalar_lea.vmem [#allocation0], 177
    %v2438 = vld [vmem:[%s2437] sm:$0x80]
    %vm2439 = vcmask 1047559
    %v2440 = vsel %vm2439, %v2438, %v2436
    %2441 = vrot.lane.b32.xlu0 %v2440, 16
    %v2442 = vpop.permute.xlu0 %2441
    %vm2443 = vcmask 130048
    %s2444 = scalar_lea.vmem %s1, 167
    %2445 = vst.msk [vmem:[%s2444] ss:$8 sm:$0x7] %vm2443, %v2442
    %s2446 = scalar_lea.vmem %s1, 647
    %2447 = vst.msk [vmem:[%s2446] ss:$8 sm:$0x78] %vm2443, %v2442
    %s2448 = scalar_lea.vmem %s1, 184
    %2449 = vst.msk [vmem:[%s2448] sm:$0x80] %vm2443, %v2442
    %s2450 = scalar_lea.vmem [#allocation0], 192
    %v2451 = vld [vmem:[%s2450] ss:$8 sm:$0x7]
    %s2452 = scalar_lea.vmem [#allocation0], 169
    %v2453 = vld [vmem:[%s2452] ss:$8 sm:$0x78]
    %vm2454 = vcmask 1046531
    %v2455 = vsel %vm2454, %v2453, %v2451
    %s2456 = scalar_lea.vmem [#allocation0], 209
    %v2457 = vld [vmem:[%s2456] sm:$0x80]
    %vm2458 = vcmask 1047559
    %v2459 = vsel %vm2458, %v2457, %v2455
    %2460 = vrot.lane.b32.xlu0 %v2459, 16
    %v2461 = vpop.permute.xlu0 %2460
    %vm2462 = vcmask 130048
    %s2463 = scalar_lea.vmem %s1, 199
    %2464 = vst.msk [vmem:[%s2463] ss:$8 sm:$0x7] %vm2462, %v2461
    %s2465 = scalar_lea.vmem %s1, 679
    %2466 = vst.msk [vmem:[%s2465] ss:$8 sm:$0x78] %vm2462, %v2461
    %s2467 = scalar_lea.vmem %s1, 216
    %2468 = vst.msk [vmem:[%s2467] sm:$0x80] %vm2462, %v2461
    %s2469 = scalar_lea.vmem [#allocation0], 224
    %v2470 = vld [vmem:[%s2469] ss:$8 sm:$0x7]
    %s2471 = scalar_lea.vmem [#allocation0], 201
    %v2472 = vld [vmem:[%s2471] ss:$8 sm:$0x78]
    %vm2473 = vcmask 1046531
    %v2474 = vsel %vm2473, %v2472, %v2470
    %s2475 = scalar_lea.vmem [#allocation0], 241
    %v2476 = vld [vmem:[%s2475] sm:$0x80]
    %vm2477 = vcmask 1047559
    %v2478 = vsel %vm2477, %v2476, %v2474
    %2479 = vrot.lane.b32.xlu0 %v2478, 16
    %v2480 = vpop.permute.xlu0 %2479
    %vm2481 = vcmask 130048
    %s2482 = scalar_lea.vmem %s1, 231
    %2483 = vst.msk [vmem:[%s2482] ss:$8 sm:$0x7] %vm2481, %v2480
    %s2484 = scalar_lea.vmem %s1, 711
    %2485 = vst.msk [vmem:[%s2484] ss:$8 sm:$0x78] %vm2481, %v2480
    %s2486 = scalar_lea.vmem %s1, 248
    %2487 = vst.msk [vmem:[%s2486] sm:$0x80] %vm2481, %v2480
    %s2488 = scalar_lea.vmem [#allocation0], 256
    %v2489 = vld [vmem:[%s2488] ss:$8 sm:$0x7]
    %s2490 = scalar_lea.vmem [#allocation0], 233
    %v2491 = vld [vmem:[%s2490] ss:$8 sm:$0x78]
    %vm2492 = vcmask 1046531
    %v2493 = vsel %vm2492, %v2491, %v2489
    %s2494 = scalar_lea.vmem [#allocation0], 273
    %v2495 = vld [vmem:[%s2494] sm:$0x80]
    %vm2496 = vcmask 1047559
    %v2497 = vsel %vm2496, %v2495, %v2493
    %2498 = vrot.lane.b32.xlu0 %v2497, 16
    %v2499 = vpop.permute.xlu0 %2498
    %vm2500 = vcmask 130048
    %s2501 = scalar_lea.vmem %s1, 263
    %2502 = vst.msk [vmem:[%s2501] ss:$8 sm:$0x7] %vm2500, %v2499
    %s2503 = scalar_lea.vmem %s1, 743
    %2504 = vst.msk [vmem:[%s2503] ss:$8 sm:$0x78] %vm2500, %v2499
    %s2505 = scalar_lea.vmem %s1, 280
    %2506 = vst.msk [vmem:[%s2505] sm:$0x80] %vm2500, %v2499
    %s2507 = scalar_lea.vmem [#allocation0], 288
    %v2508 = vld [vmem:[%s2507] ss:$8 sm:$0x7]
    %s2509 = scalar_lea.vmem [#allocation0], 265
    %v2510 = vld [vmem:[%s2509] ss:$8 sm:$0x78]
    %vm2511 = vcmask 1046531
    %v2512 = vsel %vm2511, %v2510, %v2508
    %s2513 = scalar_lea.vmem [#allocation0], 305
    %v2514 = vld [vmem:[%s2513] sm:$0x80]
    %vm2515 = vcmask 1047559
    %v2516 = vsel %vm2515, %v2514, %v2512
    %2517 = vrot.lane.b32.xlu0 %v2516, 16
    %v2518 = vpop.permute.xlu0 %2517
    %vm2519 = vcmask 130048
    %s2520 = scalar_lea.vmem %s1, 295
    %2521 = vst.msk [vmem:[%s2520] ss:$8 sm:$0x7] %vm2519, %v2518
    %s2522 = scalar_lea.vmem %s1, 775
    %2523 = vst.msk [vmem:[%s2522] ss:$8 sm:$0x78] %vm2519, %v2518
    %s2524 = scalar_lea.vmem %s1, 312
    %2525 = vst.msk [vmem:[%s2524] sm:$0x80] %vm2519, %v2518
    %s2526 = scalar_lea.vmem [#allocation0], 320
    %v2527 = vld [vmem:[%s2526] ss:$8 sm:$0x7]
    %s2528 = scalar_lea.vmem [#allocation0], 297
    %v2529 = vld [vmem:[%s2528] ss:$8 sm:$0x78]
    %vm2530 = vcmask 1046531
    %v2531 = vsel %vm2530, %v2529, %v2527
    %s2532 = scalar_lea.vmem [#allocation0], 337
    %v2533 = vld [vmem:[%s2532] sm:$0x80]
    %vm2534 = vcmask 1047559
    %v2535 = vsel %vm2534, %v2533, %v2531
    %2536 = vrot.lane.b32.xlu0 %v2535, 16
    %v2537 = vpop.permute.xlu0 %2536
    %vm2538 = vcmask 130048
    %s2539 = scalar_lea.vmem %s1, 327
    %2540 = vst.msk [vmem:[%s2539] ss:$8 sm:$0x7] %vm2538, %v2537
    %s2541 = scalar_lea.vmem %s1, 807
    %2542 = vst.msk [vmem:[%s2541] ss:$8 sm:$0x78] %vm2538, %v2537
    %s2543 = scalar_lea.vmem %s1, 344
    %2544 = vst.msk [vmem:[%s2543] sm:$0x80] %vm2538, %v2537
    %s2545 = scalar_lea.vmem [#allocation0], 352
    %v2546 = vld [vmem:[%s2545] ss:$8 sm:$0x7]
    %s2547 = scalar_lea.vmem [#allocation0], 329
    %v2548 = vld [vmem:[%s2547] ss:$8 sm:$0x78]
    %vm2549 = vcmask 1046531
    %v2550 = vsel %vm2549, %v2548, %v2546
    %s2551 = scalar_lea.vmem [#allocation0], 369
    %v2552 = vld [vmem:[%s2551] sm:$0x80]
    %vm2553 = vcmask 1047559
    %v2554 = vsel %vm2553, %v2552, %v2550
    %2555 = vrot.lane.b32.xlu0 %v2554, 16
    %v2556 = vpop.permute.xlu0 %2555
    %vm2557 = vcmask 130048
    %s2558 = scalar_lea.vmem %s1, 359
    %2559 = vst.msk [vmem:[%s2558] ss:$8 sm:$0x7] %vm2557, %v2556
    %s2560 = scalar_lea.vmem %s1, 839
    %2561 = vst.msk [vmem:[%s2560] ss:$8 sm:$0x78] %vm2557, %v2556
    %s2562 = scalar_lea.vmem %s1, 376
    %2563 = vst.msk [vmem:[%s2562] sm:$0x80] %vm2557, %v2556
    %s2564 = scalar_lea.vmem [#allocation0], 384
    %v2565 = vld [vmem:[%s2564] ss:$8 sm:$0x7]
    %s2566 = scalar_lea.vmem [#allocation0], 361
    %v2567 = vld [vmem:[%s2566] ss:$8 sm:$0x78]
    %vm2568 = vcmask 1046531
    %v2569 = vsel %vm2568, %v2567, %v2565
    %s2570 = scalar_lea.vmem [#allocation0], 401
    %v2571 = vld [vmem:[%s2570] sm:$0x80]
    %vm2572 = vcmask 1047559
    %v2573 = vsel %vm2572, %v2571, %v2569
    %2574 = vrot.lane.b32.xlu0 %v2573, 16
    %v2575 = vpop.permute.xlu0 %2574
    %vm2576 = vcmask 130048
    %s2577 = scalar_lea.vmem %s1, 391
    %2578 = vst.msk [vmem:[%s2577] ss:$8 sm:$0x7] %vm2576, %v2575
    %s2579 = scalar_lea.vmem %s1, 871
    %2580 = vst.msk [vmem:[%s2579] ss:$8 sm:$0x78] %vm2576, %v2575
    %s2581 = scalar_lea.vmem %s1, 408
    %2582 = vst.msk [vmem:[%s2581] sm:$0x80] %vm2576, %v2575
    %s2583 = scalar_lea.vmem [#allocation0], 416
    %v2584 = vld [vmem:[%s2583] ss:$8 sm:$0x7]
    %s2585 = scalar_lea.vmem [#allocation0], 393
    %v2586 = vld [vmem:[%s2585] ss:$8 sm:$0x78]
    %vm2587 = vcmask 1046531
    %v2588 = vsel %vm2587, %v2586, %v2584
    %s2589 = scalar_lea.vmem [#allocation0], 433
    %v2590 = vld [vmem:[%s2589] sm:$0x80]
    %vm2591 = vcmask 1047559
    %v2592 = vsel %vm2591, %v2590, %v2588
    %2593 = vrot.lane.b32.xlu0 %v2592, 16
    %v2594 = vpop.permute.xlu0 %2593
    %vm2595 = vcmask 130048
    %s2596 = scalar_lea.vmem %s1, 423
    %2597 = vst.msk [vmem:[%s2596] ss:$8 sm:$0x7] %vm2595, %v2594
    %s2598 = scalar_lea.vmem %s1, 903
    %2599 = vst.msk [vmem:[%s2598] ss:$8 sm:$0x78] %vm2595, %v2594
    %s2600 = scalar_lea.vmem %s1, 440
    %2601 = vst.msk [vmem:[%s2600] sm:$0x80] %vm2595, %v2594
    %s2602 = scalar_lea.vmem [#allocation0], 448
    %v2603 = vld [vmem:[%s2602] ss:$8 sm:$0x7]
    %s2604 = scalar_lea.vmem [#allocation0], 425
    %v2605 = vld [vmem:[%s2604] ss:$8 sm:$0x78]
    %vm2606 = vcmask 1046531
    %v2607 = vsel %vm2606, %v2605, %v2603
    %s2608 = scalar_lea.vmem [#allocation0], 465
    %v2609 = vld [vmem:[%s2608] sm:$0x80]
    %vm2610 = vcmask 1047559
    %v2611 = vsel %vm2610, %v2609, %v2607
    %2612 = vrot.lane.b32.xlu0 %v2611, 16
    %v2613 = vpop.permute.xlu0 %2612
    %vm2614 = vcmask 130048
    %s2615 = scalar_lea.vmem %s1, 455
    %2616 = vst.msk [vmem:[%s2615] ss:$8 sm:$0x7] %vm2614, %v2613
    %s2617 = scalar_lea.vmem %s1, 935
    %2618 = vst.msk [vmem:[%s2617] ss:$8 sm:$0x78] %vm2614, %v2613
    %s2619 = scalar_lea.vmem %s1, 472
    %2620 = vst.msk [vmem:[%s2619] sm:$0x80] %vm2614, %v2613
    %s2621 = scalar_lea.vmem [#allocation0], 480
    %v2622 = vld.sshfl [vmem:[%s2621] sm:$0xff pattern:$0x99999180]
    %2623 = vrot.lane.b32.xlu0 %v2622, 16
    %v2624 = vpop.permute.xlu0 %2623
    %vm2625 = vcmask 130048
    %s2626 = scalar_lea.vmem %s1, 487
    %2627 = vst.msk [vmem:[%s2626] ss:$8 sm:$0x3] %vm2625, %v2624
    %s2628 = scalar_lea.vmem %s1, 975
    %2629 = vst.msk [vmem:[%s2628] ss:$8 sm:$0xc] %vm2625, %v2624

// kernel: m5_forward.1
$region0: #{m5_forward.1}
  #allocation0 [shape = 'u32[]', space=smem, size = 0x4, offset = 0x4, fixed_abs, tag = 'smem constant byte address 0x4 - core index']
  #allocation1 [shape = 'u32[72,128]{1,0:T(1,128)}', space=vmem, size = 0x9000, scoped, tag = 'internal scratch']
  #allocation2 [shape = 'f32[992,128]{1,0:T(8,128)}', space=vmem, size = 0x7c000, scoped, tag = 'scratch operand']
  #allocation3 [shape = 'f32[248,128]{1,0:T(8,128)}', space=vmem, size = 0x1f000, scoped, tag = 'scratch operand']
  %s0 = inlined_call_operand.vmem [shape: f32[992,128], index: 0, kind: input, shape index: {}]
  %s1 = inlined_call_operand.vmem [shape: f32[128,128], index: 1, kind: input, shape index: {}]
  %s2 = inlined_call_operand.vmem [shape: f32[8,128], index: 2, kind: input, shape index: {}]
  %s3 = inlined_call_operand.vmem [shape: f32[9,128,128], index: 3, kind: input, shape index: {}]
  %s4 = inlined_call_operand.vmem [shape: f32[128,35], index: 4, kind: input, shape index: {}]
  %s5 = inlined_call_operand.vmem [shape: f32[1,35], index: 5, kind: input, shape index: {}]
  %s6 = inlined_call_operand.hbm [shape: f32[2,35], index: 6, kind: output, shape index: {}]
  %s7 = sld [smem:[#allocation0]]
  $region34: #{m5_forward.1} parent=0
    _
  %s9 = ssub.s32 1, %s7
  %s10 = scalar_select 0, %s9, %s7
  $region1: #{m5_forward.1} parent=0
    #allocation4 [shape = 'u8[1024]{0}', space=vmem, size = 0x400, scoped, tag = 'output window, operand 0, single buffered']
    #allocation5 [shape = 's32[1]{0}', space=sflag, size = 0x4, scoped, tag = 'scoped memory for m5_forward.1']
    %11 = vsyncpa [#allocation5], 0
    // Predicated region
    $region2: #{m5_forward.1} parent=1 // pred_check
      _
    $region3: #{m5_forward.1} parent=1 // pred_check_branch
      %13 = sbr.rel (0) target = $region5
    $region4: #{m5_forward.1} parent=1 // pred_region
      _
    $region5: #{m5_forward.1} parent=1 // pred_fallthru
      _
    // Predicated region
    $region6: #{m5_forward.1} parent=1 // pred_check
      _
    $region7: #{m5_forward.1} parent=1 // pred_check_branch
      %15 = sbr.rel (0) target = $region9
    $region8: #{m5_forward.1} parent=1 // pred_region
      _
    $region9: #{m5_forward.1} parent=1 // pred_fallthru
      _
    // Predicated region
    $region10: #{m5_forward.1} parent=1 // pred_check
      _
    $region11: #{m5_forward.1} parent=1 // pred_check_branch
      %17 = sbr.rel (0) target = $region13
    $region12: #{m5_forward.1} parent=1 // pred_region
      _
    $region13: #{m5_forward.1} parent=1 // pred_fallthru
      _
    // Predicated region
    $region14: #{m5_forward.1} parent=1 // pred_check
      _
    $region15: #{m5_forward.1} parent=1 // pred_check_branch
      %19 = sbr.rel (0) target = $region17
    $region16: #{m5_forward.1} parent=1 // pred_region
      _
    $region17: #{m5_forward.1} parent=1 // pred_fallthru
      _
    // Predicated region
    $region18: #{m5_forward.1} parent=1 // pred_check
      _
    $region19: #{m5_forward.1} parent=1 // pred_check_branch
      %21 = sbr.rel (0) target = $region21
    $region20: #{m5_forward.1} parent=1 // pred_region
      _
    $region21: #{m5_forward.1} parent=1 // pred_fallthru
      _
    // Predicated region
    $region22: #{m5_forward.1} parent=1 // pred_check
      _
    $region23: #{m5_forward.1} parent=1 // pred_check_branch
      %23 = sbr.rel (0) target = $region25
    $region24: #{m5_forward.1} parent=1 // pred_region
      _
    $region25: #{m5_forward.1} parent=1 // pred_fallthru
      _
    %v24 = vld [vmem:[%s0] sm:$0xff]
    %v25 = vld [vmem:[%s0 + $0x8] sm:$0xff]
    %v26 = vld [vmem:[%s0 + $0x10] sm:$0xff]
    %v27 = vld [vmem:[%s0 + $0x18] sm:$0xff]
    %v28 = vld [vmem:[%s0 + $0x20] sm:$0xff]
    %v29 = vld [vmem:[%s0 + $0x28] sm:$0xff]
    %v30 = vld [vmem:[%s0 + $0x30] sm:$0xff]
    %v31 = vld [vmem:[%s0 + $0x38] sm:$0xff]
    %v32 = vld [vmem:[%s0 + $0x40] sm:$0xff]
    %v33 = vld [vmem:[%s0 + $0x48] sm:$0xff]
    %v34 = vld [vmem:[%s0 + $0x50] sm:$0xff]
    %v35 = vld [vmem:[%s0 + $0x58] sm:$0xff]
    %v36 = vld [vmem:[%s0 + $0x60] sm:$0xff]
    %v37 = vld [vmem:[%s0 + $0x68] sm:$0xff]
    %v38 = vld [vmem:[%s0 + $0x70] sm:$0xff]
    %v39 = vld [vmem:[%s0 + $0x78] sm:$0xff]
    %v40 = vld [vmem:[%s0 + $0x80] sm:$0xff]
    %v41 = vld [vmem:[%s0 + $0x88] sm:$0xff]
    %v42 = vld [vmem:[%s0 + $0x90] sm:$0xff]
    %v43 = vld [vmem:[%s0 + $0x98] sm:$0xff]
    %v44 = vld [vmem:[%s0 + $0xa0] sm:$0xff]
    %v45 = vld [vmem:[%s0 + $0xa8] sm:$0xff]
    %v46 = vld [vmem:[%s0 + $0xb0] sm:$0xff]
    %v47 = vld [vmem:[%s0 + $0xb8] sm:$0xff]
    %v48 = vld [vmem:[%s0 + $0xc0] sm:$0xff]
    %v49 = vld [vmem:[%s0 + $0xc8] sm:$0xff]
    %v50 = vld [vmem:[%s0 + $0xd0] sm:$0xff]
    %v51 = vld [vmem:[%s0 + $0xd8] sm:$0xff]
    %v52 = vld [vmem:[%s0 + $0xe0] sm:$0xff]
    %v53 = vld [vmem:[%s0 + $0xe8] sm:$0xff]
    %v54 = vld [vmem:[%s0 + $0xf0] sm:$0xff]
    %v55 = vld [vmem:[%s1] sm:$0xff]
    %v56 = vld [vmem:[%s1 + $0x8] sm:$0xff]
    %v57 = vld [vmem:[%s1 + $0x10] sm:$0xff]
    %v58 = vld [vmem:[%s1 + $0x18] sm:$0xff]
    %v59 = vld [vmem:[%s1 + $0x20] sm:$0xff]
    %v60 = vld [vmem:[%s1 + $0x28] sm:$0xff]
    %v61 = vld [vmem:[%s1 + $0x30] sm:$0xff]
    %v62 = vld [vmem:[%s1 + $0x38] sm:$0xff]
    %v63 = vld [vmem:[%s1 + $0x40] sm:$0xff]
    %v64 = vld [vmem:[%s1 + $0x48] sm:$0xff]
    %v65 = vld [vmem:[%s1 + $0x50] sm:$0xff]
    %v66 = vld [vmem:[%s1 + $0x58] sm:$0xff]
    %v67 = vld [vmem:[%s1 + $0x60] sm:$0xff]
    %v68 = vld [vmem:[%s1 + $0x68] sm:$0xff]
    %v69 = vld [vmem:[%s1 + $0x70] sm:$0xff]
    %v70 = vld [vmem:[%s1 + $0x78] sm:$0xff]
    %71 = vmatpush.msra.mxu0 %v70
    %72 = vmatpush.msra.mxu0 %v69
    %73 = vmatpush.msra.mxu0 %v68
    %74 = vmatpush.msra.mxu0 %v67
    %75 = vmatpush.msra.mxu0 %v66
    %76 = vmatpush.msra.mxu0 %v65
    %77 = vmatpush.msra.mxu0 %v64
    %78 = vmatpush.msra.mxu0 %v63
    %79 = vmatpush.msra.mxu0 %v62
    %80 = vmatpush.msra.mxu0 %v61
    %81 = vmatpush.msra.mxu0 %v60
    %82 = vmatpush.msra.mxu0 %v59
    %83 = vmatpush.msra.mxu0 %v58
    %84 = vmatpush.msra.mxu0 %v57
    %85 = vmatpush.msra.mxu0 %v56
    %86 = vmatpush.msra.mxu0 %v55
    %87 = vmatmul.f32.gmra.mxu0 %v24
    %v88 = vpop.f32.mrf.mxu0
    %v89 = vadd.f32 0.0, %v88
    %90 = vmatmul.f32.gmra.mxu0 %v25
    %v91 = vpop.f32.mrf.mxu0
    %v92 = vadd.f32 0.0, %v91
    %93 = vmatmul.f32.gmra.mxu0 %v26
    %v94 = vpop.f32.mrf.mxu0
    %v95 = vadd.f32 0.0, %v94
    %96 = vmatmul.f32.gmra.mxu0 %v27
    %v97 = vpop.f32.mrf.mxu0
    %v98 = vadd.f32 0.0, %v97
    %99 = vmatmul.f32.gmra.mxu0 %v28
    %v100 = vpop.f32.mrf.mxu0
    %v101 = vadd.f32 0.0, %v100
    %102 = vmatmul.f32.gmra.mxu0 %v29
    %v103 = vpop.f32.mrf.mxu0
    %v104 = vadd.f32 0.0, %v103
    %105 = vmatmul.f32.gmra.mxu0 %v30
    %v106 = vpop.f32.mrf.mxu0
    %v107 = vadd.f32 0.0, %v106
    %108 = vmatmul.f32.gmra.mxu0 %v31
    %v109 = vpop.f32.mrf.mxu0
    %v110 = vadd.f32 0.0, %v109
    %111 = vmatmul.f32.gmra.mxu0 %v32
    %v112 = vpop.f32.mrf.mxu0
    %v113 = vadd.f32 0.0, %v112
    %114 = vmatmul.f32.gmra.mxu0 %v33
    %v115 = vpop.f32.mrf.mxu0
    %v116 = vadd.f32 0.0, %v115
    %117 = vmatmul.f32.gmra.mxu0 %v34
    %v118 = vpop.f32.mrf.mxu0
    %v119 = vadd.f32 0.0, %v118
    %120 = vmatmul.f32.gmra.mxu0 %v35
    %v121 = vpop.f32.mrf.mxu0
    %v122 = vadd.f32 0.0, %v121
    %123 = vmatmul.f32.gmra.mxu0 %v36
    %v124 = vpop.f32.mrf.mxu0
    %v125 = vadd.f32 0.0, %v124
    %126 = vmatmul.f32.gmra.mxu0 %v37
    %v127 = vpop.f32.mrf.mxu0
    %v128 = vadd.f32 0.0, %v127
    %129 = vmatmul.f32.gmra.mxu0 %v38
    %v130 = vpop.f32.mrf.mxu0
    %v131 = vadd.f32 0.0, %v130
    %132 = vmatmul.f32.gmra.mxu0 %v39
    %v133 = vpop.f32.mrf.mxu0
    %v134 = vadd.f32 0.0, %v133
    %135 = vmatmul.f32.gmra.mxu0 %v40
    %v136 = vpop.f32.mrf.mxu0
    %v137 = vadd.f32 0.0, %v136
    %138 = vmatmul.f32.gmra.mxu0 %v41
    %v139 = vpop.f32.mrf.mxu0
    %v140 = vadd.f32 0.0, %v139
    %141 = vmatmul.f32.gmra.mxu0 %v42
    %v142 = vpop.f32.mrf.mxu0
    %v143 = vadd.f32 0.0, %v142
    %144 = vmatmul.f32.gmra.mxu0 %v43
    %v145 = vpop.f32.mrf.mxu0
    %v146 = vadd.f32 0.0, %v145
    %147 = vmatmul.f32.gmra.mxu0 %v44
    %v148 = vpop.f32.mrf.mxu0
    %v149 = vadd.f32 0.0, %v148
    %150 = vmatmul.f32.gmra.mxu0 %v45
    %v151 = vpop.f32.mrf.mxu0
    %v152 = vadd.f32 0.0, %v151
    %153 = vmatmul.f32.gmra.mxu0 %v46
    %v154 = vpop.f32.mrf.mxu0
    %v155 = vadd.f32 0.0, %v154
    %156 = vmatmul.f32.gmra.mxu0 %v47
    %v157 = vpop.f32.mrf.mxu0
    %v158 = vadd.f32 0.0, %v157
    %159 = vmatmul.f32.gmra.mxu0 %v48
    %v160 = vpop.f32.mrf.mxu0
    %v161 = vadd.f32 0.0, %v160
    %162 = vmatmul.f32.gmra.mxu0 %v49
    %v163 = vpop.f32.mrf.mxu0
    %v164 = vadd.f32 0.0, %v163
    %165 = vmatmul.f32.gmra.mxu0 %v50
    %v166 = vpop.f32.mrf.mxu0
    %v167 = vadd.f32 0.0, %v166
    %168 = vmatmul.f32.gmra.mxu0 %v51
    %v169 = vpop.f32.mrf.mxu0
    %v170 = vadd.f32 0.0, %v169
    %171 = vmatmul.f32.gmra.mxu0 %v52
    %v172 = vpop.f32.mrf.mxu0
    %v173 = vadd.f32 0.0, %v172
    %174 = vmatmul.f32.gmra.mxu0 %v53
    %v175 = vpop.f32.mrf.mxu0
    %v176 = vadd.f32 0.0, %v175
    %177 = vmatmul.f32.gmra.mxu0 %v54
    %v178 = vpop.f32.mrf.mxu0
    %v179 = vadd.f32 0.0, %v178
    %180 = vdwg.mxu0
    %v181 = vadd.f32 %v89, %v92
    %v182 = vadd.f32 %v181, %v95
    %v183 = vadd.f32 %v182, %v98
    %v184 = vadd.f32 %v183, %v101
    %v185 = vadd.f32 %v184, %v104
    %v186 = vadd.f32 %v185, %v107
    %v187 = vadd.f32 %v186, %v110
    %v188 = vadd.f32 %v187, %v113
    %v189 = vadd.f32 %v188, %v116
    %v190 = vadd.f32 %v189, %v119
    %v191 = vadd.f32 %v190, %v122
    %v192 = vadd.f32 %v191, %v125
    %v193 = vadd.f32 %v192, %v128
    %v194 = vadd.f32 %v193, %v131
    %v195 = vadd.f32 %v194, %v134
    %v196 = vadd.f32 %v195, %v137
    %v197 = vadd.f32 %v196, %v140
    %v198 = vadd.f32 %v197, %v143
    %v199 = vadd.f32 %v198, %v146
    %v200 = vadd.f32 %v199, %v149
    %v201 = vadd.f32 %v200, %v152
    %v202 = vadd.f32 %v201, %v155
    %v203 = vadd.f32 %v202, %v158
    %v204 = vadd.f32 %v203, %v161
    %v205 = vadd.f32 %v204, %v164
    %v206 = vadd.f32 %v205, %v167
    %v207 = vadd.f32 %v206, %v170
    %v208 = vadd.f32 %v207, %v173
    %v209 = vadd.f32 %v208, %v176
    %v210 = vadd.f32 %v209, %v179
    %v211 = vrot.slane %v210, 4
    %v212 = vadd.f32 %v210, %v211
    %v213 = vrot.slane %v212, 2
    %v214 = vadd.f32 %v212, %v213
    %v215 = vrot.slane %v214, 1
    %v216 = vadd.f32 %v214, %v215
    %v217 = vadd.f32 %v216, 0.0
    %v218 = vmul.f32 %v89, %v89
    %v219 = vmul.f32 %v92, %v92
    %v220 = vmul.f32 %v95, %v95
    %v221 = vmul.f32 %v98, %v98
    %v222 = vmul.f32 %v101, %v101
    %v223 = vmul.f32 %v104, %v104
    %v224 = vmul.f32 %v107, %v107
    %v225 = vmul.f32 %v110, %v110
    %v226 = vmul.f32 %v113, %v113
    %v227 = vmul.f32 %v116, %v116
    %v228 = vmul.f32 %v119, %v119
    %v229 = vmul.f32 %v122, %v122
    %v230 = vmul.f32 %v125, %v125
    %v231 = vmul.f32 %v128, %v128
    %v232 = vmul.f32 %v131, %v131
    %v233 = vmul.f32 %v134, %v134
    %v234 = vmul.f32 %v137, %v137
    %v235 = vmul.f32 %v140, %v140
    %v236 = vmul.f32 %v143, %v143
    %v237 = vmul.f32 %v146, %v146
    %v238 = vmul.f32 %v149, %v149
    %v239 = vmul.f32 %v152, %v152
    %v240 = vmul.f32 %v155, %v155
    %v241 = vmul.f32 %v158, %v158
    %v242 = vmul.f32 %v161, %v161
    %v243 = vmul.f32 %v164, %v164
    %v244 = vmul.f32 %v167, %v167
    %v245 = vmul.f32 %v170, %v170
    %v246 = vmul.f32 %v173, %v173
    %v247 = vmul.f32 %v176, %v176
    %v248 = vmul.f32 %v179, %v179
    %v249 = vadd.f32 %v218, %v219
    %v250 = vadd.f32 %v249, %v220
    %v251 = vadd.f32 %v250, %v221
    %v252 = vadd.f32 %v251, %v222
    %v253 = vadd.f32 %v252, %v223
    %v254 = vadd.f32 %v253, %v224
    %v255 = vadd.f32 %v254, %v225
    %v256 = vadd.f32 %v255, %v226
    %v257 = vadd.f32 %v256, %v227
    %v258 = vadd.f32 %v257, %v228
    %v259 = vadd.f32 %v258, %v229
    %v260 = vadd.f32 %v259, %v230
    %v261 = vadd.f32 %v260, %v231
    %v262 = vadd.f32 %v261, %v232
    %v263 = vadd.f32 %v262, %v233
    %v264 = vadd.f32 %v263, %v234
    %v265 = vadd.f32 %v264, %v235
    %v266 = vadd.f32 %v265, %v236
    %v267 = vadd.f32 %v266, %v237
    %v268 = vadd.f32 %v267, %v238
    %v269 = vadd.f32 %v268, %v239
    %v270 = vadd.f32 %v269, %v240
    %v271 = vadd.f32 %v270, %v241
    %v272 = vadd.f32 %v271, %v242
    %v273 = vadd.f32 %v272, %v243
    %v274 = vadd.f32 %v273, %v244
    %v275 = vadd.f32 %v274, %v245
    %v276 = vadd.f32 %v275, %v246
    %v277 = vadd.f32 %v276, %v247
    %v278 = vadd.f32 %v277, %v248
    %v279 = vrot.slane %v278, 4
    %v280 = vadd.f32 %v278, %v279
    %v281 = vrot.slane %v280, 2
    %v282 = vadd.f32 %v280, %v281
    %v283 = vrot.slane %v282, 1
    %v284 = vadd.f32 %v282, %v283
    %v285 = vadd.f32 %v284, 0.0
    %286 = vst [vmem:[#allocation2] sm:$0xff] %v89
    %287 = vst [vmem:[#allocation2 + $0x8] sm:$0xff] %v92
    %288 = vst [vmem:[#allocation2 + $0x10] sm:$0xff] %v95
    %289 = vst [vmem:[#allocation2 + $0x18] sm:$0xff] %v98
    %290 = vst [vmem:[#allocation2 + $0x20] sm:$0xff] %v101
    %291 = vst [vmem:[#allocation2 + $0x28] sm:$0xff] %v104
    %292 = vst [vmem:[#allocation2 + $0x30] sm:$0xff] %v107
    %293 = vst [vmem:[#allocation2 + $0x38] sm:$0xff] %v110
    %294 = vst [vmem:[#allocation2 + $0x40] sm:$0xff] %v113
    %295 = vst [vmem:[#allocation2 + $0x48] sm:$0xff] %v116
    %296 = vst [vmem:[#allocation2 + $0x50] sm:$0xff] %v119
    %297 = vst [vmem:[#allocation2 + $0x58] sm:$0xff] %v122
    %298 = vst [vmem:[#allocation2 + $0x60] sm:$0xff] %v125
    %299 = vst [vmem:[#allocation2 + $0x68] sm:$0xff] %v128
    %300 = vst [vmem:[#allocation2 + $0x70] sm:$0xff] %v131
    %301 = vst [vmem:[#allocation2 + $0x78] sm:$0xff] %v134
    %302 = vst [vmem:[#allocation2 + $0x80] sm:$0xff] %v137
    %303 = vst [vmem:[#allocation2 + $0x88] sm:$0xff] %v140
    %304 = vst [vmem:[#allocation2 + $0x90] sm:$0xff] %v143
    %305 = vst [vmem:[#allocation2 + $0x98] sm:$0xff] %v146
    %306 = vst [vmem:[#allocation2 + $0xa0] sm:$0xff] %v149
    %307 = vst [vmem:[#allocation2 + $0xa8] sm:$0xff] %v152
    %308 = vst [vmem:[#allocation2 + $0xb0] sm:$0xff] %v155
    %309 = vst [vmem:[#allocation2 + $0xb8] sm:$0xff] %v158
    %310 = vst [vmem:[#allocation2 + $0xc0] sm:$0xff] %v161
    %311 = vst [vmem:[#allocation2 + $0xc8] sm:$0xff] %v164
    %312 = vst [vmem:[#allocation2 + $0xd0] sm:$0xff] %v167
    %313 = vst [vmem:[#allocation2 + $0xd8] sm:$0xff] %v170
    %314 = vst [vmem:[#allocation2 + $0xe0] sm:$0xff] %v173
    %315 = vst [vmem:[#allocation2 + $0xe8] sm:$0xff] %v176
    %316 = vst [vmem:[#allocation2 + $0xf0] sm:$0xff] %v179
    %v317 = vld [vmem:[%s0 + $0xf8] sm:$0xff]
    %v318 = vld [vmem:[%s0 + $0x100] sm:$0xff]
    %v319 = vld [vmem:[%s0 + $0x108] sm:$0xff]
    %v320 = vld [vmem:[%s0 + $0x110] sm:$0xff]
    %v321 = vld [vmem:[%s0 + $0x118] sm:$0xff]
    %v322 = vld [vmem:[%s0 + $0x120] sm:$0xff]
    %v323 = vld [vmem:[%s0 + $0x128] sm:$0xff]
    %v324 = vld [vmem:[%s0 + $0x130] sm:$0xff]
    %v325 = vld [vmem:[%s0 + $0x138] sm:$0xff]
    %v326 = vld [vmem:[%s0 + $0x140] sm:$0xff]
    %v327 = vld [vmem:[%s0 + $0x148] sm:$0xff]
    %v328 = vld [vmem:[%s0 + $0x150] sm:$0xff]
    %v329 = vld [vmem:[%s0 + $0x158] sm:$0xff]
    %v330 = vld [vmem:[%s0 + $0x160] sm:$0xff]
    %v331 = vld [vmem:[%s0 + $0x168] sm:$0xff]
    %v332 = vld [vmem:[%s0 + $0x170] sm:$0xff]
    %v333 = vld [vmem:[%s0 + $0x178] sm:$0xff]
    %v334 = vld [vmem:[%s0 + $0x180] sm:$0xff]
    %v335 = vld [vmem:[%s0 + $0x188] sm:$0xff]
    %v336 = vld [vmem:[%s0 + $0x190] sm:$0xff]
    %v337 = vld [vmem:[%s0 + $0x198] sm:$0xff]
    %v338 = vld [vmem:[%s0 + $0x1a0] sm:$0xff]
    %v339 = vld [vmem:[%s0 + $0x1a8] sm:$0xff]
    %v340 = vld [vmem:[%s0 + $0x1b0] sm:$0xff]
    %v341 = vld [vmem:[%s0 + $0x1b8] sm:$0xff]
    %v342 = vld [vmem:[%s0 + $0x1c0] sm:$0xff]
    %v343 = vld [vmem:[%s0 + $0x1c8] sm:$0xff]
    %v344 = vld [vmem:[%s0 + $0x1d0] sm:$0xff]
    %v345 = vld [vmem:[%s0 + $0x1d8] sm:$0xff]
    %v346 = vld [vmem:[%s0 + $0x1e0] sm:$0xff]
    %v347 = vld [vmem:[%s0 + $0x1e8] sm:$0xff]
    %v348 = vld [vmem:[%s1] sm:$0xff]
    %v349 = vld [vmem:[%s1 + $0x8] sm:$0xff]
    %v350 = vld [vmem:[%s1 + $0x10] sm:$0xff]
    %v351 = vld [vmem:[%s1 + $0x18] sm:$0xff]
    %v352 = vld [vmem:[%s1 + $0x20] sm:$0xff]
    %v353 = vld [vmem:[%s1 + $0x28] sm:$0xff]
    %v354 = vld [vmem:[%s1 + $0x30] sm:$0xff]
    %v355 = vld [vmem:[%s1 + $0x38] sm:$0xff]
    %v356 = vld [vmem:[%s1 + $0x40] sm:$0xff]
    %v357 = vld [vmem:[%s1 + $0x48] sm:$0xff]
    %v358 = vld [vmem:[%s1 + $0x50] sm:$0xff]
    %v359 = vld [vmem:[%s1 + $0x58] sm:$0xff]
    %v360 = vld [vmem:[%s1 + $0x60] sm:$0xff]
    %v361 = vld [vmem:[%s1 + $0x68] sm:$0xff]
    %v362 = vld [vmem:[%s1 + $0x70] sm:$0xff]
    %v363 = vld [vmem:[%s1 + $0x78] sm:$0xff]
    %364 = vmatpush.msra.mxu0 %v363
    %365 = vmatpush.msra.mxu0 %v362
    %366 = vmatpush.msra.mxu0 %v361
    %367 = vmatpush.msra.mxu0 %v360
    %368 = vmatpush.msra.mxu0 %v359
    %369 = vmatpush.msra.mxu0 %v358
    %370 = vmatpush.msra.mxu0 %v357
    %371 = vmatpush.msra.mxu0 %v356
    %372 = vmatpush.msra.mxu0 %v355
    %373 = vmatpush.msra.mxu0 %v354
    %374 = vmatpush.msra.mxu0 %v353
    %375 = vmatpush.msra.mxu0 %v352
    %376 = vmatpush.msra.mxu0 %v351
    %377 = vmatpush.msra.mxu0 %v350
    %378 = vmatpush.msra.mxu0 %v349
    %379 = vmatpush.msra.mxu0 %v348
    %380 = vmatmul.f32.gmra.mxu0 %v317
    %v381 = vpop.f32.mrf.mxu0
    %v382 = vadd.f32 0.0, %v381
    %383 = vmatmul.f32.gmra.mxu0 %v318
    %v384 = vpop.f32.mrf.mxu0
    %v385 = vadd.f32 0.0, %v384
    %386 = vmatmul.f32.gmra.mxu0 %v319
    %v387 = vpop.f32.mrf.mxu0
    %v388 = vadd.f32 0.0, %v387
    %389 = vmatmul.f32.gmra.mxu0 %v320
    %v390 = vpop.f32.mrf.mxu0
    %v391 = vadd.f32 0.0, %v390
    %392 = vmatmul.f32.gmra.mxu0 %v321
    %v393 = vpop.f32.mrf.mxu0
    %v394 = vadd.f32 0.0, %v393
    %395 = vmatmul.f32.gmra.mxu0 %v322
    %v396 = vpop.f32.mrf.mxu0
    %v397 = vadd.f32 0.0, %v396
    %398 = vmatmul.f32.gmra.mxu0 %v323
    %v399 = vpop.f32.mrf.mxu0
    %v400 = vadd.f32 0.0, %v399
    %401 = vmatmul.f32.gmra.mxu0 %v324
    %v402 = vpop.f32.mrf.mxu0
    %v403 = vadd.f32 0.0, %v402
    %404 = vmatmul.f32.gmra.mxu0 %v325
    %v405 = vpop.f32.mrf.mxu0
    %v406 = vadd.f32 0.0, %v405
    %407 = vmatmul.f32.gmra.mxu0 %v326
    %v408 = vpop.f32.mrf.mxu0
    %v409 = vadd.f32 0.0, %v408
    %410 = vmatmul.f32.gmra.mxu0 %v327
    %v411 = vpop.f32.mrf.mxu0
    %v412 = vadd.f32 0.0, %v411
    %413 = vmatmul.f32.gmra.mxu0 %v328
    %v414 = vpop.f32.mrf.mxu0
    %v415 = vadd.f32 0.0, %v414
    %416 = vmatmul.f32.gmra.mxu0 %v329
    %v417 = vpop.f32.mrf.mxu0
    %v418 = vadd.f32 0.0, %v417
    %419 = vmatmul.f32.gmra.mxu0 %v330
    %v420 = vpop.f32.mrf.mxu0
    %v421 = vadd.f32 0.0, %v420
    %422 = vmatmul.f32.gmra.mxu0 %v331
    %v423 = vpop.f32.mrf.mxu0
    %v424 = vadd.f32 0.0, %v423
    %425 = vmatmul.f32.gmra.mxu0 %v332
    %v426 = vpop.f32.mrf.mxu0
    %v427 = vadd.f32 0.0, %v426
    %428 = vmatmul.f32.gmra.mxu0 %v333
    %v429 = vpop.f32.mrf.mxu0
    %v430 = vadd.f32 0.0, %v429
    %431 = vmatmul.f32.gmra.mxu0 %v334
    %v432 = vpop.f32.mrf.mxu0
    %v433 = vadd.f32 0.0, %v432
    %434 = vmatmul.f32.gmra.mxu0 %v335
    %v435 = vpop.f32.mrf.mxu0
    %v436 = vadd.f32 0.0, %v435
    %437 = vmatmul.f32.gmra.mxu0 %v336
    %v438 = vpop.f32.mrf.mxu0
    %v439 = vadd.f32 0.0, %v438
    %440 = vmatmul.f32.gmra.mxu0 %v337
    %v441 = vpop.f32.mrf.mxu0
    %v442 = vadd.f32 0.0, %v441
    %443 = vmatmul.f32.gmra.mxu0 %v338
    %v444 = vpop.f32.mrf.mxu0
    %v445 = vadd.f32 0.0, %v444
    %446 = vmatmul.f32.gmra.mxu0 %v339
    %v447 = vpop.f32.mrf.mxu0
    %v448 = vadd.f32 0.0, %v447
    %449 = vmatmul.f32.gmra.mxu0 %v340
    %v450 = vpop.f32.mrf.mxu0
    %v451 = vadd.f32 0.0, %v450
    %452 = vmatmul.f32.gmra.mxu0 %v341
    %v453 = vpop.f32.mrf.mxu0
    %v454 = vadd.f32 0.0, %v453
    %455 = vmatmul.f32.gmra.mxu0 %v342
    %v456 = vpop.f32.mrf.mxu0
    %v457 = vadd.f32 0.0, %v456
    %458 = vmatmul.f32.gmra.mxu0 %v343
    %v459 = vpop.f32.mrf.mxu0
    %v460 = vadd.f32 0.0, %v459
    %461 = vmatmul.f32.gmra.mxu0 %v344
    %v462 = vpop.f32.mrf.mxu0
    %v463 = vadd.f32 0.0, %v462
    %464 = vmatmul.f32.gmra.mxu0 %v345
    %v465 = vpop.f32.mrf.mxu0
    %v466 = vadd.f32 0.0, %v465
    %467 = vmatmul.f32.gmra.mxu0 %v346
    %v468 = vpop.f32.mrf.mxu0
    %v469 = vadd.f32 0.0, %v468
    %470 = vmatmul.f32.gmra.mxu0 %v347
    %v471 = vpop.f32.mrf.mxu0
    %v472 = vadd.f32 0.0, %v471
    %473 = vdwg.mxu0
    %v474 = vadd.f32 %v382, %v385
    %v475 = vadd.f32 %v474, %v388
    %v476 = vadd.f32 %v475, %v391
    %v477 = vadd.f32 %v476, %v394
    %v478 = vadd.f32 %v477, %v397
    %v479 = vadd.f32 %v478, %v400
    %v480 = vadd.f32 %v479, %v403
    %v481 = vadd.f32 %v480, %v406
    %v482 = vadd.f32 %v481, %v409
    %v483 = vadd.f32 %v482, %v412
    %v484 = vadd.f32 %v483, %v415
    %v485 = vadd.f32 %v484, %v418
    %v486 = vadd.f32 %v485, %v421
    %v487 = vadd.f32 %v486, %v424
    %v488 = vadd.f32 %v487, %v427
    %v489 = vadd.f32 %v488, %v430
    %v490 = vadd.f32 %v489, %v433
    %v491 = vadd.f32 %v490, %v436
    %v492 = vadd.f32 %v491, %v439
    %v493 = vadd.f32 %v492, %v442
    %v494 = vadd.f32 %v493, %v445
    %v495 = vadd.f32 %v494, %v448
    %v496 = vadd.f32 %v495, %v451
    %v497 = vadd.f32 %v496, %v454
    %v498 = vadd.f32 %v497, %v457
    %v499 = vadd.f32 %v498, %v460
    %v500 = vadd.f32 %v499, %v463
    %v501 = vadd.f32 %v500, %v466
    %v502 = vadd.f32 %v501, %v469
    %v503 = vadd.f32 %v502, %v472
    %v504 = vrot.slane %v503, 4
    %v505 = vadd.f32 %v503, %v504
    %v506 = vrot.slane %v505, 2
    %v507 = vadd.f32 %v505, %v506
    %v508 = vrot.slane %v507, 1
    %v509 = vadd.f32 %v507, %v508
    %v510 = vadd.f32 %v217, %v509
    %v511 = vmul.f32 %v382, %v382
    %v512 = vmul.f32 %v385, %v385
    %v513 = vmul.f32 %v388, %v388
    %v514 = vmul.f32 %v391, %v391
    %v515 = vmul.f32 %v394, %v394
    %v516 = vmul.f32 %v397, %v397
    %v517 = vmul.f32 %v400, %v400
    %v518 = vmul.f32 %v403, %v403
    %v519 = vmul.f32 %v406, %v406
    %v520 = vmul.f32 %v409, %v409
    %v521 = vmul.f32 %v412, %v412
    %v522 = vmul.f32 %v415, %v415
    %v523 = vmul.f32 %v418, %v418
    %v524 = vmul.f32 %v421, %v421
    %v525 = vmul.f32 %v424, %v424
    %v526 = vmul.f32 %v427, %v427
    %v527 = vmul.f32 %v430, %v430
    %v528 = vmul.f32 %v433, %v433
    %v529 = vmul.f32 %v436, %v436
    %v530 = vmul.f32 %v439, %v439
    %v531 = vmul.f32 %v442, %v442
    %v532 = vmul.f32 %v445, %v445
    %v533 = vmul.f32 %v448, %v448
    %v534 = vmul.f32 %v451, %v451
    %v535 = vmul.f32 %v454, %v454
    %v536 = vmul.f32 %v457, %v457
    %v537 = vmul.f32 %v460, %v460
    %v538 = vmul.f32 %v463, %v463
    %v539 = vmul.f32 %v466, %v466
    %v540 = vmul.f32 %v469, %v469
    %v541 = vmul.f32 %v472, %v472
    %v542 = vadd.f32 %v511, %v512
    %v543 = vadd.f32 %v542, %v513
    %v544 = vadd.f32 %v543, %v514
    %v545 = vadd.f32 %v544, %v515
    %v546 = vadd.f32 %v545, %v516
    %v547 = vadd.f32 %v546, %v517
    %v548 = vadd.f32 %v547, %v518
    %v549 = vadd.f32 %v548, %v519
    %v550 = vadd.f32 %v549, %v520
    %v551 = vadd.f32 %v550, %v521
    %v552 = vadd.f32 %v551, %v522
    %v553 = vadd.f32 %v552, %v523
    %v554 = vadd.f32 %v553, %v524
    %v555 = vadd.f32 %v554, %v525
    %v556 = vadd.f32 %v555, %v526
    %v557 = vadd.f32 %v556, %v527
    %v558 = vadd.f32 %v557, %v528
    %v559 = vadd.f32 %v558, %v529
    %v560 = vadd.f32 %v559, %v530
    %v561 = vadd.f32 %v560, %v531
    %v562 = vadd.f32 %v561, %v532
    %v563 = vadd.f32 %v562, %v533
    %v564 = vadd.f32 %v563, %v534
    %v565 = vadd.f32 %v564, %v535
    %v566 = vadd.f32 %v565, %v536
    %v567 = vadd.f32 %v566, %v537
    %v568 = vadd.f32 %v567, %v538
    %v569 = vadd.f32 %v568, %v539
    %v570 = vadd.f32 %v569, %v540
    %v571 = vadd.f32 %v570, %v541
    %v572 = vrot.slane %v571, 4
    %v573 = vadd.f32 %v571, %v572
    %v574 = vrot.slane %v573, 2
    %v575 = vadd.f32 %v573, %v574
    %v576 = vrot.slane %v575, 1
    %v577 = vadd.f32 %v575, %v576
    %v578 = vadd.f32 %v285, %v577
    %579 = vst [vmem:[#allocation2 + $0xf8] sm:$0xff] %v382
    %580 = vst [vmem:[#allocation2 + $0x100] sm:$0xff] %v385
    %581 = vst [vmem:[#allocation2 + $0x108] sm:$0xff] %v388
    %582 = vst [vmem:[#allocation2 + $0x110] sm:$0xff] %v391
    %583 = vst [vmem:[#allocation2 + $0x118] sm:$0xff] %v394
    %584 = vst [vmem:[#allocation2 + $0x120] sm:$0xff] %v397
    %585 = vst [vmem:[#allocation2 + $0x128] sm:$0xff] %v400
    %586 = vst [vmem:[#allocation2 + $0x130] sm:$0xff] %v403
    %587 = vst [vmem:[#allocation2 + $0x138] sm:$0xff] %v406
    %588 = vst [vmem:[#allocation2 + $0x140] sm:$0xff] %v409
    %589 = vst [vmem:[#allocation2 + $0x148] sm:$0xff] %v412
    %590 = vst [vmem:[#allocation2 + $0x150] sm:$0xff] %v415
    %591 = vst [vmem:[#allocation2 + $0x158] sm:$0xff] %v418
    %592 = vst [vmem:[#allocation2 + $0x160] sm:$0xff] %v421
    %593 = vst [vmem:[#allocation2 + $0x168] sm:$0xff] %v424
    %594 = vst [vmem:[#allocation2 + $0x170] sm:$0xff] %v427
    %595 = vst [vmem:[#allocation2 + $0x178] sm:$0xff] %v430
    %596 = vst [vmem:[#allocation2 + $0x180] sm:$0xff] %v433
    %597 = vst [vmem:[#allocation2 + $0x188] sm:$0xff] %v436
    %598 = vst [vmem:[#allocation2 + $0x190] sm:$0xff] %v439
    %599 = vst [vmem:[#allocation2 + $0x198] sm:$0xff] %v442
    %600 = vst [vmem:[#allocation2 + $0x1a0] sm:$0xff] %v445
    %601 = vst [vmem:[#allocation2 + $0x1a8] sm:$0xff] %v448
    %602 = vst [vmem:[#allocation2 + $0x1b0] sm:$0xff] %v451
    %603 = vst [vmem:[#allocation2 + $0x1b8] sm:$0xff] %v454
    %604 = vst [vmem:[#allocation2 + $0x1c0] sm:$0xff] %v457
    %605 = vst [vmem:[#allocation2 + $0x1c8] sm:$0xff] %v460
    %606 = vst [vmem:[#allocation2 + $0x1d0] sm:$0xff] %v463
    %607 = vst [vmem:[#allocation2 + $0x1d8] sm:$0xff] %v466
    %608 = vst [vmem:[#allocation2 + $0x1e0] sm:$0xff] %v469
    %609 = vst [vmem:[#allocation2 + $0x1e8] sm:$0xff] %v472
    %v610 = vld [vmem:[%s0 + $0x1f0] sm:$0xff]
    %v611 = vld [vmem:[%s0 + $0x1f8] sm:$0xff]
    %v612 = vld [vmem:[%s0 + $0x200] sm:$0xff]
    %v613 = vld [vmem:[%s0 + $0x208] sm:$0xff]
    %v614 = vld [vmem:[%s0 + $0x210] sm:$0xff]
    %v615 = vld [vmem:[%s0 + $0x218] sm:$0xff]
    %v616 = vld [vmem:[%s0 + $0x220] sm:$0xff]
    %v617 = vld [vmem:[%s0 + $0x228] sm:$0xff]
    %v618 = vld [vmem:[%s0 + $0x230] sm:$0xff]
    %v619 = vld [vmem:[%s0 + $0x238] sm:$0xff]
    %v620 = vld [vmem:[%s0 + $0x240] sm:$0xff]
    %v621 = vld [vmem:[%s0 + $0x248] sm:$0xff]
    %v622 = vld [vmem:[%s0 + $0x250] sm:$0xff]
    %v623 = vld [vmem:[%s0 + $0x258] sm:$0xff]
    %v624 = vld [vmem:[%s0 + $0x260] sm:$0xff]
    %v625 = vld [vmem:[%s0 + $0x268] sm:$0xff]
    %v626 = vld [vmem:[%s0 + $0x270] sm:$0xff]
    %v627 = vld [vmem:[%s0 + $0x278] sm:$0xff]
    %v628 = vld [vmem:[%s0 + $0x280] sm:$0xff]
    %v629 = vld [vmem:[%s0 + $0x288] sm:$0xff]
    %v630 = vld [vmem:[%s0 + $0x290] sm:$0xff]
    %v631 = vld [vmem:[%s0 + $0x298] sm:$0xff]
    %v632 = vld [vmem:[%s0 + $0x2a0] sm:$0xff]
    %v633 = vld [vmem:[%s0 + $0x2a8] sm:$0xff]
    %v634 = vld [vmem:[%s0 + $0x2b0] sm:$0xff]
    %v635 = vld [vmem:[%s0 + $0x2b8] sm:$0xff]
    %v636 = vld [vmem:[%s0 + $0x2c0] sm:$0xff]
    %v637 = vld [vmem:[%s0 + $0x2c8] sm:$0xff]
    %v638 = vld [vmem:[%s0 + $0x2d0] sm:$0xff]
    %v639 = vld [vmem:[%s0 + $0x2d8] sm:$0xff]
    %v640 = vld [vmem:[%s0 + $0x2e0] sm:$0xff]
    %v641 = vld [vmem:[%s1] sm:$0xff]
    %v642 = vld [vmem:[%s1 + $0x8] sm:$0xff]
    %v643 = vld [vmem:[%s1 + $0x10] sm:$0xff]
    %v644 = vld [vmem:[%s1 + $0x18] sm:$0xff]
    %v645 = vld [vmem:[%s1 + $0x20] sm:$0xff]
    %v646 = vld [vmem:[%s1 + $0x28] sm:$0xff]
    %v647 = vld [vmem:[%s1 + $0x30] sm:$0xff]
    %v648 = vld [vmem:[%s1 + $0x38] sm:$0xff]
    %v649 = vld [vmem:[%s1 + $0x40] sm:$0xff]
    %v650 = vld [vmem:[%s1 + $0x48] sm:$0xff]
    %v651 = vld [vmem:[%s1 + $0x50] sm:$0xff]
    %v652 = vld [vmem:[%s1 + $0x58] sm:$0xff]
    %v653 = vld [vmem:[%s1 + $0x60] sm:$0xff]
    %v654 = vld [vmem:[%s1 + $0x68] sm:$0xff]
    %v655 = vld [vmem:[%s1 + $0x70] sm:$0xff]
    %v656 = vld [vmem:[%s1 + $0x78] sm:$0xff]
    %657 = vmatpush.msra.mxu0 %v656
    %658 = vmatpush.msra.mxu0 %v655
    %659 = vmatpush.msra.mxu0 %v654
    %660 = vmatpush.msra.mxu0 %v653
    %661 = vmatpush.msra.mxu0 %v652
    %662 = vmatpush.msra.mxu0 %v651
    %663 = vmatpush.msra.mxu0 %v650
    %664 = vmatpush.msra.mxu0 %v649
    %665 = vmatpush.msra.mxu0 %v648
    %666 = vmatpush.msra.mxu0 %v647
    %667 = vmatpush.msra.mxu0 %v646
    %668 = vmatpush.msra.mxu0 %v645
    %669 = vmatpush.msra.mxu0 %v644
    %670 = vmatpush.msra.mxu0 %v643
    %671 = vmatpush.msra.mxu0 %v642
    %672 = vmatpush.msra.mxu0 %v641
    %673 = vmatmul.f32.gmra.mxu0 %v610
    %v674 = vpop.f32.mrf.mxu0
    %v675 = vadd.f32 0.0, %v674
    %676 = vmatmul.f32.gmra.mxu0 %v611
    %v677 = vpop.f32.mrf.mxu0
    %v678 = vadd.f32 0.0, %v677
    %679 = vmatmul.f32.gmra.mxu0 %v612
    %v680 = vpop.f32.mrf.mxu0
    %v681 = vadd.f32 0.0, %v680
    %682 = vmatmul.f32.gmra.mxu0 %v613
    %v683 = vpop.f32.mrf.mxu0
    %v684 = vadd.f32 0.0, %v683
    %685 = vmatmul.f32.gmra.mxu0 %v614
    %v686 = vpop.f32.mrf.mxu0
    %v687 = vadd.f32 0.0, %v686
    %688 = vmatmul.f32.gmra.mxu0 %v615
    %v689 = vpop.f32.mrf.mxu0
    %v690 = vadd.f32 0.0, %v689
    %691 = vmatmul.f32.gmra.mxu0 %v616
    %v692 = vpop.f32.mrf.mxu0
    %v693 = vadd.f32 0.0, %v692
    %694 = vmatmul.f32.gmra.mxu0 %v617
    %v695 = vpop.f32.mrf.mxu0
    %v696 = vadd.f32 0.0, %v695
    %697 = vmatmul.f32.gmra.mxu0 %v618
    %v698 = vpop.f32.mrf.mxu0
    %v699 = vadd.f32 0.0, %v698
    %700 = vmatmul.f32.gmra.mxu0 %v619
    %v701 = vpop.f32.mrf.mxu0
    %v702 = vadd.f32 0.0, %v701
    %703 = vmatmul.f32.gmra.mxu0 %v620
    %v704 = vpop.f32.mrf.mxu0
    %v705 = vadd.f32 0.0, %v704
    %706 = vmatmul.f32.gmra.mxu0 %v621
    %v707 = vpop.f32.mrf.mxu0
    %v708 = vadd.f32 0.0, %v707
    %709 = vmatmul.f32.gmra.mxu0 %v622
    %v710 = vpop.f32.mrf.mxu0
    %v711 = vadd.f32 0.0, %v710
    %712 = vmatmul.f32.gmra.mxu0 %v623
    %v713 = vpop.f32.mrf.mxu0
    %v714 = vadd.f32 0.0, %v713
    %715 = vmatmul.f32.gmra.mxu0 %v624
    %v716 = vpop.f32.mrf.mxu0
    %v717 = vadd.f32 0.0, %v716
    %718 = vmatmul.f32.gmra.mxu0 %v625
    %v719 = vpop.f32.mrf.mxu0
    %v720 = vadd.f32 0.0, %v719
    %721 = vmatmul.f32.gmra.mxu0 %v626
    %v722 = vpop.f32.mrf.mxu0
    %v723 = vadd.f32 0.0, %v722
    %724 = vmatmul.f32.gmra.mxu0 %v627
    %v725 = vpop.f32.mrf.mxu0
    %v726 = vadd.f32 0.0, %v725
    %727 = vmatmul.f32.gmra.mxu0 %v628
    %v728 = vpop.f32.mrf.mxu0
    %v729 = vadd.f32 0.0, %v728
    %730 = vmatmul.f32.gmra.mxu0 %v629
    %v731 = vpop.f32.mrf.mxu0
    %v732 = vadd.f32 0.0, %v731
    %733 = vmatmul.f32.gmra.mxu0 %v630
    %v734 = vpop.f32.mrf.mxu0
    %v735 = vadd.f32 0.0, %v734
    %736 = vmatmul.f32.gmra.mxu0 %v631
    %v737 = vpop.f32.mrf.mxu0
    %v738 = vadd.f32 0.0, %v737
    %739 = vmatmul.f32.gmra.mxu0 %v632
    %v740 = vpop.f32.mrf.mxu0
    %v741 = vadd.f32 0.0, %v740
    %742 = vmatmul.f32.gmra.mxu0 %v633
    %v743 = vpop.f32.mrf.mxu0
    %v744 = vadd.f32 0.0, %v743
    %745 = vmatmul.f32.gmra.mxu0 %v634
    %v746 = vpop.f32.mrf.mxu0
    %v747 = vadd.f32 0.0, %v746
    %748 = vmatmul.f32.gmra.mxu0 %v635
    %v749 = vpop.f32.mrf.mxu0
    %v750 = vadd.f32 0.0, %v749
    %751 = vmatmul.f32.gmra.mxu0 %v636
    %v752 = vpop.f32.mrf.mxu0
    %v753 = vadd.f32 0.0, %v752
    %754 = vmatmul.f32.gmra.mxu0 %v637
    %v755 = vpop.f32.mrf.mxu0
    %v756 = vadd.f32 0.0, %v755
    %757 = vmatmul.f32.gmra.mxu0 %v638
    %v758 = vpop.f32.mrf.mxu0
    %v759 = vadd.f32 0.0, %v758
    %760 = vmatmul.f32.gmra.mxu0 %v639
    %v761 = vpop.f32.mrf.mxu0
    %v762 = vadd.f32 0.0, %v761
    %763 = vmatmul.f32.gmra.mxu0 %v640
    %v764 = vpop.f32.mrf.mxu0
    %v765 = vadd.f32 0.0, %v764
    %766 = vdwg.mxu0
    %v767 = vadd.f32 %v675, %v678
    %v768 = vadd.f32 %v767, %v681
    %v769 = vadd.f32 %v768, %v684
    %v770 = vadd.f32 %v769, %v687
    %v771 = vadd.f32 %v770, %v690
    %v772 = vadd.f32 %v771, %v693
    %v773 = vadd.f32 %v772, %v696
    %v774 = vadd.f32 %v773, %v699
    %v775 = vadd.f32 %v774, %v702
    %v776 = vadd.f32 %v775, %v705
    %v777 = vadd.f32 %v776, %v708
    %v778 = vadd.f32 %v777, %v711
    %v779 = vadd.f32 %v778, %v714
    %v780 = vadd.f32 %v779, %v717
    %v781 = vadd.f32 %v780, %v720
    %v782 = vadd.f32 %v781, %v723
    %v783 = vadd.f32 %v782, %v726
    %v784 = vadd.f32 %v783, %v729
    %v785 = vadd.f32 %v784, %v732
    %v786 = vadd.f32 %v785, %v735
    %v787 = vadd.f32 %v786, %v738
    %v788 = vadd.f32 %v787, %v741
    %v789 = vadd.f32 %v788, %v744
    %v790 = vadd.f32 %v789, %v747
    %v791 = vadd.f32 %v790, %v750
    %v792 = vadd.f32 %v791, %v753
    %v793 = vadd.f32 %v792, %v756
    %v794 = vadd.f32 %v793, %v759
    %v795 = vadd.f32 %v794, %v762
    %v796 = vadd.f32 %v795, %v765
    %v797 = vrot.slane %v796, 4
    %v798 = vadd.f32 %v796, %v797
    %v799 = vrot.slane %v798, 2
    %v800 = vadd.f32 %v798, %v799
    %v801 = vrot.slane %v800, 1
    %v802 = vadd.f32 %v800, %v801
    %v803 = vadd.f32 %v510, %v802
    %v804 = vmul.f32 %v675, %v675
    %v805 = vmul.f32 %v678, %v678
    %v806 = vmul.f32 %v681, %v681
    %v807 = vmul.f32 %v684, %v684
    %v808 = vmul.f32 %v687, %v687
    %v809 = vmul.f32 %v690, %v690
    %v810 = vmul.f32 %v693, %v693
    %v811 = vmul.f32 %v696, %v696
    %v812 = vmul.f32 %v699, %v699
    %v813 = vmul.f32 %v702, %v702
    %v814 = vmul.f32 %v705, %v705
    %v815 = vmul.f32 %v708, %v708
    %v816 = vmul.f32 %v711, %v711
    %v817 = vmul.f32 %v714, %v714
    %v818 = vmul.f32 %v717, %v717
    %v819 = vmul.f32 %v720, %v720
    %v820 = vmul.f32 %v723, %v723
    %v821 = vmul.f32 %v726, %v726
    %v822 = vmul.f32 %v729, %v729
    %v823 = vmul.f32 %v732, %v732
    %v824 = vmul.f32 %v735, %v735
    %v825 = vmul.f32 %v738, %v738
    %v826 = vmul.f32 %v741, %v741
    %v827 = vmul.f32 %v744, %v744
    %v828 = vmul.f32 %v747, %v747
    %v829 = vmul.f32 %v750, %v750
    %v830 = vmul.f32 %v753, %v753
    %v831 = vmul.f32 %v756, %v756
    %v832 = vmul.f32 %v759, %v759
    %v833 = vmul.f32 %v762, %v762
    %v834 = vmul.f32 %v765, %v765
    %v835 = vadd.f32 %v804, %v805
    %v836 = vadd.f32 %v835, %v806
    %v837 = vadd.f32 %v836, %v807
    %v838 = vadd.f32 %v837, %v808
    %v839 = vadd.f32 %v838, %v809
    %v840 = vadd.f32 %v839, %v810
    %v841 = vadd.f32 %v840, %v811
    %v842 = vadd.f32 %v841, %v812
    %v843 = vadd.f32 %v842, %v813
    %v844 = vadd.f32 %v843, %v814
    %v845 = vadd.f32 %v844, %v815
    %v846 = vadd.f32 %v845, %v816
    %v847 = vadd.f32 %v846, %v817
    %v848 = vadd.f32 %v847, %v818
    %v849 = vadd.f32 %v848, %v819
    %v850 = vadd.f32 %v849, %v820
    %v851 = vadd.f32 %v850, %v821
    %v852 = vadd.f32 %v851, %v822
    %v853 = vadd.f32 %v852, %v823
    %v854 = vadd.f32 %v853, %v824
    %v855 = vadd.f32 %v854, %v825
    %v856 = vadd.f32 %v855, %v826
    %v857 = vadd.f32 %v856, %v827
    %v858 = vadd.f32 %v857, %v828
    %v859 = vadd.f32 %v858, %v829
    %v860 = vadd.f32 %v859, %v830
    %v861 = vadd.f32 %v860, %v831
    %v862 = vadd.f32 %v861, %v832
    %v863 = vadd.f32 %v862, %v833
    %v864 = vadd.f32 %v863, %v834
    %v865 = vrot.slane %v864, 4
    %v866 = vadd.f32 %v864, %v865
    %v867 = vrot.slane %v866, 2
    %v868 = vadd.f32 %v866, %v867
    %v869 = vrot.slane %v868, 1
    %v870 = vadd.f32 %v868, %v869
    %v871 = vadd.f32 %v578, %v870
    %872 = vst [vmem:[#allocation2 + $0x1f0] sm:$0xff] %v675
    %873 = vst [vmem:[#allocation2 + $0x1f8] sm:$0xff] %v678
    %874 = vst [vmem:[#allocation2 + $0x200] sm:$0xff] %v681
    %875 = vst [vmem:[#allocation2 + $0x208] sm:$0xff] %v684
    %876 = vst [vmem:[#allocation2 + $0x210] sm:$0xff] %v687
    %877 = vst [vmem:[#allocation2 + $0x218] sm:$0xff] %v690
    %878 = vst [vmem:[#allocation2 + $0x220] sm:$0xff] %v693
    %879 = vst [vmem:[#allocation2 + $0x228] sm:$0xff] %v696
    %880 = vst [vmem:[#allocation2 + $0x230] sm:$0xff] %v699
    %881 = vst [vmem:[#allocation2 + $0x238] sm:$0xff] %v702
    %882 = vst [vmem:[#allocation2 + $0x240] sm:$0xff] %v705
    %883 = vst [vmem:[#allocation2 + $0x248] sm:$0xff] %v708
    %884 = vst [vmem:[#allocation2 + $0x250] sm:$0xff] %v711
    %885 = vst [vmem:[#allocation2 + $0x258] sm:$0xff] %v714
    %886 = vst [vmem:[#allocation2 + $0x260] sm:$0xff] %v717
    %887 = vst [vmem:[#allocation2 + $0x268] sm:$0xff] %v720
    %888 = vst [vmem:[#allocation2 + $0x270] sm:$0xff] %v723
    %889 = vst [vmem:[#allocation2 + $0x278] sm:$0xff] %v726
    %890 = vst [vmem:[#allocation2 + $0x280] sm:$0xff] %v729
    %891 = vst [vmem:[#allocation2 + $0x288] sm:$0xff] %v732
    %892 = vst [vmem:[#allocation2 + $0x290] sm:$0xff] %v735
    %893 = vst [vmem:[#allocation2 + $0x298] sm:$0xff] %v738
    %894 = vst [vmem:[#allocation2 + $0x2a0] sm:$0xff] %v741
    %895 = vst [vmem:[#allocation2 + $0x2a8] sm:$0xff] %v744
    %896 = vst [vmem:[#allocation2 + $0x2b0] sm:$0xff] %v747
    %897 = vst [vmem:[#allocation2 + $0x2b8] sm:$0xff] %v750
    %898 = vst [vmem:[#allocation2 + $0x2c0] sm:$0xff] %v753
    %899 = vst [vmem:[#allocation2 + $0x2c8] sm:$0xff] %v756
    %900 = vst [vmem:[#allocation2 + $0x2d0] sm:$0xff] %v759
    %901 = vst [vmem:[#allocation2 + $0x2d8] sm:$0xff] %v762
    %902 = vst [vmem:[#allocation2 + $0x2e0] sm:$0xff] %v765
    %v903 = vld [vmem:[%s0 + $0x2e8] sm:$0xff]
    %v904 = vld [vmem:[%s0 + $0x2f0] sm:$0xff]
    %v905 = vld [vmem:[%s0 + $0x2f8] sm:$0xff]
    %v906 = vld [vmem:[%s0 + $0x300] sm:$0xff]
    %v907 = vld [vmem:[%s0 + $0x308] sm:$0xff]
    %v908 = vld [vmem:[%s0 + $0x310] sm:$0xff]
    %v909 = vld [vmem:[%s0 + $0x318] sm:$0xff]
    %v910 = vld [vmem:[%s0 + $0x320] sm:$0xff]
    %v911 = vld [vmem:[%s0 + $0x328] sm:$0xff]
    %v912 = vld [vmem:[%s0 + $0x330] sm:$0xff]
    %v913 = vld [vmem:[%s0 + $0x338] sm:$0xff]
    %v914 = vld [vmem:[%s0 + $0x340] sm:$0xff]
    %v915 = vld [vmem:[%s0 + $0x348] sm:$0xff]
    %v916 = vld [vmem:[%s0 + $0x350] sm:$0xff]
    %v917 = vld [vmem:[%s0 + $0x358] sm:$0xff]
    %v918 = vld [vmem:[%s0 + $0x360] sm:$0xff]
    %v919 = vld [vmem:[%s0 + $0x368] sm:$0xff]
    %v920 = vld [vmem:[%s0 + $0x370] sm:$0xff]
    %v921 = vld [vmem:[%s0 + $0x378] sm:$0xff]
    %v922 = vld [vmem:[%s0 + $0x380] sm:$0xff]
    %v923 = vld [vmem:[%s0 + $0x388] sm:$0xff]
    %v924 = vld [vmem:[%s0 + $0x390] sm:$0xff]
    %v925 = vld [vmem:[%s0 + $0x398] sm:$0xff]
    %v926 = vld [vmem:[%s0 + $0x3a0] sm:$0xff]
    %v927 = vld [vmem:[%s0 + $0x3a8] sm:$0xff]
    %v928 = vld [vmem:[%s0 + $0x3b0] sm:$0xff]
    %v929 = vld [vmem:[%s0 + $0x3b8] sm:$0xff]
    %v930 = vld [vmem:[%s0 + $0x3c0] sm:$0xff]
    %v931 = vld [vmem:[%s0 + $0x3c8] sm:$0xff]
    %v932 = vld [vmem:[%s0 + $0x3d0] sm:$0xff]
    %v933 = vld [vmem:[%s0 + $0x3d8] sm:$0xff]
    %v934 = vld [vmem:[%s1] sm:$0xff]
    %v935 = vld [vmem:[%s1 + $0x8] sm:$0xff]
    %v936 = vld [vmem:[%s1 + $0x10] sm:$0xff]
    %v937 = vld [vmem:[%s1 + $0x18] sm:$0xff]
    %v938 = vld [vmem:[%s1 + $0x20] sm:$0xff]
    %v939 = vld [vmem:[%s1 + $0x28] sm:$0xff]
    %v940 = vld [vmem:[%s1 + $0x30] sm:$0xff]
    %v941 = vld [vmem:[%s1 + $0x38] sm:$0xff]
    %v942 = vld [vmem:[%s1 + $0x40] sm:$0xff]
    %v943 = vld [vmem:[%s1 + $0x48] sm:$0xff]
    %v944 = vld [vmem:[%s1 + $0x50] sm:$0xff]
    %v945 = vld [vmem:[%s1 + $0x58] sm:$0xff]
    %v946 = vld [vmem:[%s1 + $0x60] sm:$0xff]
    %v947 = vld [vmem:[%s1 + $0x68] sm:$0xff]
    %v948 = vld [vmem:[%s1 + $0x70] sm:$0xff]
    %v949 = vld [vmem:[%s1 + $0x78] sm:$0xff]
    %950 = vmatpush.msra.mxu0 %v949
    %951 = vmatpush.msra.mxu0 %v948
    %952 = vmatpush.msra.mxu0 %v947
    %953 = vmatpush.msra.mxu0 %v946
    %954 = vmatpush.msra.mxu0 %v945
    %955 = vmatpush.msra.mxu0 %v944
    %956 = vmatpush.msra.mxu0 %v943
    %957 = vmatpush.msra.mxu0 %v942
    %958 = vmatpush.msra.mxu0 %v941
    %959 = vmatpush.msra.mxu0 %v940
    %960 = vmatpush.msra.mxu0 %v939
    %961 = vmatpush.msra.mxu0 %v938
    %962 = vmatpush.msra.mxu0 %v937
    %963 = vmatpush.msra.mxu0 %v936
    %964 = vmatpush.msra.mxu0 %v935
    %965 = vmatpush.msra.mxu0 %v934
    %966 = vmatmul.f32.gmra.mxu0 %v903
    %v967 = vpop.f32.mrf.mxu0
    %v968 = vadd.f32 0.0, %v967
    %969 = vmatmul.f32.gmra.mxu0 %v904
    %v970 = vpop.f32.mrf.mxu0
    %v971 = vadd.f32 0.0, %v970
    %972 = vmatmul.f32.gmra.mxu0 %v905
    %v973 = vpop.f32.mrf.mxu0
    %v974 = vadd.f32 0.0, %v973
    %975 = vmatmul.f32.gmra.mxu0 %v906
    %v976 = vpop.f32.mrf.mxu0
    %v977 = vadd.f32 0.0, %v976
    %978 = vmatmul.f32.gmra.mxu0 %v907
    %v979 = vpop.f32.mrf.mxu0
    %v980 = vadd.f32 0.0, %v979
    %981 = vmatmul.f32.gmra.mxu0 %v908
    %v982 = vpop.f32.mrf.mxu0
    %v983 = vadd.f32 0.0, %v982
    %984 = vmatmul.f32.gmra.mxu0 %v909
    %v985 = vpop.f32.mrf.mxu0
    %v986 = vadd.f32 0.0, %v985
    %987 = vmatmul.f32.gmra.mxu0 %v910
    %v988 = vpop.f32.mrf.mxu0
    %v989 = vadd.f32 0.0, %v988
    %990 = vmatmul.f32.gmra.mxu0 %v911
    %v991 = vpop.f32.mrf.mxu0
    %v992 = vadd.f32 0.0, %v991
    %993 = vmatmul.f32.gmra.mxu0 %v912
    %v994 = vpop.f32.mrf.mxu0
    %v995 = vadd.f32 0.0, %v994
    %996 = vmatmul.f32.gmra.mxu0 %v913
    %v997 = vpop.f32.mrf.mxu0
    %v998 = vadd.f32 0.0, %v997
    %999 = vmatmul.f32.gmra.mxu0 %v914
    %v1000 = vpop.f32.mrf.mxu0
    %v1001 = vadd.f32 0.0, %v1000
    %1002 = vmatmul.f32.gmra.mxu0 %v915
    %v1003 = vpop.f32.mrf.mxu0
    %v1004 = vadd.f32 0.0, %v1003
    %1005 = vmatmul.f32.gmra.mxu0 %v916
    %v1006 = vpop.f32.mrf.mxu0
    %v1007 = vadd.f32 0.0, %v1006
    %1008 = vmatmul.f32.gmra.mxu0 %v917
    %v1009 = vpop.f32.mrf.mxu0
    %v1010 = vadd.f32 0.0, %v1009
    %1011 = vmatmul.f32.gmra.mxu0 %v918
    %v1012 = vpop.f32.mrf.mxu0
    %v1013 = vadd.f32 0.0, %v1012
    %1014 = vmatmul.f32.gmra.mxu0 %v919
    %v1015 = vpop.f32.mrf.mxu0
    %v1016 = vadd.f32 0.0, %v1015
    %1017 = vmatmul.f32.gmra.mxu0 %v920
    %v1018 = vpop.f32.mrf.mxu0
    %v1019 = vadd.f32 0.0, %v1018
    %1020 = vmatmul.f32.gmra.mxu0 %v921
    %v1021 = vpop.f32.mrf.mxu0
    %v1022 = vadd.f32 0.0, %v1021
    %1023 = vmatmul.f32.gmra.mxu0 %v922
    %v1024 = vpop.f32.mrf.mxu0
    %v1025 = vadd.f32 0.0, %v1024
    %1026 = vmatmul.f32.gmra.mxu0 %v923
    %v1027 = vpop.f32.mrf.mxu0
    %v1028 = vadd.f32 0.0, %v1027
    %1029 = vmatmul.f32.gmra.mxu0 %v924
    %v1030 = vpop.f32.mrf.mxu0
    %v1031 = vadd.f32 0.0, %v1030
    %1032 = vmatmul.f32.gmra.mxu0 %v925
    %v1033 = vpop.f32.mrf.mxu0
    %v1034 = vadd.f32 0.0, %v1033
    %1035 = vmatmul.f32.gmra.mxu0 %v926
    %v1036 = vpop.f32.mrf.mxu0
    %v1037 = vadd.f32 0.0, %v1036
    %1038 = vmatmul.f32.gmra.mxu0 %v927
    %v1039 = vpop.f32.mrf.mxu0
    %v1040 = vadd.f32 0.0, %v1039
    %1041 = vmatmul.f32.gmra.mxu0 %v928
    %v1042 = vpop.f32.mrf.mxu0
    %v1043 = vadd.f32 0.0, %v1042
    %1044 = vmatmul.f32.gmra.mxu0 %v929
    %v1045 = vpop.f32.mrf.mxu0
    %v1046 = vadd.f32 0.0, %v1045
    %1047 = vmatmul.f32.gmra.mxu0 %v930
    %v1048 = vpop.f32.mrf.mxu0
    %v1049 = vadd.f32 0.0, %v1048
    %1050 = vmatmul.f32.gmra.mxu0 %v931
    %v1051 = vpop.f32.mrf.mxu0
    %v1052 = vadd.f32 0.0, %v1051
    %1053 = vmatmul.f32.gmra.mxu0 %v932
    %v1054 = vpop.f32.mrf.mxu0
    %v1055 = vadd.f32 0.0, %v1054
    %1056 = vmatmul.f32.gmra.mxu0 %v933
    %v1057 = vpop.f32.mrf.mxu0
    %v1058 = vadd.f32 0.0, %v1057
    %1059 = vdwg.mxu0
    %v1060 = vadd.f32 %v968, %v971
    %v1061 = vadd.f32 %v1060, %v974
    %v1062 = vadd.f32 %v1061, %v977
    %v1063 = vadd.f32 %v1062, %v980
    %v1064 = vadd.f32 %v1063, %v983
    %v1065 = vadd.f32 %v1064, %v986
    %v1066 = vadd.f32 %v1065, %v989
    %v1067 = vadd.f32 %v1066, %v992
    %v1068 = vadd.f32 %v1067, %v995
    %v1069 = vadd.f32 %v1068, %v998
    %v1070 = vadd.f32 %v1069, %v1001
    %v1071 = vadd.f32 %v1070, %v1004
    %v1072 = vadd.f32 %v1071, %v1007
    %v1073 = vadd.f32 %v1072, %v1010
    %v1074 = vadd.f32 %v1073, %v1013
    %v1075 = vadd.f32 %v1074, %v1016
    %v1076 = vadd.f32 %v1075, %v1019
    %v1077 = vadd.f32 %v1076, %v1022
    %v1078 = vadd.f32 %v1077, %v1025
    %v1079 = vadd.f32 %v1078, %v1028
    %v1080 = vadd.f32 %v1079, %v1031
    %v1081 = vadd.f32 %v1080, %v1034
    %v1082 = vadd.f32 %v1081, %v1037
    %v1083 = vadd.f32 %v1082, %v1040
    %v1084 = vadd.f32 %v1083, %v1043
    %v1085 = vadd.f32 %v1084, %v1046
    %v1086 = vadd.f32 %v1085, %v1049
    %v1087 = vadd.f32 %v1086, %v1052
    %v1088 = vadd.f32 %v1087, %v1055
    %v1089 = vadd.f32 %v1088, %v1058
    %v1090 = vrot.slane %v1089, 4
    %v1091 = vadd.f32 %v1089, %v1090
    %v1092 = vrot.slane %v1091, 2
    %v1093 = vadd.f32 %v1091, %v1092
    %v1094 = vrot.slane %v1093, 1
    %v1095 = vadd.f32 %v1093, %v1094
    %v1096 = vadd.f32 %v803, %v1095
    %v1097 = vmul.f32 %v968, %v968
    %v1098 = vmul.f32 %v971, %v971
    %v1099 = vmul.f32 %v974, %v974
    %v1100 = vmul.f32 %v977, %v977
    %v1101 = vmul.f32 %v980, %v980
    %v1102 = vmul.f32 %v983, %v983
    %v1103 = vmul.f32 %v986, %v986
    %v1104 = vmul.f32 %v989, %v989
    %v1105 = vmul.f32 %v992, %v992
    %v1106 = vmul.f32 %v995, %v995
    %v1107 = vmul.f32 %v998, %v998
    %v1108 = vmul.f32 %v1001, %v1001
    %v1109 = vmul.f32 %v1004, %v1004
    %v1110 = vmul.f32 %v1007, %v1007
    %v1111 = vmul.f32 %v1010, %v1010
    %v1112 = vmul.f32 %v1013, %v1013
    %v1113 = vmul.f32 %v1016, %v1016
    %v1114 = vmul.f32 %v1019, %v1019
    %v1115 = vmul.f32 %v1022, %v1022
    %v1116 = vmul.f32 %v1025, %v1025
    %v1117 = vmul.f32 %v1028, %v1028
    %v1118 = vmul.f32 %v1031, %v1031
    %v1119 = vmul.f32 %v1034, %v1034
    %v1120 = vmul.f32 %v1037, %v1037
    %v1121 = vmul.f32 %v1040, %v1040
    %v1122 = vmul.f32 %v1043, %v1043
    %v1123 = vmul.f32 %v1046, %v1046
    %v1124 = vmul.f32 %v1049, %v1049
    %v1125 = vmul.f32 %v1052, %v1052
    %v1126 = vmul.f32 %v1055, %v1055
    %v1127 = vmul.f32 %v1058, %v1058
    %v1128 = vadd.f32 %v1097, %v1098
    %v1129 = vadd.f32 %v1128, %v1099
    %v1130 = vadd.f32 %v1129, %v1100
    %v1131 = vadd.f32 %v1130, %v1101
    %v1132 = vadd.f32 %v1131, %v1102
    %v1133 = vadd.f32 %v1132, %v1103
    %v1134 = vadd.f32 %v1133, %v1104
    %v1135 = vadd.f32 %v1134, %v1105
    %v1136 = vadd.f32 %v1135, %v1106
    %v1137 = vadd.f32 %v1136, %v1107
    %v1138 = vadd.f32 %v1137, %v1108
    %v1139 = vadd.f32 %v1138, %v1109
    %v1140 = vadd.f32 %v1139, %v1110
    %v1141 = vadd.f32 %v1140, %v1111
    %v1142 = vadd.f32 %v1141, %v1112
    %v1143 = vadd.f32 %v1142, %v1113
    %v1144 = vadd.f32 %v1143, %v1114
    %v1145 = vadd.f32 %v1144, %v1115
    %v1146 = vadd.f32 %v1145, %v1116
    %v1147 = vadd.f32 %v1146, %v1117
    %v1148 = vadd.f32 %v1147, %v1118
    %v1149 = vadd.f32 %v1148, %v1119
    %v1150 = vadd.f32 %v1149, %v1120
    %v1151 = vadd.f32 %v1150, %v1121
    %v1152 = vadd.f32 %v1151, %v1122
    %v1153 = vadd.f32 %v1152, %v1123
    %v1154 = vadd.f32 %v1153, %v1124
    %v1155 = vadd.f32 %v1154, %v1125
    %v1156 = vadd.f32 %v1155, %v1126
    %v1157 = vadd.f32 %v1156, %v1127
    %v1158 = vrot.slane %v1157, 4
    %v1159 = vadd.f32 %v1157, %v1158
    %v1160 = vrot.slane %v1159, 2
    %v1161 = vadd.f32 %v1159, %v1160
    %v1162 = vrot.slane %v1161, 1
    %v1163 = vadd.f32 %v1161, %v1162
    %v1164 = vadd.f32 %v871, %v1163
    %1165 = vst [vmem:[#allocation2 + $0x2e8] sm:$0xff] %v968
    %1166 = vst [vmem:[#allocation2 + $0x2f0] sm:$0xff] %v971
    %1167 = vst [vmem:[#allocation2 + $0x2f8] sm:$0xff] %v974
    %1168 = vst [vmem:[#allocation2 + $0x300] sm:$0xff] %v977
    %1169 = vst [vmem:[#allocation2 + $0x308] sm:$0xff] %v980
    %1170 = vst [vmem:[#allocation2 + $0x310] sm:$0xff] %v983
    %1171 = vst [vmem:[#allocation2 + $0x318] sm:$0xff] %v986
    %1172 = vst [vmem:[#allocation2 + $0x320] sm:$0xff] %v989
    %1173 = vst [vmem:[#allocation2 + $0x328] sm:$0xff] %v992
    %1174 = vst [vmem:[#allocation2 + $0x330] sm:$0xff] %v995
    %1175 = vst [vmem:[#allocation2 + $0x338] sm:$0xff] %v998
    %1176 = vst [vmem:[#allocation2 + $0x340] sm:$0xff] %v1001
    %1177 = vst [vmem:[#allocation2 + $0x348] sm:$0xff] %v1004
    %1178 = vst [vmem:[#allocation2 + $0x350] sm:$0xff] %v1007
    %1179 = vst [vmem:[#allocation2 + $0x358] sm:$0xff] %v1010
    %1180 = vst [vmem:[#allocation2 + $0x360] sm:$0xff] %v1013
    %1181 = vst [vmem:[#allocation2 + $0x368] sm:$0xff] %v1016
    %1182 = vst [vmem:[#allocation2 + $0x370] sm:$0xff] %v1019
    %1183 = vst [vmem:[#allocation2 + $0x378] sm:$0xff] %v1022
    %1184 = vst [vmem:[#allocation2 + $0x380] sm:$0xff] %v1025
    %1185 = vst [vmem:[#allocation2 + $0x388] sm:$0xff] %v1028
    %1186 = vst [vmem:[#allocation2 + $0x390] sm:$0xff] %v1031
    %1187 = vst [vmem:[#allocation2 + $0x398] sm:$0xff] %v1034
    %1188 = vst [vmem:[#allocation2 + $0x3a0] sm:$0xff] %v1037
    %1189 = vst [vmem:[#allocation2 + $0x3a8] sm:$0xff] %v1040
    %1190 = vst [vmem:[#allocation2 + $0x3b0] sm:$0xff] %v1043
    %1191 = vst [vmem:[#allocation2 + $0x3b8] sm:$0xff] %v1046
    %1192 = vst [vmem:[#allocation2 + $0x3c0] sm:$0xff] %v1049
    %1193 = vst [vmem:[#allocation2 + $0x3c8] sm:$0xff] %v1052
    %1194 = vst [vmem:[#allocation2 + $0x3d0] sm:$0xff] %v1055
    %1195 = vst [vmem:[#allocation2 + $0x3d8] sm:$0xff] %v1058
    %v1196 = vld [vmem:[%s2] sm:$0x1]
    %v1197 = vld [vmem:[%s2 + $0x1] sm:$0x1]
    %v1198 = vmul.f32 %v1096, 0.0010080645
    %v1199 = vmul.f32 %v1164, 0.0010080645
    %v1200 = vmul.f32 %v1198, %v1198
    %v1201 = vsub.f32 %v1199, %v1200
    %v1202 = vmax.f32 %v1201, 0.0
    %v1203 = vadd.f32 %v1202, 1e-05
    %v1204 = vrsqrt.pop %v1203
    %v1205 = vmul.f32 %v1204, %v1203
    %v1206 = vmul.f32 %v1205, %v1204
    %v1207 = vmul.f32 0.5, %v1206
    %v1208 = vsub.f32 1.5, %v1207
    %v1209 = vmul.f32 %v1204, %v1208
    %vm1210 = vweird.f32 %v1203
    %vm1211 = vweird.f32 %v1204
    %vm1212 = vmor %vm1210, %vm1211
    %v1213 = vsel %vm1212, %v1204, %v1209
    %v1214 = vmul.f32 %v1196, %v1213
    %v1215 = vmul.f32 %v1198, %v1214
    %v1216 = vsub.f32 %v1197, %v1215
    %v1217 = vld [vmem:[#allocation2] ss:$4 sm:$0xff]
    %s1218 = scalar_lea.vmem [#allocation2], 32
    %v1219 = vld [vmem:[%s1218] ss:$4 sm:$0xff]
    %s1220 = scalar_lea.vmem [#allocation2], 64
    %v1221 = vld [vmem:[%s1220] ss:$4 sm:$0xff]
    %s1222 = scalar_lea.vmem [#allocation2], 96
    %v1223 = vld [vmem:[%s1222] ss:$4 sm:$0xff]
    %s1224 = scalar_lea.vmem [#allocation2], 128
    %v1225 = vld [vmem:[%s1224] ss:$4 sm:$0xff]
    %s1226 = scalar_lea.vmem [#allocation2], 160
    %v1227 = vld [vmem:[%s1226] ss:$4 sm:$0xff]
    %s1228 = scalar_lea.vmem [#allocation2], 192
    %v1229 = vld [vmem:[%s1228] ss:$4 sm:$0xff]
    %s1230 = scalar_lea.vmem [#allocation2], 224
    %v1231 = vld [vmem:[%s1230] ss:$4 sm:$0xff]
    %s1232 = scalar_lea.vmem [#allocation2], 256
    %v1233 = vld [vmem:[%s1232] ss:$4 sm:$0xff]
    %s1234 = scalar_lea.vmem [#allocation2], 288
    %v1235 = vld [vmem:[%s1234] ss:$4 sm:$0xff]
    %s1236 = scalar_lea.vmem [#allocation2], 320
    %v1237 = vld [vmem:[%s1236] ss:$4 sm:$0xff]
    %s1238 = scalar_lea.vmem [#allocation2], 352
    %v1239 = vld [vmem:[%s1238] ss:$4 sm:$0xff]
    %s1240 = scalar_lea.vmem [#allocation2], 384
    %v1241 = vld [vmem:[%s1240] ss:$4 sm:$0xff]
    %s1242 = scalar_lea.vmem [#allocation2], 416
    %v1243 = vld [vmem:[%s1242] ss:$4 sm:$0xff]
    %s1244 = scalar_lea.vmem [#allocation2], 448
    %v1245 = vld [vmem:[%s1244] ss:$4 sm:$0xff]
    %s1246 = scalar_lea.vmem [#allocation2], 480
    %v1247 = vld [vmem:[%s1246] ss:$4 sm:$0xf]
    %v1248 = vperm.slane %v1214, 0
    %v1249 = vmul.f32 %v1217, %v1248
    %v1250 = vmul.f32 %v1219, %v1248
    %v1251 = vmul.f32 %v1221, %v1248
    %v1252 = vmul.f32 %v1223, %v1248
    %v1253 = vmul.f32 %v1225, %v1248
    %v1254 = vmul.f32 %v1227, %v1248
    %v1255 = vmul.f32 %v1229, %v1248
    %v1256 = vmul.f32 %v1231, %v1248
    %v1257 = vmul.f32 %v1233, %v1248
    %v1258 = vmul.f32 %v1235, %v1248
    %v1259 = vmul.f32 %v1237, %v1248
    %v1260 = vmul.f32 %v1239, %v1248
    %v1261 = vmul.f32 %v1241, %v1248
    %v1262 = vmul.f32 %v1243, %v1248
    %v1263 = vmul.f32 %v1245, %v1248
    %v1264 = vmul.f32 %v1247, %v1248
    %v1265 = vperm.slane %v1216, 0
    %v1266 = vadd.f32 %v1249, %v1265
    %v1267 = vadd.f32 %v1250, %v1265
    %v1268 = vadd.f32 %v1251, %v1265
    %v1269 = vadd.f32 %v1252, %v1265
    %v1270 = vadd.f32 %v1253, %v1265
    %v1271 = vadd.f32 %v1254, %v1265
    %v1272 = vadd.f32 %v1255, %v1265
    %v1273 = vadd.f32 %v1256, %v1265
    %v1274 = vadd.f32 %v1257, %v1265
    %v1275 = vadd.f32 %v1258, %v1265
    %v1276 = vadd.f32 %v1259, %v1265
    %v1277 = vadd.f32 %v1260, %v1265
    %v1278 = vadd.f32 %v1261, %v1265
    %v1279 = vadd.f32 %v1262, %v1265
    %v1280 = vadd.f32 %v1263, %v1265
    %v1281 = vadd.f32 %v1264, %v1265
    %v1282 = vmax.f32 %v1266, 0.0
    %v1283 = vmax.f32 %v1267, 0.0
    %v1284 = vmax.f32 %v1268, 0.0
    %v1285 = vmax.f32 %v1269, 0.0
    %v1286 = vmax.f32 %v1270, 0.0
    %v1287 = vmax.f32 %v1271, 0.0
    %v1288 = vmax.f32 %v1272, 0.0
    %v1289 = vmax.f32 %v1273, 0.0
    %v1290 = vmax.f32 %v1274, 0.0
    %v1291 = vmax.f32 %v1275, 0.0
    %v1292 = vmax.f32 %v1276, 0.0
    %v1293 = vmax.f32 %v1277, 0.0
    %v1294 = vmax.f32 %v1278, 0.0
    %v1295 = vmax.f32 %v1279, 0.0
    %v1296 = vmax.f32 %v1280, 0.0
    %v1297 = vmax.f32 %v1281, 0.0
    %s1298 = scalar_lea.vmem [#allocation2], 1
    %v1299 = vld [vmem:[%s1298] ss:$4 sm:$0xff]
    %s1300 = scalar_lea.vmem [#allocation2], 33
    %v1301 = vld [vmem:[%s1300] ss:$4 sm:$0xff]
    %s1302 = scalar_lea.vmem [#allocation2], 65
    %v1303 = vld [vmem:[%s1302] ss:$4 sm:$0xff]
    %s1304 = scalar_lea.vmem [#allocation2], 97
    %v1305 = vld [vmem:[%s1304] ss:$4 sm:$0xff]
    %s1306 = scalar_lea.vmem [#allocation2], 129
    %v1307 = vld [vmem:[%s1306] ss:$4 sm:$0xff]
    %s1308 = scalar_lea.vmem [#allocation2], 161
    %v1309 = vld [vmem:[%s1308] ss:$4 sm:$0xff]
    %s1310 = scalar_lea.vmem [#allocation2], 193
    %v1311 = vld [vmem:[%s1310] ss:$4 sm:$0xff]
    %s1312 = scalar_lea.vmem [#allocation2], 225
    %v1313 = vld [vmem:[%s1312] ss:$4 sm:$0xff]
    %s1314 = scalar_lea.vmem [#allocation2], 257
    %v1315 = vld [vmem:[%s1314] ss:$4 sm:$0xff]
    %s1316 = scalar_lea.vmem [#allocation2], 289
    %v1317 = vld [vmem:[%s1316] ss:$4 sm:$0xff]
    %s1318 = scalar_lea.vmem [#allocation2], 321
    %v1319 = vld [vmem:[%s1318] ss:$4 sm:$0xff]
    %s1320 = scalar_lea.vmem [#allocation2], 353
    %v1321 = vld [vmem:[%s1320] ss:$4 sm:$0xff]
    %s1322 = scalar_lea.vmem [#allocation2], 385
    %v1323 = vld [vmem:[%s1322] ss:$4 sm:$0xff]
    %s1324 = scalar_lea.vmem [#allocation2], 417
    %v1325 = vld [vmem:[%s1324] ss:$4 sm:$0xff]
    %s1326 = scalar_lea.vmem [#allocation2], 449
    %v1327 = vld [vmem:[%s1326] ss:$4 sm:$0xff]
    %s1328 = scalar_lea.vmem [#allocation2], 481
    %v1329 = vld [vmem:[%s1328] ss:$4 sm:$0xf]
    %v1330 = vmul.f32 %v1299, %v1248
    %v1331 = vmul.f32 %v1301, %v1248
    %v1332 = vmul.f32 %v1303, %v1248
    %v1333 = vmul.f32 %v1305, %v1248
    %v1334 = vmul.f32 %v1307, %v1248
    %v1335 = vmul.f32 %v1309, %v1248
    %v1336 = vmul.f32 %v1311, %v1248
    %v1337 = vmul.f32 %v1313, %v1248
    %v1338 = vmul.f32 %v1315, %v1248
    %v1339 = vmul.f32 %v1317, %v1248
    %v1340 = vmul.f32 %v1319, %v1248
    %v1341 = vmul.f32 %v1321, %v1248
    %v1342 = vmul.f32 %v1323, %v1248
    %v1343 = vmul.f32 %v1325, %v1248
    %v1344 = vmul.f32 %v1327, %v1248
    %v1345 = vmul.f32 %v1329, %v1248
    %v1346 = vadd.f32 %v1330, %v1265
    %v1347 = vadd.f32 %v1331, %v1265
    %v1348 = vadd.f32 %v1332, %v1265
    %v1349 = vadd.f32 %v1333, %v1265
    %v1350 = vadd.f32 %v1334, %v1265
    %v1351 = vadd.f32 %v1335, %v1265
    %v1352 = vadd.f32 %v1336, %v1265
    %v1353 = vadd.f32 %v1337, %v1265
    %v1354 = vadd.f32 %v1338, %v1265
    %v1355 = vadd.f32 %v1339, %v1265
    %v1356 = vadd.f32 %v1340, %v1265
    %v1357 = vadd.f32 %v1341, %v1265
    %v1358 = vadd.f32 %v1342, %v1265
    %v1359 = vadd.f32 %v1343, %v1265
    %v1360 = vadd.f32 %v1344, %v1265
    %v1361 = vadd.f32 %v1345, %v1265
    %v1362 = vmax.f32 %v1346, 0.0
    %v1363 = vmax.f32 %v1347, 0.0
    %v1364 = vmax.f32 %v1348, 0.0
    %v1365 = vmax.f32 %v1349, 0.0
    %v1366 = vmax.f32 %v1350, 0.0
    %v1367 = vmax.f32 %v1351, 0.0
    %v1368 = vmax.f32 %v1352, 0.0
    %v1369 = vmax.f32 %v1353, 0.0
    %v1370 = vmax.f32 %v1354, 0.0
    %v1371 = vmax.f32 %v1355, 0.0
    %v1372 = vmax.f32 %v1356, 0.0
    %v1373 = vmax.f32 %v1357, 0.0
    %v1374 = vmax.f32 %v1358, 0.0
    %v1375 = vmax.f32 %v1359, 0.0
    %v1376 = vmax.f32 %v1360, 0.0
    %v1377 = vmax.f32 %v1361, 0.0
    %v1378 = vmax.f32 %v1282, %v1362
    %v1379 = vmax.f32 %v1283, %v1363
    %v1380 = vmax.f32 %v1284, %v1364
    %v1381 = vmax.f32 %v1285, %v1365
    %v1382 = vmax.f32 %v1286, %v1366
    %v1383 = vmax.f32 %v1287, %v1367
    %v1384 = vmax.f32 %v1288, %v1368
    %v1385 = vmax.f32 %v1289, %v1369
    %v1386 = vmax.f32 %v1290, %v1370
    %v1387 = vmax.f32 %v1291, %v1371
    %v1388 = vmax.f32 %v1292, %v1372
    %v1389 = vmax.f32 %v1293, %v1373
    %v1390 = vmax.f32 %v1294, %v1374
    %v1391 = vmax.f32 %v1295, %v1375
    %v1392 = vmax.f32 %v1296, %v1376
    %v1393 = vmax.f32 %v1297, %v1377
    %s1394 = scalar_lea.vmem [#allocation2], 2
    %v1395 = vld [vmem:[%s1394] ss:$4 sm:$0xff]
    %s1396 = scalar_lea.vmem [#allocation2], 34
    %v1397 = vld [vmem:[%s1396] ss:$4 sm:$0xff]
    %s1398 = scalar_lea.vmem [#allocation2], 66
    %v1399 = vld [vmem:[%s1398] ss:$4 sm:$0xff]
    %s1400 = scalar_lea.vmem [#allocation2], 98
    %v1401 = vld [vmem:[%s1400] ss:$4 sm:$0xff]
    %s1402 = scalar_lea.vmem [#allocation2], 130
    %v1403 = vld [vmem:[%s1402] ss:$4 sm:$0xff]
    %s1404 = scalar_lea.vmem [#allocation2], 162
    %v1405 = vld [vmem:[%s1404] ss:$4 sm:$0xff]
    %s1406 = scalar_lea.vmem [#allocation2], 194
    %v1407 = vld [vmem:[%s1406] ss:$4 sm:$0xff]
    %s1408 = scalar_lea.vmem [#allocation2], 226
    %v1409 = vld [vmem:[%s1408] ss:$4 sm:$0xff]
    %s1410 = scalar_lea.vmem [#allocation2], 258
    %v1411 = vld [vmem:[%s1410] ss:$4 sm:$0xff]
    %s1412 = scalar_lea.vmem [#allocation2], 290
    %v1413 = vld [vmem:[%s1412] ss:$4 sm:$0xff]
    %s1414 = scalar_lea.vmem [#allocation2], 322
    %v1415 = vld [vmem:[%s1414] ss:$4 sm:$0xff]
    %s1416 = scalar_lea.vmem [#allocation2], 354
    %v1417 = vld [vmem:[%s1416] ss:$4 sm:$0xff]
    %s1418 = scalar_lea.vmem [#allocation2], 386
    %v1419 = vld [vmem:[%s1418] ss:$4 sm:$0xff]
    %s1420 = scalar_lea.vmem [#allocation2], 418
    %v1421 = vld [vmem:[%s1420] ss:$4 sm:$0xff]
    %s1422 = scalar_lea.vmem [#allocation2], 450
    %v1423 = vld [vmem:[%s1422] ss:$4 sm:$0xff]
    %s1424 = scalar_lea.vmem [#allocation2], 482
    %v1425 = vld [vmem:[%s1424] ss:$4 sm:$0xf]
    %v1426 = vmul.f32 %v1395, %v1248
    %v1427 = vmul.f32 %v1397, %v1248
    %v1428 = vmul.f32 %v1399, %v1248
    %v1429 = vmul.f32 %v1401, %v1248
    %v1430 = vmul.f32 %v1403, %v1248
    %v1431 = vmul.f32 %v1405, %v1248
    %v1432 = vmul.f32 %v1407, %v1248
    %v1433 = vmul.f32 %v1409, %v1248
    %v1434 = vmul.f32 %v1411, %v1248
    %v1435 = vmul.f32 %v1413, %v1248
    %v1436 = vmul.f32 %v1415, %v1248
    %v1437 = vmul.f32 %v1417, %v1248
    %v1438 = vmul.f32 %v1419, %v1248
    %v1439 = vmul.f32 %v1421, %v1248
    %v1440 = vmul.f32 %v1423, %v1248
    %v1441 = vmul.f32 %v1425, %v1248
    %v1442 = vadd.f32 %v1426, %v1265
    %v1443 = vadd.f32 %v1427, %v1265
    %v1444 = vadd.f32 %v1428, %v1265
    %v1445 = vadd.f32 %v1429, %v1265
    %v1446 = vadd.f32 %v1430, %v1265
    %v1447 = vadd.f32 %v1431, %v1265
    %v1448 = vadd.f32 %v1432, %v1265
    %v1449 = vadd.f32 %v1433, %v1265
    %v1450 = vadd.f32 %v1434, %v1265
    %v1451 = vadd.f32 %v1435, %v1265
    %v1452 = vadd.f32 %v1436, %v1265
    %v1453 = vadd.f32 %v1437, %v1265
    %v1454 = vadd.f32 %v1438, %v1265
    %v1455 = vadd.f32 %v1439, %v1265
    %v1456 = vadd.f32 %v1440, %v1265
    %v1457 = vadd.f32 %v1441, %v1265
    %v1458 = vmax.f32 %v1442, 0.0
    %v1459 = vmax.f32 %v1443, 0.0
    %v1460 = vmax.f32 %v1444, 0.0
    %v1461 = vmax.f32 %v1445, 0.0
    %v1462 = vmax.f32 %v1446, 0.0
    %v1463 = vmax.f32 %v1447, 0.0
    %v1464 = vmax.f32 %v1448, 0.0
    %v1465 = vmax.f32 %v1449, 0.0
    %v1466 = vmax.f32 %v1450, 0.0
    %v1467 = vmax.f32 %v1451, 0.0
    %v1468 = vmax.f32 %v1452, 0.0
    %v1469 = vmax.f32 %v1453, 0.0
    %v1470 = vmax.f32 %v1454, 0.0
    %v1471 = vmax.f32 %v1455, 0.0
    %v1472 = vmax.f32 %v1456, 0.0
    %v1473 = vmax.f32 %v1457, 0.0
    %v1474 = vmax.f32 %v1378, %v1458
    %v1475 = vmax.f32 %v1379, %v1459
    %v1476 = vmax.f32 %v1380, %v1460
    %v1477 = vmax.f32 %v1381, %v1461
    %v1478 = vmax.f32 %v1382, %v1462
    %v1479 = vmax.f32 %v1383, %v1463
    %v1480 = vmax.f32 %v1384, %v1464
    %v1481 = vmax.f32 %v1385, %v1465
    %v1482 = vmax.f32 %v1386, %v1466
    %v1483 = vmax.f32 %v1387, %v1467
    %v1484 = vmax.f32 %v1388, %v1468
    %v1485 = vmax.f32 %v1389, %v1469
    %v1486 = vmax.f32 %v1390, %v1470
    %v1487 = vmax.f32 %v1391, %v1471
    %v1488 = vmax.f32 %v1392, %v1472
    %v1489 = vmax.f32 %v1393, %v1473
    %s1490 = scalar_lea.vmem [#allocation2], 3
    %v1491 = vld [vmem:[%s1490] ss:$4 sm:$0xff]
    %s1492 = scalar_lea.vmem [#allocation2], 35
    %v1493 = vld [vmem:[%s1492] ss:$4 sm:$0xff]
    %s1494 = scalar_lea.vmem [#allocation2], 67
    %v1495 = vld [vmem:[%s1494] ss:$4 sm:$0xff]
    %s1496 = scalar_lea.vmem [#allocation2], 99
    %v1497 = vld [vmem:[%s1496] ss:$4 sm:$0xff]
    %s1498 = scalar_lea.vmem [#allocation2], 131
    %v1499 = vld [vmem:[%s1498] ss:$4 sm:$0xff]
    %s1500 = scalar_lea.vmem [#allocation2], 163
    %v1501 = vld [vmem:[%s1500] ss:$4 sm:$0xff]
    %s1502 = scalar_lea.vmem [#allocation2], 195
    %v1503 = vld [vmem:[%s1502] ss:$4 sm:$0xff]
    %s1504 = scalar_lea.vmem [#allocation2], 227
    %v1505 = vld [vmem:[%s1504] ss:$4 sm:$0xff]
    %s1506 = scalar_lea.vmem [#allocation2], 259
    %v1507 = vld [vmem:[%s1506] ss:$4 sm:$0xff]
    %s1508 = scalar_lea.vmem [#allocation2], 291
    %v1509 = vld [vmem:[%s1508] ss:$4 sm:$0xff]
    %s1510 = scalar_lea.vmem [#allocation2], 323
    %v1511 = vld [vmem:[%s1510] ss:$4 sm:$0xff]
    %s1512 = scalar_lea.vmem [#allocation2], 355
    %v1513 = vld [vmem:[%s1512] ss:$4 sm:$0xff]
    %s1514 = scalar_lea.vmem [#allocation2], 387
    %v1515 = vld [vmem:[%s1514] ss:$4 sm:$0xff]
    %s1516 = scalar_lea.vmem [#allocation2], 419
    %v1517 = vld [vmem:[%s1516] ss:$4 sm:$0xff]
    %s1518 = scalar_lea.vmem [#allocation2], 451
    %v1519 = vld [vmem:[%s1518] ss:$4 sm:$0xff]
    %s1520 = scalar_lea.vmem [#allocation2], 483
    %v1521 = vld [vmem:[%s1520] ss:$4 sm:$0xf]
    %v1522 = vmul.f32 %v1491, %v1248
    %v1523 = vmul.f32 %v1493, %v1248
    %v1524 = vmul.f32 %v1495, %v1248
    %v1525 = vmul.f32 %v1497, %v1248
    %v1526 = vmul.f32 %v1499, %v1248
    %v1527 = vmul.f32 %v1501, %v1248
    %v1528 = vmul.f32 %v1503, %v1248
    %v1529 = vmul.f32 %v1505, %v1248
    %v1530 = vmul.f32 %v1507, %v1248
    %v1531 = vmul.f32 %v1509, %v1248
    %v1532 = vmul.f32 %v1511, %v1248
    %v1533 = vmul.f32 %v1513, %v1248
    %v1534 = vmul.f32 %v1515, %v1248
    %v1535 = vmul.f32 %v1517, %v1248
    %v1536 = vmul.f32 %v1519, %v1248
    %v1537 = vmul.f32 %v1521, %v1248
    %v1538 = vadd.f32 %v1522, %v1265
    %v1539 = vadd.f32 %v1523, %v1265
    %v1540 = vadd.f32 %v1524, %v1265
    %v1541 = vadd.f32 %v1525, %v1265
    %v1542 = vadd.f32 %v1526, %v1265
    %v1543 = vadd.f32 %v1527, %v1265
    %v1544 = vadd.f32 %v1528, %v1265
    %v1545 = vadd.f32 %v1529, %v1265
    %v1546 = vadd.f32 %v1530, %v1265
    %v1547 = vadd.f32 %v1531, %v1265
    %v1548 = vadd.f32 %v1532, %v1265
    %v1549 = vadd.f32 %v1533, %v1265
    %v1550 = vadd.f32 %v1534, %v1265
    %v1551 = vadd.f32 %v1535, %v1265
    %v1552 = vadd.f32 %v1536, %v1265
    %v1553 = vadd.f32 %v1537, %v1265
    %v1554 = vmax.f32 %v1538, 0.0
    %v1555 = vmax.f32 %v1539, 0.0
    %v1556 = vmax.f32 %v1540, 0.0
    %v1557 = vmax.f32 %v1541, 0.0
    %v1558 = vmax.f32 %v1542, 0.0
    %v1559 = vmax.f32 %v1543, 0.0
    %v1560 = vmax.f32 %v1544, 0.0
    %v1561 = vmax.f32 %v1545, 0.0
    %v1562 = vmax.f32 %v1546, 0.0
    %v1563 = vmax.f32 %v1547, 0.0
    %v1564 = vmax.f32 %v1548, 0.0
    %v1565 = vmax.f32 %v1549, 0.0
    %v1566 = vmax.f32 %v1550, 0.0
    %v1567 = vmax.f32 %v1551, 0.0
    %v1568 = vmax.f32 %v1552, 0.0
    %v1569 = vmax.f32 %v1553, 0.0
    %v1570 = vmax.f32 %v1474, %v1554
    %v1571 = vmax.f32 %v1475, %v1555
    %v1572 = vmax.f32 %v1476, %v1556
    %v1573 = vmax.f32 %v1477, %v1557
    %v1574 = vmax.f32 %v1478, %v1558
    %v1575 = vmax.f32 %v1479, %v1559
    %v1576 = vmax.f32 %v1480, %v1560
    %v1577 = vmax.f32 %v1481, %v1561
    %v1578 = vmax.f32 %v1482, %v1562
    %v1579 = vmax.f32 %v1483, %v1563
    %v1580 = vmax.f32 %v1484, %v1564
    %v1581 = vmax.f32 %v1485, %v1565
    %v1582 = vmax.f32 %v1486, %v1566
    %v1583 = vmax.f32 %v1487, %v1567
    %v1584 = vmax.f32 %v1488, %v1568
    %v1585 = vmax.f32 %v1489, %v1569
    %1586 = vst [vmem:[#allocation3] sm:$0xff] %v1570
    %1587 = vst [vmem:[#allocation3 + $0x8] sm:$0xff] %v1571
    %1588 = vst [vmem:[#allocation3 + $0x10] sm:$0xff] %v1572
    %1589 = vst [vmem:[#allocation3 + $0x18] sm:$0xff] %v1573
    %1590 = vst [vmem:[#allocation3 + $0x20] sm:$0xff] %v1574
    %1591 = vst [vmem:[#allocation3 + $0x28] sm:$0xff] %v1575
    %1592 = vst [vmem:[#allocation3 + $0x30] sm:$0xff] %v1576
    %1593 = vst [vmem:[#allocation3 + $0x38] sm:$0xff] %v1577
    %1594 = vst [vmem:[#allocation3 + $0x40] sm:$0xff] %v1578
    %1595 = vst [vmem:[#allocation3 + $0x48] sm:$0xff] %v1579
    %1596 = vst [vmem:[#allocation3 + $0x50] sm:$0xff] %v1580
    %1597 = vst [vmem:[#allocation3 + $0x58] sm:$0xff] %v1581
    %1598 = vst [vmem:[#allocation3 + $0x60] sm:$0xff] %v1582
    %1599 = vst [vmem:[#allocation3 + $0x68] sm:$0xff] %v1583
    %1600 = vst [vmem:[#allocation3 + $0x70] sm:$0xff] %v1584
    %1601 = vst [vmem:[#allocation3 + $0x78] sm:$0xf] %v1585
    %s1602 = scalar_lea.vmem [#allocation2], 496
    %v1603 = vld [vmem:[%s1602] ss:$4 sm:$0xff]
    %s1604 = scalar_lea.vmem [#allocation2], 528
    %v1605 = vld [vmem:[%s1604] ss:$4 sm:$0xff]
    %s1606 = scalar_lea.vmem [#allocation2], 560
    %v1607 = vld [vmem:[%s1606] ss:$4 sm:$0xff]
    %s1608 = scalar_lea.vmem [#allocation2], 592
    %v1609 = vld [vmem:[%s1608] ss:$4 sm:$0xff]
    %s1610 = scalar_lea.vmem [#allocation2], 624
    %v1611 = vld [vmem:[%s1610] ss:$4 sm:$0xff]
    %s1612 = scalar_lea.vmem [#allocation2], 656
    %v1613 = vld [vmem:[%s1612] ss:$4 sm:$0xff]
    %s1614 = scalar_lea.vmem [#allocation2], 688
    %v1615 = vld [vmem:[%s1614] ss:$4 sm:$0xff]
    %s1616 = scalar_lea.vmem [#allocation2], 720
    %v1617 = vld [vmem:[%s1616] ss:$4 sm:$0xff]
    %s1618 = scalar_lea.vmem [#allocation2], 752
    %v1619 = vld [vmem:[%s1618] ss:$4 sm:$0xff]
    %s1620 = scalar_lea.vmem [#allocation2], 784
    %v1621 = vld [vmem:[%s1620] ss:$4 sm:$0xff]
    %s1622 = scalar_lea.vmem [#allocation2], 816
    %v1623 = vld [vmem:[%s1622] ss:$4 sm:$0xff]
    %s1624 = scalar_lea.vmem [#allocation2], 848
    %v1625 = vld [vmem:[%s1624] ss:$4 sm:$0xff]
    %s1626 = scalar_lea.vmem [#allocation2], 880
    %v1627 = vld [vmem:[%s1626] ss:$4 sm:$0xff]
    %s1628 = scalar_lea.vmem [#allocation2], 912
    %v1629 = vld [vmem:[%s1628] ss:$4 sm:$0xff]
    %s1630 = scalar_lea.vmem [#allocation2], 944
    %v1631 = vld [vmem:[%s1630] ss:$4 sm:$0xff]
    %s1632 = scalar_lea.vmem [#allocation2], 976
    %v1633 = vld [vmem:[%s1632] ss:$4 sm:$0xf]
    %v1634 = vmul.f32 %v1603, %v1248
    %v1635 = vmul.f32 %v1605, %v1248
    %v1636 = vmul.f32 %v1607, %v1248
    %v1637 = vmul.f32 %v1609, %v1248
    %v1638 = vmul.f32 %v1611, %v1248
    %v1639 = vmul.f32 %v1613, %v1248
    %v1640 = vmul.f32 %v1615, %v1248
    %v1641 = vmul.f32 %v1617, %v1248
    %v1642 = vmul.f32 %v1619, %v1248
    %v1643 = vmul.f32 %v1621, %v1248
    %v1644 = vmul.f32 %v1623, %v1248
    %v1645 = vmul.f32 %v1625, %v1248
    %v1646 = vmul.f32 %v1627, %v1248
    %v1647 = vmul.f32 %v1629, %v1248
    %v1648 = vmul.f32 %v1631, %v1248
    %v1649 = vmul.f32 %v1633, %v1248
    %v1650 = vadd.f32 %v1634, %v1265
    %v1651 = vadd.f32 %v1635, %v1265
    %v1652 = vadd.f32 %v1636, %v1265
    %v1653 = vadd.f32 %v1637, %v1265
    %v1654 = vadd.f32 %v1638, %v1265
    %v1655 = vadd.f32 %v1639, %v1265
    %v1656 = vadd.f32 %v1640, %v1265
    %v1657 = vadd.f32 %v1641, %v1265
    %v1658 = vadd.f32 %v1642, %v1265
    %v1659 = vadd.f32 %v1643, %v1265
    %v1660 = vadd.f32 %v1644, %v1265
    %v1661 = vadd.f32 %v1645, %v1265
    %v1662 = vadd.f32 %v1646, %v1265
    %v1663 = vadd.f32 %v1647, %v1265
    %v1664 = vadd.f32 %v1648, %v1265
    %v1665 = vadd.f32 %v1649, %v1265
    %v1666 = vmax.f32 %v1650, 0.0
    %v1667 = vmax.f32 %v1651, 0.0
    %v1668 = vmax.f32 %v1652, 0.0
    %v1669 = vmax.f32 %v1653, 0.0
    %v1670 = vmax.f32 %v1654, 0.0
    %v1671 = vmax.f32 %v1655, 0.0
    %v1672 = vmax.f32 %v1656, 0.0
    %v1673 = vmax.f32 %v1657, 0.0
    %v1674 = vmax.f32 %v1658, 0.0
    %v1675 = vmax.f32 %v1659, 0.0
    %v1676 = vmax.f32 %v1660, 0.0
    %v1677 = vmax.f32 %v1661, 0.0
    %v1678 = vmax.f32 %v1662, 0.0
    %v1679 = vmax.f32 %v1663, 0.0
    %v1680 = vmax.f32 %v1664, 0.0
    %v1681 = vmax.f32 %v1665, 0.0
    %s1682 = scalar_lea.vmem [#allocation2], 497
    %v1683 = vld [vmem:[%s1682] ss:$4 sm:$0xff]
    %s1684 = scalar_lea.vmem [#allocation2], 529
    %v1685 = vld [vmem:[%s1684] ss:$4 sm:$0xff]
    %s1686 = scalar_lea.vmem [#allocation2], 561
    %v1687 = vld [vmem:[%s1686] ss:$4 sm:$0xff]
    %s1688 = scalar_lea.vmem [#allocation2], 593
    %v1689 = vld [vmem:[%s1688] ss:$4 sm:$0xff]
    %s1690 = scalar_lea.vmem [#allocation2], 625
    %v1691 = vld [vmem:[%s1690] ss:$4 sm:$0xff]
    %s1692 = scalar_lea.vmem [#allocation2], 657
    %v1693 = vld [vmem:[%s1692] ss:$4 sm:$0xff]
    %s1694 = scalar_lea.vmem [#allocation2], 689
    %v1695 = vld [vmem:[%s1694] ss:$4 sm:$0xff]
    %s1696 = scalar_lea.vmem [#allocation2], 721
    %v1697 = vld [vmem:[%s1696] ss:$4 sm:$0xff]
    %s1698 = scalar_lea.vmem [#allocation2], 753
    %v1699 = vld [vmem:[%s1698] ss:$4 sm:$0xff]
    %s1700 = scalar_lea.vmem [#allocation2], 785
    %v1701 = vld [vmem:[%s1700] ss:$4 sm:$0xff]
    %s1702 = scalar_lea.vmem [#allocation2], 817
    %v1703 = vld [vmem:[%s1702] ss:$4 sm:$0xff]
    %s1704 = scalar_lea.vmem [#allocation2], 849
    %v1705 = vld [vmem:[%s1704] ss:$4 sm:$0xff]
    %s1706 = scalar_lea.vmem [#allocation2], 881
    %v1707 = vld [vmem:[%s1706] ss:$4 sm:$0xff]
    %s1708 = scalar_lea.vmem [#allocation2], 913
    %v1709 = vld [vmem:[%s1708] ss:$4 sm:$0xff]
    %s1710 = scalar_lea.vmem [#allocation2], 945
    %v1711 = vld [vmem:[%s1710] ss:$4 sm:$0xff]
    %s1712 = scalar_lea.vmem [#allocation2], 977
    %v1713 = vld [vmem:[%s1712] ss:$4 sm:$0xf]
    %v1714 = vmul.f32 %v1683, %v1248
    %v1715 = vmul.f32 %v1685, %v1248
    %v1716 = vmul.f32 %v1687, %v1248
    %v1717 = vmul.f32 %v1689, %v1248
    %v1718 = vmul.f32 %v1691, %v1248
    %v1719 = vmul.f32 %v1693, %v1248
    %v1720 = vmul.f32 %v1695, %v1248
    %v1721 = vmul.f32 %v1697, %v1248
    %v1722 = vmul.f32 %v1699, %v1248
    %v1723 = vmul.f32 %v1701, %v1248
    %v1724 = vmul.f32 %v1703, %v1248
    %v1725 = vmul.f32 %v1705, %v1248
    %v1726 = vmul.f32 %v1707, %v1248
    %v1727 = vmul.f32 %v1709, %v1248
    %v1728 = vmul.f32 %v1711, %v1248
    %v1729 = vmul.f32 %v1713, %v1248
    %v1730 = vadd.f32 %v1714, %v1265
    %v1731 = vadd.f32 %v1715, %v1265
    %v1732 = vadd.f32 %v1716, %v1265
    %v1733 = vadd.f32 %v1717, %v1265
    %v1734 = vadd.f32 %v1718, %v1265
    %v1735 = vadd.f32 %v1719, %v1265
    %v1736 = vadd.f32 %v1720, %v1265
    %v1737 = vadd.f32 %v1721, %v1265
    %v1738 = vadd.f32 %v1722, %v1265
    %v1739 = vadd.f32 %v1723, %v1265
    %v1740 = vadd.f32 %v1724, %v1265
    %v1741 = vadd.f32 %v1725, %v1265
    %v1742 = vadd.f32 %v1726, %v1265
    %v1743 = vadd.f32 %v1727, %v1265
    %v1744 = vadd.f32 %v1728, %v1265
    %v1745 = vadd.f32 %v1729, %v1265
    %v1746 = vmax.f32 %v1730, 0.0
    %v1747 = vmax.f32 %v1731, 0.0
    %v1748 = vmax.f32 %v1732, 0.0
    %v1749 = vmax.f32 %v1733, 0.0
    %v1750 = vmax.f32 %v1734, 0.0
    %v1751 = vmax.f32 %v1735, 0.0
    %v1752 = vmax.f32 %v1736, 0.0
    %v1753 = vmax.f32 %v1737, 0.0
    %v1754 = vmax.f32 %v1738, 0.0
    %v1755 = vmax.f32 %v1739, 0.0
    %v1756 = vmax.f32 %v1740, 0.0
    %v1757 = vmax.f32 %v1741, 0.0
    %v1758 = vmax.f32 %v1742, 0.0
    %v1759 = vmax.f32 %v1743, 0.0
    %v1760 = vmax.f32 %v1744, 0.0
    %v1761 = vmax.f32 %v1745, 0.0
    %v1762 = vmax.f32 %v1666, %v1746
    %v1763 = vmax.f32 %v1667, %v1747
    %v1764 = vmax.f32 %v1668, %v1748
    %v1765 = vmax.f32 %v1669, %v1749
    %v1766 = vmax.f32 %v1670, %v1750
    %v1767 = vmax.f32 %v1671, %v1751
    %v1768 = vmax.f32 %v1672, %v1752
    %v1769 = vmax.f32 %v1673, %v1753
    %v1770 = vmax.f32 %v1674, %v1754
    %v1771 = vmax.f32 %v1675, %v1755
    %v1772 = vmax.f32 %v1676, %v1756
    %v1773 = vmax.f32 %v1677, %v1757
    %v1774 = vmax.f32 %v1678, %v1758
    %v1775 = vmax.f32 %v1679, %v1759
    %v1776 = vmax.f32 %v1680, %v1760
    %v1777 = vmax.f32 %v1681, %v1761
    %s1778 = scalar_lea.vmem [#allocation2], 498
    %v1779 = vld [vmem:[%s1778] ss:$4 sm:$0xff]
    %s1780 = scalar_lea.vmem [#allocation2], 530
    %v1781 = vld [vmem:[%s1780] ss:$4 sm:$0xff]
    %s1782 = scalar_lea.vmem [#allocation2], 562
    %v1783 = vld [vmem:[%s1782] ss:$4 sm:$0xff]
    %s1784 = scalar_lea.vmem [#allocation2], 594
    %v1785 = vld [vmem:[%s1784] ss:$4 sm:$0xff]
    %s1786 = scalar_lea.vmem [#allocation2], 626
    %v1787 = vld [vmem:[%s1786] ss:$4 sm:$0xff]
    %s1788 = scalar_lea.vmem [#allocation2], 658
    %v1789 = vld [vmem:[%s1788] ss:$4 sm:$0xff]
    %s1790 = scalar_lea.vmem [#allocation2], 690
    %v1791 = vld [vmem:[%s1790] ss:$4 sm:$0xff]
    %s1792 = scalar_lea.vmem [#allocation2], 722
    %v1793 = vld [vmem:[%s1792] ss:$4 sm:$0xff]
    %s1794 = scalar_lea.vmem [#allocation2], 754
    %v1795 = vld [vmem:[%s1794] ss:$4 sm:$0xff]
    %s1796 = scalar_lea.vmem [#allocation2], 786
    %v1797 = vld [vmem:[%s1796] ss:$4 sm:$0xff]
    %s1798 = scalar_lea.vmem [#allocation2], 818
    %v1799 = vld [vmem:[%s1798] ss:$4 sm:$0xff]
    %s1800 = scalar_lea.vmem [#allocation2], 850
    %v1801 = vld [vmem:[%s1800] ss:$4 sm:$0xff]
    %s1802 = scalar_lea.vmem [#allocation2], 882
    %v1803 = vld [vmem:[%s1802] ss:$4 sm:$0xff]
    %s1804 = scalar_lea.vmem [#allocation2], 914
    %v1805 = vld [vmem:[%s1804] ss:$4 sm:$0xff]
    %s1806 = scalar_lea.vmem [#allocation2], 946
    %v1807 = vld [vmem:[%s1806] ss:$4 sm:$0xff]
    %s1808 = scalar_lea.vmem [#allocation2], 978
    %v1809 = vld [vmem:[%s1808] ss:$4 sm:$0xf]
    %v1810 = vmul.f32 %v1779, %v1248
    %v1811 = vmul.f32 %v1781, %v1248
    %v1812 = vmul.f32 %v1783, %v1248
    %v1813 = vmul.f32 %v1785, %v1248
    %v1814 = vmul.f32 %v1787, %v1248
    %v1815 = vmul.f32 %v1789, %v1248
    %v1816 = vmul.f32 %v1791, %v1248
    %v1817 = vmul.f32 %v1793, %v1248
    %v1818 = vmul.f32 %v1795, %v1248
    %v1819 = vmul.f32 %v1797, %v1248
    %v1820 = vmul.f32 %v1799, %v1248
    %v1821 = vmul.f32 %v1801, %v1248
    %v1822 = vmul.f32 %v1803, %v1248
    %v1823 = vmul.f32 %v1805, %v1248
    %v1824 = vmul.f32 %v1807, %v1248
    %v1825 = vmul.f32 %v1809, %v1248
    %v1826 = vadd.f32 %v1810, %v1265
    %v1827 = vadd.f32 %v1811, %v1265
    %v1828 = vadd.f32 %v1812, %v1265
    %v1829 = vadd.f32 %v1813, %v1265
    %v1830 = vadd.f32 %v1814, %v1265
    %v1831 = vadd.f32 %v1815, %v1265
    %v1832 = vadd.f32 %v1816, %v1265
    %v1833 = vadd.f32 %v1817, %v1265
    %v1834 = vadd.f32 %v1818, %v1265
    %v1835 = vadd.f32 %v1819, %v1265
    %v1836 = vadd.f32 %v1820, %v1265
    %v1837 = vadd.f32 %v1821, %v1265
    %v1838 = vadd.f32 %v1822, %v1265
    %v1839 = vadd.f32 %v1823, %v1265
    %v1840 = vadd.f32 %v1824, %v1265
    %v1841 = vadd.f32 %v1825, %v1265
    %v1842 = vmax.f32 %v1826, 0.0
    %v1843 = vmax.f32 %v1827, 0.0
    %v1844 = vmax.f32 %v1828, 0.0
    %v1845 = vmax.f32 %v1829, 0.0
    %v1846 = vmax.f32 %v1830, 0.0
    %v1847 = vmax.f32 %v1831, 0.0
    %v1848 = vmax.f32 %v1832, 0.0
    %v1849 = vmax.f32 %v1833, 0.0
    %v1850 = vmax.f32 %v1834, 0.0
    %v1851 = vmax.f32 %v1835, 0.0
    %v1852 = vmax.f32 %v1836, 0.0
    %v1853 = vmax.f32 %v1837, 0.0
    %v1854 = vmax.f32 %v1838, 0.0
    %v1855 = vmax.f32 %v1839, 0.0
    %v1856 = vmax.f32 %v1840, 0.0
    %v1857 = vmax.f32 %v1841, 0.0
    %v1858 = vmax.f32 %v1762, %v1842
    %v1859 = vmax.f32 %v1763, %v1843
    %v1860 = vmax.f32 %v1764, %v1844
    %v1861 = vmax.f32 %v1765, %v1845
    %v1862 = vmax.f32 %v1766, %v1846
    %v1863 = vmax.f32 %v1767, %v1847
    %v1864 = vmax.f32 %v1768, %v1848
    %v1865 = vmax.f32 %v1769, %v1849
    %v1866 = vmax.f32 %v1770, %v1850
    %v1867 = vmax.f32 %v1771, %v1851
    %v1868 = vmax.f32 %v1772, %v1852
    %v1869 = vmax.f32 %v1773, %v1853
    %v1870 = vmax.f32 %v1774, %v1854
    %v1871 = vmax.f32 %v1775, %v1855
    %v1872 = vmax.f32 %v1776, %v1856
    %v1873 = vmax.f32 %v1777, %v1857
    %s1874 = scalar_lea.vmem [#allocation2], 499
    %v1875 = vld [vmem:[%s1874] ss:$4 sm:$0xff]
    %s1876 = scalar_lea.vmem [#allocation2], 531
    %v1877 = vld [vmem:[%s1876] ss:$4 sm:$0xff]
    %s1878 = scalar_lea.vmem [#allocation2], 563
    %v1879 = vld [vmem:[%s1878] ss:$4 sm:$0xff]
    %s1880 = scalar_lea.vmem [#allocation2], 595
    %v1881 = vld [vmem:[%s1880] ss:$4 sm:$0xff]
    %s1882 = scalar_lea.vmem [#allocation2], 627
    %v1883 = vld [vmem:[%s1882] ss:$4 sm:$0xff]
    %s1884 = scalar_lea.vmem [#allocation2], 659
    %v1885 = vld [vmem:[%s1884] ss:$4 sm:$0xff]
    %s1886 = scalar_lea.vmem [#allocation2], 691
    %v1887 = vld [vmem:[%s1886] ss:$4 sm:$0xff]
    %s1888 = scalar_lea.vmem [#allocation2], 723
    %v1889 = vld [vmem:[%s1888] ss:$4 sm:$0xff]
    %s1890 = scalar_lea.vmem [#allocation2], 755
    %v1891 = vld [vmem:[%s1890] ss:$4 sm:$0xff]
    %s1892 = scalar_lea.vmem [#allocation2], 787
    %v1893 = vld [vmem:[%s1892] ss:$4 sm:$0xff]
    %s1894 = scalar_lea.vmem [#allocation2], 819
    %v1895 = vld [vmem:[%s1894] ss:$4 sm:$0xff]
    %s1896 = scalar_lea.vmem [#allocation2], 851
    %v1897 = vld [vmem:[%s1896] ss:$4 sm:$0xff]
    %s1898 = scalar_lea.vmem [#allocation2], 883
    %v1899 = vld [vmem:[%s1898] ss:$4 sm:$0xff]
    %s1900 = scalar_lea.vmem [#allocation2], 915
    %v1901 = vld [vmem:[%s1900] ss:$4 sm:$0xff]
    %s1902 = scalar_lea.vmem [#allocation2], 947
    %v1903 = vld [vmem:[%s1902] ss:$4 sm:$0xff]
    %s1904 = scalar_lea.vmem [#allocation2], 979
    %v1905 = vld [vmem:[%s1904] ss:$4 sm:$0xf]
    %v1906 = vmul.f32 %v1875, %v1248
    %v1907 = vmul.f32 %v1877, %v1248
    %v1908 = vmul.f32 %v1879, %v1248
    %v1909 = vmul.f32 %v1881, %v1248
    %v1910 = vmul.f32 %v1883, %v1248
    %v1911 = vmul.f32 %v1885, %v1248
    %v1912 = vmul.f32 %v1887, %v1248
    %v1913 = vmul.f32 %v1889, %v1248
    %v1914 = vmul.f32 %v1891, %v1248
    %v1915 = vmul.f32 %v1893, %v1248
    %v1916 = vmul.f32 %v1895, %v1248
    %v1917 = vmul.f32 %v1897, %v1248
    %v1918 = vmul.f32 %v1899, %v1248
    %v1919 = vmul.f32 %v1901, %v1248
    %v1920 = vmul.f32 %v1903, %v1248
    %v1921 = vmul.f32 %v1905, %v1248
    %v1922 = vadd.f32 %v1906, %v1265
    %v1923 = vadd.f32 %v1907, %v1265
    %v1924 = vadd.f32 %v1908, %v1265
    %v1925 = vadd.f32 %v1909, %v1265
    %v1926 = vadd.f32 %v1910, %v1265
    %v1927 = vadd.f32 %v1911, %v1265
    %v1928 = vadd.f32 %v1912, %v1265
    %v1929 = vadd.f32 %v1913, %v1265
    %v1930 = vadd.f32 %v1914, %v1265
    %v1931 = vadd.f32 %v1915, %v1265
    %v1932 = vadd.f32 %v1916, %v1265
    %v1933 = vadd.f32 %v1917, %v1265
    %v1934 = vadd.f32 %v1918, %v1265
    %v1935 = vadd.f32 %v1919, %v1265
    %v1936 = vadd.f32 %v1920, %v1265
    %v1937 = vadd.f32 %v1921, %v1265
    %v1938 = vmax.f32 %v1922, 0.0
    %v1939 = vmax.f32 %v1923, 0.0
    %v1940 = vmax.f32 %v1924, 0.0
    %v1941 = vmax.f32 %v1925, 0.0
    %v1942 = vmax.f32 %v1926, 0.0
    %v1943 = vmax.f32 %v1927, 0.0
    %v1944 = vmax.f32 %v1928, 0.0
    %v1945 = vmax.f32 %v1929, 0.0
    %v1946 = vmax.f32 %v1930, 0.0
    %v1947 = vmax.f32 %v1931, 0.0
    %v1948 = vmax.f32 %v1932, 0.0
    %v1949 = vmax.f32 %v1933, 0.0
    %v1950 = vmax.f32 %v1934, 0.0
    %v1951 = vmax.f32 %v1935, 0.0
    %v1952 = vmax.f32 %v1936, 0.0
    %v1953 = vmax.f32 %v1937, 0.0
    %v1954 = vmax.f32 %v1858, %v1938
    %v1955 = vmax.f32 %v1859, %v1939
    %v1956 = vmax.f32 %v1860, %v1940
    %v1957 = vmax.f32 %v1861, %v1941
    %v1958 = vmax.f32 %v1862, %v1942
    %v1959 = vmax.f32 %v1863, %v1943
    %v1960 = vmax.f32 %v1864, %v1944
    %v1961 = vmax.f32 %v1865, %v1945
    %v1962 = vmax.f32 %v1866, %v1946
    %v1963 = vmax.f32 %v1867, %v1947
    %v1964 = vmax.f32 %v1868, %v1948
    %v1965 = vmax.f32 %v1869, %v1949
    %v1966 = vmax.f32 %v1870, %v1950
    %v1967 = vmax.f32 %v1871, %v1951
    %v1968 = vmax.f32 %v1872, %v1952
    %v1969 = vmax.f32 %v1873, %v1953
    %1970 = vst [vmem:[#allocation3 + $0x7c] sm:$0xff] %v1954
    %1971 = vst [vmem:[#allocation3 + $0x84] sm:$0xff] %v1955
    %1972 = vst [vmem:[#allocation3 + $0x8c] sm:$0xff] %v1956
    %1973 = vst [vmem:[#allocation3 + $0x94] sm:$0xff] %v1957
    %1974 = vst [vmem:[#allocation3 + $0x9c] sm:$0xff] %v1958
    %1975 = vst [vmem:[#allocation3 + $0xa4] sm:$0xff] %v1959
    %1976 = vst [vmem:[#allocation3 + $0xac] sm:$0xff] %v1960
    %1977 = vst [vmem:[#allocation3 + $0xb4] sm:$0xff] %v1961
    %1978 = vst [vmem:[#allocation3 + $0xbc] sm:$0xff] %v1962
    %1979 = vst [vmem:[#allocation3 + $0xc4] sm:$0xff] %v1963
    %1980 = vst [vmem:[#allocation3 + $0xcc] sm:$0xff] %v1964
    %1981 = vst [vmem:[#allocation3 + $0xd4] sm:$0xff] %v1965
    %1982 = vst [vmem:[#allocation3 + $0xdc] sm:$0xff] %v1966
    %1983 = vst [vmem:[#allocation3 + $0xe4] sm:$0xff] %v1967
    %1984 = vst [vmem:[#allocation3 + $0xec] sm:$0xff] %v1968
    %1985 = vst [vmem:[#allocation3 + $0xf4] sm:$0xf] %v1969
    %v1986 = vld [vmem:[#allocation3] sm:$0xff]
    %v1987 = vld [vmem:[#allocation3 + $0x8] sm:$0xff]
    %v1988 = vld [vmem:[#allocation3 + $0x10] sm:$0xff]
    %v1989 = vld [vmem:[#allocation3 + $0x18] sm:$0xff]
    %v1990 = vld [vmem:[#allocation3 + $0x20] sm:$0xff]
    %v1991 = vld [vmem:[#allocation3 + $0x28] sm:$0xff]
    %v1992 = vld [vmem:[#allocation3 + $0x30] sm:$0xff]
    %v1993 = vld [vmem:[#allocation3 + $0x38] sm:$0xff]
    %v1994 = vld [vmem:[#allocation3 + $0x40] sm:$0xff]
    %v1995 = vld [vmem:[#allocation3 + $0x48] sm:$0xff]
    %v1996 = vld [vmem:[#allocation3 + $0x50] sm:$0xff]
    %v1997 = vld [vmem:[#allocation3 + $0x58] sm:$0xff]
    %v1998 = vld [vmem:[#allocation3 + $0x60] sm:$0xff]
    %v1999 = vld [vmem:[#allocation3 + $0x68] sm:$0xff]
    %v2000 = vld [vmem:[#allocation3 + $0x70] sm:$0xff]
    %v2001 = vld [vmem:[#allocation3 + $0x78] sm:$0xff]
    %v2002 = vld [vmem:[#allocation3 + $0x80] sm:$0xff]
    %v2003 = vld [vmem:[#allocation3 + $0x88] sm:$0xff]
    %v2004 = vld [vmem:[#allocation3 + $0x90] sm:$0xff]
    %v2005 = vld [vmem:[#allocation3 + $0x98] sm:$0xff]
    %v2006 = vld [vmem:[#allocation3 + $0xa0] sm:$0xff]
    %v2007 = vld [vmem:[#allocation3 + $0xa8] sm:$0xff]
    %v2008 = vld [vmem:[#allocation3 + $0xb0] sm:$0xff]
    %v2009 = vld [vmem:[#allocation3 + $0xb8] sm:$0xff]
    %v2010 = vld [vmem:[#allocation3 + $0xc0] sm:$0xff]
    %v2011 = vld [vmem:[#allocation3 + $0xc8] sm:$0xff]
    %v2012 = vld [vmem:[#allocation3 + $0xd0] sm:$0xff]
    %v2013 = vld [vmem:[#allocation3 + $0xd8] sm:$0xff]
    %v2014 = vld [vmem:[#allocation3 + $0xe0] sm:$0xff]
    %v2015 = vld [vmem:[#allocation3 + $0xe8] sm:$0xff]
    %v2016 = vld [vmem:[#allocation3 + $0xf0] sm:$0x3f]
    %v2017 = vld [vmem:[%s3] sm:$0xff]
    %v2018 = vld [vmem:[%s3 + $0x8] sm:$0xff]
    %v2019 = vld [vmem:[%s3 + $0x10] sm:$0xff]
    %v2020 = vld [vmem:[%s3 + $0x18] sm:$0xff]
    %v2021 = vld [vmem:[%s3 + $0x20] sm:$0xff]
    %v2022 = vld [vmem:[%s3 + $0x28] sm:$0xff]
    %v2023 = vld [vmem:[%s3 + $0x30] sm:$0xff]
    %v2024 = vld [vmem:[%s3 + $0x38] sm:$0xff]
    %v2025 = vld [vmem:[%s3 + $0x40] sm:$0xff]
    %v2026 = vld [vmem:[%s3 + $0x48] sm:$0xff]
    %v2027 = vld [vmem:[%s3 + $0x50] sm:$0xff]
    %v2028 = vld [vmem:[%s3 + $0x58] sm:$0xff]
    %v2029 = vld [vmem:[%s3 + $0x60] sm:$0xff]
    %v2030 = vld [vmem:[%s3 + $0x68] sm:$0xff]
    %v2031 = vld [vmem:[%s3 + $0x70] sm:$0xff]
    %v2032 = vld [vmem:[%s3 + $0x78] sm:$0xff]
    %v2033 = vld [vmem:[#allocation3 + $0x1] sm:$0xff]
    %v2034 = vld [vmem:[#allocation3 + $0x9] sm:$0xff]
    %v2035 = vld [vmem:[#allocation3 + $0x11] sm:$0xff]
    %v2036 = vld [vmem:[#allocation3 + $0x19] sm:$0xff]
    %v2037 = vld [vmem:[#allocation3 + $0x21] sm:$0xff]
    %v2038 = vld [vmem:[#allocation3 + $0x29] sm:$0xff]
    %v2039 = vld [vmem:[#allocation3 + $0x31] sm:$0xff]
    %v2040 = vld [vmem:[#allocation3 + $0x39] sm:$0xff]
    %v2041 = vld [vmem:[#allocation3 + $0x41] sm:$0xff]
    %v2042 = vld [vmem:[#allocation3 + $0x49] sm:$0xff]
    %v2043 = vld [vmem:[#allocation3 + $0x51] sm:$0xff]
    %v2044 = vld [vmem:[#allocation3 + $0x59] sm:$0xff]
    %v2045 = vld [vmem:[#allocation3 + $0x61] sm:$0xff]
    %v2046 = vld [vmem:[#allocation3 + $0x69] sm:$0xff]
    %v2047 = vld [vmem:[#allocation3 + $0x71] sm:$0xff]
    %v2048 = vld [vmem:[#allocation3 + $0x79] sm:$0xff]
    %v2049 = vld [vmem:[#allocation3 + $0x81] sm:$0xff]
    %v2050 = vld [vmem:[#allocation3 + $0x89] sm:$0xff]
    %v2051 = vld [vmem:[#allocation3 + $0x91] sm:$0xff]
    %v2052 = vld [vmem:[#allocation3 + $0x99] sm:$0xff]
    %v2053 = vld [vmem:[#allocation3 + $0xa1] sm:$0xff]
    %v2054 = vld [vmem:[#allocation3 + $0xa9] sm:$0xff]
    %v2055 = vld [vmem:[#allocation3 + $0xb1] sm:$0xff]
    %v2056 = vld [vmem:[#allocation3 + $0xb9] sm:$0xff]
    %v2057 = vld [vmem:[#allocation3 + $0xc1] sm:$0xff]
    %v2058 = vld [vmem:[#allocation3 + $0xc9] sm:$0xff]
    %v2059 = vld [vmem:[#allocation3 + $0xd1] sm:$0xff]
    %v2060 = vld [vmem:[#allocation3 + $0xd9] sm:$0xff]
    %v2061 = vld [vmem:[#allocation3 + $0xe1] sm:$0xff]
    %v2062 = vld [vmem:[#allocation3 + $0xe9] sm:$0xff]
    %v2063 = vld [vmem:[#allocation3 + $0xf1] sm:$0x3f]
    %s2064 = scalar_lea.vmem %s3, 128
    %v2065 = vld [vmem:[%s2064] sm:$0xff]
    %v2066 = vld [vmem:[%s2064 + $0x8] sm:$0xff]
    %v2067 = vld [vmem:[%s2064 + $0x10] sm:$0xff]
    %v2068 = vld [vmem:[%s2064 + $0x18] sm:$0xff]
    %v2069 = vld [vmem:[%s2064 + $0x20] sm:$0xff]
    %v2070 = vld [vmem:[%s2064 + $0x28] sm:$0xff]
    %v2071 = vld [vmem:[%s2064 + $0x30] sm:$0xff]
    %v2072 = vld [vmem:[%s2064 + $0x38] sm:$0xff]
    %v2073 = vld [vmem:[%s2064 + $0x40] sm:$0xff]
    %v2074 = vld [vmem:[%s2064 + $0x48] sm:$0xff]
    %v2075 = vld [vmem:[%s2064 + $0x50] sm:$0xff]
    %v2076 = vld [vmem:[%s2064 + $0x58] sm:$0xff]
    %v2077 = vld [vmem:[%s2064 + $0x60] sm:$0xff]
    %v2078 = vld [vmem:[%s2064 + $0x68] sm:$0xff]
    %v2079 = vld [vmem:[%s2064 + $0x70] sm:$0xff]
    %v2080 = vld [vmem:[%s2064 + $0x78] sm:$0xff]
    %2081 = vmatpush.msra.mxu0 %v2080
    %2082 = vmatpush.msra.mxu0 %v2079
    %2083 = vmatpush.msra.mxu0 %v2078
    %2084 = vmatpush.msra.mxu0 %v2077
    %2085 = vmatpush.msra.mxu0 %v2076
    %2086 = vmatpush.msra.mxu0 %v2075
    %2087 = vmatpush.msra.mxu0 %v2074
    %2088 = vmatpush.msra.mxu0 %v2073
    %2089 = vmatpush.msra.mxu0 %v2072
    %2090 = vmatpush.msra.mxu0 %v2071
    %2091 = vmatpush.msra.mxu0 %v2070
    %2092 = vmatpush.msra.mxu0 %v2069
    %2093 = vmatpush.msra.mxu0 %v2068
    %2094 = vmatpush.msra.mxu0 %v2067
    %2095 = vmatpush.msra.mxu0 %v2066
    %2096 = vmatpush.msra.mxu0 %v2065
    %2097 = vmatmul.f32.gmra.mxu0 %v2033
    %v2098 = vpop.f32.mrf.mxu0
    %v2099 = vadd.f32 0.0, %v2098
    %2100 = vmatmul.f32.gmra.mxu0 %v2034
    %v2101 = vpop.f32.mrf.mxu0
    %v2102 = vadd.f32 0.0, %v2101
    %2103 = vmatmul.f32.gmra.mxu0 %v2035
    %v2104 = vpop.f32.mrf.mxu0
    %v2105 = vadd.f32 0.0, %v2104
    %2106 = vmatmul.f32.gmra.mxu0 %v2036
    %v2107 = vpop.f32.mrf.mxu0
    %v2108 = vadd.f32 0.0, %v2107
    %2109 = vmatmul.f32.gmra.mxu0 %v2037
    %v2110 = vpop.f32.mrf.mxu0
    %v2111 = vadd.f32 0.0, %v2110
    %2112 = vmatmul.f32.gmra.mxu0 %v2038
    %v2113 = vpop.f32.mrf.mxu0
    %v2114 = vadd.f32 0.0, %v2113
    %2115 = vmatmul.f32.gmra.mxu0 %v2039
    %v2116 = vpop.f32.mrf.mxu0
    %v2117 = vadd.f32 0.0, %v2116
    %2118 = vmatmul.f32.gmra.mxu0 %v2040
    %v2119 = vpop.f32.mrf.mxu0
    %v2120 = vadd.f32 0.0, %v2119
    %2121 = vmatmul.f32.gmra.mxu0 %v2041
    %v2122 = vpop.f32.mrf.mxu0
    %v2123 = vadd.f32 0.0, %v2122
    %2124 = vmatmul.f32.gmra.mxu0 %v2042
    %v2125 = vpop.f32.mrf.mxu0
    %v2126 = vadd.f32 0.0, %v2125
    %2127 = vmatmul.f32.gmra.mxu0 %v2043
    %v2128 = vpop.f32.mrf.mxu0
    %v2129 = vadd.f32 0.0, %v2128
    %2130 = vmatmul.f32.gmra.mxu0 %v2044
    %v2131 = vpop.f32.mrf.mxu0
    %v2132 = vadd.f32 0.0, %v2131
    %2133 = vmatmul.f32.gmra.mxu0 %v2045
    %v2134 = vpop.f32.mrf.mxu0
    %v2135 = vadd.f32 0.0, %v2134
    %2136 = vmatmul.f32.gmra.mxu0 %v2046
    %v2137 = vpop.f32.mrf.mxu0
    %v2138 = vadd.f32 0.0, %v2137
    %2139 = vmatmul.f32.gmra.mxu0 %v2047
    %v2140 = vpop.f32.mrf.mxu0
    %v2141 = vadd.f32 0.0, %v2140
    %2142 = vmatmul.f32.gmra.mxu0 %v2048
    %v2143 = vpop.f32.mrf.mxu0
    %v2144 = vadd.f32 0.0, %v2143
    %2145 = vmatmul.f32.gmra.mxu0 %v2049
    %v2146 = vpop.f32.mrf.mxu0
    %v2147 = vadd.f32 0.0, %v2146
    %2148 = vmatmul.f32.gmra.mxu0 %v2050
    %v2149 = vpop.f32.mrf.mxu0
    %v2150 = vadd.f32 0.0, %v2149
    %2151 = vmatmul.f32.gmra.mxu0 %v2051
    %v2152 = vpop.f32.mrf.mxu0
    %v2153 = vadd.f32 0.0, %v2152
    %2154 = vmatmul.f32.gmra.mxu0 %v2052
    %v2155 = vpop.f32.mrf.mxu0
    %v2156 = vadd.f32 0.0, %v2155
    %2157 = vmatmul.f32.gmra.mxu0 %v2053
    %v2158 = vpop.f32.mrf.mxu0
    %v2159 = vadd.f32 0.0, %v2158
    %2160 = vmatmul.f32.gmra.mxu0 %v2054
    %v2161 = vpop.f32.mrf.mxu0
    %v2162 = vadd.f32 0.0, %v2161
    %2163 = vmatmul.f32.gmra.mxu0 %v2055
    %v2164 = vpop.f32.mrf.mxu0
    %v2165 = vadd.f32 0.0, %v2164
    %2166 = vmatmul.f32.gmra.mxu0 %v2056
    %v2167 = vpop.f32.mrf.mxu0
    %v2168 = vadd.f32 0.0, %v2167
    %2169 = vmatmul.f32.gmra.mxu0 %v2057
    %v2170 = vpop.f32.mrf.mxu0
    %v2171 = vadd.f32 0.0, %v2170
    %2172 = vmatmul.f32.gmra.mxu0 %v2058
    %v2173 = vpop.f32.mrf.mxu0
    %v2174 = vadd.f32 0.0, %v2173
    %2175 = vmatmul.f32.gmra.mxu0 %v2059
    %v2176 = vpop.f32.mrf.mxu0
    %v2177 = vadd.f32 0.0, %v2176
    %2178 = vmatmul.f32.gmra.mxu0 %v2060
    %v2179 = vpop.f32.mrf.mxu0
    %v2180 = vadd.f32 0.0, %v2179
    %2181 = vmatmul.f32.gmra.mxu0 %v2061
    %v2182 = vpop.f32.mrf.mxu0
    %v2183 = vadd.f32 0.0, %v2182
    %2184 = vmatmul.f32.gmra.mxu0 %v2062
    %v2185 = vpop.f32.mrf.mxu0
    %v2186 = vadd.f32 0.0, %v2185
    %2187 = vmatmul.f32.gmra.mxu0 %v2063
    %v2188 = vpop.f32.mrf.mxu0
    %v2189 = vadd.f32 0.0, %v2188
    %2190 = vdwg.mxu0
    %2191 = vmatpush.msra.mxu0 %v2032
    %2192 = vmatpush.msra.mxu0 %v2031
    %2193 = vmatpush.msra.mxu0 %v2030
    %2194 = vmatpush.msra.mxu0 %v2029
    %2195 = vmatpush.msra.mxu0 %v2028
    %2196 = vmatpush.msra.mxu0 %v2027
    %2197 = vmatpush.msra.mxu0 %v2026
    %2198 = vmatpush.msra.mxu0 %v2025
    %2199 = vmatpush.msra.mxu0 %v2024
    %2200 = vmatpush.msra.mxu0 %v2023
    %2201 = vmatpush.msra.mxu0 %v2022
    %2202 = vmatpush.msra.mxu0 %v2021
    %2203 = vmatpush.msra.mxu0 %v2020
    %2204 = vmatpush.msra.mxu0 %v2019
    %2205 = vmatpush.msra.mxu0 %v2018
    %2206 = vmatpush.msra.mxu0 %v2017
    %2207 = vmatmul.f32.gmra.mxu0 %v1986
    %v2208 = vpop.f32.mrf.mxu0
    %v2209 = vadd.f32 %v2099, %v2208
    %2210 = vmatmul.f32.gmra.mxu0 %v1987
    %v2211 = vpop.f32.mrf.mxu0
    %v2212 = vadd.f32 %v2102, %v2211
    %2213 = vmatmul.f32.gmra.mxu0 %v1988
    %v2214 = vpop.f32.mrf.mxu0
    %v2215 = vadd.f32 %v2105, %v2214
    %2216 = vmatmul.f32.gmra.mxu0 %v1989
    %v2217 = vpop.f32.mrf.mxu0
    %v2218 = vadd.f32 %v2108, %v2217
    %2219 = vmatmul.f32.gmra.mxu0 %v1990
    %v2220 = vpop.f32.mrf.mxu0
    %v2221 = vadd.f32 %v2111, %v2220
    %2222 = vmatmul.f32.gmra.mxu0 %v1991
    %v2223 = vpop.f32.mrf.mxu0
    %v2224 = vadd.f32 %v2114, %v2223
    %2225 = vmatmul.f32.gmra.mxu0 %v1992
    %v2226 = vpop.f32.mrf.mxu0
    %v2227 = vadd.f32 %v2117, %v2226
    %2228 = vmatmul.f32.gmra.mxu0 %v1993
    %v2229 = vpop.f32.mrf.mxu0
    %v2230 = vadd.f32 %v2120, %v2229
    %2231 = vmatmul.f32.gmra.mxu0 %v1994
    %v2232 = vpop.f32.mrf.mxu0
    %v2233 = vadd.f32 %v2123, %v2232
    %2234 = vmatmul.f32.gmra.mxu0 %v1995
    %v2235 = vpop.f32.mrf.mxu0
    %v2236 = vadd.f32 %v2126, %v2235
    %2237 = vmatmul.f32.gmra.mxu0 %v1996
    %v2238 = vpop.f32.mrf.mxu0
    %v2239 = vadd.f32 %v2129, %v2238
    %2240 = vmatmul.f32.gmra.mxu0 %v1997
    %v2241 = vpop.f32.mrf.mxu0
    %v2242 = vadd.f32 %v2132, %v2241
    %2243 = vmatmul.f32.gmra.mxu0 %v1998
    %v2244 = vpop.f32.mrf.mxu0
    %v2245 = vadd.f32 %v2135, %v2244
    %2246 = vmatmul.f32.gmra.mxu0 %v1999
    %v2247 = vpop.f32.mrf.mxu0
    %v2248 = vadd.f32 %v2138, %v2247
    %2249 = vmatmul.f32.gmra.mxu0 %v2000
    %v2250 = vpop.f32.mrf.mxu0
    %v2251 = vadd.f32 %v2141, %v2250
    %2252 = vmatmul.f32.gmra.mxu0 %v2001
    %v2253 = vpop.f32.mrf.mxu0
    %v2254 = vadd.f32 %v2144, %v2253
    %2255 = vmatmul.f32.gmra.mxu0 %v2002
    %v2256 = vpop.f32.mrf.mxu0
    %v2257 = vadd.f32 %v2147, %v2256
    %2258 = vmatmul.f32.gmra.mxu0 %v2003
    %v2259 = vpop.f32.mrf.mxu0
    %v2260 = vadd.f32 %v2150, %v2259
    %2261 = vmatmul.f32.gmra.mxu0 %v2004
    %v2262 = vpop.f32.mrf.mxu0
    %v2263 = vadd.f32 %v2153, %v2262
    %2264 = vmatmul.f32.gmra.mxu0 %v2005
    %v2265 = vpop.f32.mrf.mxu0
    %v2266 = vadd.f32 %v2156, %v2265
    %2267 = vmatmul.f32.gmra.mxu0 %v2006
    %v2268 = vpop.f32.mrf.mxu0
    %v2269 = vadd.f32 %v2159, %v2268
    %2270 = vmatmul.f32.gmra.mxu0 %v2007
    %v2271 = vpop.f32.mrf.mxu0
    %v2272 = vadd.f32 %v2162, %v2271
    %2273 = vmatmul.f32.gmra.mxu0 %v2008
    %v2274 = vpop.f32.mrf.mxu0
    %v2275 = vadd.f32 %v2165, %v2274
    %2276 = vmatmul.f32.gmra.mxu0 %v2009
    %v2277 = vpop.f32.mrf.mxu0
    %v2278 = vadd.f32 %v2168, %v2277
    %2279 = vmatmul.f32.gmra.mxu0 %v2010
    %v2280 = vpop.f32.mrf.mxu0
    %v2281 = vadd.f32 %v2171, %v2280
    %2282 = vmatmul.f32.gmra.mxu0 %v2011
    %v2283 = vpop.f32.mrf.mxu0
    %v2284 = vadd.f32 %v2174, %v2283
    %2285 = vmatmul.f32.gmra.mxu0 %v2012
    %v2286 = vpop.f32.mrf.mxu0
    %v2287 = vadd.f32 %v2177, %v2286
    %2288 = vmatmul.f32.gmra.mxu0 %v2013
    %v2289 = vpop.f32.mrf.mxu0
    %v2290 = vadd.f32 %v2180, %v2289
    %2291 = vmatmul.f32.gmra.mxu0 %v2014
    %v2292 = vpop.f32.mrf.mxu0
    %v2293 = vadd.f32 %v2183, %v2292
    %2294 = vmatmul.f32.gmra.mxu0 %v2015
    %v2295 = vpop.f32.mrf.mxu0
    %v2296 = vadd.f32 %v2186, %v2295
    %2297 = vmatmul.f32.gmra.mxu0 %v2016
    %v2298 = vpop.f32.mrf.mxu0
    %v2299 = vadd.f32 %v2189, %v2298
    %2300 = vdwg.mxu0
    %v2301 = vld [vmem:[#allocation3 + $0x2] sm:$0xff]
    %v2302 = vld [vmem:[#allocation3 + $0xa] sm:$0xff]
    %v2303 = vld [vmem:[#allocation3 + $0x12] sm:$0xff]
    %v2304 = vld [vmem:[#allocation3 + $0x1a] sm:$0xff]
    %v2305 = vld [vmem:[#allocation3 + $0x22] sm:$0xff]
    %v2306 = vld [vmem:[#allocation3 + $0x2a] sm:$0xff]
    %v2307 = vld [vmem:[#allocation3 + $0x32] sm:$0xff]
    %v2308 = vld [vmem:[#allocation3 + $0x3a] sm:$0xff]
    %v2309 = vld [vmem:[#allocation3 + $0x42] sm:$0xff]
    %v2310 = vld [vmem:[#allocation3 + $0x4a] sm:$0xff]
    %v2311 = vld [vmem:[#allocation3 + $0x52] sm:$0xff]
    %v2312 = vld [vmem:[#allocation3 + $0x5a] sm:$0xff]
    %v2313 = vld [vmem:[#allocation3 + $0x62] sm:$0xff]
    %v2314 = vld [vmem:[#allocation3 + $0x6a] sm:$0xff]
    %v2315 = vld [vmem:[#allocation3 + $0x72] sm:$0xff]
    %v2316 = vld [vmem:[#allocation3 + $0x7a] sm:$0xff]
    %v2317 = vld [vmem:[#allocation3 + $0x82] sm:$0xff]
    %v2318 = vld [vmem:[#allocation3 + $0x8a] sm:$0xff]
    %v2319 = vld [vmem:[#allocation3 + $0x92] sm:$0xff]
    %v2320 = vld [vmem:[#allocation3 + $0x9a] sm:$0xff]
    %v2321 = vld [vmem:[#allocation3 + $0xa2] sm:$0xff]
    %v2322 = vld [vmem:[#allocation3 + $0xaa] sm:$0xff]
    %v2323 = vld [vmem:[#allocation3 + $0xb2] sm:$0xff]
    %v2324 = vld [vmem:[#allocation3 + $0xba] sm:$0xff]
    %v2325 = vld [vmem:[#allocation3 + $0xc2] sm:$0xff]
    %v2326 = vld [vmem:[#allocation3 + $0xca] sm:$0xff]
    %v2327 = vld [vmem:[#allocation3 + $0xd2] sm:$0xff]
    %v2328 = vld [vmem:[#allocation3 + $0xda] sm:$0xff]
    %v2329 = vld [vmem:[#allocation3 + $0xe2] sm:$0xff]
    %v2330 = vld [vmem:[#allocation3 + $0xea] sm:$0xff]
    %v2331 = vld [vmem:[#allocation3 + $0xf2] sm:$0x3f]
    %s2332 = scalar_lea.vmem %s3, 256
    %v2333 = vld [vmem:[%s2332] sm:$0xff]
    %v2334 = vld [vmem:[%s2332 + $0x8] sm:$0xff]
    %v2335 = vld [vmem:[%s2332 + $0x10] sm:$0xff]
    %v2336 = vld [vmem:[%s2332 + $0x18] sm:$0xff]
    %v2337 = vld [vmem:[%s2332 + $0x20] sm:$0xff]
    %v2338 = vld [vmem:[%s2332 + $0x28] sm:$0xff]
    %v2339 = vld [vmem:[%s2332 + $0x30] sm:$0xff]
    %v2340 = vld [vmem:[%s2332 + $0x38] sm:$0xff]
    %v2341 = vld [vmem:[%s2332 + $0x40] sm:$0xff]
    %v2342 = vld [vmem:[%s2332 + $0x48] sm:$0xff]
    %v2343 = vld [vmem:[%s2332 + $0x50] sm:$0xff]
    %v2344 = vld [vmem:[%s2332 + $0x58] sm:$0xff]
    %v2345 = vld [vmem:[%s2332 + $0x60] sm:$0xff]
    %v2346 = vld [vmem:[%s2332 + $0x68] sm:$0xff]
    %v2347 = vld [vmem:[%s2332 + $0x70] sm:$0xff]
    %v2348 = vld [vmem:[%s2332 + $0x78] sm:$0xff]
    %2349 = vmatpush.msra.mxu0 %v2348
    %2350 = vmatpush.msra.mxu0 %v2347
    %2351 = vmatpush.msra.mxu0 %v2346
    %2352 = vmatpush.msra.mxu0 %v2345
    %2353 = vmatpush.msra.mxu0 %v2344
    %2354 = vmatpush.msra.mxu0 %v2343
    %2355 = vmatpush.msra.mxu0 %v2342
    %2356 = vmatpush.msra.mxu0 %v2341
    %2357 = vmatpush.msra.mxu0 %v2340
    %2358 = vmatpush.msra.mxu0 %v2339
    %2359 = vmatpush.msra.mxu0 %v2338
    %2360 = vmatpush.msra.mxu0 %v2337
    %2361 = vmatpush.msra.mxu0 %v2336
    %2362 = vmatpush.msra.mxu0 %v2335
    %2363 = vmatpush.msra.mxu0 %v2334
    %2364 = vmatpush.msra.mxu0 %v2333
    %2365 = vmatmul.f32.gmra.mxu0 %v2301
    %v2366 = vpop.f32.mrf.mxu0
    %v2367 = vadd.f32 0.0, %v2366
    %2368 = vmatmul.f32.gmra.mxu0 %v2302
    %v2369 = vpop.f32.mrf.mxu0
    %v2370 = vadd.f32 0.0, %v2369
    %2371 = vmatmul.f32.gmra.mxu0 %v2303
    %v2372 = vpop.f32.mrf.mxu0
    %v2373 = vadd.f32 0.0, %v2372
    %2374 = vmatmul.f32.gmra.mxu0 %v2304
    %v2375 = vpop.f32.mrf.mxu0
    %v2376 = vadd.f32 0.0, %v2375
    %2377 = vmatmul.f32.gmra.mxu0 %v2305
    %v2378 = vpop.f32.mrf.mxu0
    %v2379 = vadd.f32 0.0, %v2378
    %2380 = vmatmul.f32.gmra.mxu0 %v2306
    %v2381 = vpop.f32.mrf.mxu0
    %v2382 = vadd.f32 0.0, %v2381
    %2383 = vmatmul.f32.gmra.mxu0 %v2307
    %v2384 = vpop.f32.mrf.mxu0
    %v2385 = vadd.f32 0.0, %v2384
    %2386 = vmatmul.f32.gmra.mxu0 %v2308
    %v2387 = vpop.f32.mrf.mxu0
    %v2388 = vadd.f32 0.0, %v2387
    %2389 = vmatmul.f32.gmra.mxu0 %v2309
    %v2390 = vpop.f32.mrf.mxu0
    %v2391 = vadd.f32 0.0, %v2390
    %2392 = vmatmul.f32.gmra.mxu0 %v2310
    %v2393 = vpop.f32.mrf.mxu0
    %v2394 = vadd.f32 0.0, %v2393
    %2395 = vmatmul.f32.gmra.mxu0 %v2311
    %v2396 = vpop.f32.mrf.mxu0
    %v2397 = vadd.f32 0.0, %v2396
    %2398 = vmatmul.f32.gmra.mxu0 %v2312
    %v2399 = vpop.f32.mrf.mxu0
    %v2400 = vadd.f32 0.0, %v2399
    %2401 = vmatmul.f32.gmra.mxu0 %v2313
    %v2402 = vpop.f32.mrf.mxu0
    %v2403 = vadd.f32 0.0, %v2402
    %2404 = vmatmul.f32.gmra.mxu0 %v2314
    %v2405 = vpop.f32.mrf.mxu0
    %v2406 = vadd.f32 0.0, %v2405
    %2407 = vmatmul.f32.gmra.mxu0 %v2315
    %v2408 = vpop.f32.mrf.mxu0
    %v2409 = vadd.f32 0.0, %v2408
    %2410 = vmatmul.f32.gmra.mxu0 %v2316
    %v2411 = vpop.f32.mrf.mxu0
    %v2412 = vadd.f32 0.0, %v2411
    %2413 = vmatmul.f32.gmra.mxu0 %v2317
    %v2414 = vpop.f32.mrf.mxu0
    %v2415 = vadd.f32 0.0, %v2414
    %2416 = vmatmul.f32.gmra.mxu0 %v2318
    %v2417 = vpop.f32.mrf.mxu0
    %v2418 = vadd.f32 0.0, %v2417
    %2419 = vmatmul.f32.gmra.mxu0 %v2319
    %v2420 = vpop.f32.mrf.mxu0
    %v2421 = vadd.f32 0.0, %v2420
    %2422 = vmatmul.f32.gmra.mxu0 %v2320
    %v2423 = vpop.f32.mrf.mxu0
    %v2424 = vadd.f32 0.0, %v2423
    %2425 = vmatmul.f32.gmra.mxu0 %v2321
    %v2426 = vpop.f32.mrf.mxu0
    %v2427 = vadd.f32 0.0, %v2426
    %2428 = vmatmul.f32.gmra.mxu0 %v2322
    %v2429 = vpop.f32.mrf.mxu0
    %v2430 = vadd.f32 0.0, %v2429
    %2431 = vmatmul.f32.gmra.mxu0 %v2323
    %v2432 = vpop.f32.mrf.mxu0
    %v2433 = vadd.f32 0.0, %v2432
    %2434 = vmatmul.f32.gmra.mxu0 %v2324
    %v2435 = vpop.f32.mrf.mxu0
    %v2436 = vadd.f32 0.0, %v2435
    %2437 = vmatmul.f32.gmra.mxu0 %v2325
    %v2438 = vpop.f32.mrf.mxu0
    %v2439 = vadd.f32 0.0, %v2438
    %2440 = vmatmul.f32.gmra.mxu0 %v2326
    %v2441 = vpop.f32.mrf.mxu0
    %v2442 = vadd.f32 0.0, %v2441
    %2443 = vmatmul.f32.gmra.mxu0 %v2327
    %v2444 = vpop.f32.mrf.mxu0
    %v2445 = vadd.f32 0.0, %v2444
    %2446 = vmatmul.f32.gmra.mxu0 %v2328
    %v2447 = vpop.f32.mrf.mxu0
    %v2448 = vadd.f32 0.0, %v2447
    %2449 = vmatmul.f32.gmra.mxu0 %v2329
    %v2450 = vpop.f32.mrf.mxu0
    %v2451 = vadd.f32 0.0, %v2450
    %2452 = vmatmul.f32.gmra.mxu0 %v2330
    %v2453 = vpop.f32.mrf.mxu0
    %v2454 = vadd.f32 0.0, %v2453
    %2455 = vmatmul.f32.gmra.mxu0 %v2331
    %v2456 = vpop.f32.mrf.mxu0
    %v2457 = vadd.f32 0.0, %v2456
    %2458 = vdwg.mxu0
    %v2459 = vadd.f32 %v2209, %v2367
    %v2460 = vadd.f32 %v2212, %v2370
    %v2461 = vadd.f32 %v2215, %v2373
    %v2462 = vadd.f32 %v2218, %v2376
    %v2463 = vadd.f32 %v2221, %v2379
    %v2464 = vadd.f32 %v2224, %v2382
    %v2465 = vadd.f32 %v2227, %v2385
    %v2466 = vadd.f32 %v2230, %v2388
    %v2467 = vadd.f32 %v2233, %v2391
    %v2468 = vadd.f32 %v2236, %v2394
    %v2469 = vadd.f32 %v2239, %v2397
    %v2470 = vadd.f32 %v2242, %v2400
    %v2471 = vadd.f32 %v2245, %v2403
    %v2472 = vadd.f32 %v2248, %v2406
    %v2473 = vadd.f32 %v2251, %v2409
    %v2474 = vadd.f32 %v2254, %v2412
    %v2475 = vadd.f32 %v2257, %v2415
    %v2476 = vadd.f32 %v2260, %v2418
    %v2477 = vadd.f32 %v2263, %v2421
    %v2478 = vadd.f32 %v2266, %v2424
    %v2479 = vadd.f32 %v2269, %v2427
    %v2480 = vadd.f32 %v2272, %v2430
    %v2481 = vadd.f32 %v2275, %v2433
    %v2482 = vadd.f32 %v2278, %v2436
    %v2483 = vadd.f32 %v2281, %v2439
    %v2484 = vadd.f32 %v2284, %v2442
    %v2485 = vadd.f32 %v2287, %v2445
    %v2486 = vadd.f32 %v2290, %v2448
    %v2487 = vadd.f32 %v2293, %v2451
    %v2488 = vadd.f32 %v2296, %v2454
    %v2489 = vadd.f32 %v2299, %v2457
    %v2490 = vadd.f32 %v2459, %v2460
    %v2491 = vadd.f32 %v2490, %v2461
    %v2492 = vadd.f32 %v2491, %v2462
    %v2493 = vadd.f32 %v2492, %v2463
    %v2494 = vadd.f32 %v2493, %v2464
    %v2495 = vadd.f32 %v2494, %v2465
    %v2496 = vadd.f32 %v2495, %v2466
    %v2497 = vadd.f32 %v2496, %v2467
    %v2498 = vadd.f32 %v2497, %v2468
    %v2499 = vadd.f32 %v2498, %v2469
    %v2500 = vadd.f32 %v2499, %v2470
    %v2501 = vadd.f32 %v2500, %v2471
    %v2502 = vadd.f32 %v2501, %v2472
    %v2503 = vadd.f32 %v2502, %v2473
    %v2504 = vadd.f32 %v2503, %v2474
    %v2505 = vadd.f32 %v2504, %v2475
    %v2506 = vadd.f32 %v2505, %v2476
    %v2507 = vadd.f32 %v2506, %v2477
    %v2508 = vadd.f32 %v2507, %v2478
    %v2509 = vadd.f32 %v2508, %v2479
    %v2510 = vadd.f32 %v2509, %v2480
    %v2511 = vadd.f32 %v2510, %v2481
    %v2512 = vadd.f32 %v2511, %v2482
    %v2513 = vadd.f32 %v2512, %v2483
    %v2514 = vadd.f32 %v2513, %v2484
    %v2515 = vadd.f32 %v2514, %v2485
    %v2516 = vadd.f32 %v2515, %v2486
    %v2517 = vadd.f32 %v2516, %v2487
    %v2518 = vadd.f32 %v2517, %v2488
    %vm2519 = vcmask 1045504
    %v2520 = vsel %vm2519, %v2489, 0.0
    %v2521 = vadd.f32 %v2518, %v2520
    %v2522 = vrot.slane %v2521, 4
    %v2523 = vadd.f32 %v2521, %v2522
    %v2524 = vrot.slane %v2523, 2
    %v2525 = vadd.f32 %v2523, %v2524
    %v2526 = vrot.slane %v2525, 1
    %v2527 = vadd.f32 %v2525, %v2526
    %v2528 = vmul.f32 %v2459, %v2459
    %v2529 = vmul.f32 %v2460, %v2460
    %v2530 = vmul.f32 %v2461, %v2461
    %v2531 = vmul.f32 %v2462, %v2462
    %v2532 = vmul.f32 %v2463, %v2463
    %v2533 = vmul.f32 %v2464, %v2464
    %v2534 = vmul.f32 %v2465, %v2465
    %v2535 = vmul.f32 %v2466, %v2466
    %v2536 = vmul.f32 %v2467, %v2467
    %v2537 = vmul.f32 %v2468, %v2468
    %v2538 = vmul.f32 %v2469, %v2469
    %v2539 = vmul.f32 %v2470, %v2470
    %v2540 = vmul.f32 %v2471, %v2471
    %v2541 = vmul.f32 %v2472, %v2472
    %v2542 = vmul.f32 %v2473, %v2473
    %v2543 = vmul.f32 %v2474, %v2474
    %v2544 = vmul.f32 %v2475, %v2475
    %v2545 = vmul.f32 %v2476, %v2476
    %v2546 = vmul.f32 %v2477, %v2477
    %v2547 = vmul.f32 %v2478, %v2478
    %v2548 = vmul.f32 %v2479, %v2479
    %v2549 = vmul.f32 %v2480, %v2480
    %v2550 = vmul.f32 %v2481, %v2481
    %v2551 = vmul.f32 %v2482, %v2482
    %v2552 = vmul.f32 %v2483, %v2483
    %v2553 = vmul.f32 %v2484, %v2484
    %v2554 = vmul.f32 %v2485, %v2485
    %v2555 = vmul.f32 %v2486, %v2486
    %v2556 = vmul.f32 %v2487, %v2487
    %v2557 = vmul.f32 %v2488, %v2488
    %v2558 = vmul.f32 %v2489, %v2489
    %v2559 = vadd.f32 %v2528, %v2529
    %v2560 = vadd.f32 %v2559, %v2530
    %v2561 = vadd.f32 %v2560, %v2531
    %v2562 = vadd.f32 %v2561, %v2532
    %v2563 = vadd.f32 %v2562, %v2533
    %v2564 = vadd.f32 %v2563, %v2534
    %v2565 = vadd.f32 %v2564, %v2535
    %v2566 = vadd.f32 %v2565, %v2536
    %v2567 = vadd.f32 %v2566, %v2537
    %v2568 = vadd.f32 %v2567, %v2538
    %v2569 = vadd.f32 %v2568, %v2539
    %v2570 = vadd.f32 %v2569, %v2540
    %v2571 = vadd.f32 %v2570, %v2541
    %v2572 = vadd.f32 %v2571, %v2542
    %v2573 = vadd.f32 %v2572, %v2543
    %v2574 = vadd.f32 %v2573, %v2544
    %v2575 = vadd.f32 %v2574, %v2545
    %v2576 = vadd.f32 %v2575, %v2546
    %v2577 = vadd.f32 %v2576, %v2547
    %v2578 = vadd.f32 %v2577, %v2548
    %v2579 = vadd.f32 %v2578, %v2549
    %v2580 = vadd.f32 %v2579, %v2550
    %v2581 = vadd.f32 %v2580, %v2551
    %v2582 = vadd.f32 %v2581, %v2552
    %v2583 = vadd.f32 %v2582, %v2553
    %v2584 = vadd.f32 %v2583, %v2554
    %v2585 = vadd.f32 %v2584, %v2555
    %v2586 = vadd.f32 %v2585, %v2556
    %v2587 = vadd.f32 %v2586, %v2557
    %v2588 = vsel %vm2519, %v2558, 0.0
    %v2589 = vadd.f32 %v2587, %v2588
    %v2590 = vrot.slane %v2589, 4
    %v2591 = vadd.f32 %v2589, %v2590
    %v2592 = vrot.slane %v2591, 2
    %v2593 = vadd.f32 %v2591, %v2592
    %v2594 = vrot.slane %v2593, 1
    %v2595 = vadd.f32 %v2593, %v2594
    %v2597 = vrot.slane %v2474, 2
    %vm2599 = vcmask 1041408
    %v2600 = vsel %vm2599, %v2597, 0.0
    %v2601 = vrot.slane %v2600, 4
    %v2602 = vadd.f32 %v2600, %v2601
    %v2603 = vrot.slane %v2602, 2
    %v2604 = vadd.f32 %v2602, %v2603
    %v2605 = vrot.slane %v2604, 1
    %v2606 = vadd.f32 %v2604, %v2605
    %v2607 = vsub.f32 %v2527, %v2606
    %v2609 = vrot.slane %v2543, 2
    %v2611 = vsel %vm2599, %v2609, 0.0
    %v2612 = vrot.slane %v2611, 4
    %v2613 = vadd.f32 %v2611, %v2612
    %v2614 = vrot.slane %v2613, 2
    %v2615 = vadd.f32 %v2613, %v2614
    %v2616 = vrot.slane %v2615, 1
    %v2617 = vadd.f32 %v2615, %v2616
    %v2618 = vsub.f32 %v2595, %v2617
    %2619 = vst [vmem:[#allocation2] sm:$0xff] %v2459
    %2620 = vst [vmem:[#allocation2 + $0x8] sm:$0xff] %v2460
    %2621 = vst [vmem:[#allocation2 + $0x10] sm:$0xff] %v2461
    %2622 = vst [vmem:[#allocation2 + $0x18] sm:$0xff] %v2462
    %2623 = vst [vmem:[#allocation2 + $0x20] sm:$0xff] %v2463
    %2624 = vst [vmem:[#allocation2 + $0x28] sm:$0xff] %v2464
    %2625 = vst [vmem:[#allocation2 + $0x30] sm:$0xff] %v2465
    %2626 = vst [vmem:[#allocation2 + $0x38] sm:$0xff] %v2466
    %2627 = vst [vmem:[#allocation2 + $0x40] sm:$0xff] %v2467
    %2628 = vst [vmem:[#allocation2 + $0x48] sm:$0xff] %v2468
    %2629 = vst [vmem:[#allocation2 + $0x50] sm:$0xff] %v2469
    %2630 = vst [vmem:[#allocation2 + $0x58] sm:$0xff] %v2470
    %2631 = vst [vmem:[#allocation2 + $0x60] sm:$0xff] %v2471
    %2632 = vst [vmem:[#allocation2 + $0x68] sm:$0xff] %v2472
    %2633 = vst [vmem:[#allocation2 + $0x70] sm:$0xff] %v2473
    %2634 = vst [vmem:[#allocation2 + $0x78] sm:$0xff] %v2474
    %2635 = vst [vmem:[#allocation2 + $0x80] sm:$0xff] %v2475
    %2636 = vst [vmem:[#allocation2 + $0x88] sm:$0xff] %v2476
    %2637 = vst [vmem:[#allocation2 + $0x90] sm:$0xff] %v2477
    %2638 = vst [vmem:[#allocation2 + $0x98] sm:$0xff] %v2478
    %2639 = vst [vmem:[#allocation2 + $0xa0] sm:$0xff] %v2479
    %2640 = vst [vmem:[#allocation2 + $0xa8] sm:$0xff] %v2480
    %2641 = vst [vmem:[#allocation2 + $0xb0] sm:$0xff] %v2481
    %2642 = vst [vmem:[#allocation2 + $0xb8] sm:$0xff] %v2482
    %2643 = vst [vmem:[#allocation2 + $0xc0] sm:$0xff] %v2483
    %2644 = vst [vmem:[#allocation2 + $0xc8] sm:$0xff] %v2484
    %2645 = vst [vmem:[#allocation2 + $0xd0] sm:$0xff] %v2485
    %2646 = vst [vmem:[#allocation2 + $0xd8] sm:$0xff] %v2486
    %2647 = vst [vmem:[#allocation2 + $0xe0] sm:$0xff] %v2487
    %2648 = vst [vmem:[#allocation2 + $0xe8] sm:$0xff] %v2488
    %2649 = vst [vmem:[#allocation2 + $0xf0] sm:$0x3f] %v2489
    %v2650 = vld [vmem:[%s2 + $0x2] sm:$0x1]
    %v2651 = vld [vmem:[%s2 + $0x3] sm:$0x1]
    %v2652 = vmul.f32 %v2607, 0.0040983604
    %v2653 = vmul.f32 %v2618, 0.0040983604
    %v2654 = vmul.f32 %v2652, %v2652
    %v2655 = vsub.f32 %v2653, %v2654
    %v2656 = vmax.f32 %v2655, 0.0
    %v2657 = vadd.f32 %v2656, 1e-05
    %v2658 = vrsqrt.pop %v2657
    %v2659 = vmul.f32 %v2658, %v2657
    %v2660 = vmul.f32 %v2659, %v2658
    %v2661 = vmul.f32 0.5, %v2660
    %v2662 = vsub.f32 1.5, %v2661
    %v2663 = vmul.f32 %v2658, %v2662
    %vm2664 = vweird.f32 %v2657
    %vm2665 = vweird.f32 %v2658
    %vm2666 = vmor %vm2664, %vm2665
    %v2667 = vsel %vm2666, %v2658, %v2663
    %v2668 = vmul.f32 %v2650, %v2667
    %v2669 = vmul.f32 %v2652, %v2668
    %v2670 = vsub.f32 %v2651, %v2669
    %v2671 = vld [vmem:[#allocation2] ss:$4 sm:$0xff]
    %v2672 = vld [vmem:[%s1218] ss:$4 sm:$0xff]
    %v2673 = vld [vmem:[%s1220] ss:$4 sm:$0xff]
    %v2674 = vld [vmem:[%s1222] ss:$4 sm:$0x3f]
    %v2675 = vperm.slane %v2668, 0
    %v2676 = vmul.f32 %v2671, %v2675
    %v2677 = vmul.f32 %v2672, %v2675
    %v2678 = vmul.f32 %v2673, %v2675
    %v2679 = vmul.f32 %v2674, %v2675
    %v2680 = vperm.slane %v2670, 0
    %v2681 = vadd.f32 %v2676, %v2680
    %v2682 = vadd.f32 %v2677, %v2680
    %v2683 = vadd.f32 %v2678, %v2680
    %v2684 = vadd.f32 %v2679, %v2680
    %v2685 = vmax.f32 %v2681, 0.0
    %v2686 = vmax.f32 %v2682, 0.0
    %v2687 = vmax.f32 %v2683, 0.0
    %v2688 = vmax.f32 %v2684, 0.0
    %v2689 = vld [vmem:[%s1298] ss:$4 sm:$0xff]
    %v2690 = vld [vmem:[%s1300] ss:$4 sm:$0xff]
    %v2691 = vld [vmem:[%s1302] ss:$4 sm:$0xff]
    %v2692 = vld [vmem:[%s1304] ss:$4 sm:$0x3f]
    %v2693 = vmul.f32 %v2689, %v2675
    %v2694 = vmul.f32 %v2690, %v2675
    %v2695 = vmul.f32 %v2691, %v2675
    %v2696 = vmul.f32 %v2692, %v2675
    %v2697 = vadd.f32 %v2693, %v2680
    %v2698 = vadd.f32 %v2694, %v2680
    %v2699 = vadd.f32 %v2695, %v2680
    %v2700 = vadd.f32 %v2696, %v2680
    %v2701 = vmax.f32 %v2697, 0.0
    %v2702 = vmax.f32 %v2698, 0.0
    %v2703 = vmax.f32 %v2699, 0.0
    %v2704 = vmax.f32 %v2700, 0.0
    %v2705 = vmax.f32 %v2685, %v2701
    %v2706 = vmax.f32 %v2686, %v2702
    %v2707 = vmax.f32 %v2687, %v2703
    %v2708 = vmax.f32 %v2688, %v2704
    %v2709 = vld [vmem:[%s1394] ss:$4 sm:$0xff]
    %v2710 = vld [vmem:[%s1396] ss:$4 sm:$0xff]
    %v2711 = vld [vmem:[%s1398] ss:$4 sm:$0xff]
    %v2712 = vld [vmem:[%s1400] ss:$4 sm:$0x3f]
    %v2713 = vmul.f32 %v2709, %v2675
    %v2714 = vmul.f32 %v2710, %v2675
    %v2715 = vmul.f32 %v2711, %v2675
    %v2716 = vmul.f32 %v2712, %v2675
    %v2717 = vadd.f32 %v2713, %v2680
    %v2718 = vadd.f32 %v2714, %v2680
    %v2719 = vadd.f32 %v2715, %v2680
    %v2720 = vadd.f32 %v2716, %v2680
    %v2721 = vmax.f32 %v2717, 0.0
    %v2722 = vmax.f32 %v2718, 0.0
    %v2723 = vmax.f32 %v2719, 0.0
    %v2724 = vmax.f32 %v2720, 0.0
    %v2725 = vmax.f32 %v2705, %v2721
    %v2726 = vmax.f32 %v2706, %v2722
    %v2727 = vmax.f32 %v2707, %v2723
    %v2728 = vmax.f32 %v2708, %v2724
    %v2729 = vld [vmem:[%s1490] ss:$4 sm:$0xff]
    %v2730 = vld [vmem:[%s1492] ss:$4 sm:$0xff]
    %v2731 = vld [vmem:[%s1494] ss:$4 sm:$0xff]
    %v2732 = vld [vmem:[%s1496] ss:$4 sm:$0x3f]
    %v2733 = vmul.f32 %v2729, %v2675
    %v2734 = vmul.f32 %v2730, %v2675
    %v2735 = vmul.f32 %v2731, %v2675
    %v2736 = vmul.f32 %v2732, %v2675
    %v2737 = vadd.f32 %v2733, %v2680
    %v2738 = vadd.f32 %v2734, %v2680
    %v2739 = vadd.f32 %v2735, %v2680
    %v2740 = vadd.f32 %v2736, %v2680
    %v2741 = vmax.f32 %v2737, 0.0
    %v2742 = vmax.f32 %v2738, 0.0
    %v2743 = vmax.f32 %v2739, 0.0
    %v2744 = vmax.f32 %v2740, 0.0
    %v2745 = vmax.f32 %v2725, %v2741
    %v2746 = vmax.f32 %v2726, %v2742
    %v2747 = vmax.f32 %v2727, %v2743
    %v2748 = vmax.f32 %v2728, %v2744
    %2749 = vst [vmem:[#allocation3] sm:$0xff] %v2745
    %2750 = vst [vmem:[#allocation3 + $0x8] sm:$0xff] %v2746
    %2751 = vst [vmem:[#allocation3 + $0x10] sm:$0xff] %v2747
    %2752 = vst [vmem:[#allocation3 + $0x18] sm:$0x3f] %v2748
    %s2753 = scalar_lea.vmem [#allocation2], 124
    %v2754 = vld [vmem:[%s2753] ss:$4 sm:$0xff]
    %s2755 = scalar_lea.vmem [#allocation2], 156
    %v2756 = vld [vmem:[%s2755] ss:$4 sm:$0xff]
    %s2757 = scalar_lea.vmem [#allocation2], 188
    %v2758 = vld [vmem:[%s2757] ss:$4 sm:$0xff]
    %s2759 = scalar_lea.vmem [#allocation2], 220
    %v2760 = vld [vmem:[%s2759] ss:$4 sm:$0x3f]
    %v2761 = vmul.f32 %v2754, %v2675
    %v2762 = vmul.f32 %v2756, %v2675
    %v2763 = vmul.f32 %v2758, %v2675
    %v2764 = vmul.f32 %v2760, %v2675
    %v2765 = vadd.f32 %v2761, %v2680
    %v2766 = vadd.f32 %v2762, %v2680
    %v2767 = vadd.f32 %v2763, %v2680
    %v2768 = vadd.f32 %v2764, %v2680
    %v2769 = vmax.f32 %v2765, 0.0
    %v2770 = vmax.f32 %v2766, 0.0
    %v2771 = vmax.f32 %v2767, 0.0
    %v2772 = vmax.f32 %v2768, 0.0
    %s2773 = scalar_lea.vmem [#allocation2], 125
    %v2774 = vld [vmem:[%s2773] ss:$4 sm:$0xff]
    %s2775 = scalar_lea.vmem [#allocation2], 157
    %v2776 = vld [vmem:[%s2775] ss:$4 sm:$0xff]
    %s2777 = scalar_lea.vmem [#allocation2], 189
    %v2778 = vld [vmem:[%s2777] ss:$4 sm:$0xff]
    %s2779 = scalar_lea.vmem [#allocation2], 221
    %v2780 = vld [vmem:[%s2779] ss:$4 sm:$0x3f]
    %v2781 = vmul.f32 %v2774, %v2675
    %v2782 = vmul.f32 %v2776, %v2675
    %v2783 = vmul.f32 %v2778, %v2675
    %v2784 = vmul.f32 %v2780, %v2675
    %v2785 = vadd.f32 %v2781, %v2680
    %v2786 = vadd.f32 %v2782, %v2680
    %v2787 = vadd.f32 %v2783, %v2680
    %v2788 = vadd.f32 %v2784, %v2680
    %v2789 = vmax.f32 %v2785, 0.0
    %v2790 = vmax.f32 %v2786, 0.0
    %v2791 = vmax.f32 %v2787, 0.0
    %v2792 = vmax.f32 %v2788, 0.0
    %v2793 = vmax.f32 %v2769, %v2789
    %v2794 = vmax.f32 %v2770, %v2790
    %v2795 = vmax.f32 %v2771, %v2791
    %v2796 = vmax.f32 %v2772, %v2792
    %s2797 = scalar_lea.vmem [#allocation2], 126
    %v2798 = vld [vmem:[%s2797] ss:$4 sm:$0xff]
    %s2799 = scalar_lea.vmem [#allocation2], 158
    %v2800 = vld [vmem:[%s2799] ss:$4 sm:$0xff]
    %s2801 = scalar_lea.vmem [#allocation2], 190
    %v2802 = vld [vmem:[%s2801] ss:$4 sm:$0xff]
    %s2803 = scalar_lea.vmem [#allocation2], 222
    %v2804 = vld [vmem:[%s2803] ss:$4 sm:$0x3f]
    %v2805 = vmul.f32 %v2798, %v2675
    %v2806 = vmul.f32 %v2800, %v2675
    %v2807 = vmul.f32 %v2802, %v2675
    %v2808 = vmul.f32 %v2804, %v2675
    %v2809 = vadd.f32 %v2805, %v2680
    %v2810 = vadd.f32 %v2806, %v2680
    %v2811 = vadd.f32 %v2807, %v2680
    %v2812 = vadd.f32 %v2808, %v2680
    %v2813 = vmax.f32 %v2809, 0.0
    %v2814 = vmax.f32 %v2810, 0.0
    %v2815 = vmax.f32 %v2811, 0.0
    %v2816 = vmax.f32 %v2812, 0.0
    %v2817 = vmax.f32 %v2793, %v2813
    %v2818 = vmax.f32 %v2794, %v2814
    %v2819 = vmax.f32 %v2795, %v2815
    %v2820 = vmax.f32 %v2796, %v2816
    %s2821 = scalar_lea.vmem [#allocation2], 127
    %v2822 = vld [vmem:[%s2821] ss:$4 sm:$0xff]
    %s2823 = scalar_lea.vmem [#allocation2], 159
    %v2824 = vld [vmem:[%s2823] ss:$4 sm:$0xff]
    %s2825 = scalar_lea.vmem [#allocation2], 191
    %v2826 = vld [vmem:[%s2825] ss:$4 sm:$0xff]
    %s2827 = scalar_lea.vmem [#allocation2], 223
    %v2828 = vld [vmem:[%s2827] ss:$4 sm:$0x3f]
    %v2829 = vmul.f32 %v2822, %v2675
    %v2830 = vmul.f32 %v2824, %v2675
    %v2831 = vmul.f32 %v2826, %v2675
    %v2832 = vmul.f32 %v2828, %v2675
    %v2833 = vadd.f32 %v2829, %v2680
    %v2834 = vadd.f32 %v2830, %v2680
    %v2835 = vadd.f32 %v2831, %v2680
    %v2836 = vadd.f32 %v2832, %v2680
    %v2837 = vmax.f32 %v2833, 0.0
    %v2838 = vmax.f32 %v2834, 0.0
    %v2839 = vmax.f32 %v2835, 0.0
    %v2840 = vmax.f32 %v2836, 0.0
    %v2841 = vmax.f32 %v2817, %v2837
    %v2842 = vmax.f32 %v2818, %v2838
    %v2843 = vmax.f32 %v2819, %v2839
    %v2844 = vmax.f32 %v2820, %v2840
    %2845 = vst [vmem:[#allocation3 + $0x1e] sm:$0xff] %v2841
    %2846 = vst [vmem:[#allocation3 + $0x26] sm:$0xff] %v2842
    %2847 = vst [vmem:[#allocation3 + $0x2e] sm:$0xff] %v2843
    %2848 = vst [vmem:[#allocation3 + $0x36] sm:$0x3f] %v2844
    %v2849 = vld [vmem:[#allocation3] sm:$0xff]
    %v2850 = vld [vmem:[#allocation3 + $0x8] sm:$0xff]
    %v2851 = vld [vmem:[#allocation3 + $0x10] sm:$0xff]
    %v2852 = vld [vmem:[#allocation3 + $0x18] sm:$0xff]
    %v2853 = vld [vmem:[#allocation3 + $0x20] sm:$0xff]
    %v2854 = vld [vmem:[#allocation3 + $0x28] sm:$0xff]
    %v2855 = vld [vmem:[#allocation3 + $0x30] sm:$0xff]
    %v2856 = vld [vmem:[#allocation3 + $0x38] sm:$0x3]
    %s2857 = scalar_lea.vmem %s3, 384
    %v2858 = vld [vmem:[%s2857] sm:$0xff]
    %v2859 = vld [vmem:[%s2857 + $0x8] sm:$0xff]
    %v2860 = vld [vmem:[%s2857 + $0x10] sm:$0xff]
    %v2861 = vld [vmem:[%s2857 + $0x18] sm:$0xff]
    %v2862 = vld [vmem:[%s2857 + $0x20] sm:$0xff]
    %v2863 = vld [vmem:[%s2857 + $0x28] sm:$0xff]
    %v2864 = vld [vmem:[%s2857 + $0x30] sm:$0xff]
    %v2865 = vld [vmem:[%s2857 + $0x38] sm:$0xff]
    %v2866 = vld [vmem:[%s2857 + $0x40] sm:$0xff]
    %v2867 = vld [vmem:[%s2857 + $0x48] sm:$0xff]
    %v2868 = vld [vmem:[%s2857 + $0x50] sm:$0xff]
    %v2869 = vld [vmem:[%s2857 + $0x58] sm:$0xff]
    %v2870 = vld [vmem:[%s2857 + $0x60] sm:$0xff]
    %v2871 = vld [vmem:[%s2857 + $0x68] sm:$0xff]
    %v2872 = vld [vmem:[%s2857 + $0x70] sm:$0xff]
    %v2873 = vld [vmem:[%s2857 + $0x78] sm:$0xff]
    %v2874 = vld [vmem:[#allocation3 + $0x1] sm:$0xff]
    %v2875 = vld [vmem:[#allocation3 + $0x9] sm:$0xff]
    %v2876 = vld [vmem:[#allocation3 + $0x11] sm:$0xff]
    %v2877 = vld [vmem:[#allocation3 + $0x19] sm:$0xff]
    %v2878 = vld [vmem:[#allocation3 + $0x21] sm:$0xff]
    %v2879 = vld [vmem:[#allocation3 + $0x29] sm:$0xff]
    %v2880 = vld [vmem:[#allocation3 + $0x31] sm:$0xff]
    %v2881 = vld [vmem:[#allocation3 + $0x39] sm:$0x3]
    %s2882 = scalar_lea.vmem %s3, 512
    %v2883 = vld [vmem:[%s2882] sm:$0xff]
    %v2884 = vld [vmem:[%s2882 + $0x8] sm:$0xff]
    %v2885 = vld [vmem:[%s2882 + $0x10] sm:$0xff]
    %v2886 = vld [vmem:[%s2882 + $0x18] sm:$0xff]
    %v2887 = vld [vmem:[%s2882 + $0x20] sm:$0xff]
    %v2888 = vld [vmem:[%s2882 + $0x28] sm:$0xff]
    %v2889 = vld [vmem:[%s2882 + $0x30] sm:$0xff]
    %v2890 = vld [vmem:[%s2882 + $0x38] sm:$0xff]
    %v2891 = vld [vmem:[%s2882 + $0x40] sm:$0xff]
    %v2892 = vld [vmem:[%s2882 + $0x48] sm:$0xff]
    %v2893 = vld [vmem:[%s2882 + $0x50] sm:$0xff]
    %v2894 = vld [vmem:[%s2882 + $0x58] sm:$0xff]
    %v2895 = vld [vmem:[%s2882 + $0x60] sm:$0xff]
    %v2896 = vld [vmem:[%s2882 + $0x68] sm:$0xff]
    %v2897 = vld [vmem:[%s2882 + $0x70] sm:$0xff]
    %v2898 = vld [vmem:[%s2882 + $0x78] sm:$0xff]
    %2899 = vmatpush.msra.mxu0 %v2898
    %2900 = vmatpush.msra.mxu0 %v2897
    %2901 = vmatpush.msra.mxu0 %v2896
    %2902 = vmatpush.msra.mxu0 %v2895
    %2903 = vmatpush.msra.mxu0 %v2894
    %2904 = vmatpush.msra.mxu0 %v2893
    %2905 = vmatpush.msra.mxu0 %v2892
    %2906 = vmatpush.msra.mxu0 %v2891
    %2907 = vmatpush.msra.mxu0 %v2890
    %2908 = vmatpush.msra.mxu0 %v2889
    %2909 = vmatpush.msra.mxu0 %v2888
    %2910 = vmatpush.msra.mxu0 %v2887
    %2911 = vmatpush.msra.mxu0 %v2886
    %2912 = vmatpush.msra.mxu0 %v2885
    %2913 = vmatpush.msra.mxu0 %v2884
    %2914 = vmatpush.msra.mxu0 %v2883
    %2915 = vmatmul.f32.gmra.mxu0 %v2874
    %v2916 = vpop.f32.mrf.mxu0
    %v2917 = vadd.f32 0.0, %v2916
    %2918 = vmatmul.f32.gmra.mxu0 %v2875
    %v2919 = vpop.f32.mrf.mxu0
    %v2920 = vadd.f32 0.0, %v2919
    %2921 = vmatmul.f32.gmra.mxu0 %v2876
    %v2922 = vpop.f32.mrf.mxu0
    %v2923 = vadd.f32 0.0, %v2922
    %2924 = vmatmul.f32.gmra.mxu0 %v2877
    %v2925 = vpop.f32.mrf.mxu0
    %v2926 = vadd.f32 0.0, %v2925
    %2927 = vmatmul.f32.gmra.mxu0 %v2878
    %v2928 = vpop.f32.mrf.mxu0
    %v2929 = vadd.f32 0.0, %v2928
    %2930 = vmatmul.f32.gmra.mxu0 %v2879
    %v2931 = vpop.f32.mrf.mxu0
    %v2932 = vadd.f32 0.0, %v2931
    %2933 = vmatmul.f32.gmra.mxu0 %v2880
    %v2934 = vpop.f32.mrf.mxu0
    %v2935 = vadd.f32 0.0, %v2934
    %2936 = vmatmul.f32.gmra.mxu0 %v2881
    %v2937 = vpop.f32.mrf.mxu0
    %v2938 = vadd.f32 0.0, %v2937
    %2939 = vdwg.mxu0
    %2940 = vmatpush.msra.mxu0 %v2873
    %2941 = vmatpush.msra.mxu0 %v2872
    %2942 = vmatpush.msra.mxu0 %v2871
    %2943 = vmatpush.msra.mxu0 %v2870
    %2944 = vmatpush.msra.mxu0 %v2869
    %2945 = vmatpush.msra.mxu0 %v2868
    %2946 = vmatpush.msra.mxu0 %v2867
    %2947 = vmatpush.msra.mxu0 %v2866
    %2948 = vmatpush.msra.mxu0 %v2865
    %2949 = vmatpush.msra.mxu0 %v2864
    %2950 = vmatpush.msra.mxu0 %v2863
    %2951 = vmatpush.msra.mxu0 %v2862
    %2952 = vmatpush.msra.mxu0 %v2861
    %2953 = vmatpush.msra.mxu0 %v2860
    %2954 = vmatpush.msra.mxu0 %v2859
    %2955 = vmatpush.msra.mxu0 %v2858
    %2956 = vmatmul.f32.gmra.mxu0 %v2849
    %v2957 = vpop.f32.mrf.mxu0
    %v2958 = vadd.f32 %v2917, %v2957
    %2959 = vmatmul.f32.gmra.mxu0 %v2850
    %v2960 = vpop.f32.mrf.mxu0
    %v2961 = vadd.f32 %v2920, %v2960
    %2962 = vmatmul.f32.gmra.mxu0 %v2851
    %v2963 = vpop.f32.mrf.mxu0
    %v2964 = vadd.f32 %v2923, %v2963
    %2965 = vmatmul.f32.gmra.mxu0 %v2852
    %v2966 = vpop.f32.mrf.mxu0
    %v2967 = vadd.f32 %v2926, %v2966
    %2968 = vmatmul.f32.gmra.mxu0 %v2853
    %v2969 = vpop.f32.mrf.mxu0
    %v2970 = vadd.f32 %v2929, %v2969
    %2971 = vmatmul.f32.gmra.mxu0 %v2854
    %v2972 = vpop.f32.mrf.mxu0
    %v2973 = vadd.f32 %v2932, %v2972
    %2974 = vmatmul.f32.gmra.mxu0 %v2855
    %v2975 = vpop.f32.mrf.mxu0
    %v2976 = vadd.f32 %v2935, %v2975
    %2977 = vmatmul.f32.gmra.mxu0 %v2856
    %v2978 = vpop.f32.mrf.mxu0
    %v2979 = vadd.f32 %v2938, %v2978
    %2980 = vdwg.mxu0
    %v2981 = vld [vmem:[#allocation3 + $0x2] sm:$0xff]
    %v2982 = vld [vmem:[#allocation3 + $0xa] sm:$0xff]
    %v2983 = vld [vmem:[#allocation3 + $0x12] sm:$0xff]
    %v2984 = vld [vmem:[#allocation3 + $0x1a] sm:$0xff]
    %v2985 = vld [vmem:[#allocation3 + $0x22] sm:$0xff]
    %v2986 = vld [vmem:[#allocation3 + $0x2a] sm:$0xff]
    %v2987 = vld [vmem:[#allocation3 + $0x32] sm:$0xff]
    %v2988 = vld [vmem:[#allocation3 + $0x3a] sm:$0x3]
    %s2989 = scalar_lea.vmem %s3, 640
    %v2990 = vld [vmem:[%s2989] sm:$0xff]
    %v2991 = vld [vmem:[%s2989 + $0x8] sm:$0xff]
    %v2992 = vld [vmem:[%s2989 + $0x10] sm:$0xff]
    %v2993 = vld [vmem:[%s2989 + $0x18] sm:$0xff]
    %v2994 = vld [vmem:[%s2989 + $0x20] sm:$0xff]
    %v2995 = vld [vmem:[%s2989 + $0x28] sm:$0xff]
    %v2996 = vld [vmem:[%s2989 + $0x30] sm:$0xff]
    %v2997 = vld [vmem:[%s2989 + $0x38] sm:$0xff]
    %v2998 = vld [vmem:[%s2989 + $0x40] sm:$0xff]
    %v2999 = vld [vmem:[%s2989 + $0x48] sm:$0xff]
    %v3000 = vld [vmem:[%s2989 + $0x50] sm:$0xff]
    %v3001 = vld [vmem:[%s2989 + $0x58] sm:$0xff]
    %v3002 = vld [vmem:[%s2989 + $0x60] sm:$0xff]
    %v3003 = vld [vmem:[%s2989 + $0x68] sm:$0xff]
    %v3004 = vld [vmem:[%s2989 + $0x70] sm:$0xff]
    %v3005 = vld [vmem:[%s2989 + $0x78] sm:$0xff]
    %3006 = vmatpush.msra.mxu0 %v3005
    %3007 = vmatpush.msra.mxu0 %v3004
    %3008 = vmatpush.msra.mxu0 %v3003
    %3009 = vmatpush.msra.mxu0 %v3002
    %3010 = vmatpush.msra.mxu0 %v3001
    %3011 = vmatpush.msra.mxu0 %v3000
    %3012 = vmatpush.msra.mxu0 %v2999
    %3013 = vmatpush.msra.mxu0 %v2998
    %3014 = vmatpush.msra.mxu0 %v2997
    %3015 = vmatpush.msra.mxu0 %v2996
    %3016 = vmatpush.msra.mxu0 %v2995
    %3017 = vmatpush.msra.mxu0 %v2994
    %3018 = vmatpush.msra.mxu0 %v2993
    %3019 = vmatpush.msra.mxu0 %v2992
    %3020 = vmatpush.msra.mxu0 %v2991
    %3021 = vmatpush.msra.mxu0 %v2990
    %3022 = vmatmul.f32.gmra.mxu0 %v2981
    %v3023 = vpop.f32.mrf.mxu0
    %v3024 = vadd.f32 0.0, %v3023
    %3025 = vmatmul.f32.gmra.mxu0 %v2982
    %v3026 = vpop.f32.mrf.mxu0
    %v3027 = vadd.f32 0.0, %v3026
    %3028 = vmatmul.f32.gmra.mxu0 %v2983
    %v3029 = vpop.f32.mrf.mxu0
    %v3030 = vadd.f32 0.0, %v3029
    %3031 = vmatmul.f32.gmra.mxu0 %v2984
    %v3032 = vpop.f32.mrf.mxu0
    %v3033 = vadd.f32 0.0, %v3032
    %3034 = vmatmul.f32.gmra.mxu0 %v2985
    %v3035 = vpop.f32.mrf.mxu0
    %v3036 = vadd.f32 0.0, %v3035
    %3037 = vmatmul.f32.gmra.mxu0 %v2986
    %v3038 = vpop.f32.mrf.mxu0
    %v3039 = vadd.f32 0.0, %v3038
    %3040 = vmatmul.f32.gmra.mxu0 %v2987
    %v3041 = vpop.f32.mrf.mxu0
    %v3042 = vadd.f32 0.0, %v3041
    %3043 = vmatmul.f32.gmra.mxu0 %v2988
    %v3044 = vpop.f32.mrf.mxu0
    %v3045 = vadd.f32 0.0, %v3044
    %3046 = vdwg.mxu0
    %v3047 = vadd.f32 %v2958, %v3024
    %v3048 = vadd.f32 %v2961, %v3027
    %v3049 = vadd.f32 %v2964, %v3030
    %v3050 = vadd.f32 %v2967, %v3033
    %v3051 = vadd.f32 %v2970, %v3036
    %v3052 = vadd.f32 %v2973, %v3039
    %v3053 = vadd.f32 %v2976, %v3042
    %v3054 = vadd.f32 %v2979, %v3045
    %v3055 = vadd.f32 %v3047, %v3048
    %v3056 = vadd.f32 %v3055, %v3049
    %v3057 = vadd.f32 %v3056, %v3050
    %v3058 = vadd.f32 %v3057, %v3051
    %v3059 = vadd.f32 %v3058, %v3052
    %v3060 = vadd.f32 %v3059, %v3053
    %v3061 = vsel %vm2599, %v3054, 0.0
    %v3062 = vadd.f32 %v3060, %v3061
    %v3063 = vrot.slane %v3062, 4
    %v3064 = vadd.f32 %v3062, %v3063
    %v3065 = vrot.slane %v3064, 2
    %v3066 = vadd.f32 %v3064, %v3065
    %v3067 = vrot.slane %v3066, 1
    %v3068 = vadd.f32 %v3066, %v3067
    %v3069 = vmul.f32 %v3047, %v3047
    %v3070 = vmul.f32 %v3048, %v3048
    %v3071 = vmul.f32 %v3049, %v3049
    %v3072 = vmul.f32 %v3050, %v3050
    %v3073 = vmul.f32 %v3051, %v3051
    %v3074 = vmul.f32 %v3052, %v3052
    %v3075 = vmul.f32 %v3053, %v3053
    %v3076 = vmul.f32 %v3054, %v3054
    %v3077 = vadd.f32 %v3069, %v3070
    %v3078 = vadd.f32 %v3077, %v3071
    %v3079 = vadd.f32 %v3078, %v3072
    %v3080 = vadd.f32 %v3079, %v3073
    %v3081 = vadd.f32 %v3080, %v3074
    %v3082 = vadd.f32 %v3081, %v3075
    %v3083 = vsel %vm2599, %v3076, 0.0
    %v3084 = vadd.f32 %v3082, %v3083
    %v3085 = vrot.slane %v3084, 4
    %v3086 = vadd.f32 %v3084, %v3085
    %v3087 = vrot.slane %v3086, 2
    %v3088 = vadd.f32 %v3086, %v3087
    %v3089 = vrot.slane %v3088, 1
    %v3090 = vadd.f32 %v3088, %v3089
    %v3092 = vrot.slane %v3050, 4
    %v3094 = vsel %vm2599, %v3092, 0.0
    %v3095 = vrot.slane %v3094, 4
    %v3096 = vadd.f32 %v3094, %v3095
    %v3097 = vrot.slane %v3096, 2
    %v3098 = vadd.f32 %v3096, %v3097
    %v3099 = vrot.slane %v3098, 1
    %v3100 = vadd.f32 %v3098, %v3099
    %v3101 = vsub.f32 %v3068, %v3100
    %v3103 = vrot.slane %v3072, 4
    %v3105 = vsel %vm2599, %v3103, 0.0
    %v3106 = vrot.slane %v3105, 4
    %v3107 = vadd.f32 %v3105, %v3106
    %v3108 = vrot.slane %v3107, 2
    %v3109 = vadd.f32 %v3107, %v3108
    %v3110 = vrot.slane %v3109, 1
    %v3111 = vadd.f32 %v3109, %v3110
    %v3112 = vsub.f32 %v3090, %v3111
    %3113 = vst [vmem:[#allocation2] sm:$0xff] %v3047
    %3114 = vst [vmem:[#allocation2 + $0x8] sm:$0xff] %v3048
    %3115 = vst [vmem:[#allocation2 + $0x10] sm:$0xff] %v3049
    %3116 = vst [vmem:[#allocation2 + $0x18] sm:$0xff] %v3050
    %3117 = vst [vmem:[#allocation2 + $0x20] sm:$0xff] %v3051
    %3118 = vst [vmem:[#allocation2 + $0x28] sm:$0xff] %v3052
    %3119 = vst [vmem:[#allocation2 + $0x30] sm:$0xff] %v3053
    %3120 = vst [vmem:[#allocation2 + $0x38] sm:$0x3] %v3054
    %v3121 = vld [vmem:[%s2 + $0x4] sm:$0x1]
    %v3122 = vld [vmem:[%s2 + $0x5] sm:$0x1]
    %v3123 = vmul.f32 %v3101, 0.017857144
    %v3124 = vmul.f32 %v3112, 0.017857144
    %v3125 = vmul.f32 %v3123, %v3123
    %v3126 = vsub.f32 %v3124, %v3125
    %v3127 = vmax.f32 %v3126, 0.0
    %v3128 = vadd.f32 %v3127, 1e-05
    %v3129 = vrsqrt.pop %v3128
    %v3130 = vmul.f32 %v3129, %v3128
    %v3131 = vmul.f32 %v3130, %v3129
    %v3132 = vmul.f32 0.5, %v3131
    %v3133 = vsub.f32 1.5, %v3132
    %v3134 = vmul.f32 %v3129, %v3133
    %vm3135 = vweird.f32 %v3128
    %vm3136 = vweird.f32 %v3129
    %vm3137 = vmor %vm3135, %vm3136
    %v3138 = vsel %vm3137, %v3129, %v3134
    %v3139 = vmul.f32 %v3121, %v3138
    %v3140 = vmul.f32 %v3123, %v3139
    %v3141 = vsub.f32 %v3122, %v3140
    %v3142 = vld [vmem:[#allocation2] ss:$4 sm:$0x7f]
    %v3143 = vperm.slane %v3139, 0
    %v3144 = vmul.f32 %v3142, %v3143
    %v3145 = vperm.slane %v3141, 0
    %v3146 = vadd.f32 %v3144, %v3145
    %v3147 = vmax.f32 %v3146, 0.0
    %v3148 = vld [vmem:[%s1298] ss:$4 sm:$0x7f]
    %v3149 = vmul.f32 %v3148, %v3143
    %v3150 = vadd.f32 %v3149, %v3145
    %v3151 = vmax.f32 %v3150, 0.0
    %v3152 = vmax.f32 %v3147, %v3151
    %v3153 = vld [vmem:[%s1394] ss:$4 sm:$0x7f]
    %v3154 = vmul.f32 %v3153, %v3143
    %v3155 = vadd.f32 %v3154, %v3145
    %v3156 = vmax.f32 %v3155, 0.0
    %v3157 = vmax.f32 %v3152, %v3156
    %v3158 = vld [vmem:[%s1490] ss:$4 sm:$0x7f]
    %v3159 = vmul.f32 %v3158, %v3143
    %v3160 = vadd.f32 %v3159, %v3145
    %v3161 = vmax.f32 %v3160, 0.0
    %v3162 = vmax.f32 %v3157, %v3161
    %3163 = vst [vmem:[#allocation3] sm:$0x7f] %v3162
    %s3164 = scalar_lea.vmem [#allocation2], 30
    %v3165 = vld [vmem:[%s3164] ss:$4 sm:$0x7f]
    %v3166 = vmul.f32 %v3165, %v3143
    %v3167 = vadd.f32 %v3166, %v3145
    %v3168 = vmax.f32 %v3167, 0.0
    %s3169 = scalar_lea.vmem [#allocation2], 31
    %v3170 = vld [vmem:[%s3169] ss:$4 sm:$0x7f]
    %v3171 = vmul.f32 %v3170, %v3143
    %v3172 = vadd.f32 %v3171, %v3145
    %v3173 = vmax.f32 %v3172, 0.0
    %v3174 = vmax.f32 %v3168, %v3173
    %v3175 = vld [vmem:[%s1218] ss:$4 sm:$0x7f]
    %v3176 = vmul.f32 %v3175, %v3143
    %v3177 = vadd.f32 %v3176, %v3145
    %v3178 = vmax.f32 %v3177, 0.0
    %v3179 = vmax.f32 %v3174, %v3178
    %v3180 = vld [vmem:[%s1300] ss:$4 sm:$0x7f]
    %v3181 = vmul.f32 %v3180, %v3143
    %v3182 = vadd.f32 %v3181, %v3145
    %v3183 = vmax.f32 %v3182, 0.0
    %v3184 = vmax.f32 %v3179, %v3183
    %3185 = vst [vmem:[#allocation3 + $0x7] sm:$0x7f] %v3184
    %v3186 = vld [vmem:[#allocation3] sm:$0xff]
    %v3187 = vld [vmem:[#allocation3 + $0x8] sm:$0xf]
    %s3188 = scalar_lea.vmem %s3, 768
    %v3189 = vld [vmem:[%s3188] sm:$0xff]
    %v3190 = vld [vmem:[%s3188 + $0x8] sm:$0xff]
    %v3191 = vld [vmem:[%s3188 + $0x10] sm:$0xff]
    %v3192 = vld [vmem:[%s3188 + $0x18] sm:$0xff]
    %v3193 = vld [vmem:[%s3188 + $0x20] sm:$0xff]
    %v3194 = vld [vmem:[%s3188 + $0x28] sm:$0xff]
    %v3195 = vld [vmem:[%s3188 + $0x30] sm:$0xff]
    %v3196 = vld [vmem:[%s3188 + $0x38] sm:$0xff]
    %v3197 = vld [vmem:[%s3188 + $0x40] sm:$0xff]
    %v3198 = vld [vmem:[%s3188 + $0x48] sm:$0xff]
    %v3199 = vld [vmem:[%s3188 + $0x50] sm:$0xff]
    %v3200 = vld [vmem:[%s3188 + $0x58] sm:$0xff]
    %v3201 = vld [vmem:[%s3188 + $0x60] sm:$0xff]
    %v3202 = vld [vmem:[%s3188 + $0x68] sm:$0xff]
    %v3203 = vld [vmem:[%s3188 + $0x70] sm:$0xff]
    %v3204 = vld [vmem:[%s3188 + $0x78] sm:$0xff]
    %v3205 = vld [vmem:[#allocation3 + $0x1] sm:$0xff]
    %v3206 = vld [vmem:[#allocation3 + $0x9] sm:$0xf]
    %s3207 = scalar_lea.vmem %s3, 896
    %v3208 = vld [vmem:[%s3207] sm:$0xff]
    %v3209 = vld [vmem:[%s3207 + $0x8] sm:$0xff]
    %v3210 = vld [vmem:[%s3207 + $0x10] sm:$0xff]
    %v3211 = vld [vmem:[%s3207 + $0x18] sm:$0xff]
    %v3212 = vld [vmem:[%s3207 + $0x20] sm:$0xff]
    %v3213 = vld [vmem:[%s3207 + $0x28] sm:$0xff]
    %v3214 = vld [vmem:[%s3207 + $0x30] sm:$0xff]
    %v3215 = vld [vmem:[%s3207 + $0x38] sm:$0xff]
    %v3216 = vld [vmem:[%s3207 + $0x40] sm:$0xff]
    %v3217 = vld [vmem:[%s3207 + $0x48] sm:$0xff]
    %v3218 = vld [vmem:[%s3207 + $0x50] sm:$0xff]
    %v3219 = vld [vmem:[%s3207 + $0x58] sm:$0xff]
    %v3220 = vld [vmem:[%s3207 + $0x60] sm:$0xff]
    %v3221 = vld [vmem:[%s3207 + $0x68] sm:$0xff]
    %v3222 = vld [vmem:[%s3207 + $0x70] sm:$0xff]
    %v3223 = vld [vmem:[%s3207 + $0x78] sm:$0xff]
    %3224 = vmatpush.msra.mxu0 %v3223
    %3225 = vmatpush.msra.mxu0 %v3222
    %3226 = vmatpush.msra.mxu0 %v3221
    %3227 = vmatpush.msra.mxu0 %v3220
    %3228 = vmatpush.msra.mxu0 %v3219
    %3229 = vmatpush.msra.mxu0 %v3218
    %3230 = vmatpush.msra.mxu0 %v3217
    %3231 = vmatpush.msra.mxu0 %v3216
    %3232 = vmatpush.msra.mxu0 %v3215
    %3233 = vmatpush.msra.mxu0 %v3214
    %3234 = vmatpush.msra.mxu0 %v3213
    %3235 = vmatpush.msra.mxu0 %v3212
    %3236 = vmatpush.msra.mxu0 %v3211
    %3237 = vmatpush.msra.mxu0 %v3210
    %3238 = vmatpush.msra.mxu0 %v3209
    %3239 = vmatpush.msra.mxu0 %v3208
    %3240 = vmatmul.f32.gmra.mxu0 %v3205
    %v3241 = vpop.f32.mrf.mxu0
    %v3242 = vadd.f32 0.0, %v3241
    %3243 = vmatmul.f32.gmra.mxu0 %v3206
    %v3244 = vpop.f32.mrf.mxu0
    %v3245 = vadd.f32 0.0, %v3244
    %3246 = vdwg.mxu0
    %3247 = vmatpush.msra.mxu0 %v3204
    %3248 = vmatpush.msra.mxu0 %v3203
    %3249 = vmatpush.msra.mxu0 %v3202
    %3250 = vmatpush.msra.mxu0 %v3201
    %3251 = vmatpush.msra.mxu0 %v3200
    %3252 = vmatpush.msra.mxu0 %v3199
    %3253 = vmatpush.msra.mxu0 %v3198
    %3254 = vmatpush.msra.mxu0 %v3197
    %3255 = vmatpush.msra.mxu0 %v3196
    %3256 = vmatpush.msra.mxu0 %v3195
    %3257 = vmatpush.msra.mxu0 %v3194
    %3258 = vmatpush.msra.mxu0 %v3193
    %3259 = vmatpush.msra.mxu0 %v3192
    %3260 = vmatpush.msra.mxu0 %v3191
    %3261 = vmatpush.msra.mxu0 %v3190
    %3262 = vmatpush.msra.mxu0 %v3189
    %3263 = vmatmul.f32.gmra.mxu0 %v3186
    %v3264 = vpop.f32.mrf.mxu0
    %v3265 = vadd.f32 %v3242, %v3264
    %3266 = vmatmul.f32.gmra.mxu0 %v3187
    %v3267 = vpop.f32.mrf.mxu0
    %v3268 = vadd.f32 %v3245, %v3267
    %3269 = vdwg.mxu0
    %v3270 = vld [vmem:[#allocation3 + $0x2] sm:$0xff]
    %v3271 = vld [vmem:[#allocation3 + $0xa] sm:$0xf]
    %s3272 = scalar_lea.vmem %s3, 1024
    %v3273 = vld [vmem:[%s3272] sm:$0xff]
    %v3274 = vld [vmem:[%s3272 + $0x8] sm:$0xff]
    %v3275 = vld [vmem:[%s3272 + $0x10] sm:$0xff]
    %v3276 = vld [vmem:[%s3272 + $0x18] sm:$0xff]
    %v3277 = vld [vmem:[%s3272 + $0x20] sm:$0xff]
    %v3278 = vld [vmem:[%s3272 + $0x28] sm:$0xff]
    %v3279 = vld [vmem:[%s3272 + $0x30] sm:$0xff]
    %v3280 = vld [vmem:[%s3272 + $0x38] sm:$0xff]
    %v3281 = vld [vmem:[%s3272 + $0x40] sm:$0xff]
    %v3282 = vld [vmem:[%s3272 + $0x48] sm:$0xff]
    %v3283 = vld [vmem:[%s3272 + $0x50] sm:$0xff]
    %v3284 = vld [vmem:[%s3272 + $0x58] sm:$0xff]
    %v3285 = vld [vmem:[%s3272 + $0x60] sm:$0xff]
    %v3286 = vld [vmem:[%s3272 + $0x68] sm:$0xff]
    %v3287 = vld [vmem:[%s3272 + $0x70] sm:$0xff]
    %v3288 = vld [vmem:[%s3272 + $0x78] sm:$0xff]
    %3289 = vmatpush.msra.mxu0 %v3288
    %3290 = vmatpush.msra.mxu0 %v3287
    %3291 = vmatpush.msra.mxu0 %v3286
    %3292 = vmatpush.msra.mxu0 %v3285
    %3293 = vmatpush.msra.mxu0 %v3284
    %3294 = vmatpush.msra.mxu0 %v3283
    %3295 = vmatpush.msra.mxu0 %v3282
    %3296 = vmatpush.msra.mxu0 %v3281
    %3297 = vmatpush.msra.mxu0 %v3280
    %3298 = vmatpush.msra.mxu0 %v3279
    %3299 = vmatpush.msra.mxu0 %v3278
    %3300 = vmatpush.msra.mxu0 %v3277
    %3301 = vmatpush.msra.mxu0 %v3276
    %3302 = vmatpush.msra.mxu0 %v3275
    %3303 = vmatpush.msra.mxu0 %v3274
    %3304 = vmatpush.msra.mxu0 %v3273
    %3305 = vmatmul.f32.gmra.mxu0 %v3270
    %v3306 = vpop.f32.mrf.mxu0
    %v3307 = vadd.f32 0.0, %v3306
    %3308 = vmatmul.f32.gmra.mxu0 %v3271
    %v3309 = vpop.f32.mrf.mxu0
    %v3310 = vadd.f32 0.0, %v3309
    %3311 = vdwg.mxu0
    %v3312 = vadd.f32 %v3265, %v3307
    %v3313 = vadd.f32 %v3268, %v3310
    %vm3314 = vcmask 1043456
    %v3315 = vsel %vm3314, %v3313, 0.0
    %v3316 = vadd.f32 %v3312, %v3315
    %v3317 = vrot.slane %v3316, 4
    %v3318 = vadd.f32 %v3316, %v3317
    %v3319 = vrot.slane %v3318, 2
    %v3320 = vadd.f32 %v3318, %v3319
    %v3321 = vrot.slane %v3320, 1
    %v3322 = vadd.f32 %v3320, %v3321
    %v3323 = vmul.f32 %v3312, %v3312
    %v3324 = vmul.f32 %v3313, %v3313
    %v3325 = vsel %vm3314, %v3324, 0.0
    %v3326 = vadd.f32 %v3323, %v3325
    %v3327 = vrot.slane %v3326, 4
    %v3328 = vadd.f32 %v3326, %v3327
    %v3329 = vrot.slane %v3328, 2
    %v3330 = vadd.f32 %v3328, %v3329
    %v3331 = vrot.slane %v3330, 1
    %v3332 = vadd.f32 %v3330, %v3331
    %v3334 = vrot.slane %v3312, 5
    %v3336 = vsel %vm2599, %v3334, 0.0
    %v3337 = vrot.slane %v3336, 4
    %v3338 = vadd.f32 %v3336, %v3337
    %v3339 = vrot.slane %v3338, 2
    %v3340 = vadd.f32 %v3338, %v3339
    %v3341 = vrot.slane %v3340, 1
    %v3342 = vadd.f32 %v3340, %v3341
    %v3343 = vsub.f32 %v3322, %v3342
    %v3345 = vrot.slane %v3323, 5
    %v3347 = vsel %vm2599, %v3345, 0.0
    %v3348 = vrot.slane %v3347, 4
    %v3349 = vadd.f32 %v3347, %v3348
    %v3350 = vrot.slane %v3349, 2
    %v3351 = vadd.f32 %v3349, %v3350
    %v3352 = vrot.slane %v3351, 1
    %v3353 = vadd.f32 %v3351, %v3352
    %v3354 = vsub.f32 %v3332, %v3353
    %3355 = vst [vmem:[#allocation2] sm:$0xff] %v3312
    %3356 = vst [vmem:[#allocation2 + $0x8] sm:$0xf] %v3313
    %v3357 = vld [vmem:[%s2 + $0x6] sm:$0x1]
    %v3358 = vld [vmem:[%s2 + $0x7] sm:$0x1]
    %v3359 = vmul.f32 %v3343, 0.1
    %v3360 = vmul.f32 %v3354, 0.1
    %v3361 = vmul.f32 %v3359, %v3359
    %v3362 = vsub.f32 %v3360, %v3361
    %v3363 = vmax.f32 %v3362, 0.0
    %v3364 = vadd.f32 %v3363, 1e-05
    %v3365 = vrsqrt.pop %v3364
    %v3366 = vmul.f32 %v3365, %v3364
    %v3367 = vmul.f32 %v3366, %v3365
    %v3368 = vmul.f32 0.5, %v3367
    %v3369 = vsub.f32 1.5, %v3368
    %v3370 = vmul.f32 %v3365, %v3369
    %vm3371 = vweird.f32 %v3364
    %vm3372 = vweird.f32 %v3365
    %vm3373 = vmor %vm3371, %vm3372
    %v3374 = vsel %vm3373, %v3365, %v3370
    %v3375 = vmul.f32 %v3357, %v3374
    %v3376 = vmul.f32 %v3359, %v3375
    %v3377 = vsub.f32 %v3358, %v3376
    %v3378 = vld [vmem:[#allocation2] ss:$4 sm:$0x1]
    %v3379 = vmul.f32 %v3378, %v3375
    %v3380 = vadd.f32 %v3379, %v3377
    %v3381 = vmax.f32 %v3380, 0.0
    %v3382 = vld [vmem:[%s1298] ss:$4 sm:$0x1]
    %v3383 = vmul.f32 %v3382, %v3375
    %v3384 = vadd.f32 %v3383, %v3377
    %v3385 = vmax.f32 %v3384, 0.0
    %v3386 = vmax.f32 %v3381, %v3385
    %v3387 = vld [vmem:[%s1394] ss:$4 sm:$0x1]
    %v3388 = vmul.f32 %v3387, %v3375
    %v3389 = vadd.f32 %v3388, %v3377
    %v3390 = vmax.f32 %v3389, 0.0
    %v3391 = vmax.f32 %v3386, %v3390
    %v3392 = vld [vmem:[%s1490] ss:$4 sm:$0x1]
    %v3393 = vmul.f32 %v3392, %v3375
    %v3394 = vadd.f32 %v3393, %v3377
    %v3395 = vmax.f32 %v3394, 0.0
    %v3396 = vmax.f32 %v3391, %v3395
    %3397 = vst [vmem:[#allocation3] sm:$0x1] %v3396
    %s3398 = scalar_lea.vmem [#allocation2], 7
    %v3399 = vld [vmem:[%s3398] ss:$4 sm:$0x1]
    %v3400 = vmul.f32 %v3399, %v3375
    %v3401 = vadd.f32 %v3400, %v3377
    %v3402 = vmax.f32 %v3401, 0.0
    %s3403 = scalar_lea.vmem [#allocation2], 8
    %v3404 = vld [vmem:[%s3403] ss:$4 sm:$0x1]
    %v3405 = vmul.f32 %v3404, %v3375
    %v3406 = vadd.f32 %v3405, %v3377
    %v3407 = vmax.f32 %v3406, 0.0
    %v3408 = vmax.f32 %v3402, %v3407
    %s3409 = scalar_lea.vmem [#allocation2], 9
    %v3410 = vld [vmem:[%s3409] ss:$4 sm:$0x1]
    %v3411 = vmul.f32 %v3410, %v3375
    %v3412 = vadd.f32 %v3411, %v3377
    %v3413 = vmax.f32 %v3412, 0.0
    %v3414 = vmax.f32 %v3408, %v3413
    %s3415 = scalar_lea.vmem [#allocation2], 10
    %v3416 = vld [vmem:[%s3415] ss:$4 sm:$0x1]
    %v3417 = vmul.f32 %v3416, %v3375
    %v3418 = vadd.f32 %v3417, %v3377
    %v3419 = vmax.f32 %v3418, 0.0
    %v3420 = vmax.f32 %v3414, %v3419
    %3421 = vst [vmem:[#allocation3 + $0x1] sm:$0x1] %v3420
    %v3422 = vld [vmem:[#allocation3] sm:$0x1]
    %v3423 = vadd.f32 %v3422, 0.0
    %v3424 = vld [vmem:[#allocation3 + $0x1] sm:$0x1]
    %v3425 = vadd.f32 %v3424, 0.0
    %v3427 = vrot.slane %v3425, 7
    %vm3429 = vcmask 1040384
    %v3430 = vsel %vm3429, %v3423, %v3427
    %v3431 = vld [vmem:[%s4] sm:$0xff]
    %v3432 = vld [vmem:[%s4 + $0x8] sm:$0xff]
    %v3433 = vld [vmem:[%s4 + $0x10] sm:$0xff]
    %v3434 = vld [vmem:[%s4 + $0x18] sm:$0xff]
    %v3435 = vld [vmem:[%s4 + $0x20] sm:$0xff]
    %v3436 = vld [vmem:[%s4 + $0x28] sm:$0xff]
    %v3437 = vld [vmem:[%s4 + $0x30] sm:$0xff]
    %v3438 = vld [vmem:[%s4 + $0x38] sm:$0xff]
    %v3439 = vld [vmem:[%s4 + $0x40] sm:$0xff]
    %v3440 = vld [vmem:[%s4 + $0x48] sm:$0xff]
    %v3441 = vld [vmem:[%s4 + $0x50] sm:$0xff]
    %v3442 = vld [vmem:[%s4 + $0x58] sm:$0xff]
    %v3443 = vld [vmem:[%s4 + $0x60] sm:$0xff]
    %v3444 = vld [vmem:[%s4 + $0x68] sm:$0xff]
    %v3445 = vld [vmem:[%s4 + $0x70] sm:$0xff]
    %v3446 = vld [vmem:[%s4 + $0x78] sm:$0xff]
    %v3447 = vld [vmem:[%s5] sm:$0x1]
    %v3449 = vperm.slane %v3447, 0
    %3451 = vmatpush.msra.mxu0 %v3446
    %3452 = vmatpush.msra.mxu0 %v3445
    %3453 = vmatpush.msra.mxu0 %v3444
    %3454 = vmatpush.msra.mxu0 %v3443
    %3455 = vmatpush.msra.mxu0 %v3442
    %3456 = vmatpush.msra.mxu0 %v3441
    %3457 = vmatpush.msra.mxu0 %v3440
    %3458 = vmatpush.msra.mxu0 %v3439
    %3459 = vmatpush.msra.mxu0 %v3438
    %3460 = vmatpush.msra.mxu0 %v3437
    %3461 = vmatpush.msra.mxu0 %v3436
    %3462 = vmatpush.msra.mxu0 %v3435
    %3463 = vmatpush.msra.mxu0 %v3434
    %3464 = vmatpush.msra.mxu0 %v3433
    %3465 = vmatpush.msra.mxu0 %v3432
    %3466 = vmatpush.msra.mxu0 %v3431
    %3467 = vmatmul.f32.gmra.mxu0 %v3430
    %v3468 = vpop.f32.mrf.mxu0
    %v3469 = vadd.f32 %v3449, %v3468
    %3470 = vdwg.mxu0
    %vm3471 = vcmask 279552
    %3472 = vst.msk [vmem:[#allocation4] sm:$0x3] %vm3471, %v3469
    // Predicated region
    $region26: #{m5_forward.1} parent=1 // pred_check
      _
    $region27: #{m5_forward.1} parent=1 // pred_check_branch
      %3474 = sbr.rel (0) target = $region29
    $region28: #{m5_forward.1} parent=1 // pred_region
      %3476 = vsyncadd [#allocation5], 0
      %s3478 = sshll.u32 [#allocation4], 4
      %s3479 = int_to_ptr.vmem [resolvable:$true] %s3478
      %s3480 = sshll.u32 %s6, 4
      %s3481 = int_to_ptr.hbm [resolvable:$true] %s3480
      %3483 = dma.vmem_to_hbm [thread:$0]  %s3479, 32, %s3481, [#allocation5]
    $region29: #{m5_forward.1} parent=1 // pred_fallthru
      _
    // Predicated region
    $region30: #{m5_forward.1} parent=1 // pred_check
      _
    $region31: #{m5_forward.1} parent=1 // pred_check_branch
      %3485 = sbr.rel (0) target = $region33
    $region32: #{m5_forward.1} parent=1 // pred_region
      %3487 = dma.done [#allocation5], 32
    $region33: #{m5_forward.1} parent=1 // pred_fallthru
      _
    %3488 = vsyncpa [#allocation5], 1

</llo_original>
